<compile_context>
chip_gen: v6e
topology: v6e:2x2x1
jax: 0.10.0
libtpu: 0.0.40
codegen_flags: <defaults>
</compile_context>

<pallas_src>
import jax
import jax.numpy as jnp
from jax import lax
from jax.experimental import pallas as pl
from jax.experimental.pallas import tpu as pltpu

# ------------------------- config (small synthetic ViT) -------------------------
B, C_IN, IMG = 2, 3, 16
PATCH = 4
GRID = IMG // PATCH                 # 4
NP = GRID * GRID                    # 16 patch tokens per image
PDIM = C_IN * PATCH * PATCH         # 48 (flattened patch, order (C, ph, pw))
DIM = 32                            # hidden size
HEADS = 4
HDIM = DIM // HEADS                 # 8
MLP = 64
LAYERS = 2
NUM_OUTPUT_TRANS = 4                # num_output_trans (real output channels)
KPAD = 8                            # padded output channels (full 8-sublane store)
NPIX = IMG * IMG                    # 256 (lane-dense output width)
NTOK = B * NP                       # 32 — batch folded into token rows
EPS = 1e-6

# TODO(synk): the real TransformerV2 encoder carries a CLS token that the
# linear decoder drops; it is omitted here (pure patch tokens).
# TODO(synk): PyTorch nn.GELU uses the exact erf form; tanh approximation used here.


# ------------------------------ in-kernel helpers ------------------------------
def _ln(x, g, b):
    mu = jnp.mean(x, axis=-1, keepdims=True)
    var = jnp.mean((x - mu) * (x - mu), axis=-1, keepdims=True)
    return (x - mu) * lax.rsqrt(var + EPS) * g + b


def _gelu(x):
    c = 0.7978845608028654  # sqrt(2/pi)
    return 0.5 * x * (1.0 + jnp.tanh(c * (x + 0.044715 * x * x * x)))


# --------------------------------- fused kernel ---------------------------------
def fused_vit_kernel(p_ref, pe_w_ref, pos_ref,
                     ln1g_ref, ln1b_ref, wqkvT_ref, bqkvT_ref, wo_ref, bo_ref,
                     ln2g_ref, ln2b_ref, w1_ref, b1_ref, w2_ref, b2_ref,
                     decg_ref, decb_ref, decwT_ref, decbT_ref, ut_ref,
                     o_ref, headT_ref, attn_ref):
    f32 = jnp.float32
    scale = 1.0 / (HDIM ** 0.5)

    # ---- patch embed (conv k=P,s=P == patchify + matmul); pos embed carries the bias ----
    x = jnp.dot(p_ref[...], pe_w_ref[...],
                preferred_element_type=f32) + pos_ref[...]            # (NTOK, DIM)

    # ---- transformer blocks (static unroll; all weights VMEM-resident, all f32) ----
    for l in range(LAYERS):
        # pre-LN multi-head self-attention
        h = _ln(x, ln1g_ref[l], ln1b_ref[l])                          # (NTOK, DIM)
        wqkvT_l = wqkvT_ref[l]                                        # (3*DIM, DIM)
        bqkvT_l = bqkvT_ref[l]                                        # (3*DIM, 1)
        wo_l = wo_ref[l]                                              # (DIM, DIM)

        for bb in range(B):                                           # static 2-way batch split
            h_b = h[bb * NP:(bb + 1) * NP, :]                         # sublane slice (aligned)
            # fused QKV projection in transposed layout: (3*DIM, NP)
            qkvT = lax.dot_general(wqkvT_l, h_b, (((1,), (1,)), ((), ())),
                                   preferred_element_type=f32) + bqkvT_l
            for hh in range(HEADS):                                   # static unroll
                # per-head slices are SUBLANE slices at multiples of 8 -> no relayout
                qT = qkvT[hh * HDIM:(hh + 1) * HDIM, :]               # (HDIM, NP)
                kT = qkvT[DIM + hh * HDIM:DIM + (hh + 1) * HDIM, :]
                vT = qkvT[2 * DIM + hh * HDIM:2 * DIM + (hh + 1) * HDIM, :]
                s = lax.dot_general(qT, kT, (((0,), (0,)), ((), ())),
                                    preferred_element_type=f32) * scale   # (NP, NP)
                s = s - jnp.max(s, axis=-1, keepdims=True)
                probs = jnp.exp(s)
                probs = probs * pl.reciprocal(
                    jnp.sum(probs, axis=-1, keepdims=True), approx=True)
                ohT = lax.dot_general(vT, probs, (((1,), (1,)), ((), ())),
                                      preferred_element_type=f32)     # (HDIM, NP)
                # drop this head's output at its sublane offset
                headT_ref[hh * HDIM:(hh + 1) * HDIM, :] = ohT
            # ONE Wo matmul per (layer, batch): (DIM, NP)^T @ (DIM, DIM) -> (NP, DIM)
            attn_b = lax.dot_general(headT_ref[...], wo_l, (((0,), (0,)), ((), ())),
                                     preferred_element_type=f32)
            attn_ref[bb * NP:(bb + 1) * NP, :] = attn_b               # sublane-aligned store

        x = x + attn_ref[...] + bo_ref[l]

        # pre-LN MLP (full 32-row matmuls)
        h2 = _ln(x, ln2g_ref[l], ln2b_ref[l])
        m = jnp.dot(h2, w1_ref[l], preferred_element_type=f32) + b1_ref[l]   # (NTOK, MLP)
        m = _gelu(m)
        m = jnp.dot(m, w2_ref[l], preferred_element_type=f32) + b2_ref[l]    # (NTOK, DIM)
        x = x + m

    # ---- final LN + linear decode + bilinear upsample (fused tail, per batch) ----
    hdec = _ln(x, decg_ref[...], decb_ref[...])                       # (NTOK, DIM)
    for bb in range(B):
        hdec_b = hdec[bb * NP:(bb + 1) * NP, :]                       # (NP, DIM)
        # yT[c, t] = (LN(x) @ Wd + bd)^T, channels padded to KPAD=8 sublanes
        yT = lax.dot_general(decwT_ref[...], hdec_b, (((1,), (1,)), ((), ())),
                             preferred_element_type=f32) + decbT_ref[...]    # (KPAD, NP)
        # bilinear upsample as one matmul with the precomputed kron(U, U)^T
        o_ref[bb] = jnp.dot(yT, ut_ref[...], preferred_element_type=f32)     # (KPAD, NPIX)


# ------------------------------ pallas_call wrapper ------------------------------
def _const_spec(shape):
    n = len(shape)
    return pl.BlockSpec(shape, lambda i: (0,) * n)


def just_vit_pallas(patches, p):
    weights = [p["pe_w"], p["pos"],
               p["ln1_g"], p["ln1_b"], p["wqkvT"], p["bqkvT"], p["wo"], p["bo"],
               p["ln2_g"], p["ln2_b"], p["w1"], p["b1"], p["w2"], p["b2"],
               p["dec_lng"], p["dec_lnb"], p["dec_wT"], p["dec_bT"], p["ut"]]
    in_specs = [_const_spec(patches.shape)] + [_const_spec(w.shape) for w in weights]
    out = pl.pallas_call(
        fused_vit_kernel,
        out_shape=jax.ShapeDtypeStruct((B, KPAD, NPIX), jnp.float32),
        grid=(1,),                                    # whole network in one grid step
        in_specs=in_specs,
        out_specs=pl.BlockSpec((B, KPAD, NPIX), lambda i: (0, 0, 0)),
        scratch_shapes=[
            pltpu.VMEM((DIM, NP), jnp.float32),       # per-batch concat of head outputs (transposed)
            pltpu.VMEM((NTOK, DIM), jnp.float32),     # attention output for both batch elements
        ],
        compiler_params=pltpu.CompilerParams(dimension_semantics=("arbitrary",)),
    )(patches, *weights)
    return out


# ------------------------------ glue (plain JAX) ------------------------------
def patchify(images):
    # NCHW -> (B*NP, C*P*P) with per-patch element order (C, ph, pw),
    # matching a Conv2d(C_IN, DIM, kernel=P, stride=P) weight flatten.
    x = images.reshape(B, C_IN, GRID, PATCH, GRID, PATCH)
    x = x.transpose(0, 2, 4, 1, 3, 5)
    return x.reshape(NTOK, PDIM)


def bilinear_matrix(out_size, in_size):
    # PyTorch F.interpolate(mode='bilinear', align_corners=False) weights.
    scale = in_size / out_size
    o = jnp.arange(out_size, dtype=jnp.float32)
    src = jnp.clip((o + 0.5) * scale - 0.5, 0.0, in_size - 1)
    i0 = jnp.floor(src).astype(jnp.int32)
    i1 = jnp.minimum(i0 + 1, in_size - 1)
    w1 = src - i0.astype(jnp.float32)
    w0 = 1.0 - w1
    m = jnp.zeros((out_size, in_size), jnp.float32)
    rows = jnp.arange(out_size)
    m = m.at[rows, i0].add(w0)
    m = m.at[rows, i1].add(w1)
    return m


def init_params(key):
    def nrm(k, shape, scale=0.02):
        return scale * jax.random.normal(k, shape, jnp.float32)

    keys = iter(jax.random.split(key, 8))
    pos = nrm(next(keys), (NP, DIM))
    p = {
        "pe_w": nrm(next(keys), (PDIM, DIM)),
        # positional embedding pre-tiled over the folded batch; patch-embed bias
        # (zeros here) is folded in as well.
        "pos": jnp.tile(pos, (B, 1)),
        # per-layer weights stacked along a leading LAYERS axis (VMEM-resident)
        "ln1_g": jnp.ones((LAYERS, 1, DIM), jnp.float32),
        "ln1_b": jnp.zeros((LAYERS, 1, DIM), jnp.float32),
        "wqkvT": nrm(next(keys), (LAYERS, 3 * DIM, DIM)),   # fused Q|K|V, stored transposed
        "bqkvT": jnp.zeros((LAYERS, 3 * DIM, 1), jnp.float32),
        "wo": nrm(next(keys), (LAYERS, DIM, DIM)),
        "bo": jnp.zeros((LAYERS, 1, DIM), jnp.float32),
        "ln2_g": jnp.ones((LAYERS, 1, DIM), jnp.float32),
        "ln2_b": jnp.zeros((LAYERS, 1, DIM), jnp.float32),
        "w1": nrm(next(keys), (LAYERS, DIM, MLP)),
        "b1": jnp.zeros((LAYERS, 1, MLP), jnp.float32),
        "w2": nrm(next(keys), (LAYERS, MLP, DIM)),
        "b2": jnp.zeros((LAYERS, 1, DIM), jnp.float32),
        # decoder (stored transposed; channel dim zero-padded 4 -> 8 for full-tile stores)
        "dec_lng": jnp.ones((1, DIM), jnp.float32),
        "dec_lnb": jnp.zeros((1, DIM), jnp.float32),
        "dec_bT": jnp.zeros((KPAD, 1), jnp.float32),
    }
    dec_w = nrm(next(keys), (NUM_OUTPUT_TRANS, DIM))
    p["dec_wT"] = jnp.concatenate(
        [dec_w, jnp.zeros((KPAD - NUM_OUTPUT_TRANS, DIM), jnp.float32)], axis=0)
    # bilinear upsample as one matmul: out_flat = kron(uh, uh) @ feat_flat
    uh = bilinear_matrix(IMG, GRID)                       # (IMG, GRID)
    p["ut"] = jnp.kron(uh, uh).T                          # (NP, IMG*IMG)
    return p


@jax.jit
def just_vit_forward(images, params):
    patches = patchify(images)                            # (B*NP, PDIM)
    out = just_vit_pallas(patches, params)                # (B, KPAD, IMG*IMG)
    out = out[:, :NUM_OUTPUT_TRANS, :]                    # drop pad channels
    return out.reshape(B, NUM_OUTPUT_TRANS, IMG, IMG)     # NCHW


if __name__ == "__main__":
    key = jax.random.PRNGKey(0)
    k_img, k_par = jax.random.split(key)
    images = jax.random.normal(k_img, (B, C_IN, IMG, IMG), jnp.float32)
    params = init_params(k_par)

    out = just_vit_forward(images, params)
    jax.block_until_ready(out)
    assert out.shape == (B, NUM_OUTPUT_TRANS, IMG, IMG)
    assert bool(jnp.all(jnp.isfinite(out)))
    print("KERNEL_OK")
</pallas_src>

<mosaic_0001>
module attributes {stable_mosaic.version = 11 : i64} {
  func.func @fused_vit_kernel(%arg0: i32, %arg1: memref<32x48xf32, #tpu.memory_space<vmem>>, %arg2: memref<48x32xf32, #tpu.memory_space<vmem>>, %arg3: memref<32x32xf32, #tpu.memory_space<vmem>>, %arg4: memref<2x1x32xf32, #tpu.memory_space<vmem>>, %arg5: memref<2x1x32xf32, #tpu.memory_space<vmem>>, %arg6: memref<2x96x32xf32, #tpu.memory_space<vmem>>, %arg7: memref<2x96x1xf32, #tpu.memory_space<vmem>>, %arg8: memref<2x32x32xf32, #tpu.memory_space<vmem>>, %arg9: memref<2x1x32xf32, #tpu.memory_space<vmem>>, %arg10: memref<2x1x32xf32, #tpu.memory_space<vmem>>, %arg11: memref<2x1x32xf32, #tpu.memory_space<vmem>>, %arg12: memref<2x32x64xf32, #tpu.memory_space<vmem>>, %arg13: memref<2x1x64xf32, #tpu.memory_space<vmem>>, %arg14: memref<2x64x32xf32, #tpu.memory_space<vmem>>, %arg15: memref<2x1x32xf32, #tpu.memory_space<vmem>>, %arg16: memref<1x32xf32, #tpu.memory_space<vmem>>, %arg17: memref<1x32xf32, #tpu.memory_space<vmem>>, %arg18: memref<8x32xf32, #tpu.memory_space<vmem>>, %arg19: memref<8x1xf32, #tpu.memory_space<vmem>>, %arg20: memref<16x256xf32, #tpu.memory_space<vmem>>, %arg21: memref<2x8x256xf32, #tpu.memory_space<vmem>>, %arg22: memref<32x16xf32, #tpu.memory_space<vmem>>, %arg23: memref<32x32xf32, #tpu.memory_space<vmem>>) attributes {dimension_semantics = [#tpu.dimension_semantics<arbitrary>], iteration_bounds = array<i64: 1>, scalar_prefetch = 0 : i64, scratch_operands = 2 : i64, tpu.core_type = #tpu.core_type<tc>, window_params = [{pipeline_mode = #tpu.pipeline_mode<synchronous>, transform_indices = @transform_0, window_bounds = array<i64: 32, 48>}, {pipeline_mode = #tpu.pipeline_mode<synchronous>, transform_indices = @transform_1, window_bounds = array<i64: 48, 32>}, {pipeline_mode = #tpu.pipeline_mode<synchronous>, transform_indices = @transform_2, window_bounds = array<i64: 32, 32>}, {pipeline_mode = #tpu.pipeline_mode<synchronous>, transform_indices = @transform_3, window_bounds = array<i64: 2, 1, 32>}, {pipeline_mode = #tpu.pipeline_mode<synchronous>, transform_indices = @transform_4, window_bounds = array<i64: 2, 1, 32>}, {pipeline_mode = #tpu.pipeline_mode<synchronous>, transform_indices = @transform_5, window_bounds = array<i64: 2, 96, 32>}, {pipeline_mode = #tpu.pipeline_mode<synchronous>, transform_indices = @transform_6, window_bounds = array<i64: 2, 96, 1>}, {pipeline_mode = #tpu.pipeline_mode<synchronous>, transform_indices = @transform_7, window_bounds = array<i64: 2, 32, 32>}, {pipeline_mode = #tpu.pipeline_mode<synchronous>, transform_indices = @transform_8, window_bounds = array<i64: 2, 1, 32>}, {pipeline_mode = #tpu.pipeline_mode<synchronous>, transform_indices = @transform_9, window_bounds = array<i64: 2, 1, 32>}, {pipeline_mode = #tpu.pipeline_mode<synchronous>, transform_indices = @transform_10, window_bounds = array<i64: 2, 1, 32>}, {pipeline_mode = #tpu.pipeline_mode<synchronous>, transform_indices = @transform_11, window_bounds = array<i64: 2, 32, 64>}, {pipeline_mode = #tpu.pipeline_mode<synchronous>, transform_indices = @transform_12, window_bounds = array<i64: 2, 1, 64>}, {pipeline_mode = #tpu.pipeline_mode<synchronous>, transform_indices = @transform_13, window_bounds = array<i64: 2, 64, 32>}, {pipeline_mode = #tpu.pipeline_mode<synchronous>, transform_indices = @transform_14, window_bounds = array<i64: 2, 1, 32>}, {pipeline_mode = #tpu.pipeline_mode<synchronous>, transform_indices = @transform_15, window_bounds = array<i64: 1, 32>}, {pipeline_mode = #tpu.pipeline_mode<synchronous>, transform_indices = @transform_16, window_bounds = array<i64: 1, 32>}, {pipeline_mode = #tpu.pipeline_mode<synchronous>, transform_indices = @transform_17, window_bounds = array<i64: 8, 32>}, {pipeline_mode = #tpu.pipeline_mode<synchronous>, transform_indices = @transform_18, window_bounds = array<i64: 8, 1>}, {pipeline_mode = #tpu.pipeline_mode<synchronous>, transform_indices = @transform_19, window_bounds = array<i64: 16, 256>}, {pipeline_mode = #tpu.pipeline_mode<synchronous>, transform_indices = @transform_20, window_bounds = array<i64: 2, 8, 256>}]} {
    %c0 = arith.constant 0 : index
    %c0_0 = arith.constant 0 : index
    %0 = vector.load %arg1[%c0, %c0_0] : memref<32x48xf32, #tpu.memory_space<vmem>>, vector<32x48xf32>
    %c0_1 = arith.constant 0 : index
    %c0_2 = arith.constant 0 : index
    %1 = vector.load %arg2[%c0_1, %c0_2] : memref<48x32xf32, #tpu.memory_space<vmem>>, vector<48x32xf32>
    %cst = arith.constant dense<0.000000e+00> : vector<32x32xf32>
    %2 = tpu.matmul %0, %1, %cst {dimension_numbers = #tpu.dot_dimension_numbers<[1], [0], [0], [1], [0, 0, 1, 1], [], []>} : vector<32x48xf32>, vector<48x32xf32>, vector<32x32xf32> -> vector<32x32xf32>
    %c0_3 = arith.constant 0 : index
    %c0_4 = arith.constant 0 : index
    %3 = vector.load %arg3[%c0_3, %c0_4] : memref<32x32xf32, #tpu.memory_space<vmem>>, vector<32x32xf32>
    %4 = arith.addf %2, %3 : vector<32x32xf32>
    %c0_5 = arith.constant 0 : index
    %c0_6 = arith.constant 0 : index
    %c0_7 = arith.constant 0 : index
    %5 = vector.load %arg4[%c0_5, %c0_6, %c0_7] : memref<2x1x32xf32, #tpu.memory_space<vmem>>, vector<1x1x32xf32>
    %6 = vector.shape_cast %5 : vector<1x1x32xf32> to vector<1x32xf32>
    %c0_8 = arith.constant 0 : index
    %c0_9 = arith.constant 0 : index
    %c0_10 = arith.constant 0 : index
    %7 = vector.load %arg5[%c0_8, %c0_9, %c0_10] : memref<2x1x32xf32, #tpu.memory_space<vmem>>, vector<1x1x32xf32>
    %8 = vector.shape_cast %7 : vector<1x1x32xf32> to vector<1x32xf32>
    %cst_11 = arith.constant dense<0.000000e+00> : vector<32xf32>
    %9 = vector.multi_reduction <add>, %4, %cst_11 [1] : vector<32x32xf32> to vector<32xf32>
    %10 = vector.shape_cast %9 : vector<32xf32> to vector<32x1xf32>
    %cst_12 = arith.constant 3.200000e+01 : f32
    %11 = vector.broadcast %cst_12 : f32 to vector<32x1xf32>
    %12 = arith.divf %10, %11 : vector<32x1xf32>
    %13 = vector.broadcast %12 : vector<32x1xf32> to vector<32x32xf32>
    %14 = arith.subf %4, %13 : vector<32x32xf32>
    %15 = vector.broadcast %12 : vector<32x1xf32> to vector<32x32xf32>
    %16 = arith.subf %4, %15 : vector<32x32xf32>
    %17 = arith.mulf %14, %16 : vector<32x32xf32>
    %cst_13 = arith.constant dense<0.000000e+00> : vector<32xf32>
    %18 = vector.multi_reduction <add>, %17, %cst_13 [1] : vector<32x32xf32> to vector<32xf32>
    %19 = vector.shape_cast %18 : vector<32xf32> to vector<32x1xf32>
    %cst_14 = arith.constant 3.200000e+01 : f32
    %20 = vector.broadcast %cst_14 : f32 to vector<32x1xf32>
    %21 = arith.divf %19, %20 : vector<32x1xf32>
    %22 = vector.broadcast %12 : vector<32x1xf32> to vector<32x32xf32>
    %23 = arith.subf %4, %22 : vector<32x32xf32>
    %cst_15 = arith.constant 9.99999997E-7 : f32
    %24 = vector.broadcast %cst_15 : f32 to vector<32x1xf32>
    %25 = arith.addf %21, %24 : vector<32x1xf32>
    %26 = math.rsqrt %25 : vector<32x1xf32>
    %27 = vector.broadcast %26 : vector<32x1xf32> to vector<32x32xf32>
    %28 = arith.mulf %23, %27 : vector<32x32xf32>
    %29 = vector.broadcast %6 : vector<1x32xf32> to vector<32x32xf32>
    %30 = arith.mulf %28, %29 : vector<32x32xf32>
    %31 = vector.broadcast %8 : vector<1x32xf32> to vector<32x32xf32>
    %32 = arith.addf %30, %31 : vector<32x32xf32>
    %c0_16 = arith.constant 0 : index
    %c0_17 = arith.constant 0 : index
    %c0_18 = arith.constant 0 : index
    %33 = vector.load %arg6[%c0_16, %c0_17, %c0_18] : memref<2x96x32xf32, #tpu.memory_space<vmem>>, vector<1x96x32xf32>
    %34 = vector.shape_cast %33 : vector<1x96x32xf32> to vector<96x32xf32>
    %c0_19 = arith.constant 0 : index
    %c0_20 = arith.constant 0 : index
    %c0_21 = arith.constant 0 : index
    %35 = vector.load %arg7[%c0_19, %c0_20, %c0_21] : memref<2x96x1xf32, #tpu.memory_space<vmem>>, vector<1x96x1xf32>
    %36 = vector.shape_cast %35 : vector<1x96x1xf32> to vector<96x1xf32>
    %c0_22 = arith.constant 0 : index
    %c0_23 = arith.constant 0 : index
    %c0_24 = arith.constant 0 : index
    %37 = vector.load %arg8[%c0_22, %c0_23, %c0_24] : memref<2x32x32xf32, #tpu.memory_space<vmem>>, vector<1x32x32xf32>
    %38 = vector.shape_cast %37 : vector<1x32x32xf32> to vector<32x32xf32>
    %39 = vector.extract_strided_slice %32 {offsets = [0, 0], sizes = [16, 32], strides = [1, 1]} : vector<32x32xf32> to vector<16x32xf32>
    %cst_25 = arith.constant dense<0.000000e+00> : vector<96x16xf32>
    %40 = tpu.matmul %34, %39, %cst_25 {dimension_numbers = #tpu.dot_dimension_numbers<[1], [1], [0], [0], [0, 0, 1, 0], [], []>} : vector<96x32xf32>, vector<16x32xf32>, vector<96x16xf32> -> vector<96x16xf32>
    %41 = vector.broadcast %36 : vector<96x1xf32> to vector<96x16xf32>
    %42 = arith.addf %40, %41 : vector<96x16xf32>
    %43 = vector.extract_strided_slice %42 {offsets = [0, 0], sizes = [8, 16], strides = [1, 1]} : vector<96x16xf32> to vector<8x16xf32>
    %44 = vector.extract_strided_slice %42 {offsets = [32, 0], sizes = [8, 16], strides = [1, 1]} : vector<96x16xf32> to vector<8x16xf32>
    %45 = vector.extract_strided_slice %42 {offsets = [64, 0], sizes = [8, 16], strides = [1, 1]} : vector<96x16xf32> to vector<8x16xf32>
    %cst_26 = arith.constant dense<0.000000e+00> : vector<16x16xf32>
    %46 = tpu.matmul %43, %44, %cst_26 {dimension_numbers = #tpu.dot_dimension_numbers<[0], [0], [1], [1], [0, 1, 1, 1], [], []>} : vector<8x16xf32>, vector<8x16xf32>, vector<16x16xf32> -> vector<16x16xf32>
    %cst_27 = arith.constant 0.353553385 : f32
    %47 = vector.broadcast %cst_27 : f32 to vector<16x16xf32>
    %48 = arith.mulf %46, %47 : vector<16x16xf32>
    %cst_28 = arith.constant dense<0xFF800000> : vector<16xf32>
    %49 = vector.multi_reduction <maximumf>, %48, %cst_28 [1] : vector<16x16xf32> to vector<16xf32>
    %50 = vector.shape_cast %49 : vector<16xf32> to vector<16x1xf32>
    %51 = vector.broadcast %50 : vector<16x1xf32> to vector<16x16xf32>
    %52 = arith.subf %48, %51 : vector<16x16xf32>
    %53 = math.exp %52 : vector<16x16xf32>
    %cst_29 = arith.constant dense<0.000000e+00> : vector<16xf32>
    %54 = vector.multi_reduction <add>, %53, %cst_29 [1] : vector<16x16xf32> to vector<16xf32>
    %55 = vector.shape_cast %54 : vector<16xf32> to vector<16x1xf32>
    %56 = tpu.reciprocal %55 {approx = true} : vector<16x1xf32> -> vector<16x1xf32>
    %57 = vector.broadcast %56 : vector<16x1xf32> to vector<16x16xf32>
    %58 = arith.mulf %53, %57 : vector<16x16xf32>
    %cst_30 = arith.constant dense<0.000000e+00> : vector<8x16xf32>
    %59 = tpu.matmul %45, %58, %cst_30 {dimension_numbers = #tpu.dot_dimension_numbers<[1], [1], [0], [0], [0, 0, 1, 0], [], []>} : vector<8x16xf32>, vector<16x16xf32>, vector<8x16xf32> -> vector<8x16xf32>
    %c0_31 = arith.constant 0 : index
    %c0_32 = arith.constant 0 : index
    %60 = vector.load %arg22[%c0_31, %c0_32] : memref<32x16xf32, #tpu.memory_space<vmem>>, vector<8x16xf32>
    tpu.vector_store %arg22[%c0_31, %c0_32], %59 {strides = array<i32>} : memref<32x16xf32, #tpu.memory_space<vmem>>, vector<8x16xf32>,
    %61 = vector.extract_strided_slice %42 {offsets = [8, 0], sizes = [8, 16], strides = [1, 1]} : vector<96x16xf32> to vector<8x16xf32>
    %62 = vector.extract_strided_slice %42 {offsets = [40, 0], sizes = [8, 16], strides = [1, 1]} : vector<96x16xf32> to vector<8x16xf32>
    %63 = vector.extract_strided_slice %42 {offsets = [72, 0], sizes = [8, 16], strides = [1, 1]} : vector<96x16xf32> to vector<8x16xf32>
    %cst_33 = arith.constant dense<0.000000e+00> : vector<16x16xf32>
    %64 = tpu.matmul %61, %62, %cst_33 {dimension_numbers = #tpu.dot_dimension_numbers<[0], [0], [1], [1], [0, 1, 1, 1], [], []>} : vector<8x16xf32>, vector<8x16xf32>, vector<16x16xf32> -> vector<16x16xf32>
    %cst_34 = arith.constant 0.353553385 : f32
    %65 = vector.broadcast %cst_34 : f32 to vector<16x16xf32>
    %66 = arith.mulf %64, %65 : vector<16x16xf32>
    %cst_35 = arith.constant dense<0xFF800000> : vector<16xf32>
    %67 = vector.multi_reduction <maximumf>, %66, %cst_35 [1] : vector<16x16xf32> to vector<16xf32>
    %68 = vector.shape_cast %67 : vector<16xf32> to vector<16x1xf32>
    %69 = vector.broadcast %68 : vector<16x1xf32> to vector<16x16xf32>
    %70 = arith.subf %66, %69 : vector<16x16xf32>
    %71 = math.exp %70 : vector<16x16xf32>
    %cst_36 = arith.constant dense<0.000000e+00> : vector<16xf32>
    %72 = vector.multi_reduction <add>, %71, %cst_36 [1] : vector<16x16xf32> to vector<16xf32>
    %73 = vector.shape_cast %72 : vector<16xf32> to vector<16x1xf32>
    %74 = tpu.reciprocal %73 {approx = true} : vector<16x1xf32> -> vector<16x1xf32>
    %75 = vector.broadcast %74 : vector<16x1xf32> to vector<16x16xf32>
    %76 = arith.mulf %71, %75 : vector<16x16xf32>
    %cst_37 = arith.constant dense<0.000000e+00> : vector<8x16xf32>
    %77 = tpu.matmul %63, %76, %cst_37 {dimension_numbers = #tpu.dot_dimension_numbers<[1], [1], [0], [0], [0, 0, 1, 0], [], []>} : vector<8x16xf32>, vector<16x16xf32>, vector<8x16xf32> -> vector<8x16xf32>
    %c8 = arith.constant 8 : index
    %c0_38 = arith.constant 0 : index
    %78 = vector.load %arg22[%c8, %c0_38] : memref<32x16xf32, #tpu.memory_space<vmem>>, vector<8x16xf32>
    tpu.vector_store %arg22[%c8, %c0_38], %77 {strides = array<i32>} : memref<32x16xf32, #tpu.memory_space<vmem>>, vector<8x16xf32>,
    %79 = vector.extract_strided_slice %42 {offsets = [16, 0], sizes = [8, 16], strides = [1, 1]} : vector<96x16xf32> to vector<8x16xf32>
    %80 = vector.extract_strided_slice %42 {offsets = [48, 0], sizes = [8, 16], strides = [1, 1]} : vector<96x16xf32> to vector<8x16xf32>
    %81 = vector.extract_strided_slice %42 {offsets = [80, 0], sizes = [8, 16], strides = [1, 1]} : vector<96x16xf32> to vector<8x16xf32>
    %cst_39 = arith.constant dense<0.000000e+00> : vector<16x16xf32>
    %82 = tpu.matmul %79, %80, %cst_39 {dimension_numbers = #tpu.dot_dimension_numbers<[0], [0], [1], [1], [0, 1, 1, 1], [], []>} : vector<8x16xf32>, vector<8x16xf32>, vector<16x16xf32> -> vector<16x16xf32>
    %cst_40 = arith.constant 0.353553385 : f32
    %83 = vector.broadcast %cst_40 : f32 to vector<16x16xf32>
    %84 = arith.mulf %82, %83 : vector<16x16xf32>
    %cst_41 = arith.constant dense<0xFF800000> : vector<16xf32>
    %85 = vector.multi_reduction <maximumf>, %84, %cst_41 [1] : vector<16x16xf32> to vector<16xf32>
    %86 = vector.shape_cast %85 : vector<16xf32> to vector<16x1xf32>
    %87 = vector.broadcast %86 : vector<16x1xf32> to vector<16x16xf32>
    %88 = arith.subf %84, %87 : vector<16x16xf32>
    %89 = math.exp %88 : vector<16x16xf32>
    %cst_42 = arith.constant dense<0.000000e+00> : vector<16xf32>
    %90 = vector.multi_reduction <add>, %89, %cst_42 [1] : vector<16x16xf32> to vector<16xf32>
    %91 = vector.shape_cast %90 : vector<16xf32> to vector<16x1xf32>
    %92 = tpu.reciprocal %91 {approx = true} : vector<16x1xf32> -> vector<16x1xf32>
    %93 = vector.broadcast %92 : vector<16x1xf32> to vector<16x16xf32>
    %94 = arith.mulf %89, %93 : vector<16x16xf32>
    %cst_43 = arith.constant dense<0.000000e+00> : vector<8x16xf32>
    %95 = tpu.matmul %81, %94, %cst_43 {dimension_numbers = #tpu.dot_dimension_numbers<[1], [1], [0], [0], [0, 0, 1, 0], [], []>} : vector<8x16xf32>, vector<16x16xf32>, vector<8x16xf32> -> vector<8x16xf32>
    %c16 = arith.constant 16 : index
    %c0_44 = arith.constant 0 : index
    %96 = vector.load %arg22[%c16, %c0_44] : memref<32x16xf32, #tpu.memory_space<vmem>>, vector<8x16xf32>
    tpu.vector_store %arg22[%c16, %c0_44], %95 {strides = array<i32>} : memref<32x16xf32, #tpu.memory_space<vmem>>, vector<8x16xf32>,
    %97 = vector.extract_strided_slice %42 {offsets = [24, 0], sizes = [8, 16], strides = [1, 1]} : vector<96x16xf32> to vector<8x16xf32>
    %98 = vector.extract_strided_slice %42 {offsets = [56, 0], sizes = [8, 16], strides = [1, 1]} : vector<96x16xf32> to vector<8x16xf32>
    %99 = vector.extract_strided_slice %42 {offsets = [88, 0], sizes = [8, 16], strides = [1, 1]} : vector<96x16xf32> to vector<8x16xf32>
    %cst_45 = arith.constant dense<0.000000e+00> : vector<16x16xf32>
    %100 = tpu.matmul %97, %98, %cst_45 {dimension_numbers = #tpu.dot_dimension_numbers<[0], [0], [1], [1], [0, 1, 1, 1], [], []>} : vector<8x16xf32>, vector<8x16xf32>, vector<16x16xf32> -> vector<16x16xf32>
    %cst_46 = arith.constant 0.353553385 : f32
    %101 = vector.broadcast %cst_46 : f32 to vector<16x16xf32>
    %102 = arith.mulf %100, %101 : vector<16x16xf32>
    %cst_47 = arith.constant dense<0xFF800000> : vector<16xf32>
    %103 = vector.multi_reduction <maximumf>, %102, %cst_47 [1] : vector<16x16xf32> to vector<16xf32>
    %104 = vector.shape_cast %103 : vector<16xf32> to vector<16x1xf32>
    %105 = vector.broadcast %104 : vector<16x1xf32> to vector<16x16xf32>
    %106 = arith.subf %102, %105 : vector<16x16xf32>
    %107 = math.exp %106 : vector<16x16xf32>
    %cst_48 = arith.constant dense<0.000000e+00> : vector<16xf32>
    %108 = vector.multi_reduction <add>, %107, %cst_48 [1] : vector<16x16xf32> to vector<16xf32>
    %109 = vector.shape_cast %108 : vector<16xf32> to vector<16x1xf32>
    %110 = tpu.reciprocal %109 {approx = true} : vector<16x1xf32> -> vector<16x1xf32>
    %111 = vector.broadcast %110 : vector<16x1xf32> to vector<16x16xf32>
    %112 = arith.mulf %107, %111 : vector<16x16xf32>
    %cst_49 = arith.constant dense<0.000000e+00> : vector<8x16xf32>
    %113 = tpu.matmul %99, %112, %cst_49 {dimension_numbers = #tpu.dot_dimension_numbers<[1], [1], [0], [0], [0, 0, 1, 0], [], []>} : vector<8x16xf32>, vector<16x16xf32>, vector<8x16xf32> -> vector<8x16xf32>
    %c24 = arith.constant 24 : index
    %c0_50 = arith.constant 0 : index
    %114 = vector.load %arg22[%c24, %c0_50] : memref<32x16xf32, #tpu.memory_space<vmem>>, vector<8x16xf32>
    tpu.vector_store %arg22[%c24, %c0_50], %113 {strides = array<i32>} : memref<32x16xf32, #tpu.memory_space<vmem>>, vector<8x16xf32>,
    %c0_51 = arith.constant 0 : index
    %c0_52 = arith.constant 0 : index
    %115 = vector.load %arg22[%c0_51, %c0_52] : memref<32x16xf32, #tpu.memory_space<vmem>>, vector<32x16xf32>
    %cst_53 = arith.constant dense<0.000000e+00> : vector<16x32xf32>
    %116 = tpu.matmul %115, %38, %cst_53 {dimension_numbers = #tpu.dot_dimension_numbers<[0], [0], [1], [1], [0, 1, 1, 1], [], []>} : vector<32x16xf32>, vector<32x32xf32>, vector<16x32xf32> -> vector<16x32xf32>
    %c0_54 = arith.constant 0 : index
    %c0_55 = arith.constant 0 : index
    %117 = vector.load %arg23[%c0_54, %c0_55] : memref<32x32xf32, #tpu.memory_space<vmem>>, vector<16x32xf32>
    tpu.vector_store %arg23[%c0_54, %c0_55], %116 {strides = array<i32>} : memref<32x32xf32, #tpu.memory_space<vmem>>, vector<16x32xf32>,
    %118 = vector.extract_strided_slice %32 {offsets = [16, 0], sizes = [16, 32], strides = [1, 1]} : vector<32x32xf32> to vector<16x32xf32>
    %cst_56 = arith.constant dense<0.000000e+00> : vector<96x16xf32>
    %119 = tpu.matmul %34, %118, %cst_56 {dimension_numbers = #tpu.dot_dimension_numbers<[1], [1], [0], [0], [0, 0, 1, 0], [], []>} : vector<96x32xf32>, vector<16x32xf32>, vector<96x16xf32> -> vector<96x16xf32>
    %120 = vector.broadcast %36 : vector<96x1xf32> to vector<96x16xf32>
    %121 = arith.addf %119, %120 : vector<96x16xf32>
    %122 = vector.extract_strided_slice %121 {offsets = [0, 0], sizes = [8, 16], strides = [1, 1]} : vector<96x16xf32> to vector<8x16xf32>
    %123 = vector.extract_strided_slice %121 {offsets = [32, 0], sizes = [8, 16], strides = [1, 1]} : vector<96x16xf32> to vector<8x16xf32>
    %124 = vector.extract_strided_slice %121 {offsets = [64, 0], sizes = [8, 16], strides = [1, 1]} : vector<96x16xf32> to vector<8x16xf32>
    %cst_57 = arith.constant dense<0.000000e+00> : vector<16x16xf32>
    %125 = tpu.matmul %122, %123, %cst_57 {dimension_numbers = #tpu.dot_dimension_numbers<[0], [0], [1], [1], [0, 1, 1, 1], [], []>} : vector<8x16xf32>, vector<8x16xf32>, vector<16x16xf32> -> vector<16x16xf32>
    %cst_58 = arith.constant 0.353553385 : f32
    %126 = vector.broadcast %cst_58 : f32 to vector<16x16xf32>
    %127 = arith.mulf %125, %126 : vector<16x16xf32>
    %cst_59 = arith.constant dense<0xFF800000> : vector<16xf32>
    %128 = vector.multi_reduction <maximumf>, %127, %cst_59 [1] : vector<16x16xf32> to vector<16xf32>
    %129 = vector.shape_cast %128 : vector<16xf32> to vector<16x1xf32>
    %130 = vector.broadcast %129 : vector<16x1xf32> to vector<16x16xf32>
    %131 = arith.subf %127, %130 : vector<16x16xf32>
    %132 = math.exp %131 : vector<16x16xf32>
    %cst_60 = arith.constant dense<0.000000e+00> : vector<16xf32>
    %133 = vector.multi_reduction <add>, %132, %cst_60 [1] : vector<16x16xf32> to vector<16xf32>
    %134 = vector.shape_cast %133 : vector<16xf32> to vector<16x1xf32>
    %135 = tpu.reciprocal %134 {approx = true} : vector<16x1xf32> -> vector<16x1xf32>
    %136 = vector.broadcast %135 : vector<16x1xf32> to vector<16x16xf32>
    %137 = arith.mulf %132, %136 : vector<16x16xf32>
    %cst_61 = arith.constant dense<0.000000e+00> : vector<8x16xf32>
    %138 = tpu.matmul %124, %137, %cst_61 {dimension_numbers = #tpu.dot_dimension_numbers<[1], [1], [0], [0], [0, 0, 1, 0], [], []>} : vector<8x16xf32>, vector<16x16xf32>, vector<8x16xf32> -> vector<8x16xf32>
    %c0_62 = arith.constant 0 : index
    %c0_63 = arith.constant 0 : index
    %139 = vector.load %arg22[%c0_62, %c0_63] : memref<32x16xf32, #tpu.memory_space<vmem>>, vector<8x16xf32>
    tpu.vector_store %arg22[%c0_62, %c0_63], %138 {strides = array<i32>} : memref<32x16xf32, #tpu.memory_space<vmem>>, vector<8x16xf32>,
    %140 = vector.extract_strided_slice %121 {offsets = [8, 0], sizes = [8, 16], strides = [1, 1]} : vector<96x16xf32> to vector<8x16xf32>
    %141 = vector.extract_strided_slice %121 {offsets = [40, 0], sizes = [8, 16], strides = [1, 1]} : vector<96x16xf32> to vector<8x16xf32>
    %142 = vector.extract_strided_slice %121 {offsets = [72, 0], sizes = [8, 16], strides = [1, 1]} : vector<96x16xf32> to vector<8x16xf32>
    %cst_64 = arith.constant dense<0.000000e+00> : vector<16x16xf32>
    %143 = tpu.matmul %140, %141, %cst_64 {dimension_numbers = #tpu.dot_dimension_numbers<[0], [0], [1], [1], [0, 1, 1, 1], [], []>} : vector<8x16xf32>, vector<8x16xf32>, vector<16x16xf32> -> vector<16x16xf32>
    %cst_65 = arith.constant 0.353553385 : f32
    %144 = vector.broadcast %cst_65 : f32 to vector<16x16xf32>
    %145 = arith.mulf %143, %144 : vector<16x16xf32>
    %cst_66 = arith.constant dense<0xFF800000> : vector<16xf32>
    %146 = vector.multi_reduction <maximumf>, %145, %cst_66 [1] : vector<16x16xf32> to vector<16xf32>
    %147 = vector.shape_cast %146 : vector<16xf32> to vector<16x1xf32>
    %148 = vector.broadcast %147 : vector<16x1xf32> to vector<16x16xf32>
    %149 = arith.subf %145, %148 : vector<16x16xf32>
    %150 = math.exp %149 : vector<16x16xf32>
    %cst_67 = arith.constant dense<0.000000e+00> : vector<16xf32>
    %151 = vector.multi_reduction <add>, %150, %cst_67 [1] : vector<16x16xf32> to vector<16xf32>
    %152 = vector.shape_cast %151 : vector<16xf32> to vector<16x1xf32>
    %153 = tpu.reciprocal %152 {approx = true} : vector<16x1xf32> -> vector<16x1xf32>
    %154 = vector.broadcast %153 : vector<16x1xf32> to vector<16x16xf32>
    %155 = arith.mulf %150, %154 : vector<16x16xf32>
    %cst_68 = arith.constant dense<0.000000e+00> : vector<8x16xf32>
    %156 = tpu.matmul %142, %155, %cst_68 {dimension_numbers = #tpu.dot_dimension_numbers<[1], [1], [0], [0], [0, 0, 1, 0], [], []>} : vector<8x16xf32>, vector<16x16xf32>, vector<8x16xf32> -> vector<8x16xf32>
    %c8_69 = arith.constant 8 : index
    %c0_70 = arith.constant 0 : index
    %157 = vector.load %arg22[%c8_69, %c0_70] : memref<32x16xf32, #tpu.memory_space<vmem>>, vector<8x16xf32>
    tpu.vector_store %arg22[%c8_69, %c0_70], %156 {strides = array<i32>} : memref<32x16xf32, #tpu.memory_space<vmem>>, vector<8x16xf32>,
    %158 = vector.extract_strided_slice %121 {offsets = [16, 0], sizes = [8, 16], strides = [1, 1]} : vector<96x16xf32> to vector<8x16xf32>
    %159 = vector.extract_strided_slice %121 {offsets = [48, 0], sizes = [8, 16], strides = [1, 1]} : vector<96x16xf32> to vector<8x16xf32>
    %160 = vector.extract_strided_slice %121 {offsets = [80, 0], sizes = [8, 16], strides = [1, 1]} : vector<96x16xf32> to vector<8x16xf32>
    %cst_71 = arith.constant dense<0.000000e+00> : vector<16x16xf32>
    %161 = tpu.matmul %158, %159, %cst_71 {dimension_numbers = #tpu.dot_dimension_numbers<[0], [0], [1], [1], [0, 1, 1, 1], [], []>} : vector<8x16xf32>, vector<8x16xf32>, vector<16x16xf32> -> vector<16x16xf32>
    %cst_72 = arith.constant 0.353553385 : f32
    %162 = vector.broadcast %cst_72 : f32 to vector<16x16xf32>
    %163 = arith.mulf %161, %162 : vector<16x16xf32>
    %cst_73 = arith.constant dense<0xFF800000> : vector<16xf32>
    %164 = vector.multi_reduction <maximumf>, %163, %cst_73 [1] : vector<16x16xf32> to vector<16xf32>
    %165 = vector.shape_cast %164 : vector<16xf32> to vector<16x1xf32>
    %166 = vector.broadcast %165 : vector<16x1xf32> to vector<16x16xf32>
    %167 = arith.subf %163, %166 : vector<16x16xf32>
    %168 = math.exp %167 : vector<16x16xf32>
    %cst_74 = arith.constant dense<0.000000e+00> : vector<16xf32>
    %169 = vector.multi_reduction <add>, %168, %cst_74 [1] : vector<16x16xf32> to vector<16xf32>
    %170 = vector.shape_cast %169 : vector<16xf32> to vector<16x1xf32>
    %171 = tpu.reciprocal %170 {approx = true} : vector<16x1xf32> -> vector<16x1xf32>
    %172 = vector.broadcast %171 : vector<16x1xf32> to vector<16x16xf32>
    %173 = arith.mulf %168, %172 : vector<16x16xf32>
    %cst_75 = arith.constant dense<0.000000e+00> : vector<8x16xf32>
    %174 = tpu.matmul %160, %173, %cst_75 {dimension_numbers = #tpu.dot_dimension_numbers<[1], [1], [0], [0], [0, 0, 1, 0], [], []>} : vector<8x16xf32>, vector<16x16xf32>, vector<8x16xf32> -> vector<8x16xf32>
    %c16_76 = arith.constant 16 : index
    %c0_77 = arith.constant 0 : index
    %175 = vector.load %arg22[%c16_76, %c0_77] : memref<32x16xf32, #tpu.memory_space<vmem>>, vector<8x16xf32>
    tpu.vector_store %arg22[%c16_76, %c0_77], %174 {strides = array<i32>} : memref<32x16xf32, #tpu.memory_space<vmem>>, vector<8x16xf32>,
    %176 = vector.extract_strided_slice %121 {offsets = [24, 0], sizes = [8, 16], strides = [1, 1]} : vector<96x16xf32> to vector<8x16xf32>
    %177 = vector.extract_strided_slice %121 {offsets = [56, 0], sizes = [8, 16], strides = [1, 1]} : vector<96x16xf32> to vector<8x16xf32>
    %178 = vector.extract_strided_slice %121 {offsets = [88, 0], sizes = [8, 16], strides = [1, 1]} : vector<96x16xf32> to vector<8x16xf32>
    %cst_78 = arith.constant dense<0.000000e+00> : vector<16x16xf32>
    %179 = tpu.matmul %176, %177, %cst_78 {dimension_numbers = #tpu.dot_dimension_numbers<[0], [0], [1], [1], [0, 1, 1, 1], [], []>} : vector<8x16xf32>, vector<8x16xf32>, vector<16x16xf32> -> vector<16x16xf32>
    %cst_79 = arith.constant 0.353553385 : f32
    %180 = vector.broadcast %cst_79 : f32 to vector<16x16xf32>
    %181 = arith.mulf %179, %180 : vector<16x16xf32>
    %cst_80 = arith.constant dense<0xFF800000> : vector<16xf32>
    %182 = vector.multi_reduction <maximumf>, %181, %cst_80 [1] : vector<16x16xf32> to vector<16xf32>
    %183 = vector.shape_cast %182 : vector<16xf32> to vector<16x1xf32>
    %184 = vector.broadcast %183 : vector<16x1xf32> to vector<16x16xf32>
    %185 = arith.subf %181, %184 : vector<16x16xf32>
    %186 = math.exp %185 : vector<16x16xf32>
    %cst_81 = arith.constant dense<0.000000e+00> : vector<16xf32>
    %187 = vector.multi_reduction <add>, %186, %cst_81 [1] : vector<16x16xf32> to vector<16xf32>
    %188 = vector.shape_cast %187 : vector<16xf32> to vector<16x1xf32>
    %189 = tpu.reciprocal %188 {approx = true} : vector<16x1xf32> -> vector<16x1xf32>
    %190 = vector.broadcast %189 : vector<16x1xf32> to vector<16x16xf32>
    %191 = arith.mulf %186, %190 : vector<16x16xf32>
    %cst_82 = arith.constant dense<0.000000e+00> : vector<8x16xf32>
    %192 = tpu.matmul %178, %191, %cst_82 {dimension_numbers = #tpu.dot_dimension_numbers<[1], [1], [0], [0], [0, 0, 1, 0], [], []>} : vector<8x16xf32>, vector<16x16xf32>, vector<8x16xf32> -> vector<8x16xf32>
    %c24_83 = arith.constant 24 : index
    %c0_84 = arith.constant 0 : index
    %193 = vector.load %arg22[%c24_83, %c0_84] : memref<32x16xf32, #tpu.memory_space<vmem>>, vector<8x16xf32>
    tpu.vector_store %arg22[%c24_83, %c0_84], %192 {strides = array<i32>} : memref<32x16xf32, #tpu.memory_space<vmem>>, vector<8x16xf32>,
    %c0_85 = arith.constant 0 : index
    %c0_86 = arith.constant 0 : index
    %194 = vector.load %arg22[%c0_85, %c0_86] : memref<32x16xf32, #tpu.memory_space<vmem>>, vector<32x16xf32>
    %cst_87 = arith.constant dense<0.000000e+00> : vector<16x32xf32>
    %195 = tpu.matmul %194, %38, %cst_87 {dimension_numbers = #tpu.dot_dimension_numbers<[0], [0], [1], [1], [0, 1, 1, 1], [], []>} : vector<32x16xf32>, vector<32x32xf32>, vector<16x32xf32> -> vector<16x32xf32>
    %c16_88 = arith.constant 16 : index
    %c0_89 = arith.constant 0 : index
    %196 = vector.load %arg23[%c16_88, %c0_89] : memref<32x32xf32, #tpu.memory_space<vmem>>, vector<16x32xf32>
    tpu.vector_store %arg23[%c16_88, %c0_89], %195 {strides = array<i32>} : memref<32x32xf32, #tpu.memory_space<vmem>>, vector<16x32xf32>,
    %c0_90 = arith.constant 0 : index
    %c0_91 = arith.constant 0 : index
    %197 = vector.load %arg23[%c0_90, %c0_91] : memref<32x32xf32, #tpu.memory_space<vmem>>, vector<32x32xf32>
    %198 = arith.addf %4, %197 : vector<32x32xf32>
    %c0_92 = arith.constant 0 : index
    %c0_93 = arith.constant 0 : index
    %c0_94 = arith.constant 0 : index
    %199 = vector.load %arg9[%c0_92, %c0_93, %c0_94] : memref<2x1x32xf32, #tpu.memory_space<vmem>>, vector<1x1x32xf32>
    %200 = vector.shape_cast %199 : vector<1x1x32xf32> to vector<1x32xf32>
    %201 = vector.broadcast %200 : vector<1x32xf32> to vector<32x32xf32>
    %202 = arith.addf %198, %201 : vector<32x32xf32>
    %c0_95 = arith.constant 0 : index
    %c0_96 = arith.constant 0 : index
    %c0_97 = arith.constant 0 : index
    %203 = vector.load %arg10[%c0_95, %c0_96, %c0_97] : memref<2x1x32xf32, #tpu.memory_space<vmem>>, vector<1x1x32xf32>
    %204 = vector.shape_cast %203 : vector<1x1x32xf32> to vector<1x32xf32>
    %c0_98 = arith.constant 0 : index
    %c0_99 = arith.constant 0 : index
    %c0_100 = arith.constant 0 : index
    %205 = vector.load %arg11[%c0_98, %c0_99, %c0_100] : memref<2x1x32xf32, #tpu.memory_space<vmem>>, vector<1x1x32xf32>
    %206 = vector.shape_cast %205 : vector<1x1x32xf32> to vector<1x32xf32>
    %cst_101 = arith.constant dense<0.000000e+00> : vector<32xf32>
    %207 = vector.multi_reduction <add>, %202, %cst_101 [1] : vector<32x32xf32> to vector<32xf32>
    %208 = vector.shape_cast %207 : vector<32xf32> to vector<32x1xf32>
    %cst_102 = arith.constant 3.200000e+01 : f32
    %209 = vector.broadcast %cst_102 : f32 to vector<32x1xf32>
    %210 = arith.divf %208, %209 : vector<32x1xf32>
    %211 = vector.broadcast %210 : vector<32x1xf32> to vector<32x32xf32>
    %212 = arith.subf %202, %211 : vector<32x32xf32>
    %213 = vector.broadcast %210 : vector<32x1xf32> to vector<32x32xf32>
    %214 = arith.subf %202, %213 : vector<32x32xf32>
    %215 = arith.mulf %212, %214 : vector<32x32xf32>
    %cst_103 = arith.constant dense<0.000000e+00> : vector<32xf32>
    %216 = vector.multi_reduction <add>, %215, %cst_103 [1] : vector<32x32xf32> to vector<32xf32>
    %217 = vector.shape_cast %216 : vector<32xf32> to vector<32x1xf32>
    %cst_104 = arith.constant 3.200000e+01 : f32
    %218 = vector.broadcast %cst_104 : f32 to vector<32x1xf32>
    %219 = arith.divf %217, %218 : vector<32x1xf32>
    %220 = vector.broadcast %210 : vector<32x1xf32> to vector<32x32xf32>
    %221 = arith.subf %202, %220 : vector<32x32xf32>
    %cst_105 = arith.constant 9.99999997E-7 : f32
    %222 = vector.broadcast %cst_105 : f32 to vector<32x1xf32>
    %223 = arith.addf %219, %222 : vector<32x1xf32>
    %224 = math.rsqrt %223 : vector<32x1xf32>
    %225 = vector.broadcast %224 : vector<32x1xf32> to vector<32x32xf32>
    %226 = arith.mulf %221, %225 : vector<32x32xf32>
    %227 = vector.broadcast %204 : vector<1x32xf32> to vector<32x32xf32>
    %228 = arith.mulf %226, %227 : vector<32x32xf32>
    %229 = vector.broadcast %206 : vector<1x32xf32> to vector<32x32xf32>
    %230 = arith.addf %228, %229 : vector<32x32xf32>
    %c0_106 = arith.constant 0 : index
    %c0_107 = arith.constant 0 : index
    %c0_108 = arith.constant 0 : index
    %231 = vector.load %arg12[%c0_106, %c0_107, %c0_108] : memref<2x32x64xf32, #tpu.memory_space<vmem>>, vector<1x32x64xf32>
    %232 = vector.shape_cast %231 : vector<1x32x64xf32> to vector<32x64xf32>
    %cst_109 = arith.constant dense<0.000000e+00> : vector<32x64xf32>
    %233 = tpu.matmul %230, %232, %cst_109 {dimension_numbers = #tpu.dot_dimension_numbers<[1], [0], [0], [1], [0, 0, 1, 1], [], []>} : vector<32x32xf32>, vector<32x64xf32>, vector<32x64xf32> -> vector<32x64xf32>
    %c0_110 = arith.constant 0 : index
    %c0_111 = arith.constant 0 : index
    %c0_112 = arith.constant 0 : index
    %234 = vector.load %arg13[%c0_110, %c0_111, %c0_112] : memref<2x1x64xf32, #tpu.memory_space<vmem>>, vector<1x1x64xf32>
    %235 = vector.shape_cast %234 : vector<1x1x64xf32> to vector<1x64xf32>
    %236 = vector.broadcast %235 : vector<1x64xf32> to vector<32x64xf32>
    %237 = arith.addf %233, %236 : vector<32x64xf32>
    %cst_113 = arith.constant 5.000000e-01 : f32
    %238 = vector.broadcast %cst_113 : f32 to vector<32x64xf32>
    %239 = arith.mulf %238, %237 : vector<32x64xf32>
    %cst_114 = arith.constant 4.471500e-02 : f32
    %240 = vector.broadcast %cst_114 : f32 to vector<32x64xf32>
    %241 = arith.mulf %240, %237 : vector<32x64xf32>
    %242 = arith.mulf %241, %237 : vector<32x64xf32>
    %243 = arith.mulf %242, %237 : vector<32x64xf32>
    %244 = arith.addf %237, %243 : vector<32x64xf32>
    %cst_115 = arith.constant 0.797884583 : f32
    %245 = vector.broadcast %cst_115 : f32 to vector<32x64xf32>
    %246 = arith.mulf %245, %244 : vector<32x64xf32>
    %247 = math.tanh %246 : vector<32x64xf32>
    %cst_116 = arith.constant 1.000000e+00 : f32
    %248 = vector.broadcast %cst_116 : f32 to vector<32x64xf32>
    %249 = arith.addf %248, %247 : vector<32x64xf32>
    %250 = arith.mulf %239, %249 : vector<32x64xf32>
    %c0_117 = arith.constant 0 : index
    %c0_118 = arith.constant 0 : index
    %c0_119 = arith.constant 0 : index
    %251 = vector.load %arg14[%c0_117, %c0_118, %c0_119] : memref<2x64x32xf32, #tpu.memory_space<vmem>>, vector<1x64x32xf32>
    %252 = vector.shape_cast %251 : vector<1x64x32xf32> to vector<64x32xf32>
    %cst_120 = arith.constant dense<0.000000e+00> : vector<32x32xf32>
    %253 = tpu.matmul %250, %252, %cst_120 {dimension_numbers = #tpu.dot_dimension_numbers<[1], [0], [0], [1], [0, 0, 1, 1], [], []>} : vector<32x64xf32>, vector<64x32xf32>, vector<32x32xf32> -> vector<32x32xf32>
    %c0_121 = arith.constant 0 : index
    %c0_122 = arith.constant 0 : index
    %c0_123 = arith.constant 0 : index
    %254 = vector.load %arg15[%c0_121, %c0_122, %c0_123] : memref<2x1x32xf32, #tpu.memory_space<vmem>>, vector<1x1x32xf32>
    %255 = vector.shape_cast %254 : vector<1x1x32xf32> to vector<1x32xf32>
    %256 = vector.broadcast %255 : vector<1x32xf32> to vector<32x32xf32>
    %257 = arith.addf %253, %256 : vector<32x32xf32>
    %258 = arith.addf %202, %257 : vector<32x32xf32>
    %c1 = arith.constant 1 : index
    %c0_124 = arith.constant 0 : index
    %c0_125 = arith.constant 0 : index
    %259 = vector.load %arg4[%c1, %c0_124, %c0_125] : memref<2x1x32xf32, #tpu.memory_space<vmem>>, vector<1x1x32xf32>
    %260 = vector.shape_cast %259 : vector<1x1x32xf32> to vector<1x32xf32>
    %c1_126 = arith.constant 1 : index
    %c0_127 = arith.constant 0 : index
    %c0_128 = arith.constant 0 : index
    %261 = vector.load %arg5[%c1_126, %c0_127, %c0_128] : memref<2x1x32xf32, #tpu.memory_space<vmem>>, vector<1x1x32xf32>
    %262 = vector.shape_cast %261 : vector<1x1x32xf32> to vector<1x32xf32>
    %cst_129 = arith.constant dense<0.000000e+00> : vector<32xf32>
    %263 = vector.multi_reduction <add>, %258, %cst_129 [1] : vector<32x32xf32> to vector<32xf32>
    %264 = vector.shape_cast %263 : vector<32xf32> to vector<32x1xf32>
    %cst_130 = arith.constant 3.200000e+01 : f32
    %265 = vector.broadcast %cst_130 : f32 to vector<32x1xf32>
    %266 = arith.divf %264, %265 : vector<32x1xf32>
    %267 = vector.broadcast %266 : vector<32x1xf32> to vector<32x32xf32>
    %268 = arith.subf %258, %267 : vector<32x32xf32>
    %269 = vector.broadcast %266 : vector<32x1xf32> to vector<32x32xf32>
    %270 = arith.subf %258, %269 : vector<32x32xf32>
    %271 = arith.mulf %268, %270 : vector<32x32xf32>
    %cst_131 = arith.constant dense<0.000000e+00> : vector<32xf32>
    %272 = vector.multi_reduction <add>, %271, %cst_131 [1] : vector<32x32xf32> to vector<32xf32>
    %273 = vector.shape_cast %272 : vector<32xf32> to vector<32x1xf32>
    %cst_132 = arith.constant 3.200000e+01 : f32
    %274 = vector.broadcast %cst_132 : f32 to vector<32x1xf32>
    %275 = arith.divf %273, %274 : vector<32x1xf32>
    %276 = vector.broadcast %266 : vector<32x1xf32> to vector<32x32xf32>
    %277 = arith.subf %258, %276 : vector<32x32xf32>
    %cst_133 = arith.constant 9.99999997E-7 : f32
    %278 = vector.broadcast %cst_133 : f32 to vector<32x1xf32>
    %279 = arith.addf %275, %278 : vector<32x1xf32>
    %280 = math.rsqrt %279 : vector<32x1xf32>
    %281 = vector.broadcast %280 : vector<32x1xf32> to vector<32x32xf32>
    %282 = arith.mulf %277, %281 : vector<32x32xf32>
    %283 = vector.broadcast %260 : vector<1x32xf32> to vector<32x32xf32>
    %284 = arith.mulf %282, %283 : vector<32x32xf32>
    %285 = vector.broadcast %262 : vector<1x32xf32> to vector<32x32xf32>
    %286 = arith.addf %284, %285 : vector<32x32xf32>
    %c1_134 = arith.constant 1 : index
    %c0_135 = arith.constant 0 : index
    %c0_136 = arith.constant 0 : index
    %287 = vector.load %arg6[%c1_134, %c0_135, %c0_136] : memref<2x96x32xf32, #tpu.memory_space<vmem>>, vector<1x96x32xf32>
    %288 = vector.shape_cast %287 : vector<1x96x32xf32> to vector<96x32xf32>
    %c1_137 = arith.constant 1 : index
    %c0_138 = arith.constant 0 : index
    %c0_139 = arith.constant 0 : index
    %289 = vector.load %arg7[%c1_137, %c0_138, %c0_139] : memref<2x96x1xf32, #tpu.memory_space<vmem>>, vector<1x96x1xf32>
    %290 = vector.shape_cast %289 : vector<1x96x1xf32> to vector<96x1xf32>
    %c1_140 = arith.constant 1 : index
    %c0_141 = arith.constant 0 : index
    %c0_142 = arith.constant 0 : index
    %291 = vector.load %arg8[%c1_140, %c0_141, %c0_142] : memref<2x32x32xf32, #tpu.memory_space<vmem>>, vector<1x32x32xf32>
    %292 = vector.shape_cast %291 : vector<1x32x32xf32> to vector<32x32xf32>
    %293 = vector.extract_strided_slice %286 {offsets = [0, 0], sizes = [16, 32], strides = [1, 1]} : vector<32x32xf32> to vector<16x32xf32>
    %cst_143 = arith.constant dense<0.000000e+00> : vector<96x16xf32>
    %294 = tpu.matmul %288, %293, %cst_143 {dimension_numbers = #tpu.dot_dimension_numbers<[1], [1], [0], [0], [0, 0, 1, 0], [], []>} : vector<96x32xf32>, vector<16x32xf32>, vector<96x16xf32> -> vector<96x16xf32>
    %295 = vector.broadcast %290 : vector<96x1xf32> to vector<96x16xf32>
    %296 = arith.addf %294, %295 : vector<96x16xf32>
    %297 = vector.extract_strided_slice %296 {offsets = [0, 0], sizes = [8, 16], strides = [1, 1]} : vector<96x16xf32> to vector<8x16xf32>
    %298 = vector.extract_strided_slice %296 {offsets = [32, 0], sizes = [8, 16], strides = [1, 1]} : vector<96x16xf32> to vector<8x16xf32>
    %299 = vector.extract_strided_slice %296 {offsets = [64, 0], sizes = [8, 16], strides = [1, 1]} : vector<96x16xf32> to vector<8x16xf32>
    %cst_144 = arith.constant dense<0.000000e+00> : vector<16x16xf32>
    %300 = tpu.matmul %297, %298, %cst_144 {dimension_numbers = #tpu.dot_dimension_numbers<[0], [0], [1], [1], [0, 1, 1, 1], [], []>} : vector<8x16xf32>, vector<8x16xf32>, vector<16x16xf32> -> vector<16x16xf32>
    %cst_145 = arith.constant 0.353553385 : f32
    %301 = vector.broadcast %cst_145 : f32 to vector<16x16xf32>
    %302 = arith.mulf %300, %301 : vector<16x16xf32>
    %cst_146 = arith.constant dense<0xFF800000> : vector<16xf32>
    %303 = vector.multi_reduction <maximumf>, %302, %cst_146 [1] : vector<16x16xf32> to vector<16xf32>
    %304 = vector.shape_cast %303 : vector<16xf32> to vector<16x1xf32>
    %305 = vector.broadcast %304 : vector<16x1xf32> to vector<16x16xf32>
    %306 = arith.subf %302, %305 : vector<16x16xf32>
    %307 = math.exp %306 : vector<16x16xf32>
    %cst_147 = arith.constant dense<0.000000e+00> : vector<16xf32>
    %308 = vector.multi_reduction <add>, %307, %cst_147 [1] : vector<16x16xf32> to vector<16xf32>
    %309 = vector.shape_cast %308 : vector<16xf32> to vector<16x1xf32>
    %310 = tpu.reciprocal %309 {approx = true} : vector<16x1xf32> -> vector<16x1xf32>
    %311 = vector.broadcast %310 : vector<16x1xf32> to vector<16x16xf32>
    %312 = arith.mulf %307, %311 : vector<16x16xf32>
    %cst_148 = arith.constant dense<0.000000e+00> : vector<8x16xf32>
    %313 = tpu.matmul %299, %312, %cst_148 {dimension_numbers = #tpu.dot_dimension_numbers<[1], [1], [0], [0], [0, 0, 1, 0], [], []>} : vector<8x16xf32>, vector<16x16xf32>, vector<8x16xf32> -> vector<8x16xf32>
    %c0_149 = arith.constant 0 : index
    %c0_150 = arith.constant 0 : index
    %314 = vector.load %arg22[%c0_149, %c0_150] : memref<32x16xf32, #tpu.memory_space<vmem>>, vector<8x16xf32>
    tpu.vector_store %arg22[%c0_149, %c0_150], %313 {strides = array<i32>} : memref<32x16xf32, #tpu.memory_space<vmem>>, vector<8x16xf32>,
    %315 = vector.extract_strided_slice %296 {offsets = [8, 0], sizes = [8, 16], strides = [1, 1]} : vector<96x16xf32> to vector<8x16xf32>
    %316 = vector.extract_strided_slice %296 {offsets = [40, 0], sizes = [8, 16], strides = [1, 1]} : vector<96x16xf32> to vector<8x16xf32>
    %317 = vector.extract_strided_slice %296 {offsets = [72, 0], sizes = [8, 16], strides = [1, 1]} : vector<96x16xf32> to vector<8x16xf32>
    %cst_151 = arith.constant dense<0.000000e+00> : vector<16x16xf32>
    %318 = tpu.matmul %315, %316, %cst_151 {dimension_numbers = #tpu.dot_dimension_numbers<[0], [0], [1], [1], [0, 1, 1, 1], [], []>} : vector<8x16xf32>, vector<8x16xf32>, vector<16x16xf32> -> vector<16x16xf32>
    %cst_152 = arith.constant 0.353553385 : f32
    %319 = vector.broadcast %cst_152 : f32 to vector<16x16xf32>
    %320 = arith.mulf %318, %319 : vector<16x16xf32>
    %cst_153 = arith.constant dense<0xFF800000> : vector<16xf32>
    %321 = vector.multi_reduction <maximumf>, %320, %cst_153 [1] : vector<16x16xf32> to vector<16xf32>
    %322 = vector.shape_cast %321 : vector<16xf32> to vector<16x1xf32>
    %323 = vector.broadcast %322 : vector<16x1xf32> to vector<16x16xf32>
    %324 = arith.subf %320, %323 : vector<16x16xf32>
    %325 = math.exp %324 : vector<16x16xf32>
    %cst_154 = arith.constant dense<0.000000e+00> : vector<16xf32>
    %326 = vector.multi_reduction <add>, %325, %cst_154 [1] : vector<16x16xf32> to vector<16xf32>
    %327 = vector.shape_cast %326 : vector<16xf32> to vector<16x1xf32>
    %328 = tpu.reciprocal %327 {approx = true} : vector<16x1xf32> -> vector<16x1xf32>
    %329 = vector.broadcast %328 : vector<16x1xf32> to vector<16x16xf32>
    %330 = arith.mulf %325, %329 : vector<16x16xf32>
    %cst_155 = arith.constant dense<0.000000e+00> : vector<8x16xf32>
    %331 = tpu.matmul %317, %330, %cst_155 {dimension_numbers = #tpu.dot_dimension_numbers<[1], [1], [0], [0], [0, 0, 1, 0], [], []>} : vector<8x16xf32>, vector<16x16xf32>, vector<8x16xf32> -> vector<8x16xf32>
    %c8_156 = arith.constant 8 : index
    %c0_157 = arith.constant 0 : index
    %332 = vector.load %arg22[%c8_156, %c0_157] : memref<32x16xf32, #tpu.memory_space<vmem>>, vector<8x16xf32>
    tpu.vector_store %arg22[%c8_156, %c0_157], %331 {strides = array<i32>} : memref<32x16xf32, #tpu.memory_space<vmem>>, vector<8x16xf32>,
    %333 = vector.extract_strided_slice %296 {offsets = [16, 0], sizes = [8, 16], strides = [1, 1]} : vector<96x16xf32> to vector<8x16xf32>
    %334 = vector.extract_strided_slice %296 {offsets = [48, 0], sizes = [8, 16], strides = [1, 1]} : vector<96x16xf32> to vector<8x16xf32>
    %335 = vector.extract_strided_slice %296 {offsets = [80, 0], sizes = [8, 16], strides = [1, 1]} : vector<96x16xf32> to vector<8x16xf32>
    %cst_158 = arith.constant dense<0.000000e+00> : vector<16x16xf32>
    %336 = tpu.matmul %333, %334, %cst_158 {dimension_numbers = #tpu.dot_dimension_numbers<[0], [0], [1], [1], [0, 1, 1, 1], [], []>} : vector<8x16xf32>, vector<8x16xf32>, vector<16x16xf32> -> vector<16x16xf32>
    %cst_159 = arith.constant 0.353553385 : f32
    %337 = vector.broadcast %cst_159 : f32 to vector<16x16xf32>
    %338 = arith.mulf %336, %337 : vector<16x16xf32>
    %cst_160 = arith.constant dense<0xFF800000> : vector<16xf32>
    %339 = vector.multi_reduction <maximumf>, %338, %cst_160 [1] : vector<16x16xf32> to vector<16xf32>
    %340 = vector.shape_cast %339 : vector<16xf32> to vector<16x1xf32>
    %341 = vector.broadcast %340 : vector<16x1xf32> to vector<16x16xf32>
    %342 = arith.subf %338, %341 : vector<16x16xf32>
    %343 = math.exp %342 : vector<16x16xf32>
    %cst_161 = arith.constant dense<0.000000e+00> : vector<16xf32>
    %344 = vector.multi_reduction <add>, %343, %cst_161 [1] : vector<16x16xf32> to vector<16xf32>
    %345 = vector.shape_cast %344 : vector<16xf32> to vector<16x1xf32>
    %346 = tpu.reciprocal %345 {approx = true} : vector<16x1xf32> -> vector<16x1xf32>
    %347 = vector.broadcast %346 : vector<16x1xf32> to vector<16x16xf32>
    %348 = arith.mulf %343, %347 : vector<16x16xf32>
    %cst_162 = arith.constant dense<0.000000e+00> : vector<8x16xf32>
    %349 = tpu.matmul %335, %348, %cst_162 {dimension_numbers = #tpu.dot_dimension_numbers<[1], [1], [0], [0], [0, 0, 1, 0], [], []>} : vector<8x16xf32>, vector<16x16xf32>, vector<8x16xf32> -> vector<8x16xf32>
    %c16_163 = arith.constant 16 : index
    %c0_164 = arith.constant 0 : index
    %350 = vector.load %arg22[%c16_163, %c0_164] : memref<32x16xf32, #tpu.memory_space<vmem>>, vector<8x16xf32>
    tpu.vector_store %arg22[%c16_163, %c0_164], %349 {strides = array<i32>} : memref<32x16xf32, #tpu.memory_space<vmem>>, vector<8x16xf32>,
    %351 = vector.extract_strided_slice %296 {offsets = [24, 0], sizes = [8, 16], strides = [1, 1]} : vector<96x16xf32> to vector<8x16xf32>
    %352 = vector.extract_strided_slice %296 {offsets = [56, 0], sizes = [8, 16], strides = [1, 1]} : vector<96x16xf32> to vector<8x16xf32>
    %353 = vector.extract_strided_slice %296 {offsets = [88, 0], sizes = [8, 16], strides = [1, 1]} : vector<96x16xf32> to vector<8x16xf32>
    %cst_165 = arith.constant dense<0.000000e+00> : vector<16x16xf32>
    %354 = tpu.matmul %351, %352, %cst_165 {dimension_numbers = #tpu.dot_dimension_numbers<[0], [0], [1], [1], [0, 1, 1, 1], [], []>} : vector<8x16xf32>, vector<8x16xf32>, vector<16x16xf32> -> vector<16x16xf32>
    %cst_166 = arith.constant 0.353553385 : f32
    %355 = vector.broadcast %cst_166 : f32 to vector<16x16xf32>
    %356 = arith.mulf %354, %355 : vector<16x16xf32>
    %cst_167 = arith.constant dense<0xFF800000> : vector<16xf32>
    %357 = vector.multi_reduction <maximumf>, %356, %cst_167 [1] : vector<16x16xf32> to vector<16xf32>
    %358 = vector.shape_cast %357 : vector<16xf32> to vector<16x1xf32>
    %359 = vector.broadcast %358 : vector<16x1xf32> to vector<16x16xf32>
    %360 = arith.subf %356, %359 : vector<16x16xf32>
    %361 = math.exp %360 : vector<16x16xf32>
    %cst_168 = arith.constant dense<0.000000e+00> : vector<16xf32>
    %362 = vector.multi_reduction <add>, %361, %cst_168 [1] : vector<16x16xf32> to vector<16xf32>
    %363 = vector.shape_cast %362 : vector<16xf32> to vector<16x1xf32>
    %364 = tpu.reciprocal %363 {approx = true} : vector<16x1xf32> -> vector<16x1xf32>
    %365 = vector.broadcast %364 : vector<16x1xf32> to vector<16x16xf32>
    %366 = arith.mulf %361, %365 : vector<16x16xf32>
    %cst_169 = arith.constant dense<0.000000e+00> : vector<8x16xf32>
    %367 = tpu.matmul %353, %366, %cst_169 {dimension_numbers = #tpu.dot_dimension_numbers<[1], [1], [0], [0], [0, 0, 1, 0], [], []>} : vector<8x16xf32>, vector<16x16xf32>, vector<8x16xf32> -> vector<8x16xf32>
    %c24_170 = arith.constant 24 : index
    %c0_171 = arith.constant 0 : index
    %368 = vector.load %arg22[%c24_170, %c0_171] : memref<32x16xf32, #tpu.memory_space<vmem>>, vector<8x16xf32>
    tpu.vector_store %arg22[%c24_170, %c0_171], %367 {strides = array<i32>} : memref<32x16xf32, #tpu.memory_space<vmem>>, vector<8x16xf32>,
    %c0_172 = arith.constant 0 : index
    %c0_173 = arith.constant 0 : index
    %369 = vector.load %arg22[%c0_172, %c0_173] : memref<32x16xf32, #tpu.memory_space<vmem>>, vector<32x16xf32>
    %cst_174 = arith.constant dense<0.000000e+00> : vector<16x32xf32>
    %370 = tpu.matmul %369, %292, %cst_174 {dimension_numbers = #tpu.dot_dimension_numbers<[0], [0], [1], [1], [0, 1, 1, 1], [], []>} : vector<32x16xf32>, vector<32x32xf32>, vector<16x32xf32> -> vector<16x32xf32>
    %c0_175 = arith.constant 0 : index
    %c0_176 = arith.constant 0 : index
    %371 = vector.load %arg23[%c0_175, %c0_176] : memref<32x32xf32, #tpu.memory_space<vmem>>, vector<16x32xf32>
    tpu.vector_store %arg23[%c0_175, %c0_176], %370 {strides = array<i32>} : memref<32x32xf32, #tpu.memory_space<vmem>>, vector<16x32xf32>,
    %372 = vector.extract_strided_slice %286 {offsets = [16, 0], sizes = [16, 32], strides = [1, 1]} : vector<32x32xf32> to vector<16x32xf32>
    %cst_177 = arith.constant dense<0.000000e+00> : vector<96x16xf32>
    %373 = tpu.matmul %288, %372, %cst_177 {dimension_numbers = #tpu.dot_dimension_numbers<[1], [1], [0], [0], [0, 0, 1, 0], [], []>} : vector<96x32xf32>, vector<16x32xf32>, vector<96x16xf32> -> vector<96x16xf32>
    %374 = vector.broadcast %290 : vector<96x1xf32> to vector<96x16xf32>
    %375 = arith.addf %373, %374 : vector<96x16xf32>
    %376 = vector.extract_strided_slice %375 {offsets = [0, 0], sizes = [8, 16], strides = [1, 1]} : vector<96x16xf32> to vector<8x16xf32>
    %377 = vector.extract_strided_slice %375 {offsets = [32, 0], sizes = [8, 16], strides = [1, 1]} : vector<96x16xf32> to vector<8x16xf32>
    %378 = vector.extract_strided_slice %375 {offsets = [64, 0], sizes = [8, 16], strides = [1, 1]} : vector<96x16xf32> to vector<8x16xf32>
    %cst_178 = arith.constant dense<0.000000e+00> : vector<16x16xf32>
    %379 = tpu.matmul %376, %377, %cst_178 {dimension_numbers = #tpu.dot_dimension_numbers<[0], [0], [1], [1], [0, 1, 1, 1], [], []>} : vector<8x16xf32>, vector<8x16xf32>, vector<16x16xf32> -> vector<16x16xf32>
    %cst_179 = arith.constant 0.353553385 : f32
    %380 = vector.broadcast %cst_179 : f32 to vector<16x16xf32>
    %381 = arith.mulf %379, %380 : vector<16x16xf32>
    %cst_180 = arith.constant dense<0xFF800000> : vector<16xf32>
    %382 = vector.multi_reduction <maximumf>, %381, %cst_180 [1] : vector<16x16xf32> to vector<16xf32>
    %383 = vector.shape_cast %382 : vector<16xf32> to vector<16x1xf32>
    %384 = vector.broadcast %383 : vector<16x1xf32> to vector<16x16xf32>
    %385 = arith.subf %381, %384 : vector<16x16xf32>
    %386 = math.exp %385 : vector<16x16xf32>
    %cst_181 = arith.constant dense<0.000000e+00> : vector<16xf32>
    %387 = vector.multi_reduction <add>, %386, %cst_181 [1] : vector<16x16xf32> to vector<16xf32>
    %388 = vector.shape_cast %387 : vector<16xf32> to vector<16x1xf32>
    %389 = tpu.reciprocal %388 {approx = true} : vector<16x1xf32> -> vector<16x1xf32>
    %390 = vector.broadcast %389 : vector<16x1xf32> to vector<16x16xf32>
    %391 = arith.mulf %386, %390 : vector<16x16xf32>
    %cst_182 = arith.constant dense<0.000000e+00> : vector<8x16xf32>
    %392 = tpu.matmul %378, %391, %cst_182 {dimension_numbers = #tpu.dot_dimension_numbers<[1], [1], [0], [0], [0, 0, 1, 0], [], []>} : vector<8x16xf32>, vector<16x16xf32>, vector<8x16xf32> -> vector<8x16xf32>
    %c0_183 = arith.constant 0 : index
    %c0_184 = arith.constant 0 : index
    %393 = vector.load %arg22[%c0_183, %c0_184] : memref<32x16xf32, #tpu.memory_space<vmem>>, vector<8x16xf32>
    tpu.vector_store %arg22[%c0_183, %c0_184], %392 {strides = array<i32>} : memref<32x16xf32, #tpu.memory_space<vmem>>, vector<8x16xf32>,
    %394 = vector.extract_strided_slice %375 {offsets = [8, 0], sizes = [8, 16], strides = [1, 1]} : vector<96x16xf32> to vector<8x16xf32>
    %395 = vector.extract_strided_slice %375 {offsets = [40, 0], sizes = [8, 16], strides = [1, 1]} : vector<96x16xf32> to vector<8x16xf32>
    %396 = vector.extract_strided_slice %375 {offsets = [72, 0], sizes = [8, 16], strides = [1, 1]} : vector<96x16xf32> to vector<8x16xf32>
    %cst_185 = arith.constant dense<0.000000e+00> : vector<16x16xf32>
    %397 = tpu.matmul %394, %395, %cst_185 {dimension_numbers = #tpu.dot_dimension_numbers<[0], [0], [1], [1], [0, 1, 1, 1], [], []>} : vector<8x16xf32>, vector<8x16xf32>, vector<16x16xf32> -> vector<16x16xf32>
    %cst_186 = arith.constant 0.353553385 : f32
    %398 = vector.broadcast %cst_186 : f32 to vector<16x16xf32>
    %399 = arith.mulf %397, %398 : vector<16x16xf32>
    %cst_187 = arith.constant dense<0xFF800000> : vector<16xf32>
    %400 = vector.multi_reduction <maximumf>, %399, %cst_187 [1] : vector<16x16xf32> to vector<16xf32>
    %401 = vector.shape_cast %400 : vector<16xf32> to vector<16x1xf32>
    %402 = vector.broadcast %401 : vector<16x1xf32> to vector<16x16xf32>
    %403 = arith.subf %399, %402 : vector<16x16xf32>
    %404 = math.exp %403 : vector<16x16xf32>
    %cst_188 = arith.constant dense<0.000000e+00> : vector<16xf32>
    %405 = vector.multi_reduction <add>, %404, %cst_188 [1] : vector<16x16xf32> to vector<16xf32>
    %406 = vector.shape_cast %405 : vector<16xf32> to vector<16x1xf32>
    %407 = tpu.reciprocal %406 {approx = true} : vector<16x1xf32> -> vector<16x1xf32>
    %408 = vector.broadcast %407 : vector<16x1xf32> to vector<16x16xf32>
    %409 = arith.mulf %404, %408 : vector<16x16xf32>
    %cst_189 = arith.constant dense<0.000000e+00> : vector<8x16xf32>
    %410 = tpu.matmul %396, %409, %cst_189 {dimension_numbers = #tpu.dot_dimension_numbers<[1], [1], [0], [0], [0, 0, 1, 0], [], []>} : vector<8x16xf32>, vector<16x16xf32>, vector<8x16xf32> -> vector<8x16xf32>
    %c8_190 = arith.constant 8 : index
    %c0_191 = arith.constant 0 : index
    %411 = vector.load %arg22[%c8_190, %c0_191] : memref<32x16xf32, #tpu.memory_space<vmem>>, vector<8x16xf32>
    tpu.vector_store %arg22[%c8_190, %c0_191], %410 {strides = array<i32>} : memref<32x16xf32, #tpu.memory_space<vmem>>, vector<8x16xf32>,
    %412 = vector.extract_strided_slice %375 {offsets = [16, 0], sizes = [8, 16], strides = [1, 1]} : vector<96x16xf32> to vector<8x16xf32>
    %413 = vector.extract_strided_slice %375 {offsets = [48, 0], sizes = [8, 16], strides = [1, 1]} : vector<96x16xf32> to vector<8x16xf32>
    %414 = vector.extract_strided_slice %375 {offsets = [80, 0], sizes = [8, 16], strides = [1, 1]} : vector<96x16xf32> to vector<8x16xf32>
    %cst_192 = arith.constant dense<0.000000e+00> : vector<16x16xf32>
    %415 = tpu.matmul %412, %413, %cst_192 {dimension_numbers = #tpu.dot_dimension_numbers<[0], [0], [1], [1], [0, 1, 1, 1], [], []>} : vector<8x16xf32>, vector<8x16xf32>, vector<16x16xf32> -> vector<16x16xf32>
    %cst_193 = arith.constant 0.353553385 : f32
    %416 = vector.broadcast %cst_193 : f32 to vector<16x16xf32>
    %417 = arith.mulf %415, %416 : vector<16x16xf32>
    %cst_194 = arith.constant dense<0xFF800000> : vector<16xf32>
    %418 = vector.multi_reduction <maximumf>, %417, %cst_194 [1] : vector<16x16xf32> to vector<16xf32>
    %419 = vector.shape_cast %418 : vector<16xf32> to vector<16x1xf32>
    %420 = vector.broadcast %419 : vector<16x1xf32> to vector<16x16xf32>
    %421 = arith.subf %417, %420 : vector<16x16xf32>
    %422 = math.exp %421 : vector<16x16xf32>
    %cst_195 = arith.constant dense<0.000000e+00> : vector<16xf32>
    %423 = vector.multi_reduction <add>, %422, %cst_195 [1] : vector<16x16xf32> to vector<16xf32>
    %424 = vector.shape_cast %423 : vector<16xf32> to vector<16x1xf32>
    %425 = tpu.reciprocal %424 {approx = true} : vector<16x1xf32> -> vector<16x1xf32>
    %426 = vector.broadcast %425 : vector<16x1xf32> to vector<16x16xf32>
    %427 = arith.mulf %422, %426 : vector<16x16xf32>
    %cst_196 = arith.constant dense<0.000000e+00> : vector<8x16xf32>
    %428 = tpu.matmul %414, %427, %cst_196 {dimension_numbers = #tpu.dot_dimension_numbers<[1], [1], [0], [0], [0, 0, 1, 0], [], []>} : vector<8x16xf32>, vector<16x16xf32>, vector<8x16xf32> -> vector<8x16xf32>
    %c16_197 = arith.constant 16 : index
    %c0_198 = arith.constant 0 : index
    %429 = vector.load %arg22[%c16_197, %c0_198] : memref<32x16xf32, #tpu.memory_space<vmem>>, vector<8x16xf32>
    tpu.vector_store %arg22[%c16_197, %c0_198], %428 {strides = array<i32>} : memref<32x16xf32, #tpu.memory_space<vmem>>, vector<8x16xf32>,
    %430 = vector.extract_strided_slice %375 {offsets = [24, 0], sizes = [8, 16], strides = [1, 1]} : vector<96x16xf32> to vector<8x16xf32>
    %431 = vector.extract_strided_slice %375 {offsets = [56, 0], sizes = [8, 16], strides = [1, 1]} : vector<96x16xf32> to vector<8x16xf32>
    %432 = vector.extract_strided_slice %375 {offsets = [88, 0], sizes = [8, 16], strides = [1, 1]} : vector<96x16xf32> to vector<8x16xf32>
    %cst_199 = arith.constant dense<0.000000e+00> : vector<16x16xf32>
    %433 = tpu.matmul %430, %431, %cst_199 {dimension_numbers = #tpu.dot_dimension_numbers<[0], [0], [1], [1], [0, 1, 1, 1], [], []>} : vector<8x16xf32>, vector<8x16xf32>, vector<16x16xf32> -> vector<16x16xf32>
    %cst_200 = arith.constant 0.353553385 : f32
    %434 = vector.broadcast %cst_200 : f32 to vector<16x16xf32>
    %435 = arith.mulf %433, %434 : vector<16x16xf32>
    %cst_201 = arith.constant dense<0xFF800000> : vector<16xf32>
    %436 = vector.multi_reduction <maximumf>, %435, %cst_201 [1] : vector<16x16xf32> to vector<16xf32>
    %437 = vector.shape_cast %436 : vector<16xf32> to vector<16x1xf32>
    %438 = vector.broadcast %437 : vector<16x1xf32> to vector<16x16xf32>
    %439 = arith.subf %435, %438 : vector<16x16xf32>
    %440 = math.exp %439 : vector<16x16xf32>
    %cst_202 = arith.constant dense<0.000000e+00> : vector<16xf32>
    %441 = vector.multi_reduction <add>, %440, %cst_202 [1] : vector<16x16xf32> to vector<16xf32>
    %442 = vector.shape_cast %441 : vector<16xf32> to vector<16x1xf32>
    %443 = tpu.reciprocal %442 {approx = true} : vector<16x1xf32> -> vector<16x1xf32>
    %444 = vector.broadcast %443 : vector<16x1xf32> to vector<16x16xf32>
    %445 = arith.mulf %440, %444 : vector<16x16xf32>
    %cst_203 = arith.constant dense<0.000000e+00> : vector<8x16xf32>
    %446 = tpu.matmul %432, %445, %cst_203 {dimension_numbers = #tpu.dot_dimension_numbers<[1], [1], [0], [0], [0, 0, 1, 0], [], []>} : vector<8x16xf32>, vector<16x16xf32>, vector<8x16xf32> -> vector<8x16xf32>
    %c24_204 = arith.constant 24 : index
    %c0_205 = arith.constant 0 : index
    %447 = vector.load %arg22[%c24_204, %c0_205] : memref<32x16xf32, #tpu.memory_space<vmem>>, vector<8x16xf32>
    tpu.vector_store %arg22[%c24_204, %c0_205], %446 {strides = array<i32>} : memref<32x16xf32, #tpu.memory_space<vmem>>, vector<8x16xf32>,
    %c0_206 = arith.constant 0 : index
    %c0_207 = arith.constant 0 : index
    %448 = vector.load %arg22[%c0_206, %c0_207] : memref<32x16xf32, #tpu.memory_space<vmem>>, vector<32x16xf32>
    %cst_208 = arith.constant dense<0.000000e+00> : vector<16x32xf32>
    %449 = tpu.matmul %448, %292, %cst_208 {dimension_numbers = #tpu.dot_dimension_numbers<[0], [0], [1], [1], [0, 1, 1, 1], [], []>} : vector<32x16xf32>, vector<32x32xf32>, vector<16x32xf32> -> vector<16x32xf32>
    %c16_209 = arith.constant 16 : index
    %c0_210 = arith.constant 0 : index
    %450 = vector.load %arg23[%c16_209, %c0_210] : memref<32x32xf32, #tpu.memory_space<vmem>>, vector<16x32xf32>
    tpu.vector_store %arg23[%c16_209, %c0_210], %449 {strides = array<i32>} : memref<32x32xf32, #tpu.memory_space<vmem>>, vector<16x32xf32>,
    %c0_211 = arith.constant 0 : index
    %c0_212 = arith.constant 0 : index
    %451 = vector.load %arg23[%c0_211, %c0_212] : memref<32x32xf32, #tpu.memory_space<vmem>>, vector<32x32xf32>
    %452 = arith.addf %258, %451 : vector<32x32xf32>
    %c1_213 = arith.constant 1 : index
    %c0_214 = arith.constant 0 : index
    %c0_215 = arith.constant 0 : index
    %453 = vector.load %arg9[%c1_213, %c0_214, %c0_215] : memref<2x1x32xf32, #tpu.memory_space<vmem>>, vector<1x1x32xf32>
    %454 = vector.shape_cast %453 : vector<1x1x32xf32> to vector<1x32xf32>
    %455 = vector.broadcast %454 : vector<1x32xf32> to vector<32x32xf32>
    %456 = arith.addf %452, %455 : vector<32x32xf32>
    %c1_216 = arith.constant 1 : index
    %c0_217 = arith.constant 0 : index
    %c0_218 = arith.constant 0 : index
    %457 = vector.load %arg10[%c1_216, %c0_217, %c0_218] : memref<2x1x32xf32, #tpu.memory_space<vmem>>, vector<1x1x32xf32>
    %458 = vector.shape_cast %457 : vector<1x1x32xf32> to vector<1x32xf32>
    %c1_219 = arith.constant 1 : index
    %c0_220 = arith.constant 0 : index
    %c0_221 = arith.constant 0 : index
    %459 = vector.load %arg11[%c1_219, %c0_220, %c0_221] : memref<2x1x32xf32, #tpu.memory_space<vmem>>, vector<1x1x32xf32>
    %460 = vector.shape_cast %459 : vector<1x1x32xf32> to vector<1x32xf32>
    %cst_222 = arith.constant dense<0.000000e+00> : vector<32xf32>
    %461 = vector.multi_reduction <add>, %456, %cst_222 [1] : vector<32x32xf32> to vector<32xf32>
    %462 = vector.shape_cast %461 : vector<32xf32> to vector<32x1xf32>
    %cst_223 = arith.constant 3.200000e+01 : f32
    %463 = vector.broadcast %cst_223 : f32 to vector<32x1xf32>
    %464 = arith.divf %462, %463 : vector<32x1xf32>
    %465 = vector.broadcast %464 : vector<32x1xf32> to vector<32x32xf32>
    %466 = arith.subf %456, %465 : vector<32x32xf32>
    %467 = vector.broadcast %464 : vector<32x1xf32> to vector<32x32xf32>
    %468 = arith.subf %456, %467 : vector<32x32xf32>
    %469 = arith.mulf %466, %468 : vector<32x32xf32>
    %cst_224 = arith.constant dense<0.000000e+00> : vector<32xf32>
    %470 = vector.multi_reduction <add>, %469, %cst_224 [1] : vector<32x32xf32> to vector<32xf32>
    %471 = vector.shape_cast %470 : vector<32xf32> to vector<32x1xf32>
    %cst_225 = arith.constant 3.200000e+01 : f32
    %472 = vector.broadcast %cst_225 : f32 to vector<32x1xf32>
    %473 = arith.divf %471, %472 : vector<32x1xf32>
    %474 = vector.broadcast %464 : vector<32x1xf32> to vector<32x32xf32>
    %475 = arith.subf %456, %474 : vector<32x32xf32>
    %cst_226 = arith.constant 9.99999997E-7 : f32
    %476 = vector.broadcast %cst_226 : f32 to vector<32x1xf32>
    %477 = arith.addf %473, %476 : vector<32x1xf32>
    %478 = math.rsqrt %477 : vector<32x1xf32>
    %479 = vector.broadcast %478 : vector<32x1xf32> to vector<32x32xf32>
    %480 = arith.mulf %475, %479 : vector<32x32xf32>
    %481 = vector.broadcast %458 : vector<1x32xf32> to vector<32x32xf32>
    %482 = arith.mulf %480, %481 : vector<32x32xf32>
    %483 = vector.broadcast %460 : vector<1x32xf32> to vector<32x32xf32>
    %484 = arith.addf %482, %483 : vector<32x32xf32>
    %c1_227 = arith.constant 1 : index
    %c0_228 = arith.constant 0 : index
    %c0_229 = arith.constant 0 : index
    %485 = vector.load %arg12[%c1_227, %c0_228, %c0_229] : memref<2x32x64xf32, #tpu.memory_space<vmem>>, vector<1x32x64xf32>
    %486 = vector.shape_cast %485 : vector<1x32x64xf32> to vector<32x64xf32>
    %cst_230 = arith.constant dense<0.000000e+00> : vector<32x64xf32>
    %487 = tpu.matmul %484, %486, %cst_230 {dimension_numbers = #tpu.dot_dimension_numbers<[1], [0], [0], [1], [0, 0, 1, 1], [], []>} : vector<32x32xf32>, vector<32x64xf32>, vector<32x64xf32> -> vector<32x64xf32>
    %c1_231 = arith.constant 1 : index
    %c0_232 = arith.constant 0 : index
    %c0_233 = arith.constant 0 : index
    %488 = vector.load %arg13[%c1_231, %c0_232, %c0_233] : memref<2x1x64xf32, #tpu.memory_space<vmem>>, vector<1x1x64xf32>
    %489 = vector.shape_cast %488 : vector<1x1x64xf32> to vector<1x64xf32>
    %490 = vector.broadcast %489 : vector<1x64xf32> to vector<32x64xf32>
    %491 = arith.addf %487, %490 : vector<32x64xf32>
    %cst_234 = arith.constant 5.000000e-01 : f32
    %492 = vector.broadcast %cst_234 : f32 to vector<32x64xf32>
    %493 = arith.mulf %492, %491 : vector<32x64xf32>
    %cst_235 = arith.constant 4.471500e-02 : f32
    %494 = vector.broadcast %cst_235 : f32 to vector<32x64xf32>
    %495 = arith.mulf %494, %491 : vector<32x64xf32>
    %496 = arith.mulf %495, %491 : vector<32x64xf32>
    %497 = arith.mulf %496, %491 : vector<32x64xf32>
    %498 = arith.addf %491, %497 : vector<32x64xf32>
    %cst_236 = arith.constant 0.797884583 : f32
    %499 = vector.broadcast %cst_236 : f32 to vector<32x64xf32>
    %500 = arith.mulf %499, %498 : vector<32x64xf32>
    %501 = math.tanh %500 : vector<32x64xf32>
    %cst_237 = arith.constant 1.000000e+00 : f32
    %502 = vector.broadcast %cst_237 : f32 to vector<32x64xf32>
    %503 = arith.addf %502, %501 : vector<32x64xf32>
    %504 = arith.mulf %493, %503 : vector<32x64xf32>
    %c1_238 = arith.constant 1 : index
    %c0_239 = arith.constant 0 : index
    %c0_240 = arith.constant 0 : index
    %505 = vector.load %arg14[%c1_238, %c0_239, %c0_240] : memref<2x64x32xf32, #tpu.memory_space<vmem>>, vector<1x64x32xf32>
    %506 = vector.shape_cast %505 : vector<1x64x32xf32> to vector<64x32xf32>
    %cst_241 = arith.constant dense<0.000000e+00> : vector<32x32xf32>
    %507 = tpu.matmul %504, %506, %cst_241 {dimension_numbers = #tpu.dot_dimension_numbers<[1], [0], [0], [1], [0, 0, 1, 1], [], []>} : vector<32x64xf32>, vector<64x32xf32>, vector<32x32xf32> -> vector<32x32xf32>
    %c1_242 = arith.constant 1 : index
    %c0_243 = arith.constant 0 : index
    %c0_244 = arith.constant 0 : index
    %508 = vector.load %arg15[%c1_242, %c0_243, %c0_244] : memref<2x1x32xf32, #tpu.memory_space<vmem>>, vector<1x1x32xf32>
    %509 = vector.shape_cast %508 : vector<1x1x32xf32> to vector<1x32xf32>
    %510 = vector.broadcast %509 : vector<1x32xf32> to vector<32x32xf32>
    %511 = arith.addf %507, %510 : vector<32x32xf32>
    %512 = arith.addf %456, %511 : vector<32x32xf32>
    %c0_245 = arith.constant 0 : index
    %c0_246 = arith.constant 0 : index
    %513 = vector.load %arg16[%c0_245, %c0_246] : memref<1x32xf32, #tpu.memory_space<vmem>>, vector<1x32xf32>
    %c0_247 = arith.constant 0 : index
    %c0_248 = arith.constant 0 : index
    %514 = vector.load %arg17[%c0_247, %c0_248] : memref<1x32xf32, #tpu.memory_space<vmem>>, vector<1x32xf32>
    %cst_249 = arith.constant dense<0.000000e+00> : vector<32xf32>
    %515 = vector.multi_reduction <add>, %512, %cst_249 [1] : vector<32x32xf32> to vector<32xf32>
    %516 = vector.shape_cast %515 : vector<32xf32> to vector<32x1xf32>
    %cst_250 = arith.constant 3.200000e+01 : f32
    %517 = vector.broadcast %cst_250 : f32 to vector<32x1xf32>
    %518 = arith.divf %516, %517 : vector<32x1xf32>
    %519 = vector.broadcast %518 : vector<32x1xf32> to vector<32x32xf32>
    %520 = arith.subf %512, %519 : vector<32x32xf32>
    %521 = vector.broadcast %518 : vector<32x1xf32> to vector<32x32xf32>
    %522 = arith.subf %512, %521 : vector<32x32xf32>
    %523 = arith.mulf %520, %522 : vector<32x32xf32>
    %cst_251 = arith.constant dense<0.000000e+00> : vector<32xf32>
    %524 = vector.multi_reduction <add>, %523, %cst_251 [1] : vector<32x32xf32> to vector<32xf32>
    %525 = vector.shape_cast %524 : vector<32xf32> to vector<32x1xf32>
    %cst_252 = arith.constant 3.200000e+01 : f32
    %526 = vector.broadcast %cst_252 : f32 to vector<32x1xf32>
    %527 = arith.divf %525, %526 : vector<32x1xf32>
    %528 = vector.broadcast %518 : vector<32x1xf32> to vector<32x32xf32>
    %529 = arith.subf %512, %528 : vector<32x32xf32>
    %cst_253 = arith.constant 9.99999997E-7 : f32
    %530 = vector.broadcast %cst_253 : f32 to vector<32x1xf32>
    %531 = arith.addf %527, %530 : vector<32x1xf32>
    %532 = math.rsqrt %531 : vector<32x1xf32>
    %533 = vector.broadcast %532 : vector<32x1xf32> to vector<32x32xf32>
    %534 = arith.mulf %529, %533 : vector<32x32xf32>
    %535 = vector.broadcast %513 : vector<1x32xf32> to vector<32x32xf32>
    %536 = arith.mulf %534, %535 : vector<32x32xf32>
    %537 = vector.broadcast %514 : vector<1x32xf32> to vector<32x32xf32>
    %538 = arith.addf %536, %537 : vector<32x32xf32>
    %539 = vector.extract_strided_slice %538 {offsets = [0, 0], sizes = [16, 32], strides = [1, 1]} : vector<32x32xf32> to vector<16x32xf32>
    %c0_254 = arith.constant 0 : index
    %c0_255 = arith.constant 0 : index
    %540 = vector.load %arg18[%c0_254, %c0_255] : memref<8x32xf32, #tpu.memory_space<vmem>>, vector<8x32xf32>
    %cst_256 = arith.constant dense<0.000000e+00> : vector<8x16xf32>
    %541 = tpu.matmul %540, %539, %cst_256 {dimension_numbers = #tpu.dot_dimension_numbers<[1], [1], [0], [0], [0, 0, 1, 0], [], []>} : vector<8x32xf32>, vector<16x32xf32>, vector<8x16xf32> -> vector<8x16xf32>
    %c0_257 = arith.constant 0 : index
    %c0_258 = arith.constant 0 : index
    %542 = vector.load %arg19[%c0_257, %c0_258] : memref<8x1xf32, #tpu.memory_space<vmem>>, vector<8x1xf32>
    %543 = vector.broadcast %542 : vector<8x1xf32> to vector<8x16xf32>
    %544 = arith.addf %541, %543 : vector<8x16xf32>
    %c0_259 = arith.constant 0 : index
    %c0_260 = arith.constant 0 : index
    %545 = vector.load %arg20[%c0_259, %c0_260] : memref<16x256xf32, #tpu.memory_space<vmem>>, vector<16x256xf32>
    %cst_261 = arith.constant dense<0.000000e+00> : vector<8x256xf32>
    %546 = tpu.matmul %544, %545, %cst_261 {dimension_numbers = #tpu.dot_dimension_numbers<[1], [0], [0], [1], [0, 0, 1, 1], [], []>} : vector<8x16xf32>, vector<16x256xf32>, vector<8x256xf32> -> vector<8x256xf32>
    %c0_262 = arith.constant 0 : index
    %c0_263 = arith.constant 0 : index
    %c0_264 = arith.constant 0 : index
    %547 = vector.load %arg21[%c0_262, %c0_263, %c0_264] : memref<2x8x256xf32, #tpu.memory_space<vmem>>, vector<1x8x256xf32>
    %548 = vector.shape_cast %547 : vector<1x8x256xf32> to vector<8x256xf32>
    %549 = vector.shape_cast %546 : vector<8x256xf32> to vector<1x8x256xf32>
    tpu.vector_store %arg21[%c0_262, %c0_263, %c0_264], %549 {strides = array<i32>} : memref<2x8x256xf32, #tpu.memory_space<vmem>>, vector<1x8x256xf32>,
    %550 = vector.extract_strided_slice %538 {offsets = [16, 0], sizes = [16, 32], strides = [1, 1]} : vector<32x32xf32> to vector<16x32xf32>
    %c0_265 = arith.constant 0 : index
    %c0_266 = arith.constant 0 : index
    %551 = vector.load %arg18[%c0_265, %c0_266] : memref<8x32xf32, #tpu.memory_space<vmem>>, vector<8x32xf32>
    %cst_267 = arith.constant dense<0.000000e+00> : vector<8x16xf32>
    %552 = tpu.matmul %551, %550, %cst_267 {dimension_numbers = #tpu.dot_dimension_numbers<[1], [1], [0], [0], [0, 0, 1, 0], [], []>} : vector<8x32xf32>, vector<16x32xf32>, vector<8x16xf32> -> vector<8x16xf32>
    %c0_268 = arith.constant 0 : index
    %c0_269 = arith.constant 0 : index
    %553 = vector.load %arg19[%c0_268, %c0_269] : memref<8x1xf32, #tpu.memory_space<vmem>>, vector<8x1xf32>
    %554 = vector.broadcast %553 : vector<8x1xf32> to vector<8x16xf32>
    %555 = arith.addf %552, %554 : vector<8x16xf32>
    %c0_270 = arith.constant 0 : index
    %c0_271 = arith.constant 0 : index
    %556 = vector.load %arg20[%c0_270, %c0_271] : memref<16x256xf32, #tpu.memory_space<vmem>>, vector<16x256xf32>
    %cst_272 = arith.constant dense<0.000000e+00> : vector<8x256xf32>
    %557 = tpu.matmul %555, %556, %cst_272 {dimension_numbers = #tpu.dot_dimension_numbers<[1], [0], [0], [1], [0, 0, 1, 1], [], []>} : vector<8x16xf32>, vector<16x256xf32>, vector<8x256xf32> -> vector<8x256xf32>
    %c1_273 = arith.constant 1 : index
    %c0_274 = arith.constant 0 : index
    %c0_275 = arith.constant 0 : index
    %558 = vector.load %arg21[%c1_273, %c0_274, %c0_275] : memref<2x8x256xf32, #tpu.memory_space<vmem>>, vector<1x8x256xf32>
    %559 = vector.shape_cast %558 : vector<1x8x256xf32> to vector<8x256xf32>
    %560 = vector.shape_cast %557 : vector<8x256xf32> to vector<1x8x256xf32>
    tpu.vector_store %arg21[%c1_273, %c0_274, %c0_275], %560 {strides = array<i32>} : memref<2x8x256xf32, #tpu.memory_space<vmem>>, vector<1x8x256xf32>,
    return
  }
  func.func @transform_0(%arg0: i32) -> (i32, i32) {
    %c0_i32 = arith.constant 0 : i32
    %c0_i32_0 = arith.constant 0 : i32
    %c0_i32_1 = arith.constant 0 : i32
    return %c0_i32, %c0_i32_0 : i32, i32
  }
  func.func @transform_1(%arg0: i32) -> (i32, i32) {
    %c0_i32 = arith.constant 0 : i32
    %c0_i32_0 = arith.constant 0 : i32
    %c0_i32_1 = arith.constant 0 : i32
    return %c0_i32, %c0_i32_0 : i32, i32
  }
  func.func @transform_2(%arg0: i32) -> (i32, i32) {
    %c0_i32 = arith.constant 0 : i32
    %c0_i32_0 = arith.constant 0 : i32
    %c0_i32_1 = arith.constant 0 : i32
    return %c0_i32, %c0_i32_0 : i32, i32
  }
  func.func @transform_3(%arg0: i32) -> (i32, i32, i32) {
    %c0_i32 = arith.constant 0 : i32
    %c0_i32_0 = arith.constant 0 : i32
    %c0_i32_1 = arith.constant 0 : i32
    %c0_i32_2 = arith.constant 0 : i32
    return %c0_i32, %c0_i32_0, %c0_i32_1 : i32, i32, i32
  }
  func.func @transform_4(%arg0: i32) -> (i32, i32, i32) {
    %c0_i32 = arith.constant 0 : i32
    %c0_i32_0 = arith.constant 0 : i32
    %c0_i32_1 = arith.constant 0 : i32
    %c0_i32_2 = arith.constant 0 : i32
    return %c0_i32, %c0_i32_0, %c0_i32_1 : i32, i32, i32
  }
  func.func @transform_5(%arg0: i32) -> (i32, i32, i32) {
    %c0_i32 = arith.constant 0 : i32
    %c0_i32_0 = arith.constant 0 : i32
    %c0_i32_1 = arith.constant 0 : i32
    %c0_i32_2 = arith.constant 0 : i32
    return %c0_i32, %c0_i32_0, %c0_i32_1 : i32, i32, i32
  }
  func.func @transform_6(%arg0: i32) -> (i32, i32, i32) {
    %c0_i32 = arith.constant 0 : i32
    %c0_i32_0 = arith.constant 0 : i32
    %c0_i32_1 = arith.constant 0 : i32
    %c0_i32_2 = arith.constant 0 : i32
    return %c0_i32, %c0_i32_0, %c0_i32_1 : i32, i32, i32
  }
  func.func @transform_7(%arg0: i32) -> (i32, i32, i32) {
    %c0_i32 = arith.constant 0 : i32
    %c0_i32_0 = arith.constant 0 : i32
    %c0_i32_1 = arith.constant 0 : i32
    %c0_i32_2 = arith.constant 0 : i32
    return %c0_i32, %c0_i32_0, %c0_i32_1 : i32, i32, i32
  }
  func.func @transform_8(%arg0: i32) -> (i32, i32, i32) {
    %c0_i32 = arith.constant 0 : i32
    %c0_i32_0 = arith.constant 0 : i32
    %c0_i32_1 = arith.constant 0 : i32
    %c0_i32_2 = arith.constant 0 : i32
    return %c0_i32, %c0_i32_0, %c0_i32_1 : i32, i32, i32
  }
  func.func @transform_9(%arg0: i32) -> (i32, i32, i32) {
    %c0_i32 = arith.constant 0 : i32
    %c0_i32_0 = arith.constant 0 : i32
    %c0_i32_1 = arith.constant 0 : i32
    %c0_i32_2 = arith.constant 0 : i32
    return %c0_i32, %c0_i32_0, %c0_i32_1 : i32, i32, i32
  }
  func.func @transform_10(%arg0: i32) -> (i32, i32, i32) {
    %c0_i32 = arith.constant 0 : i32
    %c0_i32_0 = arith.constant 0 : i32
    %c0_i32_1 = arith.constant 0 : i32
    %c0_i32_2 = arith.constant 0 : i32
    return %c0_i32, %c0_i32_0, %c0_i32_1 : i32, i32, i32
  }
  func.func @transform_11(%arg0: i32) -> (i32, i32, i32) {
    %c0_i32 = arith.constant 0 : i32
    %c0_i32_0 = arith.constant 0 : i32
    %c0_i32_1 = arith.constant 0 : i32
    %c0_i32_2 = arith.constant 0 : i32
    return %c0_i32, %c0_i32_0, %c0_i32_1 : i32, i32, i32
  }
  func.func @transform_12(%arg0: i32) -> (i32, i32, i32) {
    %c0_i32 = arith.constant 0 : i32
    %c0_i32_0 = arith.constant 0 : i32
    %c0_i32_1 = arith.constant 0 : i32
    %c0_i32_2 = arith.constant 0 : i32
    return %c0_i32, %c0_i32_0, %c0_i32_1 : i32, i32, i32
  }
  func.func @transform_13(%arg0: i32) -> (i32, i32, i32) {
    %c0_i32 = arith.constant 0 : i32
    %c0_i32_0 = arith.constant 0 : i32
    %c0_i32_1 = arith.constant 0 : i32
    %c0_i32_2 = arith.constant 0 : i32
    return %c0_i32, %c0_i32_0, %c0_i32_1 : i32, i32, i32
  }
  func.func @transform_14(%arg0: i32) -> (i32, i32, i32) {
    %c0_i32 = arith.constant 0 : i32
    %c0_i32_0 = arith.constant 0 : i32
    %c0_i32_1 = arith.constant 0 : i32
    %c0_i32_2 = arith.constant 0 : i32
    return %c0_i32, %c0_i32_0, %c0_i32_1 : i32, i32, i32
  }
  func.func @transform_15(%arg0: i32) -> (i32, i32) {
    %c0_i32 = arith.constant 0 : i32
    %c0_i32_0 = arith.constant 0 : i32
    %c0_i32_1 = arith.constant 0 : i32
    return %c0_i32, %c0_i32_0 : i32, i32
  }
  func.func @transform_16(%arg0: i32) -> (i32, i32) {
    %c0_i32 = arith.constant 0 : i32
    %c0_i32_0 = arith.constant 0 : i32
    %c0_i32_1 = arith.constant 0 : i32
    return %c0_i32, %c0_i32_0 : i32, i32
  }
  func.func @transform_17(%arg0: i32) -> (i32, i32) {
    %c0_i32 = arith.constant 0 : i32
    %c0_i32_0 = arith.constant 0 : i32
    %c0_i32_1 = arith.constant 0 : i32
    return %c0_i32, %c0_i32_0 : i32, i32
  }
  func.func @transform_18(%arg0: i32) -> (i32, i32) {
    %c0_i32 = arith.constant 0 : i32
    %c0_i32_0 = arith.constant 0 : i32
    %c0_i32_1 = arith.constant 0 : i32
    return %c0_i32, %c0_i32_0 : i32, i32
  }
  func.func @transform_19(%arg0: i32) -> (i32, i32) {
    %c0_i32 = arith.constant 0 : i32
    %c0_i32_0 = arith.constant 0 : i32
    %c0_i32_1 = arith.constant 0 : i32
    return %c0_i32, %c0_i32_0 : i32, i32
  }
  func.func @transform_20(%arg0: i32) -> (i32, i32, i32) {
    %c0_i32 = arith.constant 0 : i32
    %c0_i32_0 = arith.constant 0 : i32
    %c0_i32_1 = arith.constant 0 : i32
    %c0_i32_2 = arith.constant 0 : i32
    return %c0_i32, %c0_i32_0, %c0_i32_1 : i32, i32, i32
  }
}

</mosaic_0001>

<llo_original>
// kernel: just_vit_forward.1
$region0: #{just_vit_forward.1}
  #allocation0 [shape = 'u32[]', space=smem, size = 0x4, offset = 0x4, fixed_abs, tag = 'smem constant byte address 0x4 - core index']
  #allocation1 [shape = 'u32[144,128]{1,0:T(1,128)}', space=vmem, size = 0x12000, scoped, tag = 'internal scratch']
  #allocation2 [shape = 'f32[32,16]{1,0:T(8,128)}', space=vmem, size = 0x4000, scoped, tag = 'scratch operand']
  #allocation3 [shape = 'f32[32,32]{1,0:T(8,128)}', space=vmem, size = 0x4000, scoped, tag = 'scratch operand']
  %s0 = inlined_call_operand.vmem [shape: f32[32,48], index: 0, kind: input, shape index: {}]
  %s1 = inlined_call_operand.vmem [shape: f32[48,32], index: 1, kind: input, shape index: {}]
  %s2 = inlined_call_operand.vmem [shape: f32[32,32], index: 2, kind: input, shape index: {}]
  %s3 = inlined_call_operand.vmem [shape: f32[2,1,32], index: 3, kind: input, shape index: {}]
  %s4 = inlined_call_operand.vmem [shape: f32[2,1,32], index: 4, kind: input, shape index: {}]
  %s5 = inlined_call_operand.vmem [shape: f32[2,96,32], index: 5, kind: input, shape index: {}]
  %s6 = inlined_call_operand.vmem [shape: f32[2,96,1], index: 6, kind: input, shape index: {}]
  %s7 = inlined_call_operand.vmem [shape: f32[2,32,32], index: 7, kind: input, shape index: {}]
  %s8 = inlined_call_operand.vmem [shape: f32[2,1,32], index: 8, kind: input, shape index: {}]
  %s9 = inlined_call_operand.vmem [shape: f32[2,1,32], index: 9, kind: input, shape index: {}]
  %s10 = inlined_call_operand.vmem [shape: f32[2,1,32], index: 10, kind: input, shape index: {}]
  %s11 = inlined_call_operand.vmem [shape: f32[2,32,64], index: 11, kind: input, shape index: {}]
  %s12 = inlined_call_operand.vmem [shape: f32[2,1,64], index: 12, kind: input, shape index: {}]
  %s13 = inlined_call_operand.vmem [shape: f32[2,64,32], index: 13, kind: input, shape index: {}]
  %s14 = inlined_call_operand.vmem [shape: f32[2,1,32], index: 14, kind: input, shape index: {}]
  %s15 = inlined_call_operand.vmem [shape: f32[1,32], index: 15, kind: input, shape index: {}]
  %s16 = inlined_call_operand.vmem [shape: f32[1,32], index: 16, kind: input, shape index: {}]
  %s17 = inlined_call_operand.vmem [shape: f32[8,32], index: 17, kind: input, shape index: {}]
  %s18 = inlined_call_operand.vmem [shape: f32[8,1], index: 18, kind: input, shape index: {}]
  %s19 = inlined_call_operand.vmem [shape: f32[16,256], index: 19, kind: input, shape index: {}]
  %s20 = inlined_call_operand.vmem [shape: f32[2,8,256], index: 20, kind: output, shape index: {}]
  %s21 = sld [smem:[#allocation0]]
  $region90: #{just_vit_forward.1} parent=0
    _
  %s23 = ssub.s32 1, %s21
  %s24 = scalar_select 0, %s23, %s21
  // Predicated region
  $region2: #{just_vit_forward.1} parent=0 // pred_check
    _
  $region3: #{just_vit_forward.1} parent=0 // pred_check_branch
    %26 = sbr.rel (0) target = $region5
  $region4: #{just_vit_forward.1} parent=0 // pred_region
    _
  $region5: #{just_vit_forward.1} parent=0 // pred_fallthru
    _
  // Predicated region
  $region6: #{just_vit_forward.1} parent=0 // pred_check
    _
  $region7: #{just_vit_forward.1} parent=0 // pred_check_branch
    %28 = sbr.rel (0) target = $region9
  $region8: #{just_vit_forward.1} parent=0 // pred_region
    _
  $region9: #{just_vit_forward.1} parent=0 // pred_fallthru
    _
  // Predicated region
  $region10: #{just_vit_forward.1} parent=0 // pred_check
    _
  $region11: #{just_vit_forward.1} parent=0 // pred_check_branch
    %30 = sbr.rel (0) target = $region13
  $region12: #{just_vit_forward.1} parent=0 // pred_region
    _
  $region13: #{just_vit_forward.1} parent=0 // pred_fallthru
    _
  // Predicated region
  $region14: #{just_vit_forward.1} parent=0 // pred_check
    _
  $region15: #{just_vit_forward.1} parent=0 // pred_check_branch
    %32 = sbr.rel (0) target = $region17
  $region16: #{just_vit_forward.1} parent=0 // pred_region
    _
  $region17: #{just_vit_forward.1} parent=0 // pred_fallthru
    _
  // Predicated region
  $region18: #{just_vit_forward.1} parent=0 // pred_check
    _
  $region19: #{just_vit_forward.1} parent=0 // pred_check_branch
    %34 = sbr.rel (0) target = $region21
  $region20: #{just_vit_forward.1} parent=0 // pred_region
    _
  $region21: #{just_vit_forward.1} parent=0 // pred_fallthru
    _
  // Predicated region
  $region22: #{just_vit_forward.1} parent=0 // pred_check
    _
  $region23: #{just_vit_forward.1} parent=0 // pred_check_branch
    %36 = sbr.rel (0) target = $region25
  $region24: #{just_vit_forward.1} parent=0 // pred_region
    _
  $region25: #{just_vit_forward.1} parent=0 // pred_fallthru
    _
  // Predicated region
  $region26: #{just_vit_forward.1} parent=0 // pred_check
    _
  $region27: #{just_vit_forward.1} parent=0 // pred_check_branch
    %38 = sbr.rel (0) target = $region29
  $region28: #{just_vit_forward.1} parent=0 // pred_region
    _
  $region29: #{just_vit_forward.1} parent=0 // pred_fallthru
    _
  // Predicated region
  $region30: #{just_vit_forward.1} parent=0 // pred_check
    _
  $region31: #{just_vit_forward.1} parent=0 // pred_check_branch
    %40 = sbr.rel (0) target = $region33
  $region32: #{just_vit_forward.1} parent=0 // pred_region
    _
  $region33: #{just_vit_forward.1} parent=0 // pred_fallthru
    _
  // Predicated region
  $region34: #{just_vit_forward.1} parent=0 // pred_check
    _
  $region35: #{just_vit_forward.1} parent=0 // pred_check_branch
    %42 = sbr.rel (0) target = $region37
  $region36: #{just_vit_forward.1} parent=0 // pred_region
    _
  $region37: #{just_vit_forward.1} parent=0 // pred_fallthru
    _
  // Predicated region
  $region38: #{just_vit_forward.1} parent=0 // pred_check
    _
  $region39: #{just_vit_forward.1} parent=0 // pred_check_branch
    %44 = sbr.rel (0) target = $region41
  $region40: #{just_vit_forward.1} parent=0 // pred_region
    _
  $region41: #{just_vit_forward.1} parent=0 // pred_fallthru
    _
  // Predicated region
  $region42: #{just_vit_forward.1} parent=0 // pred_check
    _
  $region43: #{just_vit_forward.1} parent=0 // pred_check_branch
    %46 = sbr.rel (0) target = $region45
  $region44: #{just_vit_forward.1} parent=0 // pred_region
    _
  $region45: #{just_vit_forward.1} parent=0 // pred_fallthru
    _
  // Predicated region
  $region46: #{just_vit_forward.1} parent=0 // pred_check
    _
  $region47: #{just_vit_forward.1} parent=0 // pred_check_branch
    %48 = sbr.rel (0) target = $region49
  $region48: #{just_vit_forward.1} parent=0 // pred_region
    _
  $region49: #{just_vit_forward.1} parent=0 // pred_fallthru
    _
  // Predicated region
  $region50: #{just_vit_forward.1} parent=0 // pred_check
    _
  $region51: #{just_vit_forward.1} parent=0 // pred_check_branch
    %50 = sbr.rel (0) target = $region53
  $region52: #{just_vit_forward.1} parent=0 // pred_region
    _
  $region53: #{just_vit_forward.1} parent=0 // pred_fallthru
    _
  // Predicated region
  $region54: #{just_vit_forward.1} parent=0 // pred_check
    _
  $region55: #{just_vit_forward.1} parent=0 // pred_check_branch
    %52 = sbr.rel (0) target = $region57
  $region56: #{just_vit_forward.1} parent=0 // pred_region
    _
  $region57: #{just_vit_forward.1} parent=0 // pred_fallthru
    _
  // Predicated region
  $region58: #{just_vit_forward.1} parent=0 // pred_check
    _
  $region59: #{just_vit_forward.1} parent=0 // pred_check_branch
    %54 = sbr.rel (0) target = $region61
  $region60: #{just_vit_forward.1} parent=0 // pred_region
    _
  $region61: #{just_vit_forward.1} parent=0 // pred_fallthru
    _
  // Predicated region
  $region62: #{just_vit_forward.1} parent=0 // pred_check
    _
  $region63: #{just_vit_forward.1} parent=0 // pred_check_branch
    %56 = sbr.rel (0) target = $region65
  $region64: #{just_vit_forward.1} parent=0 // pred_region
    _
  $region65: #{just_vit_forward.1} parent=0 // pred_fallthru
    _
  // Predicated region
  $region66: #{just_vit_forward.1} parent=0 // pred_check
    _
  $region67: #{just_vit_forward.1} parent=0 // pred_check_branch
    %58 = sbr.rel (0) target = $region69
  $region68: #{just_vit_forward.1} parent=0 // pred_region
    _
  $region69: #{just_vit_forward.1} parent=0 // pred_fallthru
    _
  // Predicated region
  $region70: #{just_vit_forward.1} parent=0 // pred_check
    _
  $region71: #{just_vit_forward.1} parent=0 // pred_check_branch
    %60 = sbr.rel (0) target = $region73
  $region72: #{just_vit_forward.1} parent=0 // pred_region
    _
  $region73: #{just_vit_forward.1} parent=0 // pred_fallthru
    _
  // Predicated region
  $region74: #{just_vit_forward.1} parent=0 // pred_check
    _
  $region75: #{just_vit_forward.1} parent=0 // pred_check_branch
    %62 = sbr.rel (0) target = $region77
  $region76: #{just_vit_forward.1} parent=0 // pred_region
    _
  $region77: #{just_vit_forward.1} parent=0 // pred_fallthru
    _
  // Predicated region
  $region78: #{just_vit_forward.1} parent=0 // pred_check
    _
  $region79: #{just_vit_forward.1} parent=0 // pred_check_branch
    %64 = sbr.rel (0) target = $region81
  $region80: #{just_vit_forward.1} parent=0 // pred_region
    _
  $region81: #{just_vit_forward.1} parent=0 // pred_fallthru
    _
  %v65 = vld [vmem:[%s0] sm:$0xff]
  %v66 = vld [vmem:[%s0 + $0x8] sm:$0xff]
  %v67 = vld [vmem:[%s0 + $0x10] sm:$0xff]
  %v68 = vld [vmem:[%s0 + $0x18] sm:$0xff]
  %v69 = vld [vmem:[%s1] sm:$0xff]
  %v70 = vld [vmem:[%s1 + $0x8] sm:$0xff]
  %v71 = vld [vmem:[%s1 + $0x10] sm:$0xff]
  %v72 = vld [vmem:[%s1 + $0x18] sm:$0xff]
  %v73 = vld [vmem:[%s1 + $0x20] sm:$0xff]
  %v74 = vld [vmem:[%s1 + $0x28] sm:$0xff]
  %v75 = vld [vmem:[%s2] sm:$0xff]
  %v76 = vld [vmem:[%s2 + $0x8] sm:$0xff]
  %v77 = vld [vmem:[%s2 + $0x10] sm:$0xff]
  %v78 = vld [vmem:[%s2 + $0x18] sm:$0xff]
  %vm79 = vcmask 392192
  %v81 = vsel %vm79, %v65, 0
  %v84 = vsel %vm79, %v66, 0
  %v87 = vsel %vm79, %v67, 0
  %v90 = vsel %vm79, %v68, 0
  %92 = vmatprep.subr.mxu0 0.0
  %93 = vmatpush1.msra.mxu0 0.0
  %94 = vmatprep.subr.mxu0 0.0
  %95 = vmatpush1.msra.mxu0 0.0
  %96 = vmatprep.subr.mxu0 0.0
  %97 = vmatpush1.msra.mxu0 0.0
  %98 = vmatprep.subr.mxu0 0.0
  %99 = vmatpush1.msra.mxu0 0.0
  %100 = vmatprep.subr.mxu0 0.0
  %101 = vmatpush1.msra.mxu0 0.0
  %102 = vmatprep.subr.mxu0 0.0
  %103 = vmatpush1.msra.mxu0 0.0
  %104 = vmatprep.subr.mxu0 0.0
  %105 = vmatpush1.msra.mxu0 0.0
  %106 = vmatprep.subr.mxu0 0.0
  %107 = vmatpush1.msra.mxu0 0.0
  %108 = vmatprep.subr.mxu0 0.0
  %109 = vmatpush1.msra.mxu0 0.0
  %110 = vmatprep.subr.mxu0 0.0
  %111 = vmatpush1.msra.mxu0 0.0
  %112 = vmatprep.subr.mxu0 0.0
  %113 = vmatpush1.msra.mxu0 %v74
  %114 = vmatprep.subr.mxu0 0.0
  %115 = vmatpush1.msra.mxu0 %v73
  %116 = vmatprep.subr.mxu0 0.0
  %117 = vmatpush1.msra.mxu0 %v72
  %118 = vmatprep.subr.mxu0 0.0
  %119 = vmatpush1.msra.mxu0 %v71
  %120 = vmatprep.subr.mxu0 0.0
  %121 = vmatpush1.msra.mxu0 %v70
  %122 = vmatprep.subr.mxu0 0.0
  %123 = vmatpush1.msra.mxu0 %v69
  %124 = vmatprep.subr.mxu0 0.0
  %125 = vmatpush2.msra.mxu0 0.0
  %126 = vmatprep.subr.mxu0 0.0
  %127 = vmatpush2.msra.mxu0 0.0
  %128 = vmatprep.subr.mxu0 0.0
  %129 = vmatpush2.msra.mxu0 0.0
  %130 = vmatprep.subr.mxu0 0.0
  %131 = vmatpush2.msra.mxu0 0.0
  %132 = vmatprep.subr.mxu0 0.0
  %133 = vmatpush2.msra.mxu0 0.0
  %134 = vmatprep.subr.mxu0 0.0
  %135 = vmatpush2.msra.mxu0 0.0
  %136 = vmatprep.subr.mxu0 0.0
  %137 = vmatpush2.msra.mxu0 0.0
  %138 = vmatprep.subr.mxu0 0.0
  %139 = vmatpush2.msra.mxu0 0.0
  %140 = vmatprep.subr.mxu0 0.0
  %141 = vmatpush2.msra.mxu0 0.0
  %142 = vmatprep.subr.mxu0 0.0
  %143 = vmatpush2.msra.mxu0 0.0
  %144 = vmatprep.subr.mxu0 0.0
  %145 = vmatpush2.msra.mxu0 0.0
  %146 = vmatprep.subr.mxu0 0.0
  %147 = vmatpush2.msra.mxu0 0.0
  %148 = vmatprep.subr.mxu0 0.0
  %149 = vmatpush2.msra.mxu0 0.0
  %150 = vmatprep.subr.mxu0 0.0
  %151 = vmatpush2.msra.mxu0 0.0
  %152 = vmatprep.subr.mxu0 0.0
  %153 = vmatpush2.msra.mxu0 0.0
  %154 = vmatprep.subr.mxu0 0.0
  %155 = vmatpush2.msra.mxu0 0.0
  %156 = vmatprep.mubr.f32.mxu0 0.0
  %157 = vmatmul.mubr.f32.gmra.mxu0 %v81
  %v158 = vpop.f32.mrf.mxu0
  %v159 = vadd.f32 %v75, %v158
  %v160 = vpop.f32.mrf.mxu0
  %161 = vmatprep.mubr.f32.mxu0 0.0
  %162 = vmatmul.mubr.f32.gmra.mxu0 %v84
  %v163 = vpop.f32.mrf.mxu0
  %v164 = vadd.f32 %v76, %v163
  %v165 = vpop.f32.mrf.mxu0
  %166 = vmatprep.mubr.f32.mxu0 0.0
  %167 = vmatmul.mubr.f32.gmra.mxu0 %v87
  %v168 = vpop.f32.mrf.mxu0
  %v169 = vadd.f32 %v77, %v168
  %v170 = vpop.f32.mrf.mxu0
  %171 = vmatprep.mubr.f32.mxu0 0.0
  %172 = vmatmul.mubr.f32.gmra.mxu0 %v90
  %v173 = vpop.f32.mrf.mxu0
  %v174 = vadd.f32 %v78, %v173
  %v175 = vpop.f32.mrf.mxu0
  %176 = vdwg.mxu0
  %v177 = vld [vmem:[%s3] sm:$0x1]
  %v178 = vld [vmem:[%s4] sm:$0x1]
  %vm179 = vcmask 261120
  %v180 = vsel %vm179, %v159, 0.0
  %181 = vadd.xlane.f32.xlu0 %v180
  %v182 = vpop.xlane.xlu0 %181
  %v183 = vsel %vm179, %v164, 0.0
  %184 = vadd.xlane.f32.xlu0 %v183
  %v185 = vpop.xlane.xlu0 %184
  %v186 = vsel %vm179, %v169, 0.0
  %187 = vadd.xlane.f32.xlu0 %v186
  %v188 = vpop.xlane.xlu0 %187
  %v189 = vsel %vm179, %v174, 0.0
  %190 = vadd.xlane.f32.xlu0 %v189
  %v191 = vpop.xlane.xlu0 %190
  %v192 = vrcp.pop 32.0
  %v193 = vmul.f32 %v182, %v192
  %v194 = vmul.f32 %v185, %v192
  %v195 = vmul.f32 %v188, %v192
  %v196 = vmul.f32 %v191, %v192
  %v197 = vsub.f32 %v159, %v193
  %v198 = vsub.f32 %v164, %v194
  %v199 = vsub.f32 %v169, %v195
  %v200 = vsub.f32 %v174, %v196
  %v201 = vmul.f32 %v197, %v197
  %v202 = vmul.f32 %v198, %v198
  %v203 = vmul.f32 %v199, %v199
  %v204 = vmul.f32 %v200, %v200
  %v205 = vsel %vm179, %v201, 0.0
  %206 = vadd.xlane.f32.xlu0 %v205
  %v207 = vpop.xlane.xlu0 %206
  %v208 = vsel %vm179, %v202, 0.0
  %209 = vadd.xlane.f32.xlu0 %v208
  %v210 = vpop.xlane.xlu0 %209
  %v211 = vsel %vm179, %v203, 0.0
  %212 = vadd.xlane.f32.xlu0 %v211
  %v213 = vpop.xlane.xlu0 %212
  %v214 = vsel %vm179, %v204, 0.0
  %215 = vadd.xlane.f32.xlu0 %v214
  %v216 = vpop.xlane.xlu0 %215
  %v217 = vmul.f32 %v207, %v192
  %v218 = vmul.f32 %v210, %v192
  %v219 = vmul.f32 %v213, %v192
  %v220 = vmul.f32 %v216, %v192
  %v221 = vadd.f32 %v217, 1e-06
  %v222 = vadd.f32 %v218, 1e-06
  %v223 = vadd.f32 %v219, 1e-06
  %v224 = vadd.f32 %v220, 1e-06
  %v225 = vrsqrt.pop %v221
  %v226 = vrsqrt.pop %v222
  %v227 = vrsqrt.pop %v223
  %v228 = vrsqrt.pop %v224
  %v229 = vmul.f32 %v197, %v225
  %v230 = vmul.f32 %v198, %v226
  %v231 = vmul.f32 %v199, %v227
  %v232 = vmul.f32 %v200, %v228
  %v234 = vlaneseq
  %v235 = vshrl.u32 %v234, 7
  %v236 = vsub.s32 0, %v235
  %v237 = vrot.slane %v177, %v236
  %v239 = vmul.f32 %v229, %v237
  %v240 = vmul.f32 %v230, %v237
  %v241 = vmul.f32 %v231, %v237
  %v242 = vmul.f32 %v232, %v237
  %v244 = vlaneseq
  %v245 = vshrl.u32 %v244, 7
  %v246 = vsub.s32 0, %v245
  %v247 = vrot.slane %v178, %v246
  %v249 = vadd.f32 %v239, %v247
  %v250 = vadd.f32 %v240, %v247
  %v251 = vadd.f32 %v241, %v247
  %v252 = vadd.f32 %v242, %v247
  %v253 = vld [vmem:[%s5] sm:$0xff]
  %v254 = vld [vmem:[%s5 + $0x8] sm:$0xff]
  %v255 = vld [vmem:[%s5 + $0x10] sm:$0xff]
  %v256 = vld [vmem:[%s5 + $0x18] sm:$0xff]
  %v257 = vld [vmem:[%s5 + $0x20] sm:$0xff]
  %v258 = vld [vmem:[%s5 + $0x28] sm:$0xff]
  %v259 = vld [vmem:[%s5 + $0x30] sm:$0xff]
  %v260 = vld [vmem:[%s5 + $0x38] sm:$0xff]
  %v261 = vld [vmem:[%s5 + $0x40] sm:$0xff]
  %v262 = vld [vmem:[%s5 + $0x48] sm:$0xff]
  %v263 = vld [vmem:[%s5 + $0x50] sm:$0xff]
  %v264 = vld [vmem:[%s5 + $0x58] sm:$0xff]
  %v265 = vld [vmem:[%s6] sm:$0xff]
  %v266 = vld [vmem:[%s6 + $0x8] sm:$0xff]
  %v267 = vld [vmem:[%s6 + $0x10] sm:$0xff]
  %v268 = vld [vmem:[%s6 + $0x18] sm:$0xff]
  %v269 = vld [vmem:[%s6 + $0x20] sm:$0xff]
  %v270 = vld [vmem:[%s6 + $0x28] sm:$0xff]
  %v271 = vld [vmem:[%s6 + $0x30] sm:$0xff]
  %v272 = vld [vmem:[%s6 + $0x38] sm:$0xff]
  %v273 = vld [vmem:[%s6 + $0x40] sm:$0xff]
  %v274 = vld [vmem:[%s6 + $0x48] sm:$0xff]
  %v275 = vld [vmem:[%s6 + $0x50] sm:$0xff]
  %v276 = vld [vmem:[%s6 + $0x58] sm:$0xff]
  %v277 = vld [vmem:[%s7] sm:$0xff]
  %v278 = vld [vmem:[%s7 + $0x8] sm:$0xff]
  %v279 = vld [vmem:[%s7 + $0x10] sm:$0xff]
  %v280 = vld [vmem:[%s7 + $0x18] sm:$0xff]
  %282 = vset.pattern.permute.xlu0 0
  %283 = vperm.xlu0 %282, %v265
  %v284 = vpop.permute.xlu0 %283
  %287 = vset.pattern.permute.xlu0 0
  %288 = vperm.xlu0 %287, %v266
  %v289 = vpop.permute.xlu0 %288
  %292 = vset.pattern.permute.xlu0 0
  %293 = vperm.xlu0 %292, %v267
  %v294 = vpop.permute.xlu0 %293
  %297 = vset.pattern.permute.xlu0 0
  %298 = vperm.xlu0 %297, %v268
  %v299 = vpop.permute.xlu0 %298
  %302 = vset.pattern.permute.xlu0 0
  %303 = vperm.xlu0 %302, %v269
  %v304 = vpop.permute.xlu0 %303
  %307 = vset.pattern.permute.xlu0 0
  %308 = vperm.xlu0 %307, %v270
  %v309 = vpop.permute.xlu0 %308
  %312 = vset.pattern.permute.xlu0 0
  %313 = vperm.xlu0 %312, %v271
  %v314 = vpop.permute.xlu0 %313
  %317 = vset.pattern.permute.xlu0 0
  %318 = vperm.xlu0 %317, %v272
  %v319 = vpop.permute.xlu0 %318
  %322 = vset.pattern.permute.xlu0 0
  %323 = vperm.xlu0 %322, %v273
  %v324 = vpop.permute.xlu0 %323
  %327 = vset.pattern.permute.xlu0 0
  %328 = vperm.xlu0 %327, %v274
  %v329 = vpop.permute.xlu0 %328
  %332 = vset.pattern.permute.xlu0 0
  %333 = vperm.xlu0 %332, %v275
  %v334 = vpop.permute.xlu0 %333
  %337 = vset.pattern.permute.xlu0 0
  %338 = vperm.xlu0 %337, %v276
  %v339 = vpop.permute.xlu0 %338
  %v342 = vsel %vm179, %v253, 0
  %v345 = vsel %vm179, %v254, 0
  %v348 = vsel %vm179, %v255, 0
  %v351 = vsel %vm179, %v256, 0
  %v354 = vsel %vm179, %v257, 0
  %v357 = vsel %vm179, %v258, 0
  %v360 = vsel %vm179, %v259, 0
  %v363 = vsel %vm179, %v260, 0
  %v366 = vsel %vm179, %v261, 0
  %v369 = vsel %vm179, %v262, 0
  %v372 = vsel %vm179, %v263, 0
  %v375 = vsel %vm179, %v264, 0
  %v378 = vsel %vm179, %v249, 0
  %v381 = vsel %vm179, %v250, 0
  %383 = vmatprep.subr.mxu0 0.0
  %384 = vmatpush1.xpose.msra.mxu0 0.0
  %385 = vmatprep.subr.mxu0 0.0
  %386 = vmatpush1.xpose.msra.mxu0 0.0
  %387 = vmatprep.subr.mxu0 0.0
  %388 = vmatpush1.xpose.msra.mxu0 0.0
  %389 = vmatprep.subr.mxu0 0.0
  %390 = vmatpush1.xpose.msra.mxu0 0.0
  %391 = vmatprep.subr.mxu0 0.0
  %392 = vmatpush1.xpose.msra.mxu0 0.0
  %393 = vmatprep.subr.mxu0 0.0
  %394 = vmatpush1.xpose.msra.mxu0 0.0
  %395 = vmatprep.subr.mxu0 0.0
  %396 = vmatpush1.xpose.msra.mxu0 0.0
  %397 = vmatprep.subr.mxu0 0.0
  %398 = vmatpush1.xpose.msra.mxu0 0.0
  %399 = vmatprep.subr.mxu0 0.0
  %400 = vmatpush1.xpose.msra.mxu0 0.0
  %401 = vmatprep.subr.mxu0 0.0
  %402 = vmatpush1.xpose.msra.mxu0 0.0
  %403 = vmatprep.subr.mxu0 0.0
  %404 = vmatpush1.xpose.msra.mxu0 0.0
  %405 = vmatprep.subr.mxu0 0.0
  %406 = vmatpush1.xpose.msra.mxu0 0.0
  %407 = vmatprep.subr.mxu0 0.0
  %408 = vmatpush1.xpose.msra.mxu0 0.0
  %409 = vmatprep.subr.mxu0 0.0
  %410 = vmatpush1.xpose.msra.mxu0 0.0
  %411 = vmatprep.subr.mxu0 0.0
  %412 = vmatpush1.xpose.msra.mxu0 %v381
  %413 = vmatprep.subr.mxu0 0.0
  %414 = vmatpush1.xpose.msra.mxu0 %v378
  %415 = vmatprep.subr.mxu0 0.0
  %416 = vmatpush2.xpose.msra.mxu0 0.0
  %417 = vmatprep.subr.mxu0 0.0
  %418 = vmatpush2.xpose.msra.mxu0 0.0
  %419 = vmatprep.subr.mxu0 0.0
  %420 = vmatpush2.xpose.msra.mxu0 0.0
  %421 = vmatprep.subr.mxu0 0.0
  %422 = vmatpush2.xpose.msra.mxu0 0.0
  %423 = vmatprep.subr.mxu0 0.0
  %424 = vmatpush2.xpose.msra.mxu0 0.0
  %425 = vmatprep.subr.mxu0 0.0
  %426 = vmatpush2.xpose.msra.mxu0 0.0
  %427 = vmatprep.subr.mxu0 0.0
  %428 = vmatpush2.xpose.msra.mxu0 0.0
  %429 = vmatprep.subr.mxu0 0.0
  %430 = vmatpush2.xpose.msra.mxu0 0.0
  %431 = vmatprep.subr.mxu0 0.0
  %432 = vmatpush2.xpose.msra.mxu0 0.0
  %433 = vmatprep.subr.mxu0 0.0
  %434 = vmatpush2.xpose.msra.mxu0 0.0
  %435 = vmatprep.subr.mxu0 0.0
  %436 = vmatpush2.xpose.msra.mxu0 0.0
  %437 = vmatprep.subr.mxu0 0.0
  %438 = vmatpush2.xpose.msra.mxu0 0.0
  %439 = vmatprep.subr.mxu0 0.0
  %440 = vmatpush2.xpose.msra.mxu0 0.0
  %441 = vmatprep.subr.mxu0 0.0
  %442 = vmatpush2.xpose.msra.mxu0 0.0
  %443 = vmatprep.subr.mxu0 0.0
  %444 = vmatpush2.xpose.msra.mxu0 0.0
  %445 = vmatprep.subr.mxu0 0.0
  %446 = vmatpush2.xpose.msra.mxu0 0.0
  %447 = vmatprep.mubr.f32.mxu0 0.0
  %448 = vmatmul.mubr.f32.gmra.mxu0 %v342
  %v449 = vpop.f32.mrf.mxu0
  %v450 = vadd.f32 %v284, %v449
  %v451 = vpop.f32.mrf.mxu0
  %452 = vmatprep.mubr.f32.mxu0 0.0
  %453 = vmatmul.mubr.f32.gmra.mxu0 %v345
  %v454 = vpop.f32.mrf.mxu0
  %v455 = vadd.f32 %v289, %v454
  %v456 = vpop.f32.mrf.mxu0
  %457 = vmatprep.mubr.f32.mxu0 0.0
  %458 = vmatmul.mubr.f32.gmra.mxu0 %v348
  %v459 = vpop.f32.mrf.mxu0
  %v460 = vadd.f32 %v294, %v459
  %v461 = vpop.f32.mrf.mxu0
  %462 = vmatprep.mubr.f32.mxu0 0.0
  %463 = vmatmul.mubr.f32.gmra.mxu0 %v351
  %v464 = vpop.f32.mrf.mxu0
  %v465 = vadd.f32 %v299, %v464
  %v466 = vpop.f32.mrf.mxu0
  %467 = vmatprep.mubr.f32.mxu0 0.0
  %468 = vmatmul.mubr.f32.gmra.mxu0 %v354
  %v469 = vpop.f32.mrf.mxu0
  %v470 = vadd.f32 %v304, %v469
  %v471 = vpop.f32.mrf.mxu0
  %472 = vmatprep.mubr.f32.mxu0 0.0
  %473 = vmatmul.mubr.f32.gmra.mxu0 %v357
  %v474 = vpop.f32.mrf.mxu0
  %v475 = vadd.f32 %v309, %v474
  %v476 = vpop.f32.mrf.mxu0
  %477 = vmatprep.mubr.f32.mxu0 0.0
  %478 = vmatmul.mubr.f32.gmra.mxu0 %v360
  %v479 = vpop.f32.mrf.mxu0
  %v480 = vadd.f32 %v314, %v479
  %v481 = vpop.f32.mrf.mxu0
  %482 = vmatprep.mubr.f32.mxu0 0.0
  %483 = vmatmul.mubr.f32.gmra.mxu0 %v363
  %v484 = vpop.f32.mrf.mxu0
  %v485 = vadd.f32 %v319, %v484
  %v486 = vpop.f32.mrf.mxu0
  %487 = vmatprep.mubr.f32.mxu0 0.0
  %488 = vmatmul.mubr.f32.gmra.mxu0 %v366
  %v489 = vpop.f32.mrf.mxu0
  %v490 = vadd.f32 %v324, %v489
  %v491 = vpop.f32.mrf.mxu0
  %492 = vmatprep.mubr.f32.mxu0 0.0
  %493 = vmatmul.mubr.f32.gmra.mxu0 %v369
  %v494 = vpop.f32.mrf.mxu0
  %v495 = vadd.f32 %v329, %v494
  %v496 = vpop.f32.mrf.mxu0
  %497 = vmatprep.mubr.f32.mxu0 0.0
  %498 = vmatmul.mubr.f32.gmra.mxu0 %v372
  %v499 = vpop.f32.mrf.mxu0
  %v500 = vadd.f32 %v334, %v499
  %v501 = vpop.f32.mrf.mxu0
  %502 = vmatprep.mubr.f32.mxu0 0.0
  %503 = vmatmul.mubr.f32.gmra.mxu0 %v375
  %v504 = vpop.f32.mrf.mxu0
  %v505 = vadd.f32 %v339, %v504
  %v506 = vpop.f32.mrf.mxu0
  %507 = vdwg.mxu0
  %508 = vxpose.xlu0.b32.start [1/16] %v450, 128
  %509 = vxpose.xlu0.b32.cont [2/16] 0.0, 128
  %510 = vxpose.xlu0.b32.cont [3/16] 0.0, 128
  %511 = vxpose.xlu0.b32.cont [4/16] 0.0, 128
  %512 = vxpose.xlu0.b32.cont [5/16] 0.0, 128
  %513 = vxpose.xlu0.b32.cont [6/16] 0.0, 128
  %514 = vxpose.xlu0.b32.cont [7/16] 0.0, 128
  %515 = vxpose.xlu0.b32.cont [8/16] 0.0, 128
  %516 = vxpose.xlu0.b32.cont [9/16] 0.0, 128
  %517 = vxpose.xlu0.b32.cont [10/16] 0.0, 128
  %518 = vxpose.xlu0.b32.cont [11/16] 0.0, 128
  %519 = vxpose.xlu0.b32.cont [12/16] 0.0, 128
  %520 = vxpose.xlu0.b32.cont [13/16] 0.0, 128
  %521 = vxpose.xlu0.b32.cont [14/16] 0.0, 128
  %522 = vxpose.xlu0.b32.cont [15/16] 0.0, 128
  %523 = vxpose.xlu0.b32.end [16/16] 0.0, 128
  %v524 = vpop.trf.xlu0
  %v525 = vpop.trf.xlu0
  %v526 = vpop.trf.xlu0
  %v527 = vpop.trf.xlu0
  %v528 = vpop.trf.xlu0
  %v529 = vpop.trf.xlu0
  %v530 = vpop.trf.xlu0
  %v531 = vpop.trf.xlu0
  %v532 = vpop.trf.xlu0
  %v533 = vpop.trf.xlu0
  %v534 = vpop.trf.xlu0
  %v535 = vpop.trf.xlu0
  %v536 = vpop.trf.xlu0
  %v537 = vpop.trf.xlu0
  %v538 = vpop.trf.xlu0
  %v539 = vpop.trf.xlu0
  %vm540 = vcmask 64512
  %v542 = vsel %vm540, %v524, 0
  %v545 = vsel %vm540, %v525, 0
  %547 = vmatprep.subr.mxu0 0.0
  %548 = vmatpush1.msra.mxu0 0.0
  %549 = vmatprep.subr.mxu0 0.0
  %550 = vmatpush1.msra.mxu0 0.0
  %551 = vmatprep.subr.mxu0 0.0
  %552 = vmatpush1.msra.mxu0 0.0
  %553 = vmatprep.subr.mxu0 0.0
  %554 = vmatpush1.msra.mxu0 0.0
  %555 = vmatprep.subr.mxu0 0.0
  %556 = vmatpush1.msra.mxu0 0.0
  %557 = vmatprep.subr.mxu0 0.0
  %558 = vmatpush1.msra.mxu0 0.0
  %559 = vmatprep.subr.mxu0 0.0
  %560 = vmatpush1.msra.mxu0 0.0
  %561 = vmatprep.subr.mxu0 0.0
  %562 = vmatpush1.msra.mxu0 0.0
  %563 = vmatprep.subr.mxu0 0.0
  %564 = vmatpush1.msra.mxu0 0.0
  %565 = vmatprep.subr.mxu0 0.0
  %566 = vmatpush1.msra.mxu0 0.0
  %567 = vmatprep.subr.mxu0 0.0
  %568 = vmatpush1.msra.mxu0 0.0
  %569 = vmatprep.subr.mxu0 0.0
  %570 = vmatpush1.msra.mxu0 0.0
  %571 = vmatprep.subr.mxu0 0.0
  %572 = vmatpush1.msra.mxu0 0.0
  %573 = vmatprep.subr.mxu0 0.0
  %574 = vmatpush1.msra.mxu0 0.0
  %575 = vmatprep.subr.mxu0 0.0
  %576 = vmatpush1.msra.mxu0 0.0
  %577 = vmatprep.subr.mxu0 0.0
  %578 = vmatpush1.msra.mxu0 %v470
  %579 = vmatprep.subr.mxu0 0.0
  %580 = vmatpush2.msra.mxu0 0.0
  %581 = vmatprep.subr.mxu0 0.0
  %582 = vmatpush2.msra.mxu0 0.0
  %583 = vmatprep.subr.mxu0 0.0
  %584 = vmatpush2.msra.mxu0 0.0
  %585 = vmatprep.subr.mxu0 0.0
  %586 = vmatpush2.msra.mxu0 0.0
  %587 = vmatprep.subr.mxu0 0.0
  %588 = vmatpush2.msra.mxu0 0.0
  %589 = vmatprep.subr.mxu0 0.0
  %590 = vmatpush2.msra.mxu0 0.0
  %591 = vmatprep.subr.mxu0 0.0
  %592 = vmatpush2.msra.mxu0 0.0
  %593 = vmatprep.subr.mxu0 0.0
  %594 = vmatpush2.msra.mxu0 0.0
  %595 = vmatprep.subr.mxu0 0.0
  %596 = vmatpush2.msra.mxu0 0.0
  %597 = vmatprep.subr.mxu0 0.0
  %598 = vmatpush2.msra.mxu0 0.0
  %599 = vmatprep.subr.mxu0 0.0
  %600 = vmatpush2.msra.mxu0 0.0
  %601 = vmatprep.subr.mxu0 0.0
  %602 = vmatpush2.msra.mxu0 0.0
  %603 = vmatprep.subr.mxu0 0.0
  %604 = vmatpush2.msra.mxu0 0.0
  %605 = vmatprep.subr.mxu0 0.0
  %606 = vmatpush2.msra.mxu0 0.0
  %607 = vmatprep.subr.mxu0 0.0
  %608 = vmatpush2.msra.mxu0 0.0
  %609 = vmatprep.subr.mxu0 0.0
  %610 = vmatpush2.msra.mxu0 0.0
  %611 = vmatprep.mubr.f32.mxu0 0.0
  %612 = vmatmul.mubr.f32.gmra.mxu0 %v542
  %v613 = vpop.f32.mrf.mxu0
  %v614 = vadd.f32 0.0, %v613
  %v615 = vpop.f32.mrf.mxu0
  %616 = vmatprep.mubr.f32.mxu0 0.0
  %617 = vmatmul.mubr.f32.gmra.mxu0 %v545
  %v618 = vpop.f32.mrf.mxu0
  %v619 = vadd.f32 0.0, %v618
  %v620 = vpop.f32.mrf.mxu0
  %621 = vdwg.mxu0
  %v622 = vmul.f32 %v614, 0.35355338
  %v623 = vmul.f32 %v619, 0.35355338
  %vm624 = vcmask 130048
  %v625 = vsel %vm624, %v622, -inf
  %626 = vmax.xlane.f32.xlu0 %v625
  %v627 = vpop.xlane.xlu0 %626
  %v628 = vsel %vm624, %v623, -inf
  %629 = vmax.xlane.f32.xlu0 %v628
  %v630 = vpop.xlane.xlu0 %629
  %v631 = vsub.f32 %v622, %v627
  %v632 = vsub.f32 %v623, %v630
  %v633 = vmul.f32 %v631, 1.442695
  %v634 = vpow.pop %v633
  %v635 = vmul.f32 %v632, 1.442695
  %v636 = vpow.pop %v635
  %v637 = vsel %vm624, %v634, 0.0
  %638 = vadd.xlane.f32.xlu0 %v637
  %v639 = vpop.xlane.xlu0 %638
  %v640 = vsel %vm624, %v636, 0.0
  %641 = vadd.xlane.f32.xlu0 %v640
  %v642 = vpop.xlane.xlu0 %641
  %v643 = vrcp.pop %v639
  %v644 = vrcp.pop %v642
  %v645 = vmul.f32 %v634, %v643
  %v646 = vmul.f32 %v636, %v644
  %v648 = vsel %vm624, %v490, 0
  %v651 = vsel %vm624, %v645, 0
  %v654 = vsel %vm624, %v646, 0
  %656 = vmatprep.subr.mxu0 0.0
  %657 = vmatpush1.xpose.msra.mxu0 0.0
  %658 = vmatprep.subr.mxu0 0.0
  %659 = vmatpush1.xpose.msra.mxu0 0.0
  %660 = vmatprep.subr.mxu0 0.0
  %661 = vmatpush1.xpose.msra.mxu0 0.0
  %662 = vmatprep.subr.mxu0 0.0
  %663 = vmatpush1.xpose.msra.mxu0 0.0
  %664 = vmatprep.subr.mxu0 0.0
  %665 = vmatpush1.xpose.msra.mxu0 0.0
  %666 = vmatprep.subr.mxu0 0.0
  %667 = vmatpush1.xpose.msra.mxu0 0.0
  %668 = vmatprep.subr.mxu0 0.0
  %669 = vmatpush1.xpose.msra.mxu0 0.0
  %670 = vmatprep.subr.mxu0 0.0
  %671 = vmatpush1.xpose.msra.mxu0 0.0
  %672 = vmatprep.subr.mxu0 0.0
  %673 = vmatpush1.xpose.msra.mxu0 0.0
  %674 = vmatprep.subr.mxu0 0.0
  %675 = vmatpush1.xpose.msra.mxu0 0.0
  %676 = vmatprep.subr.mxu0 0.0
  %677 = vmatpush1.xpose.msra.mxu0 0.0
  %678 = vmatprep.subr.mxu0 0.0
  %679 = vmatpush1.xpose.msra.mxu0 0.0
  %680 = vmatprep.subr.mxu0 0.0
  %681 = vmatpush1.xpose.msra.mxu0 0.0
  %682 = vmatprep.subr.mxu0 0.0
  %683 = vmatpush1.xpose.msra.mxu0 0.0
  %684 = vmatprep.subr.mxu0 0.0
  %685 = vmatpush1.xpose.msra.mxu0 %v654
  %686 = vmatprep.subr.mxu0 0.0
  %687 = vmatpush1.xpose.msra.mxu0 %v651
  %688 = vmatprep.subr.mxu0 0.0
  %689 = vmatpush2.xpose.msra.mxu0 0.0
  %690 = vmatprep.subr.mxu0 0.0
  %691 = vmatpush2.xpose.msra.mxu0 0.0
  %692 = vmatprep.subr.mxu0 0.0
  %693 = vmatpush2.xpose.msra.mxu0 0.0
  %694 = vmatprep.subr.mxu0 0.0
  %695 = vmatpush2.xpose.msra.mxu0 0.0
  %696 = vmatprep.subr.mxu0 0.0
  %697 = vmatpush2.xpose.msra.mxu0 0.0
  %698 = vmatprep.subr.mxu0 0.0
  %699 = vmatpush2.xpose.msra.mxu0 0.0
  %700 = vmatprep.subr.mxu0 0.0
  %701 = vmatpush2.xpose.msra.mxu0 0.0
  %702 = vmatprep.subr.mxu0 0.0
  %703 = vmatpush2.xpose.msra.mxu0 0.0
  %704 = vmatprep.subr.mxu0 0.0
  %705 = vmatpush2.xpose.msra.mxu0 0.0
  %706 = vmatprep.subr.mxu0 0.0
  %707 = vmatpush2.xpose.msra.mxu0 0.0
  %708 = vmatprep.subr.mxu0 0.0
  %709 = vmatpush2.xpose.msra.mxu0 0.0
  %710 = vmatprep.subr.mxu0 0.0
  %711 = vmatpush2.xpose.msra.mxu0 0.0
  %712 = vmatprep.subr.mxu0 0.0
  %713 = vmatpush2.xpose.msra.mxu0 0.0
  %714 = vmatprep.subr.mxu0 0.0
  %715 = vmatpush2.xpose.msra.mxu0 0.0
  %716 = vmatprep.subr.mxu0 0.0
  %717 = vmatpush2.xpose.msra.mxu0 0.0
  %718 = vmatprep.subr.mxu0 0.0
  %719 = vmatpush2.xpose.msra.mxu0 0.0
  %720 = vmatprep.mubr.f32.mxu0 0.0
  %721 = vmatmul.mubr.f32.gmra.mxu0 %v648
  %v722 = vpop.f32.mrf.mxu0
  %v723 = vadd.f32 0.0, %v722
  %v724 = vpop.f32.mrf.mxu0
  %725 = vdwg.mxu0
  %726 = vst.msk [vmem:[#allocation2] sm:$0xff] %vm624, %v723
  %727 = vxpose.xlu0.b32.start [1/16] %v455, 128
  %728 = vxpose.xlu0.b32.cont [2/16] 0.0, 128
  %729 = vxpose.xlu0.b32.cont [3/16] 0.0, 128
  %730 = vxpose.xlu0.b32.cont [4/16] 0.0, 128
  %731 = vxpose.xlu0.b32.cont [5/16] 0.0, 128
  %732 = vxpose.xlu0.b32.cont [6/16] 0.0, 128
  %733 = vxpose.xlu0.b32.cont [7/16] 0.0, 128
  %734 = vxpose.xlu0.b32.cont [8/16] 0.0, 128
  %735 = vxpose.xlu0.b32.cont [9/16] 0.0, 128
  %736 = vxpose.xlu0.b32.cont [10/16] 0.0, 128
  %737 = vxpose.xlu0.b32.cont [11/16] 0.0, 128
  %738 = vxpose.xlu0.b32.cont [12/16] 0.0, 128
  %739 = vxpose.xlu0.b32.cont [13/16] 0.0, 128
  %740 = vxpose.xlu0.b32.cont [14/16] 0.0, 128
  %741 = vxpose.xlu0.b32.cont [15/16] 0.0, 128
  %742 = vxpose.xlu0.b32.end [16/16] 0.0, 128
  %v743 = vpop.trf.xlu0
  %v744 = vpop.trf.xlu0
  %v745 = vpop.trf.xlu0
  %v746 = vpop.trf.xlu0
  %v747 = vpop.trf.xlu0
  %v748 = vpop.trf.xlu0
  %v749 = vpop.trf.xlu0
  %v750 = vpop.trf.xlu0
  %v751 = vpop.trf.xlu0
  %v752 = vpop.trf.xlu0
  %v753 = vpop.trf.xlu0
  %v754 = vpop.trf.xlu0
  %v755 = vpop.trf.xlu0
  %v756 = vpop.trf.xlu0
  %v757 = vpop.trf.xlu0
  %v758 = vpop.trf.xlu0
  %v760 = vsel %vm540, %v743, 0
  %v763 = vsel %vm540, %v744, 0
  %765 = vmatprep.subr.mxu0 0.0
  %766 = vmatpush1.msra.mxu0 0.0
  %767 = vmatprep.subr.mxu0 0.0
  %768 = vmatpush1.msra.mxu0 0.0
  %769 = vmatprep.subr.mxu0 0.0
  %770 = vmatpush1.msra.mxu0 0.0
  %771 = vmatprep.subr.mxu0 0.0
  %772 = vmatpush1.msra.mxu0 0.0
  %773 = vmatprep.subr.mxu0 0.0
  %774 = vmatpush1.msra.mxu0 0.0
  %775 = vmatprep.subr.mxu0 0.0
  %776 = vmatpush1.msra.mxu0 0.0
  %777 = vmatprep.subr.mxu0 0.0
  %778 = vmatpush1.msra.mxu0 0.0
  %779 = vmatprep.subr.mxu0 0.0
  %780 = vmatpush1.msra.mxu0 0.0
  %781 = vmatprep.subr.mxu0 0.0
  %782 = vmatpush1.msra.mxu0 0.0
  %783 = vmatprep.subr.mxu0 0.0
  %784 = vmatpush1.msra.mxu0 0.0
  %785 = vmatprep.subr.mxu0 0.0
  %786 = vmatpush1.msra.mxu0 0.0
  %787 = vmatprep.subr.mxu0 0.0
  %788 = vmatpush1.msra.mxu0 0.0
  %789 = vmatprep.subr.mxu0 0.0
  %790 = vmatpush1.msra.mxu0 0.0
  %791 = vmatprep.subr.mxu0 0.0
  %792 = vmatpush1.msra.mxu0 0.0
  %793 = vmatprep.subr.mxu0 0.0
  %794 = vmatpush1.msra.mxu0 0.0
  %795 = vmatprep.subr.mxu0 0.0
  %796 = vmatpush1.msra.mxu0 %v475
  %797 = vmatprep.subr.mxu0 0.0
  %798 = vmatpush2.msra.mxu0 0.0
  %799 = vmatprep.subr.mxu0 0.0
  %800 = vmatpush2.msra.mxu0 0.0
  %801 = vmatprep.subr.mxu0 0.0
  %802 = vmatpush2.msra.mxu0 0.0
  %803 = vmatprep.subr.mxu0 0.0
  %804 = vmatpush2.msra.mxu0 0.0
  %805 = vmatprep.subr.mxu0 0.0
  %806 = vmatpush2.msra.mxu0 0.0
  %807 = vmatprep.subr.mxu0 0.0
  %808 = vmatpush2.msra.mxu0 0.0
  %809 = vmatprep.subr.mxu0 0.0
  %810 = vmatpush2.msra.mxu0 0.0
  %811 = vmatprep.subr.mxu0 0.0
  %812 = vmatpush2.msra.mxu0 0.0
  %813 = vmatprep.subr.mxu0 0.0
  %814 = vmatpush2.msra.mxu0 0.0
  %815 = vmatprep.subr.mxu0 0.0
  %816 = vmatpush2.msra.mxu0 0.0
  %817 = vmatprep.subr.mxu0 0.0
  %818 = vmatpush2.msra.mxu0 0.0
  %819 = vmatprep.subr.mxu0 0.0
  %820 = vmatpush2.msra.mxu0 0.0
  %821 = vmatprep.subr.mxu0 0.0
  %822 = vmatpush2.msra.mxu0 0.0
  %823 = vmatprep.subr.mxu0 0.0
  %824 = vmatpush2.msra.mxu0 0.0
  %825 = vmatprep.subr.mxu0 0.0
  %826 = vmatpush2.msra.mxu0 0.0
  %827 = vmatprep.subr.mxu0 0.0
  %828 = vmatpush2.msra.mxu0 0.0
  %829 = vmatprep.mubr.f32.mxu0 0.0
  %830 = vmatmul.mubr.f32.gmra.mxu0 %v760
  %v831 = vpop.f32.mrf.mxu0
  %v832 = vadd.f32 0.0, %v831
  %v833 = vpop.f32.mrf.mxu0
  %834 = vmatprep.mubr.f32.mxu0 0.0
  %835 = vmatmul.mubr.f32.gmra.mxu0 %v763
  %v836 = vpop.f32.mrf.mxu0
  %v837 = vadd.f32 0.0, %v836
  %v838 = vpop.f32.mrf.mxu0
  %839 = vdwg.mxu0
  %v840 = vmul.f32 %v832, 0.35355338
  %v841 = vmul.f32 %v837, 0.35355338
  %v842 = vsel %vm624, %v840, -inf
  %843 = vmax.xlane.f32.xlu0 %v842
  %v844 = vpop.xlane.xlu0 %843
  %v845 = vsel %vm624, %v841, -inf
  %846 = vmax.xlane.f32.xlu0 %v845
  %v847 = vpop.xlane.xlu0 %846
  %v848 = vsub.f32 %v840, %v844
  %v849 = vsub.f32 %v841, %v847
  %v850 = vmul.f32 %v848, 1.442695
  %v851 = vpow.pop %v850
  %v852 = vmul.f32 %v849, 1.442695
  %v853 = vpow.pop %v852
  %v854 = vsel %vm624, %v851, 0.0
  %855 = vadd.xlane.f32.xlu0 %v854
  %v856 = vpop.xlane.xlu0 %855
  %v857 = vsel %vm624, %v853, 0.0
  %858 = vadd.xlane.f32.xlu0 %v857
  %v859 = vpop.xlane.xlu0 %858
  %v860 = vrcp.pop %v856
  %v861 = vrcp.pop %v859
  %v862 = vmul.f32 %v851, %v860
  %v863 = vmul.f32 %v853, %v861
  %v865 = vsel %vm624, %v495, 0
  %v868 = vsel %vm624, %v862, 0
  %v871 = vsel %vm624, %v863, 0
  %873 = vmatprep.subr.mxu0 0.0
  %874 = vmatpush1.xpose.msra.mxu0 0.0
  %875 = vmatprep.subr.mxu0 0.0
  %876 = vmatpush1.xpose.msra.mxu0 0.0
  %877 = vmatprep.subr.mxu0 0.0
  %878 = vmatpush1.xpose.msra.mxu0 0.0
  %879 = vmatprep.subr.mxu0 0.0
  %880 = vmatpush1.xpose.msra.mxu0 0.0
  %881 = vmatprep.subr.mxu0 0.0
  %882 = vmatpush1.xpose.msra.mxu0 0.0
  %883 = vmatprep.subr.mxu0 0.0
  %884 = vmatpush1.xpose.msra.mxu0 0.0
  %885 = vmatprep.subr.mxu0 0.0
  %886 = vmatpush1.xpose.msra.mxu0 0.0
  %887 = vmatprep.subr.mxu0 0.0
  %888 = vmatpush1.xpose.msra.mxu0 0.0
  %889 = vmatprep.subr.mxu0 0.0
  %890 = vmatpush1.xpose.msra.mxu0 0.0
  %891 = vmatprep.subr.mxu0 0.0
  %892 = vmatpush1.xpose.msra.mxu0 0.0
  %893 = vmatprep.subr.mxu0 0.0
  %894 = vmatpush1.xpose.msra.mxu0 0.0
  %895 = vmatprep.subr.mxu0 0.0
  %896 = vmatpush1.xpose.msra.mxu0 0.0
  %897 = vmatprep.subr.mxu0 0.0
  %898 = vmatpush1.xpose.msra.mxu0 0.0
  %899 = vmatprep.subr.mxu0 0.0
  %900 = vmatpush1.xpose.msra.mxu0 0.0
  %901 = vmatprep.subr.mxu0 0.0
  %902 = vmatpush1.xpose.msra.mxu0 %v871
  %903 = vmatprep.subr.mxu0 0.0
  %904 = vmatpush1.xpose.msra.mxu0 %v868
  %905 = vmatprep.subr.mxu0 0.0
  %906 = vmatpush2.xpose.msra.mxu0 0.0
  %907 = vmatprep.subr.mxu0 0.0
  %908 = vmatpush2.xpose.msra.mxu0 0.0
  %909 = vmatprep.subr.mxu0 0.0
  %910 = vmatpush2.xpose.msra.mxu0 0.0
  %911 = vmatprep.subr.mxu0 0.0
  %912 = vmatpush2.xpose.msra.mxu0 0.0
  %913 = vmatprep.subr.mxu0 0.0
  %914 = vmatpush2.xpose.msra.mxu0 0.0
  %915 = vmatprep.subr.mxu0 0.0
  %916 = vmatpush2.xpose.msra.mxu0 0.0
  %917 = vmatprep.subr.mxu0 0.0
  %918 = vmatpush2.xpose.msra.mxu0 0.0
  %919 = vmatprep.subr.mxu0 0.0
  %920 = vmatpush2.xpose.msra.mxu0 0.0
  %921 = vmatprep.subr.mxu0 0.0
  %922 = vmatpush2.xpose.msra.mxu0 0.0
  %923 = vmatprep.subr.mxu0 0.0
  %924 = vmatpush2.xpose.msra.mxu0 0.0
  %925 = vmatprep.subr.mxu0 0.0
  %926 = vmatpush2.xpose.msra.mxu0 0.0
  %927 = vmatprep.subr.mxu0 0.0
  %928 = vmatpush2.xpose.msra.mxu0 0.0
  %929 = vmatprep.subr.mxu0 0.0
  %930 = vmatpush2.xpose.msra.mxu0 0.0
  %931 = vmatprep.subr.mxu0 0.0
  %932 = vmatpush2.xpose.msra.mxu0 0.0
  %933 = vmatprep.subr.mxu0 0.0
  %934 = vmatpush2.xpose.msra.mxu0 0.0
  %935 = vmatprep.subr.mxu0 0.0
  %936 = vmatpush2.xpose.msra.mxu0 0.0
  %937 = vmatprep.mubr.f32.mxu0 0.0
  %938 = vmatmul.mubr.f32.gmra.mxu0 %v865
  %v939 = vpop.f32.mrf.mxu0
  %v940 = vadd.f32 0.0, %v939
  %v941 = vpop.f32.mrf.mxu0
  %942 = vdwg.mxu0
  %943 = vst.msk [vmem:[#allocation2 + $0x8] sm:$0xff] %vm624, %v940
  %944 = vxpose.xlu0.b32.start [1/16] %v460, 128
  %945 = vxpose.xlu0.b32.cont [2/16] 0.0, 128
  %946 = vxpose.xlu0.b32.cont [3/16] 0.0, 128
  %947 = vxpose.xlu0.b32.cont [4/16] 0.0, 128
  %948 = vxpose.xlu0.b32.cont [5/16] 0.0, 128
  %949 = vxpose.xlu0.b32.cont [6/16] 0.0, 128
  %950 = vxpose.xlu0.b32.cont [7/16] 0.0, 128
  %951 = vxpose.xlu0.b32.cont [8/16] 0.0, 128
  %952 = vxpose.xlu0.b32.cont [9/16] 0.0, 128
  %953 = vxpose.xlu0.b32.cont [10/16] 0.0, 128
  %954 = vxpose.xlu0.b32.cont [11/16] 0.0, 128
  %955 = vxpose.xlu0.b32.cont [12/16] 0.0, 128
  %956 = vxpose.xlu0.b32.cont [13/16] 0.0, 128
  %957 = vxpose.xlu0.b32.cont [14/16] 0.0, 128
  %958 = vxpose.xlu0.b32.cont [15/16] 0.0, 128
  %959 = vxpose.xlu0.b32.end [16/16] 0.0, 128
  %v960 = vpop.trf.xlu0
  %v961 = vpop.trf.xlu0
  %v962 = vpop.trf.xlu0
  %v963 = vpop.trf.xlu0
  %v964 = vpop.trf.xlu0
  %v965 = vpop.trf.xlu0
  %v966 = vpop.trf.xlu0
  %v967 = vpop.trf.xlu0
  %v968 = vpop.trf.xlu0
  %v969 = vpop.trf.xlu0
  %v970 = vpop.trf.xlu0
  %v971 = vpop.trf.xlu0
  %v972 = vpop.trf.xlu0
  %v973 = vpop.trf.xlu0
  %v974 = vpop.trf.xlu0
  %v975 = vpop.trf.xlu0
  %v977 = vsel %vm540, %v960, 0
  %v980 = vsel %vm540, %v961, 0
  %982 = vmatprep.subr.mxu0 0.0
  %983 = vmatpush1.msra.mxu0 0.0
  %984 = vmatprep.subr.mxu0 0.0
  %985 = vmatpush1.msra.mxu0 0.0
  %986 = vmatprep.subr.mxu0 0.0
  %987 = vmatpush1.msra.mxu0 0.0
  %988 = vmatprep.subr.mxu0 0.0
  %989 = vmatpush1.msra.mxu0 0.0
  %990 = vmatprep.subr.mxu0 0.0
  %991 = vmatpush1.msra.mxu0 0.0
  %992 = vmatprep.subr.mxu0 0.0
  %993 = vmatpush1.msra.mxu0 0.0
  %994 = vmatprep.subr.mxu0 0.0
  %995 = vmatpush1.msra.mxu0 0.0
  %996 = vmatprep.subr.mxu0 0.0
  %997 = vmatpush1.msra.mxu0 0.0
  %998 = vmatprep.subr.mxu0 0.0
  %999 = vmatpush1.msra.mxu0 0.0
  %1000 = vmatprep.subr.mxu0 0.0
  %1001 = vmatpush1.msra.mxu0 0.0
  %1002 = vmatprep.subr.mxu0 0.0
  %1003 = vmatpush1.msra.mxu0 0.0
  %1004 = vmatprep.subr.mxu0 0.0
  %1005 = vmatpush1.msra.mxu0 0.0
  %1006 = vmatprep.subr.mxu0 0.0
  %1007 = vmatpush1.msra.mxu0 0.0
  %1008 = vmatprep.subr.mxu0 0.0
  %1009 = vmatpush1.msra.mxu0 0.0
  %1010 = vmatprep.subr.mxu0 0.0
  %1011 = vmatpush1.msra.mxu0 0.0
  %1012 = vmatprep.subr.mxu0 0.0
  %1013 = vmatpush1.msra.mxu0 %v480
  %1014 = vmatprep.subr.mxu0 0.0
  %1015 = vmatpush2.msra.mxu0 0.0
  %1016 = vmatprep.subr.mxu0 0.0
  %1017 = vmatpush2.msra.mxu0 0.0
  %1018 = vmatprep.subr.mxu0 0.0
  %1019 = vmatpush2.msra.mxu0 0.0
  %1020 = vmatprep.subr.mxu0 0.0
  %1021 = vmatpush2.msra.mxu0 0.0
  %1022 = vmatprep.subr.mxu0 0.0
  %1023 = vmatpush2.msra.mxu0 0.0
  %1024 = vmatprep.subr.mxu0 0.0
  %1025 = vmatpush2.msra.mxu0 0.0
  %1026 = vmatprep.subr.mxu0 0.0
  %1027 = vmatpush2.msra.mxu0 0.0
  %1028 = vmatprep.subr.mxu0 0.0
  %1029 = vmatpush2.msra.mxu0 0.0
  %1030 = vmatprep.subr.mxu0 0.0
  %1031 = vmatpush2.msra.mxu0 0.0
  %1032 = vmatprep.subr.mxu0 0.0
  %1033 = vmatpush2.msra.mxu0 0.0
  %1034 = vmatprep.subr.mxu0 0.0
  %1035 = vmatpush2.msra.mxu0 0.0
  %1036 = vmatprep.subr.mxu0 0.0
  %1037 = vmatpush2.msra.mxu0 0.0
  %1038 = vmatprep.subr.mxu0 0.0
  %1039 = vmatpush2.msra.mxu0 0.0
  %1040 = vmatprep.subr.mxu0 0.0
  %1041 = vmatpush2.msra.mxu0 0.0
  %1042 = vmatprep.subr.mxu0 0.0
  %1043 = vmatpush2.msra.mxu0 0.0
  %1044 = vmatprep.subr.mxu0 0.0
  %1045 = vmatpush2.msra.mxu0 0.0
  %1046 = vmatprep.mubr.f32.mxu0 0.0
  %1047 = vmatmul.mubr.f32.gmra.mxu0 %v977
  %v1048 = vpop.f32.mrf.mxu0
  %v1049 = vadd.f32 0.0, %v1048
  %v1050 = vpop.f32.mrf.mxu0
  %1051 = vmatprep.mubr.f32.mxu0 0.0
  %1052 = vmatmul.mubr.f32.gmra.mxu0 %v980
  %v1053 = vpop.f32.mrf.mxu0
  %v1054 = vadd.f32 0.0, %v1053
  %v1055 = vpop.f32.mrf.mxu0
  %1056 = vdwg.mxu0
  %v1057 = vmul.f32 %v1049, 0.35355338
  %v1058 = vmul.f32 %v1054, 0.35355338
  %v1059 = vsel %vm624, %v1057, -inf
  %1060 = vmax.xlane.f32.xlu0 %v1059
  %v1061 = vpop.xlane.xlu0 %1060
  %v1062 = vsel %vm624, %v1058, -inf
  %1063 = vmax.xlane.f32.xlu0 %v1062
  %v1064 = vpop.xlane.xlu0 %1063
  %v1065 = vsub.f32 %v1057, %v1061
  %v1066 = vsub.f32 %v1058, %v1064
  %v1067 = vmul.f32 %v1065, 1.442695
  %v1068 = vpow.pop %v1067
  %v1069 = vmul.f32 %v1066, 1.442695
  %v1070 = vpow.pop %v1069
  %v1071 = vsel %vm624, %v1068, 0.0
  %1072 = vadd.xlane.f32.xlu0 %v1071
  %v1073 = vpop.xlane.xlu0 %1072
  %v1074 = vsel %vm624, %v1070, 0.0
  %1075 = vadd.xlane.f32.xlu0 %v1074
  %v1076 = vpop.xlane.xlu0 %1075
  %v1077 = vrcp.pop %v1073
  %v1078 = vrcp.pop %v1076
  %v1079 = vmul.f32 %v1068, %v1077
  %v1080 = vmul.f32 %v1070, %v1078
  %v1082 = vsel %vm624, %v500, 0
  %v1085 = vsel %vm624, %v1079, 0
  %v1088 = vsel %vm624, %v1080, 0
  %1090 = vmatprep.subr.mxu0 0.0
  %1091 = vmatpush1.xpose.msra.mxu0 0.0
  %1092 = vmatprep.subr.mxu0 0.0
  %1093 = vmatpush1.xpose.msra.mxu0 0.0
  %1094 = vmatprep.subr.mxu0 0.0
  %1095 = vmatpush1.xpose.msra.mxu0 0.0
  %1096 = vmatprep.subr.mxu0 0.0
  %1097 = vmatpush1.xpose.msra.mxu0 0.0
  %1098 = vmatprep.subr.mxu0 0.0
  %1099 = vmatpush1.xpose.msra.mxu0 0.0
  %1100 = vmatprep.subr.mxu0 0.0
  %1101 = vmatpush1.xpose.msra.mxu0 0.0
  %1102 = vmatprep.subr.mxu0 0.0
  %1103 = vmatpush1.xpose.msra.mxu0 0.0
  %1104 = vmatprep.subr.mxu0 0.0
  %1105 = vmatpush1.xpose.msra.mxu0 0.0
  %1106 = vmatprep.subr.mxu0 0.0
  %1107 = vmatpush1.xpose.msra.mxu0 0.0
  %1108 = vmatprep.subr.mxu0 0.0
  %1109 = vmatpush1.xpose.msra.mxu0 0.0
  %1110 = vmatprep.subr.mxu0 0.0
  %1111 = vmatpush1.xpose.msra.mxu0 0.0
  %1112 = vmatprep.subr.mxu0 0.0
  %1113 = vmatpush1.xpose.msra.mxu0 0.0
  %1114 = vmatprep.subr.mxu0 0.0
  %1115 = vmatpush1.xpose.msra.mxu0 0.0
  %1116 = vmatprep.subr.mxu0 0.0
  %1117 = vmatpush1.xpose.msra.mxu0 0.0
  %1118 = vmatprep.subr.mxu0 0.0
  %1119 = vmatpush1.xpose.msra.mxu0 %v1088
  %1120 = vmatprep.subr.mxu0 0.0
  %1121 = vmatpush1.xpose.msra.mxu0 %v1085
  %1122 = vmatprep.subr.mxu0 0.0
  %1123 = vmatpush2.xpose.msra.mxu0 0.0
  %1124 = vmatprep.subr.mxu0 0.0
  %1125 = vmatpush2.xpose.msra.mxu0 0.0
  %1126 = vmatprep.subr.mxu0 0.0
  %1127 = vmatpush2.xpose.msra.mxu0 0.0
  %1128 = vmatprep.subr.mxu0 0.0
  %1129 = vmatpush2.xpose.msra.mxu0 0.0
  %1130 = vmatprep.subr.mxu0 0.0
  %1131 = vmatpush2.xpose.msra.mxu0 0.0
  %1132 = vmatprep.subr.mxu0 0.0
  %1133 = vmatpush2.xpose.msra.mxu0 0.0
  %1134 = vmatprep.subr.mxu0 0.0
  %1135 = vmatpush2.xpose.msra.mxu0 0.0
  %1136 = vmatprep.subr.mxu0 0.0
  %1137 = vmatpush2.xpose.msra.mxu0 0.0
  %1138 = vmatprep.subr.mxu0 0.0
  %1139 = vmatpush2.xpose.msra.mxu0 0.0
  %1140 = vmatprep.subr.mxu0 0.0
  %1141 = vmatpush2.xpose.msra.mxu0 0.0
  %1142 = vmatprep.subr.mxu0 0.0
  %1143 = vmatpush2.xpose.msra.mxu0 0.0
  %1144 = vmatprep.subr.mxu0 0.0
  %1145 = vmatpush2.xpose.msra.mxu0 0.0
  %1146 = vmatprep.subr.mxu0 0.0
  %1147 = vmatpush2.xpose.msra.mxu0 0.0
  %1148 = vmatprep.subr.mxu0 0.0
  %1149 = vmatpush2.xpose.msra.mxu0 0.0
  %1150 = vmatprep.subr.mxu0 0.0
  %1151 = vmatpush2.xpose.msra.mxu0 0.0
  %1152 = vmatprep.subr.mxu0 0.0
  %1153 = vmatpush2.xpose.msra.mxu0 0.0
  %1154 = vmatprep.mubr.f32.mxu0 0.0
  %1155 = vmatmul.mubr.f32.gmra.mxu0 %v1082
  %v1156 = vpop.f32.mrf.mxu0
  %v1157 = vadd.f32 0.0, %v1156
  %v1158 = vpop.f32.mrf.mxu0
  %1159 = vdwg.mxu0
  %1160 = vst.msk [vmem:[#allocation2 + $0x10] sm:$0xff] %vm624, %v1157
  %1161 = vxpose.xlu0.b32.start [1/16] %v465, 128
  %1162 = vxpose.xlu0.b32.cont [2/16] 0.0, 128
  %1163 = vxpose.xlu0.b32.cont [3/16] 0.0, 128
  %1164 = vxpose.xlu0.b32.cont [4/16] 0.0, 128
  %1165 = vxpose.xlu0.b32.cont [5/16] 0.0, 128
  %1166 = vxpose.xlu0.b32.cont [6/16] 0.0, 128
  %1167 = vxpose.xlu0.b32.cont [7/16] 0.0, 128
  %1168 = vxpose.xlu0.b32.cont [8/16] 0.0, 128
  %1169 = vxpose.xlu0.b32.cont [9/16] 0.0, 128
  %1170 = vxpose.xlu0.b32.cont [10/16] 0.0, 128
  %1171 = vxpose.xlu0.b32.cont [11/16] 0.0, 128
  %1172 = vxpose.xlu0.b32.cont [12/16] 0.0, 128
  %1173 = vxpose.xlu0.b32.cont [13/16] 0.0, 128
  %1174 = vxpose.xlu0.b32.cont [14/16] 0.0, 128
  %1175 = vxpose.xlu0.b32.cont [15/16] 0.0, 128
  %1176 = vxpose.xlu0.b32.end [16/16] 0.0, 128
  %v1177 = vpop.trf.xlu0
  %v1178 = vpop.trf.xlu0
  %v1179 = vpop.trf.xlu0
  %v1180 = vpop.trf.xlu0
  %v1181 = vpop.trf.xlu0
  %v1182 = vpop.trf.xlu0
  %v1183 = vpop.trf.xlu0
  %v1184 = vpop.trf.xlu0
  %v1185 = vpop.trf.xlu0
  %v1186 = vpop.trf.xlu0
  %v1187 = vpop.trf.xlu0
  %v1188 = vpop.trf.xlu0
  %v1189 = vpop.trf.xlu0
  %v1190 = vpop.trf.xlu0
  %v1191 = vpop.trf.xlu0
  %v1192 = vpop.trf.xlu0
  %v1194 = vsel %vm540, %v1177, 0
  %v1197 = vsel %vm540, %v1178, 0
  %1199 = vmatprep.subr.mxu0 0.0
  %1200 = vmatpush1.msra.mxu0 0.0
  %1201 = vmatprep.subr.mxu0 0.0
  %1202 = vmatpush1.msra.mxu0 0.0
  %1203 = vmatprep.subr.mxu0 0.0
  %1204 = vmatpush1.msra.mxu0 0.0
  %1205 = vmatprep.subr.mxu0 0.0
  %1206 = vmatpush1.msra.mxu0 0.0
  %1207 = vmatprep.subr.mxu0 0.0
  %1208 = vmatpush1.msra.mxu0 0.0
  %1209 = vmatprep.subr.mxu0 0.0
  %1210 = vmatpush1.msra.mxu0 0.0
  %1211 = vmatprep.subr.mxu0 0.0
  %1212 = vmatpush1.msra.mxu0 0.0
  %1213 = vmatprep.subr.mxu0 0.0
  %1214 = vmatpush1.msra.mxu0 0.0
  %1215 = vmatprep.subr.mxu0 0.0
  %1216 = vmatpush1.msra.mxu0 0.0
  %1217 = vmatprep.subr.mxu0 0.0
  %1218 = vmatpush1.msra.mxu0 0.0
  %1219 = vmatprep.subr.mxu0 0.0
  %1220 = vmatpush1.msra.mxu0 0.0
  %1221 = vmatprep.subr.mxu0 0.0
  %1222 = vmatpush1.msra.mxu0 0.0
  %1223 = vmatprep.subr.mxu0 0.0
  %1224 = vmatpush1.msra.mxu0 0.0
  %1225 = vmatprep.subr.mxu0 0.0
  %1226 = vmatpush1.msra.mxu0 0.0
  %1227 = vmatprep.subr.mxu0 0.0
  %1228 = vmatpush1.msra.mxu0 0.0
  %1229 = vmatprep.subr.mxu0 0.0
  %1230 = vmatpush1.msra.mxu0 %v485
  %1231 = vmatprep.subr.mxu0 0.0
  %1232 = vmatpush2.msra.mxu0 0.0
  %1233 = vmatprep.subr.mxu0 0.0
  %1234 = vmatpush2.msra.mxu0 0.0
  %1235 = vmatprep.subr.mxu0 0.0
  %1236 = vmatpush2.msra.mxu0 0.0
  %1237 = vmatprep.subr.mxu0 0.0
  %1238 = vmatpush2.msra.mxu0 0.0
  %1239 = vmatprep.subr.mxu0 0.0
  %1240 = vmatpush2.msra.mxu0 0.0
  %1241 = vmatprep.subr.mxu0 0.0
  %1242 = vmatpush2.msra.mxu0 0.0
  %1243 = vmatprep.subr.mxu0 0.0
  %1244 = vmatpush2.msra.mxu0 0.0
  %1245 = vmatprep.subr.mxu0 0.0
  %1246 = vmatpush2.msra.mxu0 0.0
  %1247 = vmatprep.subr.mxu0 0.0
  %1248 = vmatpush2.msra.mxu0 0.0
  %1249 = vmatprep.subr.mxu0 0.0
  %1250 = vmatpush2.msra.mxu0 0.0
  %1251 = vmatprep.subr.mxu0 0.0
  %1252 = vmatpush2.msra.mxu0 0.0
  %1253 = vmatprep.subr.mxu0 0.0
  %1254 = vmatpush2.msra.mxu0 0.0
  %1255 = vmatprep.subr.mxu0 0.0
  %1256 = vmatpush2.msra.mxu0 0.0
  %1257 = vmatprep.subr.mxu0 0.0
  %1258 = vmatpush2.msra.mxu0 0.0
  %1259 = vmatprep.subr.mxu0 0.0
  %1260 = vmatpush2.msra.mxu0 0.0
  %1261 = vmatprep.subr.mxu0 0.0
  %1262 = vmatpush2.msra.mxu0 0.0
  %1263 = vmatprep.mubr.f32.mxu0 0.0
  %1264 = vmatmul.mubr.f32.gmra.mxu0 %v1194
  %v1265 = vpop.f32.mrf.mxu0
  %v1266 = vadd.f32 0.0, %v1265
  %v1267 = vpop.f32.mrf.mxu0
  %1268 = vmatprep.mubr.f32.mxu0 0.0
  %1269 = vmatmul.mubr.f32.gmra.mxu0 %v1197
  %v1270 = vpop.f32.mrf.mxu0
  %v1271 = vadd.f32 0.0, %v1270
  %v1272 = vpop.f32.mrf.mxu0
  %1273 = vdwg.mxu0
  %v1274 = vmul.f32 %v1266, 0.35355338
  %v1275 = vmul.f32 %v1271, 0.35355338
  %v1276 = vsel %vm624, %v1274, -inf
  %1277 = vmax.xlane.f32.xlu0 %v1276
  %v1278 = vpop.xlane.xlu0 %1277
  %v1279 = vsel %vm624, %v1275, -inf
  %1280 = vmax.xlane.f32.xlu0 %v1279
  %v1281 = vpop.xlane.xlu0 %1280
  %v1282 = vsub.f32 %v1274, %v1278
  %v1283 = vsub.f32 %v1275, %v1281
  %v1284 = vmul.f32 %v1282, 1.442695
  %v1285 = vpow.pop %v1284
  %v1286 = vmul.f32 %v1283, 1.442695
  %v1287 = vpow.pop %v1286
  %v1288 = vsel %vm624, %v1285, 0.0
  %1289 = vadd.xlane.f32.xlu0 %v1288
  %v1290 = vpop.xlane.xlu0 %1289
  %v1291 = vsel %vm624, %v1287, 0.0
  %1292 = vadd.xlane.f32.xlu0 %v1291
  %v1293 = vpop.xlane.xlu0 %1292
  %v1294 = vrcp.pop %v1290
  %v1295 = vrcp.pop %v1293
  %v1296 = vmul.f32 %v1285, %v1294
  %v1297 = vmul.f32 %v1287, %v1295
  %v1299 = vsel %vm624, %v505, 0
  %v1302 = vsel %vm624, %v1296, 0
  %v1305 = vsel %vm624, %v1297, 0
  %1307 = vmatprep.subr.mxu0 0.0
  %1308 = vmatpush1.xpose.msra.mxu0 0.0
  %1309 = vmatprep.subr.mxu0 0.0
  %1310 = vmatpush1.xpose.msra.mxu0 0.0
  %1311 = vmatprep.subr.mxu0 0.0
  %1312 = vmatpush1.xpose.msra.mxu0 0.0
  %1313 = vmatprep.subr.mxu0 0.0
  %1314 = vmatpush1.xpose.msra.mxu0 0.0
  %1315 = vmatprep.subr.mxu0 0.0
  %1316 = vmatpush1.xpose.msra.mxu0 0.0
  %1317 = vmatprep.subr.mxu0 0.0
  %1318 = vmatpush1.xpose.msra.mxu0 0.0
  %1319 = vmatprep.subr.mxu0 0.0
  %1320 = vmatpush1.xpose.msra.mxu0 0.0
  %1321 = vmatprep.subr.mxu0 0.0
  %1322 = vmatpush1.xpose.msra.mxu0 0.0
  %1323 = vmatprep.subr.mxu0 0.0
  %1324 = vmatpush1.xpose.msra.mxu0 0.0
  %1325 = vmatprep.subr.mxu0 0.0
  %1326 = vmatpush1.xpose.msra.mxu0 0.0
  %1327 = vmatprep.subr.mxu0 0.0
  %1328 = vmatpush1.xpose.msra.mxu0 0.0
  %1329 = vmatprep.subr.mxu0 0.0
  %1330 = vmatpush1.xpose.msra.mxu0 0.0
  %1331 = vmatprep.subr.mxu0 0.0
  %1332 = vmatpush1.xpose.msra.mxu0 0.0
  %1333 = vmatprep.subr.mxu0 0.0
  %1334 = vmatpush1.xpose.msra.mxu0 0.0
  %1335 = vmatprep.subr.mxu0 0.0
  %1336 = vmatpush1.xpose.msra.mxu0 %v1305
  %1337 = vmatprep.subr.mxu0 0.0
  %1338 = vmatpush1.xpose.msra.mxu0 %v1302
  %1339 = vmatprep.subr.mxu0 0.0
  %1340 = vmatpush2.xpose.msra.mxu0 0.0
  %1341 = vmatprep.subr.mxu0 0.0
  %1342 = vmatpush2.xpose.msra.mxu0 0.0
  %1343 = vmatprep.subr.mxu0 0.0
  %1344 = vmatpush2.xpose.msra.mxu0 0.0
  %1345 = vmatprep.subr.mxu0 0.0
  %1346 = vmatpush2.xpose.msra.mxu0 0.0
  %1347 = vmatprep.subr.mxu0 0.0
  %1348 = vmatpush2.xpose.msra.mxu0 0.0
  %1349 = vmatprep.subr.mxu0 0.0
  %1350 = vmatpush2.xpose.msra.mxu0 0.0
  %1351 = vmatprep.subr.mxu0 0.0
  %1352 = vmatpush2.xpose.msra.mxu0 0.0
  %1353 = vmatprep.subr.mxu0 0.0
  %1354 = vmatpush2.xpose.msra.mxu0 0.0
  %1355 = vmatprep.subr.mxu0 0.0
  %1356 = vmatpush2.xpose.msra.mxu0 0.0
  %1357 = vmatprep.subr.mxu0 0.0
  %1358 = vmatpush2.xpose.msra.mxu0 0.0
  %1359 = vmatprep.subr.mxu0 0.0
  %1360 = vmatpush2.xpose.msra.mxu0 0.0
  %1361 = vmatprep.subr.mxu0 0.0
  %1362 = vmatpush2.xpose.msra.mxu0 0.0
  %1363 = vmatprep.subr.mxu0 0.0
  %1364 = vmatpush2.xpose.msra.mxu0 0.0
  %1365 = vmatprep.subr.mxu0 0.0
  %1366 = vmatpush2.xpose.msra.mxu0 0.0
  %1367 = vmatprep.subr.mxu0 0.0
  %1368 = vmatpush2.xpose.msra.mxu0 0.0
  %1369 = vmatprep.subr.mxu0 0.0
  %1370 = vmatpush2.xpose.msra.mxu0 0.0
  %1371 = vmatprep.mubr.f32.mxu0 0.0
  %1372 = vmatmul.mubr.f32.gmra.mxu0 %v1299
  %v1373 = vpop.f32.mrf.mxu0
  %v1374 = vadd.f32 0.0, %v1373
  %v1375 = vpop.f32.mrf.mxu0
  %1376 = vdwg.mxu0
  %1377 = vst.msk [vmem:[#allocation2 + $0x18] sm:$0xff] %vm624, %v1374
  %v1378 = vld [vmem:[#allocation2] sm:$0xff]
  %v1379 = vld [vmem:[#allocation2 + $0x8] sm:$0xff]
  %v1380 = vld [vmem:[#allocation2 + $0x10] sm:$0xff]
  %v1381 = vld [vmem:[#allocation2 + $0x18] sm:$0xff]
  %1382 = vxpose.xlu0.b32.start [1/16] %v1378, 128
  %1383 = vxpose.xlu0.b32.cont [2/16] %v1379, 128
  %1384 = vxpose.xlu0.b32.cont [3/16] %v1380, 128
  %1385 = vxpose.xlu0.b32.cont [4/16] %v1381, 128
  %1386 = vxpose.xlu0.b32.cont [5/16] 0.0, 128
  %1387 = vxpose.xlu0.b32.cont [6/16] 0.0, 128
  %1388 = vxpose.xlu0.b32.cont [7/16] 0.0, 128
  %1389 = vxpose.xlu0.b32.cont [8/16] 0.0, 128
  %1390 = vxpose.xlu0.b32.cont [9/16] 0.0, 128
  %1391 = vxpose.xlu0.b32.cont [10/16] 0.0, 128
  %1392 = vxpose.xlu0.b32.cont [11/16] 0.0, 128
  %1393 = vxpose.xlu0.b32.cont [12/16] 0.0, 128
  %1394 = vxpose.xlu0.b32.cont [13/16] 0.0, 128
  %1395 = vxpose.xlu0.b32.cont [14/16] 0.0, 128
  %1396 = vxpose.xlu0.b32.cont [15/16] 0.0, 128
  %1397 = vxpose.xlu0.b32.end [16/16] 0.0, 128
  %v1398 = vpop.trf.xlu0
  %v1399 = vpop.trf.xlu0
  %v1400 = vpop.trf.xlu0
  %v1401 = vpop.trf.xlu0
  %v1402 = vpop.trf.xlu0
  %v1403 = vpop.trf.xlu0
  %v1404 = vpop.trf.xlu0
  %v1405 = vpop.trf.xlu0
  %v1406 = vpop.trf.xlu0
  %v1407 = vpop.trf.xlu0
  %v1408 = vpop.trf.xlu0
  %v1409 = vpop.trf.xlu0
  %v1410 = vpop.trf.xlu0
  %v1411 = vpop.trf.xlu0
  %v1412 = vpop.trf.xlu0
  %v1413 = vpop.trf.xlu0
  %v1415 = vsel %vm179, %v1398, 0
  %v1418 = vsel %vm179, %v1399, 0
  %1420 = vmatprep.subr.mxu0 0.0
  %1421 = vmatpush1.msra.mxu0 0.0
  %1422 = vmatprep.subr.mxu0 0.0
  %1423 = vmatpush1.msra.mxu0 0.0
  %1424 = vmatprep.subr.mxu0 0.0
  %1425 = vmatpush1.msra.mxu0 0.0
  %1426 = vmatprep.subr.mxu0 0.0
  %1427 = vmatpush1.msra.mxu0 0.0
  %1428 = vmatprep.subr.mxu0 0.0
  %1429 = vmatpush1.msra.mxu0 0.0
  %1430 = vmatprep.subr.mxu0 0.0
  %1431 = vmatpush1.msra.mxu0 0.0
  %1432 = vmatprep.subr.mxu0 0.0
  %1433 = vmatpush1.msra.mxu0 0.0
  %1434 = vmatprep.subr.mxu0 0.0
  %1435 = vmatpush1.msra.mxu0 0.0
  %1436 = vmatprep.subr.mxu0 0.0
  %1437 = vmatpush1.msra.mxu0 0.0
  %1438 = vmatprep.subr.mxu0 0.0
  %1439 = vmatpush1.msra.mxu0 0.0
  %1440 = vmatprep.subr.mxu0 0.0
  %1441 = vmatpush1.msra.mxu0 0.0
  %1442 = vmatprep.subr.mxu0 0.0
  %1443 = vmatpush1.msra.mxu0 0.0
  %1444 = vmatprep.subr.mxu0 0.0
  %1445 = vmatpush1.msra.mxu0 %v280
  %1446 = vmatprep.subr.mxu0 0.0
  %1447 = vmatpush1.msra.mxu0 %v279
  %1448 = vmatprep.subr.mxu0 0.0
  %1449 = vmatpush1.msra.mxu0 %v278
  %1450 = vmatprep.subr.mxu0 0.0
  %1451 = vmatpush1.msra.mxu0 %v277
  %1452 = vmatprep.subr.mxu0 0.0
  %1453 = vmatpush2.msra.mxu0 0.0
  %1454 = vmatprep.subr.mxu0 0.0
  %1455 = vmatpush2.msra.mxu0 0.0
  %1456 = vmatprep.subr.mxu0 0.0
  %1457 = vmatpush2.msra.mxu0 0.0
  %1458 = vmatprep.subr.mxu0 0.0
  %1459 = vmatpush2.msra.mxu0 0.0
  %1460 = vmatprep.subr.mxu0 0.0
  %1461 = vmatpush2.msra.mxu0 0.0
  %1462 = vmatprep.subr.mxu0 0.0
  %1463 = vmatpush2.msra.mxu0 0.0
  %1464 = vmatprep.subr.mxu0 0.0
  %1465 = vmatpush2.msra.mxu0 0.0
  %1466 = vmatprep.subr.mxu0 0.0
  %1467 = vmatpush2.msra.mxu0 0.0
  %1468 = vmatprep.subr.mxu0 0.0
  %1469 = vmatpush2.msra.mxu0 0.0
  %1470 = vmatprep.subr.mxu0 0.0
  %1471 = vmatpush2.msra.mxu0 0.0
  %1472 = vmatprep.subr.mxu0 0.0
  %1473 = vmatpush2.msra.mxu0 0.0
  %1474 = vmatprep.subr.mxu0 0.0
  %1475 = vmatpush2.msra.mxu0 0.0
  %1476 = vmatprep.subr.mxu0 0.0
  %1477 = vmatpush2.msra.mxu0 0.0
  %1478 = vmatprep.subr.mxu0 0.0
  %1479 = vmatpush2.msra.mxu0 0.0
  %1480 = vmatprep.subr.mxu0 0.0
  %1481 = vmatpush2.msra.mxu0 0.0
  %1482 = vmatprep.subr.mxu0 0.0
  %1483 = vmatpush2.msra.mxu0 0.0
  %1484 = vmatprep.mubr.f32.mxu0 0.0
  %1485 = vmatmul.mubr.f32.gmra.mxu0 %v1415
  %v1486 = vpop.f32.mrf.mxu0
  %v1487 = vadd.f32 0.0, %v1486
  %v1488 = vpop.f32.mrf.mxu0
  %1489 = vmatprep.mubr.f32.mxu0 0.0
  %1490 = vmatmul.mubr.f32.gmra.mxu0 %v1418
  %v1491 = vpop.f32.mrf.mxu0
  %v1492 = vadd.f32 0.0, %v1491
  %v1493 = vpop.f32.mrf.mxu0
  %1494 = vdwg.mxu0
  %1495 = vst.msk [vmem:[#allocation3] sm:$0xff] %vm179, %v1487
  %1496 = vst.msk [vmem:[#allocation3 + $0x8] sm:$0xff] %vm179, %v1492
  %v1498 = vsel %vm179, %v251, 0
  %v1501 = vsel %vm179, %v252, 0
  %1503 = vmatprep.subr.mxu0 0.0
  %1504 = vmatpush1.xpose.msra.mxu0 0.0
  %1505 = vmatprep.subr.mxu0 0.0
  %1506 = vmatpush1.xpose.msra.mxu0 0.0
  %1507 = vmatprep.subr.mxu0 0.0
  %1508 = vmatpush1.xpose.msra.mxu0 0.0
  %1509 = vmatprep.subr.mxu0 0.0
  %1510 = vmatpush1.xpose.msra.mxu0 0.0
  %1511 = vmatprep.subr.mxu0 0.0
  %1512 = vmatpush1.xpose.msra.mxu0 0.0
  %1513 = vmatprep.subr.mxu0 0.0
  %1514 = vmatpush1.xpose.msra.mxu0 0.0
  %1515 = vmatprep.subr.mxu0 0.0
  %1516 = vmatpush1.xpose.msra.mxu0 0.0
  %1517 = vmatprep.subr.mxu0 0.0
  %1518 = vmatpush1.xpose.msra.mxu0 0.0
  %1519 = vmatprep.subr.mxu0 0.0
  %1520 = vmatpush1.xpose.msra.mxu0 0.0
  %1521 = vmatprep.subr.mxu0 0.0
  %1522 = vmatpush1.xpose.msra.mxu0 0.0
  %1523 = vmatprep.subr.mxu0 0.0
  %1524 = vmatpush1.xpose.msra.mxu0 0.0
  %1525 = vmatprep.subr.mxu0 0.0
  %1526 = vmatpush1.xpose.msra.mxu0 0.0
  %1527 = vmatprep.subr.mxu0 0.0
  %1528 = vmatpush1.xpose.msra.mxu0 0.0
  %1529 = vmatprep.subr.mxu0 0.0
  %1530 = vmatpush1.xpose.msra.mxu0 0.0
  %1531 = vmatprep.subr.mxu0 0.0
  %1532 = vmatpush1.xpose.msra.mxu0 %v1501
  %1533 = vmatprep.subr.mxu0 0.0
  %1534 = vmatpush1.xpose.msra.mxu0 %v1498
  %1535 = vmatprep.subr.mxu0 0.0
  %1536 = vmatpush2.xpose.msra.mxu0 0.0
  %1537 = vmatprep.subr.mxu0 0.0
  %1538 = vmatpush2.xpose.msra.mxu0 0.0
  %1539 = vmatprep.subr.mxu0 0.0
  %1540 = vmatpush2.xpose.msra.mxu0 0.0
  %1541 = vmatprep.subr.mxu0 0.0
  %1542 = vmatpush2.xpose.msra.mxu0 0.0
  %1543 = vmatprep.subr.mxu0 0.0
  %1544 = vmatpush2.xpose.msra.mxu0 0.0
  %1545 = vmatprep.subr.mxu0 0.0
  %1546 = vmatpush2.xpose.msra.mxu0 0.0
  %1547 = vmatprep.subr.mxu0 0.0
  %1548 = vmatpush2.xpose.msra.mxu0 0.0
  %1549 = vmatprep.subr.mxu0 0.0
  %1550 = vmatpush2.xpose.msra.mxu0 0.0
  %1551 = vmatprep.subr.mxu0 0.0
  %1552 = vmatpush2.xpose.msra.mxu0 0.0
  %1553 = vmatprep.subr.mxu0 0.0
  %1554 = vmatpush2.xpose.msra.mxu0 0.0
  %1555 = vmatprep.subr.mxu0 0.0
  %1556 = vmatpush2.xpose.msra.mxu0 0.0
  %1557 = vmatprep.subr.mxu0 0.0
  %1558 = vmatpush2.xpose.msra.mxu0 0.0
  %1559 = vmatprep.subr.mxu0 0.0
  %1560 = vmatpush2.xpose.msra.mxu0 0.0
  %1561 = vmatprep.subr.mxu0 0.0
  %1562 = vmatpush2.xpose.msra.mxu0 0.0
  %1563 = vmatprep.subr.mxu0 0.0
  %1564 = vmatpush2.xpose.msra.mxu0 0.0
  %1565 = vmatprep.subr.mxu0 0.0
  %1566 = vmatpush2.xpose.msra.mxu0 0.0
  %1567 = vmatprep.mubr.f32.mxu0 0.0
  %1568 = vmatmul.mubr.f32.gmra.mxu0 %v342
  %v1569 = vpop.f32.mrf.mxu0
  %v1570 = vadd.f32 %v284, %v1569
  %v1571 = vpop.f32.mrf.mxu0
  %1572 = vmatprep.mubr.f32.mxu0 0.0
  %1573 = vmatmul.mubr.f32.gmra.mxu0 %v345
  %v1574 = vpop.f32.mrf.mxu0
  %v1575 = vadd.f32 %v289, %v1574
  %v1576 = vpop.f32.mrf.mxu0
  %1577 = vmatprep.mubr.f32.mxu0 0.0
  %1578 = vmatmul.mubr.f32.gmra.mxu0 %v348
  %v1579 = vpop.f32.mrf.mxu0
  %v1580 = vadd.f32 %v294, %v1579
  %v1581 = vpop.f32.mrf.mxu0
  %1582 = vmatprep.mubr.f32.mxu0 0.0
  %1583 = vmatmul.mubr.f32.gmra.mxu0 %v351
  %v1584 = vpop.f32.mrf.mxu0
  %v1585 = vadd.f32 %v299, %v1584
  %v1586 = vpop.f32.mrf.mxu0
  %1587 = vmatprep.mubr.f32.mxu0 0.0
  %1588 = vmatmul.mubr.f32.gmra.mxu0 %v354
  %v1589 = vpop.f32.mrf.mxu0
  %v1590 = vadd.f32 %v304, %v1589
  %v1591 = vpop.f32.mrf.mxu0
  %1592 = vmatprep.mubr.f32.mxu0 0.0
  %1593 = vmatmul.mubr.f32.gmra.mxu0 %v357
  %v1594 = vpop.f32.mrf.mxu0
  %v1595 = vadd.f32 %v309, %v1594
  %v1596 = vpop.f32.mrf.mxu0
  %1597 = vmatprep.mubr.f32.mxu0 0.0
  %1598 = vmatmul.mubr.f32.gmra.mxu0 %v360
  %v1599 = vpop.f32.mrf.mxu0
  %v1600 = vadd.f32 %v314, %v1599
  %v1601 = vpop.f32.mrf.mxu0
  %1602 = vmatprep.mubr.f32.mxu0 0.0
  %1603 = vmatmul.mubr.f32.gmra.mxu0 %v363
  %v1604 = vpop.f32.mrf.mxu0
  %v1605 = vadd.f32 %v319, %v1604
  %v1606 = vpop.f32.mrf.mxu0
  %1607 = vmatprep.mubr.f32.mxu0 0.0
  %1608 = vmatmul.mubr.f32.gmra.mxu0 %v366
  %v1609 = vpop.f32.mrf.mxu0
  %v1610 = vadd.f32 %v324, %v1609
  %v1611 = vpop.f32.mrf.mxu0
  %1612 = vmatprep.mubr.f32.mxu0 0.0
  %1613 = vmatmul.mubr.f32.gmra.mxu0 %v369
  %v1614 = vpop.f32.mrf.mxu0
  %v1615 = vadd.f32 %v329, %v1614
  %v1616 = vpop.f32.mrf.mxu0
  %1617 = vmatprep.mubr.f32.mxu0 0.0
  %1618 = vmatmul.mubr.f32.gmra.mxu0 %v372
  %v1619 = vpop.f32.mrf.mxu0
  %v1620 = vadd.f32 %v334, %v1619
  %v1621 = vpop.f32.mrf.mxu0
  %1622 = vmatprep.mubr.f32.mxu0 0.0
  %1623 = vmatmul.mubr.f32.gmra.mxu0 %v375
  %v1624 = vpop.f32.mrf.mxu0
  %v1625 = vadd.f32 %v339, %v1624
  %v1626 = vpop.f32.mrf.mxu0
  %1627 = vdwg.mxu0
  %1628 = vxpose.xlu0.b32.start [1/16] %v1570, 128
  %1629 = vxpose.xlu0.b32.cont [2/16] 0.0, 128
  %1630 = vxpose.xlu0.b32.cont [3/16] 0.0, 128
  %1631 = vxpose.xlu0.b32.cont [4/16] 0.0, 128
  %1632 = vxpose.xlu0.b32.cont [5/16] 0.0, 128
  %1633 = vxpose.xlu0.b32.cont [6/16] 0.0, 128
  %1634 = vxpose.xlu0.b32.cont [7/16] 0.0, 128
  %1635 = vxpose.xlu0.b32.cont [8/16] 0.0, 128
  %1636 = vxpose.xlu0.b32.cont [9/16] 0.0, 128
  %1637 = vxpose.xlu0.b32.cont [10/16] 0.0, 128
  %1638 = vxpose.xlu0.b32.cont [11/16] 0.0, 128
  %1639 = vxpose.xlu0.b32.cont [12/16] 0.0, 128
  %1640 = vxpose.xlu0.b32.cont [13/16] 0.0, 128
  %1641 = vxpose.xlu0.b32.cont [14/16] 0.0, 128
  %1642 = vxpose.xlu0.b32.cont [15/16] 0.0, 128
  %1643 = vxpose.xlu0.b32.end [16/16] 0.0, 128
  %v1644 = vpop.trf.xlu0
  %v1645 = vpop.trf.xlu0
  %v1646 = vpop.trf.xlu0
  %v1647 = vpop.trf.xlu0
  %v1648 = vpop.trf.xlu0
  %v1649 = vpop.trf.xlu0
  %v1650 = vpop.trf.xlu0
  %v1651 = vpop.trf.xlu0
  %v1652 = vpop.trf.xlu0
  %v1653 = vpop.trf.xlu0
  %v1654 = vpop.trf.xlu0
  %v1655 = vpop.trf.xlu0
  %v1656 = vpop.trf.xlu0
  %v1657 = vpop.trf.xlu0
  %v1658 = vpop.trf.xlu0
  %v1659 = vpop.trf.xlu0
  %v1661 = vsel %vm540, %v1644, 0
  %v1664 = vsel %vm540, %v1645, 0
  %1666 = vmatprep.subr.mxu0 0.0
  %1667 = vmatpush1.msra.mxu0 0.0
  %1668 = vmatprep.subr.mxu0 0.0
  %1669 = vmatpush1.msra.mxu0 0.0
  %1670 = vmatprep.subr.mxu0 0.0
  %1671 = vmatpush1.msra.mxu0 0.0
  %1672 = vmatprep.subr.mxu0 0.0
  %1673 = vmatpush1.msra.mxu0 0.0
  %1674 = vmatprep.subr.mxu0 0.0
  %1675 = vmatpush1.msra.mxu0 0.0
  %1676 = vmatprep.subr.mxu0 0.0
  %1677 = vmatpush1.msra.mxu0 0.0
  %1678 = vmatprep.subr.mxu0 0.0
  %1679 = vmatpush1.msra.mxu0 0.0
  %1680 = vmatprep.subr.mxu0 0.0
  %1681 = vmatpush1.msra.mxu0 0.0
  %1682 = vmatprep.subr.mxu0 0.0
  %1683 = vmatpush1.msra.mxu0 0.0
  %1684 = vmatprep.subr.mxu0 0.0
  %1685 = vmatpush1.msra.mxu0 0.0
  %1686 = vmatprep.subr.mxu0 0.0
  %1687 = vmatpush1.msra.mxu0 0.0
  %1688 = vmatprep.subr.mxu0 0.0
  %1689 = vmatpush1.msra.mxu0 0.0
  %1690 = vmatprep.subr.mxu0 0.0
  %1691 = vmatpush1.msra.mxu0 0.0
  %1692 = vmatprep.subr.mxu0 0.0
  %1693 = vmatpush1.msra.mxu0 0.0
  %1694 = vmatprep.subr.mxu0 0.0
  %1695 = vmatpush1.msra.mxu0 0.0
  %1696 = vmatprep.subr.mxu0 0.0
  %1697 = vmatpush1.msra.mxu0 %v1590
  %1698 = vmatprep.subr.mxu0 0.0
  %1699 = vmatpush2.msra.mxu0 0.0
  %1700 = vmatprep.subr.mxu0 0.0
  %1701 = vmatpush2.msra.mxu0 0.0
  %1702 = vmatprep.subr.mxu0 0.0
  %1703 = vmatpush2.msra.mxu0 0.0
  %1704 = vmatprep.subr.mxu0 0.0
  %1705 = vmatpush2.msra.mxu0 0.0
  %1706 = vmatprep.subr.mxu0 0.0
  %1707 = vmatpush2.msra.mxu0 0.0
  %1708 = vmatprep.subr.mxu0 0.0
  %1709 = vmatpush2.msra.mxu0 0.0
  %1710 = vmatprep.subr.mxu0 0.0
  %1711 = vmatpush2.msra.mxu0 0.0
  %1712 = vmatprep.subr.mxu0 0.0
  %1713 = vmatpush2.msra.mxu0 0.0
  %1714 = vmatprep.subr.mxu0 0.0
  %1715 = vmatpush2.msra.mxu0 0.0
  %1716 = vmatprep.subr.mxu0 0.0
  %1717 = vmatpush2.msra.mxu0 0.0
  %1718 = vmatprep.subr.mxu0 0.0
  %1719 = vmatpush2.msra.mxu0 0.0
  %1720 = vmatprep.subr.mxu0 0.0
  %1721 = vmatpush2.msra.mxu0 0.0
  %1722 = vmatprep.subr.mxu0 0.0
  %1723 = vmatpush2.msra.mxu0 0.0
  %1724 = vmatprep.subr.mxu0 0.0
  %1725 = vmatpush2.msra.mxu0 0.0
  %1726 = vmatprep.subr.mxu0 0.0
  %1727 = vmatpush2.msra.mxu0 0.0
  %1728 = vmatprep.subr.mxu0 0.0
  %1729 = vmatpush2.msra.mxu0 0.0
  %1730 = vmatprep.mubr.f32.mxu0 0.0
  %1731 = vmatmul.mubr.f32.gmra.mxu0 %v1661
  %v1732 = vpop.f32.mrf.mxu0
  %v1733 = vadd.f32 0.0, %v1732
  %v1734 = vpop.f32.mrf.mxu0
  %1735 = vmatprep.mubr.f32.mxu0 0.0
  %1736 = vmatmul.mubr.f32.gmra.mxu0 %v1664
  %v1737 = vpop.f32.mrf.mxu0
  %v1738 = vadd.f32 0.0, %v1737
  %v1739 = vpop.f32.mrf.mxu0
  %1740 = vdwg.mxu0
  %v1741 = vmul.f32 %v1733, 0.35355338
  %v1742 = vmul.f32 %v1738, 0.35355338
  %v1743 = vsel %vm624, %v1741, -inf
  %1744 = vmax.xlane.f32.xlu0 %v1743
  %v1745 = vpop.xlane.xlu0 %1744
  %v1746 = vsel %vm624, %v1742, -inf
  %1747 = vmax.xlane.f32.xlu0 %v1746
  %v1748 = vpop.xlane.xlu0 %1747
  %v1749 = vsub.f32 %v1741, %v1745
  %v1750 = vsub.f32 %v1742, %v1748
  %v1751 = vmul.f32 %v1749, 1.442695
  %v1752 = vpow.pop %v1751
  %v1753 = vmul.f32 %v1750, 1.442695
  %v1754 = vpow.pop %v1753
  %v1755 = vsel %vm624, %v1752, 0.0
  %1756 = vadd.xlane.f32.xlu0 %v1755
  %v1757 = vpop.xlane.xlu0 %1756
  %v1758 = vsel %vm624, %v1754, 0.0
  %1759 = vadd.xlane.f32.xlu0 %v1758
  %v1760 = vpop.xlane.xlu0 %1759
  %v1761 = vrcp.pop %v1757
  %v1762 = vrcp.pop %v1760
  %v1763 = vmul.f32 %v1752, %v1761
  %v1764 = vmul.f32 %v1754, %v1762
  %v1766 = vsel %vm624, %v1610, 0
  %v1769 = vsel %vm624, %v1763, 0
  %v1772 = vsel %vm624, %v1764, 0
  %1774 = vmatprep.subr.mxu0 0.0
  %1775 = vmatpush1.xpose.msra.mxu0 0.0
  %1776 = vmatprep.subr.mxu0 0.0
  %1777 = vmatpush1.xpose.msra.mxu0 0.0
  %1778 = vmatprep.subr.mxu0 0.0
  %1779 = vmatpush1.xpose.msra.mxu0 0.0
  %1780 = vmatprep.subr.mxu0 0.0
  %1781 = vmatpush1.xpose.msra.mxu0 0.0
  %1782 = vmatprep.subr.mxu0 0.0
  %1783 = vmatpush1.xpose.msra.mxu0 0.0
  %1784 = vmatprep.subr.mxu0 0.0
  %1785 = vmatpush1.xpose.msra.mxu0 0.0
  %1786 = vmatprep.subr.mxu0 0.0
  %1787 = vmatpush1.xpose.msra.mxu0 0.0
  %1788 = vmatprep.subr.mxu0 0.0
  %1789 = vmatpush1.xpose.msra.mxu0 0.0
  %1790 = vmatprep.subr.mxu0 0.0
  %1791 = vmatpush1.xpose.msra.mxu0 0.0
  %1792 = vmatprep.subr.mxu0 0.0
  %1793 = vmatpush1.xpose.msra.mxu0 0.0
  %1794 = vmatprep.subr.mxu0 0.0
  %1795 = vmatpush1.xpose.msra.mxu0 0.0
  %1796 = vmatprep.subr.mxu0 0.0
  %1797 = vmatpush1.xpose.msra.mxu0 0.0
  %1798 = vmatprep.subr.mxu0 0.0
  %1799 = vmatpush1.xpose.msra.mxu0 0.0
  %1800 = vmatprep.subr.mxu0 0.0
  %1801 = vmatpush1.xpose.msra.mxu0 0.0
  %1802 = vmatprep.subr.mxu0 0.0
  %1803 = vmatpush1.xpose.msra.mxu0 %v1772
  %1804 = vmatprep.subr.mxu0 0.0
  %1805 = vmatpush1.xpose.msra.mxu0 %v1769
  %1806 = vmatprep.subr.mxu0 0.0
  %1807 = vmatpush2.xpose.msra.mxu0 0.0
  %1808 = vmatprep.subr.mxu0 0.0
  %1809 = vmatpush2.xpose.msra.mxu0 0.0
  %1810 = vmatprep.subr.mxu0 0.0
  %1811 = vmatpush2.xpose.msra.mxu0 0.0
  %1812 = vmatprep.subr.mxu0 0.0
  %1813 = vmatpush2.xpose.msra.mxu0 0.0
  %1814 = vmatprep.subr.mxu0 0.0
  %1815 = vmatpush2.xpose.msra.mxu0 0.0
  %1816 = vmatprep.subr.mxu0 0.0
  %1817 = vmatpush2.xpose.msra.mxu0 0.0
  %1818 = vmatprep.subr.mxu0 0.0
  %1819 = vmatpush2.xpose.msra.mxu0 0.0
  %1820 = vmatprep.subr.mxu0 0.0
  %1821 = vmatpush2.xpose.msra.mxu0 0.0
  %1822 = vmatprep.subr.mxu0 0.0
  %1823 = vmatpush2.xpose.msra.mxu0 0.0
  %1824 = vmatprep.subr.mxu0 0.0
  %1825 = vmatpush2.xpose.msra.mxu0 0.0
  %1826 = vmatprep.subr.mxu0 0.0
  %1827 = vmatpush2.xpose.msra.mxu0 0.0
  %1828 = vmatprep.subr.mxu0 0.0
  %1829 = vmatpush2.xpose.msra.mxu0 0.0
  %1830 = vmatprep.subr.mxu0 0.0
  %1831 = vmatpush2.xpose.msra.mxu0 0.0
  %1832 = vmatprep.subr.mxu0 0.0
  %1833 = vmatpush2.xpose.msra.mxu0 0.0
  %1834 = vmatprep.subr.mxu0 0.0
  %1835 = vmatpush2.xpose.msra.mxu0 0.0
  %1836 = vmatprep.subr.mxu0 0.0
  %1837 = vmatpush2.xpose.msra.mxu0 0.0
  %1838 = vmatprep.mubr.f32.mxu0 0.0
  %1839 = vmatmul.mubr.f32.gmra.mxu0 %v1766
  %v1840 = vpop.f32.mrf.mxu0
  %v1841 = vadd.f32 0.0, %v1840
  %v1842 = vpop.f32.mrf.mxu0
  %1843 = vdwg.mxu0
  %1844 = vst.msk [vmem:[#allocation2] sm:$0xff] %vm624, %v1841
  %1845 = vxpose.xlu0.b32.start [1/16] %v1575, 128
  %1846 = vxpose.xlu0.b32.cont [2/16] 0.0, 128
  %1847 = vxpose.xlu0.b32.cont [3/16] 0.0, 128
  %1848 = vxpose.xlu0.b32.cont [4/16] 0.0, 128
  %1849 = vxpose.xlu0.b32.cont [5/16] 0.0, 128
  %1850 = vxpose.xlu0.b32.cont [6/16] 0.0, 128
  %1851 = vxpose.xlu0.b32.cont [7/16] 0.0, 128
  %1852 = vxpose.xlu0.b32.cont [8/16] 0.0, 128
  %1853 = vxpose.xlu0.b32.cont [9/16] 0.0, 128
  %1854 = vxpose.xlu0.b32.cont [10/16] 0.0, 128
  %1855 = vxpose.xlu0.b32.cont [11/16] 0.0, 128
  %1856 = vxpose.xlu0.b32.cont [12/16] 0.0, 128
  %1857 = vxpose.xlu0.b32.cont [13/16] 0.0, 128
  %1858 = vxpose.xlu0.b32.cont [14/16] 0.0, 128
  %1859 = vxpose.xlu0.b32.cont [15/16] 0.0, 128
  %1860 = vxpose.xlu0.b32.end [16/16] 0.0, 128
  %v1861 = vpop.trf.xlu0
  %v1862 = vpop.trf.xlu0
  %v1863 = vpop.trf.xlu0
  %v1864 = vpop.trf.xlu0
  %v1865 = vpop.trf.xlu0
  %v1866 = vpop.trf.xlu0
  %v1867 = vpop.trf.xlu0
  %v1868 = vpop.trf.xlu0
  %v1869 = vpop.trf.xlu0
  %v1870 = vpop.trf.xlu0
  %v1871 = vpop.trf.xlu0
  %v1872 = vpop.trf.xlu0
  %v1873 = vpop.trf.xlu0
  %v1874 = vpop.trf.xlu0
  %v1875 = vpop.trf.xlu0
  %v1876 = vpop.trf.xlu0
  %v1878 = vsel %vm540, %v1861, 0
  %v1881 = vsel %vm540, %v1862, 0
  %1883 = vmatprep.subr.mxu0 0.0
  %1884 = vmatpush1.msra.mxu0 0.0
  %1885 = vmatprep.subr.mxu0 0.0
  %1886 = vmatpush1.msra.mxu0 0.0
  %1887 = vmatprep.subr.mxu0 0.0
  %1888 = vmatpush1.msra.mxu0 0.0
  %1889 = vmatprep.subr.mxu0 0.0
  %1890 = vmatpush1.msra.mxu0 0.0
  %1891 = vmatprep.subr.mxu0 0.0
  %1892 = vmatpush1.msra.mxu0 0.0
  %1893 = vmatprep.subr.mxu0 0.0
  %1894 = vmatpush1.msra.mxu0 0.0
  %1895 = vmatprep.subr.mxu0 0.0
  %1896 = vmatpush1.msra.mxu0 0.0
  %1897 = vmatprep.subr.mxu0 0.0
  %1898 = vmatpush1.msra.mxu0 0.0
  %1899 = vmatprep.subr.mxu0 0.0
  %1900 = vmatpush1.msra.mxu0 0.0
  %1901 = vmatprep.subr.mxu0 0.0
  %1902 = vmatpush1.msra.mxu0 0.0
  %1903 = vmatprep.subr.mxu0 0.0
  %1904 = vmatpush1.msra.mxu0 0.0
  %1905 = vmatprep.subr.mxu0 0.0
  %1906 = vmatpush1.msra.mxu0 0.0
  %1907 = vmatprep.subr.mxu0 0.0
  %1908 = vmatpush1.msra.mxu0 0.0
  %1909 = vmatprep.subr.mxu0 0.0
  %1910 = vmatpush1.msra.mxu0 0.0
  %1911 = vmatprep.subr.mxu0 0.0
  %1912 = vmatpush1.msra.mxu0 0.0
  %1913 = vmatprep.subr.mxu0 0.0
  %1914 = vmatpush1.msra.mxu0 %v1595
  %1915 = vmatprep.subr.mxu0 0.0
  %1916 = vmatpush2.msra.mxu0 0.0
  %1917 = vmatprep.subr.mxu0 0.0
  %1918 = vmatpush2.msra.mxu0 0.0
  %1919 = vmatprep.subr.mxu0 0.0
  %1920 = vmatpush2.msra.mxu0 0.0
  %1921 = vmatprep.subr.mxu0 0.0
  %1922 = vmatpush2.msra.mxu0 0.0
  %1923 = vmatprep.subr.mxu0 0.0
  %1924 = vmatpush2.msra.mxu0 0.0
  %1925 = vmatprep.subr.mxu0 0.0
  %1926 = vmatpush2.msra.mxu0 0.0
  %1927 = vmatprep.subr.mxu0 0.0
  %1928 = vmatpush2.msra.mxu0 0.0
  %1929 = vmatprep.subr.mxu0 0.0
  %1930 = vmatpush2.msra.mxu0 0.0
  %1931 = vmatprep.subr.mxu0 0.0
  %1932 = vmatpush2.msra.mxu0 0.0
  %1933 = vmatprep.subr.mxu0 0.0
  %1934 = vmatpush2.msra.mxu0 0.0
  %1935 = vmatprep.subr.mxu0 0.0
  %1936 = vmatpush2.msra.mxu0 0.0
  %1937 = vmatprep.subr.mxu0 0.0
  %1938 = vmatpush2.msra.mxu0 0.0
  %1939 = vmatprep.subr.mxu0 0.0
  %1940 = vmatpush2.msra.mxu0 0.0
  %1941 = vmatprep.subr.mxu0 0.0
  %1942 = vmatpush2.msra.mxu0 0.0
  %1943 = vmatprep.subr.mxu0 0.0
  %1944 = vmatpush2.msra.mxu0 0.0
  %1945 = vmatprep.subr.mxu0 0.0
  %1946 = vmatpush2.msra.mxu0 0.0
  %1947 = vmatprep.mubr.f32.mxu0 0.0
  %1948 = vmatmul.mubr.f32.gmra.mxu0 %v1878
  %v1949 = vpop.f32.mrf.mxu0
  %v1950 = vadd.f32 0.0, %v1949
  %v1951 = vpop.f32.mrf.mxu0
  %1952 = vmatprep.mubr.f32.mxu0 0.0
  %1953 = vmatmul.mubr.f32.gmra.mxu0 %v1881
  %v1954 = vpop.f32.mrf.mxu0
  %v1955 = vadd.f32 0.0, %v1954
  %v1956 = vpop.f32.mrf.mxu0
  %1957 = vdwg.mxu0
  %v1958 = vmul.f32 %v1950, 0.35355338
  %v1959 = vmul.f32 %v1955, 0.35355338
  %v1960 = vsel %vm624, %v1958, -inf
  %1961 = vmax.xlane.f32.xlu0 %v1960
  %v1962 = vpop.xlane.xlu0 %1961
  %v1963 = vsel %vm624, %v1959, -inf
  %1964 = vmax.xlane.f32.xlu0 %v1963
  %v1965 = vpop.xlane.xlu0 %1964
  %v1966 = vsub.f32 %v1958, %v1962
  %v1967 = vsub.f32 %v1959, %v1965
  %v1968 = vmul.f32 %v1966, 1.442695
  %v1969 = vpow.pop %v1968
  %v1970 = vmul.f32 %v1967, 1.442695
  %v1971 = vpow.pop %v1970
  %v1972 = vsel %vm624, %v1969, 0.0
  %1973 = vadd.xlane.f32.xlu0 %v1972
  %v1974 = vpop.xlane.xlu0 %1973
  %v1975 = vsel %vm624, %v1971, 0.0
  %1976 = vadd.xlane.f32.xlu0 %v1975
  %v1977 = vpop.xlane.xlu0 %1976
  %v1978 = vrcp.pop %v1974
  %v1979 = vrcp.pop %v1977
  %v1980 = vmul.f32 %v1969, %v1978
  %v1981 = vmul.f32 %v1971, %v1979
  %v1983 = vsel %vm624, %v1615, 0
  %v1986 = vsel %vm624, %v1980, 0
  %v1989 = vsel %vm624, %v1981, 0
  %1991 = vmatprep.subr.mxu0 0.0
  %1992 = vmatpush1.xpose.msra.mxu0 0.0
  %1993 = vmatprep.subr.mxu0 0.0
  %1994 = vmatpush1.xpose.msra.mxu0 0.0
  %1995 = vmatprep.subr.mxu0 0.0
  %1996 = vmatpush1.xpose.msra.mxu0 0.0
  %1997 = vmatprep.subr.mxu0 0.0
  %1998 = vmatpush1.xpose.msra.mxu0 0.0
  %1999 = vmatprep.subr.mxu0 0.0
  %2000 = vmatpush1.xpose.msra.mxu0 0.0
  %2001 = vmatprep.subr.mxu0 0.0
  %2002 = vmatpush1.xpose.msra.mxu0 0.0
  %2003 = vmatprep.subr.mxu0 0.0
  %2004 = vmatpush1.xpose.msra.mxu0 0.0
  %2005 = vmatprep.subr.mxu0 0.0
  %2006 = vmatpush1.xpose.msra.mxu0 0.0
  %2007 = vmatprep.subr.mxu0 0.0
  %2008 = vmatpush1.xpose.msra.mxu0 0.0
  %2009 = vmatprep.subr.mxu0 0.0
  %2010 = vmatpush1.xpose.msra.mxu0 0.0
  %2011 = vmatprep.subr.mxu0 0.0
  %2012 = vmatpush1.xpose.msra.mxu0 0.0
  %2013 = vmatprep.subr.mxu0 0.0
  %2014 = vmatpush1.xpose.msra.mxu0 0.0
  %2015 = vmatprep.subr.mxu0 0.0
  %2016 = vmatpush1.xpose.msra.mxu0 0.0
  %2017 = vmatprep.subr.mxu0 0.0
  %2018 = vmatpush1.xpose.msra.mxu0 0.0
  %2019 = vmatprep.subr.mxu0 0.0
  %2020 = vmatpush1.xpose.msra.mxu0 %v1989
  %2021 = vmatprep.subr.mxu0 0.0
  %2022 = vmatpush1.xpose.msra.mxu0 %v1986
  %2023 = vmatprep.subr.mxu0 0.0
  %2024 = vmatpush2.xpose.msra.mxu0 0.0
  %2025 = vmatprep.subr.mxu0 0.0
  %2026 = vmatpush2.xpose.msra.mxu0 0.0
  %2027 = vmatprep.subr.mxu0 0.0
  %2028 = vmatpush2.xpose.msra.mxu0 0.0
  %2029 = vmatprep.subr.mxu0 0.0
  %2030 = vmatpush2.xpose.msra.mxu0 0.0
  %2031 = vmatprep.subr.mxu0 0.0
  %2032 = vmatpush2.xpose.msra.mxu0 0.0
  %2033 = vmatprep.subr.mxu0 0.0
  %2034 = vmatpush2.xpose.msra.mxu0 0.0
  %2035 = vmatprep.subr.mxu0 0.0
  %2036 = vmatpush2.xpose.msra.mxu0 0.0
  %2037 = vmatprep.subr.mxu0 0.0
  %2038 = vmatpush2.xpose.msra.mxu0 0.0
  %2039 = vmatprep.subr.mxu0 0.0
  %2040 = vmatpush2.xpose.msra.mxu0 0.0
  %2041 = vmatprep.subr.mxu0 0.0
  %2042 = vmatpush2.xpose.msra.mxu0 0.0
  %2043 = vmatprep.subr.mxu0 0.0
  %2044 = vmatpush2.xpose.msra.mxu0 0.0
  %2045 = vmatprep.subr.mxu0 0.0
  %2046 = vmatpush2.xpose.msra.mxu0 0.0
  %2047 = vmatprep.subr.mxu0 0.0
  %2048 = vmatpush2.xpose.msra.mxu0 0.0
  %2049 = vmatprep.subr.mxu0 0.0
  %2050 = vmatpush2.xpose.msra.mxu0 0.0
  %2051 = vmatprep.subr.mxu0 0.0
  %2052 = vmatpush2.xpose.msra.mxu0 0.0
  %2053 = vmatprep.subr.mxu0 0.0
  %2054 = vmatpush2.xpose.msra.mxu0 0.0
  %2055 = vmatprep.mubr.f32.mxu0 0.0
  %2056 = vmatmul.mubr.f32.gmra.mxu0 %v1983
  %v2057 = vpop.f32.mrf.mxu0
  %v2058 = vadd.f32 0.0, %v2057
  %v2059 = vpop.f32.mrf.mxu0
  %2060 = vdwg.mxu0
  %2061 = vst.msk [vmem:[#allocation2 + $0x8] sm:$0xff] %vm624, %v2058
  %2062 = vxpose.xlu0.b32.start [1/16] %v1580, 128
  %2063 = vxpose.xlu0.b32.cont [2/16] 0.0, 128
  %2064 = vxpose.xlu0.b32.cont [3/16] 0.0, 128
  %2065 = vxpose.xlu0.b32.cont [4/16] 0.0, 128
  %2066 = vxpose.xlu0.b32.cont [5/16] 0.0, 128
  %2067 = vxpose.xlu0.b32.cont [6/16] 0.0, 128
  %2068 = vxpose.xlu0.b32.cont [7/16] 0.0, 128
  %2069 = vxpose.xlu0.b32.cont [8/16] 0.0, 128
  %2070 = vxpose.xlu0.b32.cont [9/16] 0.0, 128
  %2071 = vxpose.xlu0.b32.cont [10/16] 0.0, 128
  %2072 = vxpose.xlu0.b32.cont [11/16] 0.0, 128
  %2073 = vxpose.xlu0.b32.cont [12/16] 0.0, 128
  %2074 = vxpose.xlu0.b32.cont [13/16] 0.0, 128
  %2075 = vxpose.xlu0.b32.cont [14/16] 0.0, 128
  %2076 = vxpose.xlu0.b32.cont [15/16] 0.0, 128
  %2077 = vxpose.xlu0.b32.end [16/16] 0.0, 128
  %v2078 = vpop.trf.xlu0
  %v2079 = vpop.trf.xlu0
  %v2080 = vpop.trf.xlu0
  %v2081 = vpop.trf.xlu0
  %v2082 = vpop.trf.xlu0
  %v2083 = vpop.trf.xlu0
  %v2084 = vpop.trf.xlu0
  %v2085 = vpop.trf.xlu0
  %v2086 = vpop.trf.xlu0
  %v2087 = vpop.trf.xlu0
  %v2088 = vpop.trf.xlu0
  %v2089 = vpop.trf.xlu0
  %v2090 = vpop.trf.xlu0
  %v2091 = vpop.trf.xlu0
  %v2092 = vpop.trf.xlu0
  %v2093 = vpop.trf.xlu0
  %v2095 = vsel %vm540, %v2078, 0
  %v2098 = vsel %vm540, %v2079, 0
  %2100 = vmatprep.subr.mxu0 0.0
  %2101 = vmatpush1.msra.mxu0 0.0
  %2102 = vmatprep.subr.mxu0 0.0
  %2103 = vmatpush1.msra.mxu0 0.0
  %2104 = vmatprep.subr.mxu0 0.0
  %2105 = vmatpush1.msra.mxu0 0.0
  %2106 = vmatprep.subr.mxu0 0.0
  %2107 = vmatpush1.msra.mxu0 0.0
  %2108 = vmatprep.subr.mxu0 0.0
  %2109 = vmatpush1.msra.mxu0 0.0
  %2110 = vmatprep.subr.mxu0 0.0
  %2111 = vmatpush1.msra.mxu0 0.0
  %2112 = vmatprep.subr.mxu0 0.0
  %2113 = vmatpush1.msra.mxu0 0.0
  %2114 = vmatprep.subr.mxu0 0.0
  %2115 = vmatpush1.msra.mxu0 0.0
  %2116 = vmatprep.subr.mxu0 0.0
  %2117 = vmatpush1.msra.mxu0 0.0
  %2118 = vmatprep.subr.mxu0 0.0
  %2119 = vmatpush1.msra.mxu0 0.0
  %2120 = vmatprep.subr.mxu0 0.0
  %2121 = vmatpush1.msra.mxu0 0.0
  %2122 = vmatprep.subr.mxu0 0.0
  %2123 = vmatpush1.msra.mxu0 0.0
  %2124 = vmatprep.subr.mxu0 0.0
  %2125 = vmatpush1.msra.mxu0 0.0
  %2126 = vmatprep.subr.mxu0 0.0
  %2127 = vmatpush1.msra.mxu0 0.0
  %2128 = vmatprep.subr.mxu0 0.0
  %2129 = vmatpush1.msra.mxu0 0.0
  %2130 = vmatprep.subr.mxu0 0.0
  %2131 = vmatpush1.msra.mxu0 %v1600
  %2132 = vmatprep.subr.mxu0 0.0
  %2133 = vmatpush2.msra.mxu0 0.0
  %2134 = vmatprep.subr.mxu0 0.0
  %2135 = vmatpush2.msra.mxu0 0.0
  %2136 = vmatprep.subr.mxu0 0.0
  %2137 = vmatpush2.msra.mxu0 0.0
  %2138 = vmatprep.subr.mxu0 0.0
  %2139 = vmatpush2.msra.mxu0 0.0
  %2140 = vmatprep.subr.mxu0 0.0
  %2141 = vmatpush2.msra.mxu0 0.0
  %2142 = vmatprep.subr.mxu0 0.0
  %2143 = vmatpush2.msra.mxu0 0.0
  %2144 = vmatprep.subr.mxu0 0.0
  %2145 = vmatpush2.msra.mxu0 0.0
  %2146 = vmatprep.subr.mxu0 0.0
  %2147 = vmatpush2.msra.mxu0 0.0
  %2148 = vmatprep.subr.mxu0 0.0
  %2149 = vmatpush2.msra.mxu0 0.0
  %2150 = vmatprep.subr.mxu0 0.0
  %2151 = vmatpush2.msra.mxu0 0.0
  %2152 = vmatprep.subr.mxu0 0.0
  %2153 = vmatpush2.msra.mxu0 0.0
  %2154 = vmatprep.subr.mxu0 0.0
  %2155 = vmatpush2.msra.mxu0 0.0
  %2156 = vmatprep.subr.mxu0 0.0
  %2157 = vmatpush2.msra.mxu0 0.0
  %2158 = vmatprep.subr.mxu0 0.0
  %2159 = vmatpush2.msra.mxu0 0.0
  %2160 = vmatprep.subr.mxu0 0.0
  %2161 = vmatpush2.msra.mxu0 0.0
  %2162 = vmatprep.subr.mxu0 0.0
  %2163 = vmatpush2.msra.mxu0 0.0
  %2164 = vmatprep.mubr.f32.mxu0 0.0
  %2165 = vmatmul.mubr.f32.gmra.mxu0 %v2095
  %v2166 = vpop.f32.mrf.mxu0
  %v2167 = vadd.f32 0.0, %v2166
  %v2168 = vpop.f32.mrf.mxu0
  %2169 = vmatprep.mubr.f32.mxu0 0.0
  %2170 = vmatmul.mubr.f32.gmra.mxu0 %v2098
  %v2171 = vpop.f32.mrf.mxu0
  %v2172 = vadd.f32 0.0, %v2171
  %v2173 = vpop.f32.mrf.mxu0
  %2174 = vdwg.mxu0
  %v2175 = vmul.f32 %v2167, 0.35355338
  %v2176 = vmul.f32 %v2172, 0.35355338
  %v2177 = vsel %vm624, %v2175, -inf
  %2178 = vmax.xlane.f32.xlu0 %v2177
  %v2179 = vpop.xlane.xlu0 %2178
  %v2180 = vsel %vm624, %v2176, -inf
  %2181 = vmax.xlane.f32.xlu0 %v2180
  %v2182 = vpop.xlane.xlu0 %2181
  %v2183 = vsub.f32 %v2175, %v2179
  %v2184 = vsub.f32 %v2176, %v2182
  %v2185 = vmul.f32 %v2183, 1.442695
  %v2186 = vpow.pop %v2185
  %v2187 = vmul.f32 %v2184, 1.442695
  %v2188 = vpow.pop %v2187
  %v2189 = vsel %vm624, %v2186, 0.0
  %2190 = vadd.xlane.f32.xlu0 %v2189
  %v2191 = vpop.xlane.xlu0 %2190
  %v2192 = vsel %vm624, %v2188, 0.0
  %2193 = vadd.xlane.f32.xlu0 %v2192
  %v2194 = vpop.xlane.xlu0 %2193
  %v2195 = vrcp.pop %v2191
  %v2196 = vrcp.pop %v2194
  %v2197 = vmul.f32 %v2186, %v2195
  %v2198 = vmul.f32 %v2188, %v2196
  %v2200 = vsel %vm624, %v1620, 0
  %v2203 = vsel %vm624, %v2197, 0
  %v2206 = vsel %vm624, %v2198, 0
  %2208 = vmatprep.subr.mxu0 0.0
  %2209 = vmatpush1.xpose.msra.mxu0 0.0
  %2210 = vmatprep.subr.mxu0 0.0
  %2211 = vmatpush1.xpose.msra.mxu0 0.0
  %2212 = vmatprep.subr.mxu0 0.0
  %2213 = vmatpush1.xpose.msra.mxu0 0.0
  %2214 = vmatprep.subr.mxu0 0.0
  %2215 = vmatpush1.xpose.msra.mxu0 0.0
  %2216 = vmatprep.subr.mxu0 0.0
  %2217 = vmatpush1.xpose.msra.mxu0 0.0
  %2218 = vmatprep.subr.mxu0 0.0
  %2219 = vmatpush1.xpose.msra.mxu0 0.0
  %2220 = vmatprep.subr.mxu0 0.0
  %2221 = vmatpush1.xpose.msra.mxu0 0.0
  %2222 = vmatprep.subr.mxu0 0.0
  %2223 = vmatpush1.xpose.msra.mxu0 0.0
  %2224 = vmatprep.subr.mxu0 0.0
  %2225 = vmatpush1.xpose.msra.mxu0 0.0
  %2226 = vmatprep.subr.mxu0 0.0
  %2227 = vmatpush1.xpose.msra.mxu0 0.0
  %2228 = vmatprep.subr.mxu0 0.0
  %2229 = vmatpush1.xpose.msra.mxu0 0.0
  %2230 = vmatprep.subr.mxu0 0.0
  %2231 = vmatpush1.xpose.msra.mxu0 0.0
  %2232 = vmatprep.subr.mxu0 0.0
  %2233 = vmatpush1.xpose.msra.mxu0 0.0
  %2234 = vmatprep.subr.mxu0 0.0
  %2235 = vmatpush1.xpose.msra.mxu0 0.0
  %2236 = vmatprep.subr.mxu0 0.0
  %2237 = vmatpush1.xpose.msra.mxu0 %v2206
  %2238 = vmatprep.subr.mxu0 0.0
  %2239 = vmatpush1.xpose.msra.mxu0 %v2203
  %2240 = vmatprep.subr.mxu0 0.0
  %2241 = vmatpush2.xpose.msra.mxu0 0.0
  %2242 = vmatprep.subr.mxu0 0.0
  %2243 = vmatpush2.xpose.msra.mxu0 0.0
  %2244 = vmatprep.subr.mxu0 0.0
  %2245 = vmatpush2.xpose.msra.mxu0 0.0
  %2246 = vmatprep.subr.mxu0 0.0
  %2247 = vmatpush2.xpose.msra.mxu0 0.0
  %2248 = vmatprep.subr.mxu0 0.0
  %2249 = vmatpush2.xpose.msra.mxu0 0.0
  %2250 = vmatprep.subr.mxu0 0.0
  %2251 = vmatpush2.xpose.msra.mxu0 0.0
  %2252 = vmatprep.subr.mxu0 0.0
  %2253 = vmatpush2.xpose.msra.mxu0 0.0
  %2254 = vmatprep.subr.mxu0 0.0
  %2255 = vmatpush2.xpose.msra.mxu0 0.0
  %2256 = vmatprep.subr.mxu0 0.0
  %2257 = vmatpush2.xpose.msra.mxu0 0.0
  %2258 = vmatprep.subr.mxu0 0.0
  %2259 = vmatpush2.xpose.msra.mxu0 0.0
  %2260 = vmatprep.subr.mxu0 0.0
  %2261 = vmatpush2.xpose.msra.mxu0 0.0
  %2262 = vmatprep.subr.mxu0 0.0
  %2263 = vmatpush2.xpose.msra.mxu0 0.0
  %2264 = vmatprep.subr.mxu0 0.0
  %2265 = vmatpush2.xpose.msra.mxu0 0.0
  %2266 = vmatprep.subr.mxu0 0.0
  %2267 = vmatpush2.xpose.msra.mxu0 0.0
  %2268 = vmatprep.subr.mxu0 0.0
  %2269 = vmatpush2.xpose.msra.mxu0 0.0
  %2270 = vmatprep.subr.mxu0 0.0
  %2271 = vmatpush2.xpose.msra.mxu0 0.0
  %2272 = vmatprep.mubr.f32.mxu0 0.0
  %2273 = vmatmul.mubr.f32.gmra.mxu0 %v2200
  %v2274 = vpop.f32.mrf.mxu0
  %v2275 = vadd.f32 0.0, %v2274
  %v2276 = vpop.f32.mrf.mxu0
  %2277 = vdwg.mxu0
  %2278 = vst.msk [vmem:[#allocation2 + $0x10] sm:$0xff] %vm624, %v2275
  %2279 = vxpose.xlu0.b32.start [1/16] %v1585, 128
  %2280 = vxpose.xlu0.b32.cont [2/16] 0.0, 128
  %2281 = vxpose.xlu0.b32.cont [3/16] 0.0, 128
  %2282 = vxpose.xlu0.b32.cont [4/16] 0.0, 128
  %2283 = vxpose.xlu0.b32.cont [5/16] 0.0, 128
  %2284 = vxpose.xlu0.b32.cont [6/16] 0.0, 128
  %2285 = vxpose.xlu0.b32.cont [7/16] 0.0, 128
  %2286 = vxpose.xlu0.b32.cont [8/16] 0.0, 128
  %2287 = vxpose.xlu0.b32.cont [9/16] 0.0, 128
  %2288 = vxpose.xlu0.b32.cont [10/16] 0.0, 128
  %2289 = vxpose.xlu0.b32.cont [11/16] 0.0, 128
  %2290 = vxpose.xlu0.b32.cont [12/16] 0.0, 128
  %2291 = vxpose.xlu0.b32.cont [13/16] 0.0, 128
  %2292 = vxpose.xlu0.b32.cont [14/16] 0.0, 128
  %2293 = vxpose.xlu0.b32.cont [15/16] 0.0, 128
  %2294 = vxpose.xlu0.b32.end [16/16] 0.0, 128
  %v2295 = vpop.trf.xlu0
  %v2296 = vpop.trf.xlu0
  %v2297 = vpop.trf.xlu0
  %v2298 = vpop.trf.xlu0
  %v2299 = vpop.trf.xlu0
  %v2300 = vpop.trf.xlu0
  %v2301 = vpop.trf.xlu0
  %v2302 = vpop.trf.xlu0
  %v2303 = vpop.trf.xlu0
  %v2304 = vpop.trf.xlu0
  %v2305 = vpop.trf.xlu0
  %v2306 = vpop.trf.xlu0
  %v2307 = vpop.trf.xlu0
  %v2308 = vpop.trf.xlu0
  %v2309 = vpop.trf.xlu0
  %v2310 = vpop.trf.xlu0
  %v2312 = vsel %vm540, %v2295, 0
  %v2315 = vsel %vm540, %v2296, 0
  %2317 = vmatprep.subr.mxu0 0.0
  %2318 = vmatpush1.msra.mxu0 0.0
  %2319 = vmatprep.subr.mxu0 0.0
  %2320 = vmatpush1.msra.mxu0 0.0
  %2321 = vmatprep.subr.mxu0 0.0
  %2322 = vmatpush1.msra.mxu0 0.0
  %2323 = vmatprep.subr.mxu0 0.0
  %2324 = vmatpush1.msra.mxu0 0.0
  %2325 = vmatprep.subr.mxu0 0.0
  %2326 = vmatpush1.msra.mxu0 0.0
  %2327 = vmatprep.subr.mxu0 0.0
  %2328 = vmatpush1.msra.mxu0 0.0
  %2329 = vmatprep.subr.mxu0 0.0
  %2330 = vmatpush1.msra.mxu0 0.0
  %2331 = vmatprep.subr.mxu0 0.0
  %2332 = vmatpush1.msra.mxu0 0.0
  %2333 = vmatprep.subr.mxu0 0.0
  %2334 = vmatpush1.msra.mxu0 0.0
  %2335 = vmatprep.subr.mxu0 0.0
  %2336 = vmatpush1.msra.mxu0 0.0
  %2337 = vmatprep.subr.mxu0 0.0
  %2338 = vmatpush1.msra.mxu0 0.0
  %2339 = vmatprep.subr.mxu0 0.0
  %2340 = vmatpush1.msra.mxu0 0.0
  %2341 = vmatprep.subr.mxu0 0.0
  %2342 = vmatpush1.msra.mxu0 0.0
  %2343 = vmatprep.subr.mxu0 0.0
  %2344 = vmatpush1.msra.mxu0 0.0
  %2345 = vmatprep.subr.mxu0 0.0
  %2346 = vmatpush1.msra.mxu0 0.0
  %2347 = vmatprep.subr.mxu0 0.0
  %2348 = vmatpush1.msra.mxu0 %v1605
  %2349 = vmatprep.subr.mxu0 0.0
  %2350 = vmatpush2.msra.mxu0 0.0
  %2351 = vmatprep.subr.mxu0 0.0
  %2352 = vmatpush2.msra.mxu0 0.0
  %2353 = vmatprep.subr.mxu0 0.0
  %2354 = vmatpush2.msra.mxu0 0.0
  %2355 = vmatprep.subr.mxu0 0.0
  %2356 = vmatpush2.msra.mxu0 0.0
  %2357 = vmatprep.subr.mxu0 0.0
  %2358 = vmatpush2.msra.mxu0 0.0
  %2359 = vmatprep.subr.mxu0 0.0
  %2360 = vmatpush2.msra.mxu0 0.0
  %2361 = vmatprep.subr.mxu0 0.0
  %2362 = vmatpush2.msra.mxu0 0.0
  %2363 = vmatprep.subr.mxu0 0.0
  %2364 = vmatpush2.msra.mxu0 0.0
  %2365 = vmatprep.subr.mxu0 0.0
  %2366 = vmatpush2.msra.mxu0 0.0
  %2367 = vmatprep.subr.mxu0 0.0
  %2368 = vmatpush2.msra.mxu0 0.0
  %2369 = vmatprep.subr.mxu0 0.0
  %2370 = vmatpush2.msra.mxu0 0.0
  %2371 = vmatprep.subr.mxu0 0.0
  %2372 = vmatpush2.msra.mxu0 0.0
  %2373 = vmatprep.subr.mxu0 0.0
  %2374 = vmatpush2.msra.mxu0 0.0
  %2375 = vmatprep.subr.mxu0 0.0
  %2376 = vmatpush2.msra.mxu0 0.0
  %2377 = vmatprep.subr.mxu0 0.0
  %2378 = vmatpush2.msra.mxu0 0.0
  %2379 = vmatprep.subr.mxu0 0.0
  %2380 = vmatpush2.msra.mxu0 0.0
  %2381 = vmatprep.mubr.f32.mxu0 0.0
  %2382 = vmatmul.mubr.f32.gmra.mxu0 %v2312
  %v2383 = vpop.f32.mrf.mxu0
  %v2384 = vadd.f32 0.0, %v2383
  %v2385 = vpop.f32.mrf.mxu0
  %2386 = vmatprep.mubr.f32.mxu0 0.0
  %2387 = vmatmul.mubr.f32.gmra.mxu0 %v2315
  %v2388 = vpop.f32.mrf.mxu0
  %v2389 = vadd.f32 0.0, %v2388
  %v2390 = vpop.f32.mrf.mxu0
  %2391 = vdwg.mxu0
  %v2392 = vmul.f32 %v2384, 0.35355338
  %v2393 = vmul.f32 %v2389, 0.35355338
  %v2394 = vsel %vm624, %v2392, -inf
  %2395 = vmax.xlane.f32.xlu0 %v2394
  %v2396 = vpop.xlane.xlu0 %2395
  %v2397 = vsel %vm624, %v2393, -inf
  %2398 = vmax.xlane.f32.xlu0 %v2397
  %v2399 = vpop.xlane.xlu0 %2398
  %v2400 = vsub.f32 %v2392, %v2396
  %v2401 = vsub.f32 %v2393, %v2399
  %v2402 = vmul.f32 %v2400, 1.442695
  %v2403 = vpow.pop %v2402
  %v2404 = vmul.f32 %v2401, 1.442695
  %v2405 = vpow.pop %v2404
  %v2406 = vsel %vm624, %v2403, 0.0
  %2407 = vadd.xlane.f32.xlu0 %v2406
  %v2408 = vpop.xlane.xlu0 %2407
  %v2409 = vsel %vm624, %v2405, 0.0
  %2410 = vadd.xlane.f32.xlu0 %v2409
  %v2411 = vpop.xlane.xlu0 %2410
  %v2412 = vrcp.pop %v2408
  %v2413 = vrcp.pop %v2411
  %v2414 = vmul.f32 %v2403, %v2412
  %v2415 = vmul.f32 %v2405, %v2413
  %v2417 = vsel %vm624, %v1625, 0
  %v2420 = vsel %vm624, %v2414, 0
  %v2423 = vsel %vm624, %v2415, 0
  %2425 = vmatprep.subr.mxu0 0.0
  %2426 = vmatpush1.xpose.msra.mxu0 0.0
  %2427 = vmatprep.subr.mxu0 0.0
  %2428 = vmatpush1.xpose.msra.mxu0 0.0
  %2429 = vmatprep.subr.mxu0 0.0
  %2430 = vmatpush1.xpose.msra.mxu0 0.0
  %2431 = vmatprep.subr.mxu0 0.0
  %2432 = vmatpush1.xpose.msra.mxu0 0.0
  %2433 = vmatprep.subr.mxu0 0.0
  %2434 = vmatpush1.xpose.msra.mxu0 0.0
  %2435 = vmatprep.subr.mxu0 0.0
  %2436 = vmatpush1.xpose.msra.mxu0 0.0
  %2437 = vmatprep.subr.mxu0 0.0
  %2438 = vmatpush1.xpose.msra.mxu0 0.0
  %2439 = vmatprep.subr.mxu0 0.0
  %2440 = vmatpush1.xpose.msra.mxu0 0.0
  %2441 = vmatprep.subr.mxu0 0.0
  %2442 = vmatpush1.xpose.msra.mxu0 0.0
  %2443 = vmatprep.subr.mxu0 0.0
  %2444 = vmatpush1.xpose.msra.mxu0 0.0
  %2445 = vmatprep.subr.mxu0 0.0
  %2446 = vmatpush1.xpose.msra.mxu0 0.0
  %2447 = vmatprep.subr.mxu0 0.0
  %2448 = vmatpush1.xpose.msra.mxu0 0.0
  %2449 = vmatprep.subr.mxu0 0.0
  %2450 = vmatpush1.xpose.msra.mxu0 0.0
  %2451 = vmatprep.subr.mxu0 0.0
  %2452 = vmatpush1.xpose.msra.mxu0 0.0
  %2453 = vmatprep.subr.mxu0 0.0
  %2454 = vmatpush1.xpose.msra.mxu0 %v2423
  %2455 = vmatprep.subr.mxu0 0.0
  %2456 = vmatpush1.xpose.msra.mxu0 %v2420
  %2457 = vmatprep.subr.mxu0 0.0
  %2458 = vmatpush2.xpose.msra.mxu0 0.0
  %2459 = vmatprep.subr.mxu0 0.0
  %2460 = vmatpush2.xpose.msra.mxu0 0.0
  %2461 = vmatprep.subr.mxu0 0.0
  %2462 = vmatpush2.xpose.msra.mxu0 0.0
  %2463 = vmatprep.subr.mxu0 0.0
  %2464 = vmatpush2.xpose.msra.mxu0 0.0
  %2465 = vmatprep.subr.mxu0 0.0
  %2466 = vmatpush2.xpose.msra.mxu0 0.0
  %2467 = vmatprep.subr.mxu0 0.0
  %2468 = vmatpush2.xpose.msra.mxu0 0.0
  %2469 = vmatprep.subr.mxu0 0.0
  %2470 = vmatpush2.xpose.msra.mxu0 0.0
  %2471 = vmatprep.subr.mxu0 0.0
  %2472 = vmatpush2.xpose.msra.mxu0 0.0
  %2473 = vmatprep.subr.mxu0 0.0
  %2474 = vmatpush2.xpose.msra.mxu0 0.0
  %2475 = vmatprep.subr.mxu0 0.0
  %2476 = vmatpush2.xpose.msra.mxu0 0.0
  %2477 = vmatprep.subr.mxu0 0.0
  %2478 = vmatpush2.xpose.msra.mxu0 0.0
  %2479 = vmatprep.subr.mxu0 0.0
  %2480 = vmatpush2.xpose.msra.mxu0 0.0
  %2481 = vmatprep.subr.mxu0 0.0
  %2482 = vmatpush2.xpose.msra.mxu0 0.0
  %2483 = vmatprep.subr.mxu0 0.0
  %2484 = vmatpush2.xpose.msra.mxu0 0.0
  %2485 = vmatprep.subr.mxu0 0.0
  %2486 = vmatpush2.xpose.msra.mxu0 0.0
  %2487 = vmatprep.subr.mxu0 0.0
  %2488 = vmatpush2.xpose.msra.mxu0 0.0
  %2489 = vmatprep.mubr.f32.mxu0 0.0
  %2490 = vmatmul.mubr.f32.gmra.mxu0 %v2417
  %v2491 = vpop.f32.mrf.mxu0
  %v2492 = vadd.f32 0.0, %v2491
  %v2493 = vpop.f32.mrf.mxu0
  %2494 = vdwg.mxu0
  %2495 = vst.msk [vmem:[#allocation2 + $0x18] sm:$0xff] %vm624, %v2492
  %v2496 = vld [vmem:[#allocation2] sm:$0xff]
  %v2497 = vld [vmem:[#allocation2 + $0x8] sm:$0xff]
  %v2498 = vld [vmem:[#allocation2 + $0x10] sm:$0xff]
  %v2499 = vld [vmem:[#allocation2 + $0x18] sm:$0xff]
  %2500 = vxpose.xlu0.b32.start [1/16] %v2496, 128
  %2501 = vxpose.xlu0.b32.cont [2/16] %v2497, 128
  %2502 = vxpose.xlu0.b32.cont [3/16] %v2498, 128
  %2503 = vxpose.xlu0.b32.cont [4/16] %v2499, 128
  %2504 = vxpose.xlu0.b32.cont [5/16] 0.0, 128
  %2505 = vxpose.xlu0.b32.cont [6/16] 0.0, 128
  %2506 = vxpose.xlu0.b32.cont [7/16] 0.0, 128
  %2507 = vxpose.xlu0.b32.cont [8/16] 0.0, 128
  %2508 = vxpose.xlu0.b32.cont [9/16] 0.0, 128
  %2509 = vxpose.xlu0.b32.cont [10/16] 0.0, 128
  %2510 = vxpose.xlu0.b32.cont [11/16] 0.0, 128
  %2511 = vxpose.xlu0.b32.cont [12/16] 0.0, 128
  %2512 = vxpose.xlu0.b32.cont [13/16] 0.0, 128
  %2513 = vxpose.xlu0.b32.cont [14/16] 0.0, 128
  %2514 = vxpose.xlu0.b32.cont [15/16] 0.0, 128
  %2515 = vxpose.xlu0.b32.end [16/16] 0.0, 128
  %v2516 = vpop.trf.xlu0
  %v2517 = vpop.trf.xlu0
  %v2518 = vpop.trf.xlu0
  %v2519 = vpop.trf.xlu0
  %v2520 = vpop.trf.xlu0
  %v2521 = vpop.trf.xlu0
  %v2522 = vpop.trf.xlu0
  %v2523 = vpop.trf.xlu0
  %v2524 = vpop.trf.xlu0
  %v2525 = vpop.trf.xlu0
  %v2526 = vpop.trf.xlu0
  %v2527 = vpop.trf.xlu0
  %v2528 = vpop.trf.xlu0
  %v2529 = vpop.trf.xlu0
  %v2530 = vpop.trf.xlu0
  %v2531 = vpop.trf.xlu0
  %v2533 = vsel %vm179, %v2516, 0
  %v2536 = vsel %vm179, %v2517, 0
  %2538 = vmatprep.subr.mxu0 0.0
  %2539 = vmatpush1.msra.mxu0 0.0
  %2540 = vmatprep.subr.mxu0 0.0
  %2541 = vmatpush1.msra.mxu0 0.0
  %2542 = vmatprep.subr.mxu0 0.0
  %2543 = vmatpush1.msra.mxu0 0.0
  %2544 = vmatprep.subr.mxu0 0.0
  %2545 = vmatpush1.msra.mxu0 0.0
  %2546 = vmatprep.subr.mxu0 0.0
  %2547 = vmatpush1.msra.mxu0 0.0
  %2548 = vmatprep.subr.mxu0 0.0
  %2549 = vmatpush1.msra.mxu0 0.0
  %2550 = vmatprep.subr.mxu0 0.0
  %2551 = vmatpush1.msra.mxu0 0.0
  %2552 = vmatprep.subr.mxu0 0.0
  %2553 = vmatpush1.msra.mxu0 0.0
  %2554 = vmatprep.subr.mxu0 0.0
  %2555 = vmatpush1.msra.mxu0 0.0
  %2556 = vmatprep.subr.mxu0 0.0
  %2557 = vmatpush1.msra.mxu0 0.0
  %2558 = vmatprep.subr.mxu0 0.0
  %2559 = vmatpush1.msra.mxu0 0.0
  %2560 = vmatprep.subr.mxu0 0.0
  %2561 = vmatpush1.msra.mxu0 0.0
  %2562 = vmatprep.subr.mxu0 0.0
  %2563 = vmatpush1.msra.mxu0 %v280
  %2564 = vmatprep.subr.mxu0 0.0
  %2565 = vmatpush1.msra.mxu0 %v279
  %2566 = vmatprep.subr.mxu0 0.0
  %2567 = vmatpush1.msra.mxu0 %v278
  %2568 = vmatprep.subr.mxu0 0.0
  %2569 = vmatpush1.msra.mxu0 %v277
  %2570 = vmatprep.subr.mxu0 0.0
  %2571 = vmatpush2.msra.mxu0 0.0
  %2572 = vmatprep.subr.mxu0 0.0
  %2573 = vmatpush2.msra.mxu0 0.0
  %2574 = vmatprep.subr.mxu0 0.0
  %2575 = vmatpush2.msra.mxu0 0.0
  %2576 = vmatprep.subr.mxu0 0.0
  %2577 = vmatpush2.msra.mxu0 0.0
  %2578 = vmatprep.subr.mxu0 0.0
  %2579 = vmatpush2.msra.mxu0 0.0
  %2580 = vmatprep.subr.mxu0 0.0
  %2581 = vmatpush2.msra.mxu0 0.0
  %2582 = vmatprep.subr.mxu0 0.0
  %2583 = vmatpush2.msra.mxu0 0.0
  %2584 = vmatprep.subr.mxu0 0.0
  %2585 = vmatpush2.msra.mxu0 0.0
  %2586 = vmatprep.subr.mxu0 0.0
  %2587 = vmatpush2.msra.mxu0 0.0
  %2588 = vmatprep.subr.mxu0 0.0
  %2589 = vmatpush2.msra.mxu0 0.0
  %2590 = vmatprep.subr.mxu0 0.0
  %2591 = vmatpush2.msra.mxu0 0.0
  %2592 = vmatprep.subr.mxu0 0.0
  %2593 = vmatpush2.msra.mxu0 0.0
  %2594 = vmatprep.subr.mxu0 0.0
  %2595 = vmatpush2.msra.mxu0 0.0
  %2596 = vmatprep.subr.mxu0 0.0
  %2597 = vmatpush2.msra.mxu0 0.0
  %2598 = vmatprep.subr.mxu0 0.0
  %2599 = vmatpush2.msra.mxu0 0.0
  %2600 = vmatprep.subr.mxu0 0.0
  %2601 = vmatpush2.msra.mxu0 0.0
  %2602 = vmatprep.mubr.f32.mxu0 0.0
  %2603 = vmatmul.mubr.f32.gmra.mxu0 %v2533
  %v2604 = vpop.f32.mrf.mxu0
  %v2605 = vadd.f32 0.0, %v2604
  %v2606 = vpop.f32.mrf.mxu0
  %2607 = vmatprep.mubr.f32.mxu0 0.0
  %2608 = vmatmul.mubr.f32.gmra.mxu0 %v2536
  %v2609 = vpop.f32.mrf.mxu0
  %v2610 = vadd.f32 0.0, %v2609
  %v2611 = vpop.f32.mrf.mxu0
  %2612 = vdwg.mxu0
  %2613 = vst.msk [vmem:[#allocation3 + $0x10] sm:$0xff] %vm179, %v2605
  %2614 = vst.msk [vmem:[#allocation3 + $0x18] sm:$0xff] %vm179, %v2610
  %v2615 = vld [vmem:[#allocation3] sm:$0xff]
  %v2616 = vld [vmem:[#allocation3 + $0x8] sm:$0xff]
  %v2617 = vld [vmem:[#allocation3 + $0x10] sm:$0xff]
  %v2618 = vld [vmem:[#allocation3 + $0x18] sm:$0xff]
  %v2619 = vadd.f32 %v159, %v2615
  %v2620 = vadd.f32 %v164, %v2616
  %v2621 = vadd.f32 %v169, %v2617
  %v2622 = vadd.f32 %v174, %v2618
  %v2623 = vld [vmem:[%s8] sm:$0x1]
  %v2625 = vlaneseq
  %v2626 = vshrl.u32 %v2625, 7
  %v2627 = vsub.s32 0, %v2626
  %v2628 = vrot.slane %v2623, %v2627
  %v2630 = vadd.f32 %v2619, %v2628
  %v2631 = vadd.f32 %v2620, %v2628
  %v2632 = vadd.f32 %v2621, %v2628
  %v2633 = vadd.f32 %v2622, %v2628
  %v2634 = vld [vmem:[%s9] sm:$0x1]
  %v2635 = vld [vmem:[%s10] sm:$0x1]
  %v2636 = vsel %vm179, %v2630, 0.0
  %2637 = vadd.xlane.f32.xlu0 %v2636
  %v2638 = vpop.xlane.xlu0 %2637
  %v2639 = vsel %vm179, %v2631, 0.0
  %2640 = vadd.xlane.f32.xlu0 %v2639
  %v2641 = vpop.xlane.xlu0 %2640
  %v2642 = vsel %vm179, %v2632, 0.0
  %2643 = vadd.xlane.f32.xlu0 %v2642
  %v2644 = vpop.xlane.xlu0 %2643
  %v2645 = vsel %vm179, %v2633, 0.0
  %2646 = vadd.xlane.f32.xlu0 %v2645
  %v2647 = vpop.xlane.xlu0 %2646
  %v2648 = vmul.f32 %v2638, %v192
  %v2649 = vmul.f32 %v2641, %v192
  %v2650 = vmul.f32 %v2644, %v192
  %v2651 = vmul.f32 %v2647, %v192
  %v2652 = vsub.f32 %v2630, %v2648
  %v2653 = vsub.f32 %v2631, %v2649
  %v2654 = vsub.f32 %v2632, %v2650
  %v2655 = vsub.f32 %v2633, %v2651
  %v2656 = vmul.f32 %v2652, %v2652
  %v2657 = vmul.f32 %v2653, %v2653
  %v2658 = vmul.f32 %v2654, %v2654
  %v2659 = vmul.f32 %v2655, %v2655
  %v2660 = vsel %vm179, %v2656, 0.0
  %2661 = vadd.xlane.f32.xlu0 %v2660
  %v2662 = vpop.xlane.xlu0 %2661
  %v2663 = vsel %vm179, %v2657, 0.0
  %2664 = vadd.xlane.f32.xlu0 %v2663
  %v2665 = vpop.xlane.xlu0 %2664
  %v2666 = vsel %vm179, %v2658, 0.0
  %2667 = vadd.xlane.f32.xlu0 %v2666
  %v2668 = vpop.xlane.xlu0 %2667
  %v2669 = vsel %vm179, %v2659, 0.0
  %2670 = vadd.xlane.f32.xlu0 %v2669
  %v2671 = vpop.xlane.xlu0 %2670
  %v2672 = vmul.f32 %v2662, %v192
  %v2673 = vmul.f32 %v2665, %v192
  %v2674 = vmul.f32 %v2668, %v192
  %v2675 = vmul.f32 %v2671, %v192
  %v2676 = vadd.f32 %v2672, 1e-06
  %v2677 = vadd.f32 %v2673, 1e-06
  %v2678 = vadd.f32 %v2674, 1e-06
  %v2679 = vadd.f32 %v2675, 1e-06
  %v2680 = vrsqrt.pop %v2676
  %v2681 = vrsqrt.pop %v2677
  %v2682 = vrsqrt.pop %v2678
  %v2683 = vrsqrt.pop %v2679
  %v2684 = vmul.f32 %v2652, %v2680
  %v2685 = vmul.f32 %v2653, %v2681
  %v2686 = vmul.f32 %v2654, %v2682
  %v2687 = vmul.f32 %v2655, %v2683
  %v2689 = vlaneseq
  %v2690 = vshrl.u32 %v2689, 7
  %v2691 = vsub.s32 0, %v2690
  %v2692 = vrot.slane %v2634, %v2691
  %v2694 = vmul.f32 %v2684, %v2692
  %v2695 = vmul.f32 %v2685, %v2692
  %v2696 = vmul.f32 %v2686, %v2692
  %v2697 = vmul.f32 %v2687, %v2692
  %v2699 = vlaneseq
  %v2700 = vshrl.u32 %v2699, 7
  %v2701 = vsub.s32 0, %v2700
  %v2702 = vrot.slane %v2635, %v2701
  %v2704 = vadd.f32 %v2694, %v2702
  %v2705 = vadd.f32 %v2695, %v2702
  %v2706 = vadd.f32 %v2696, %v2702
  %v2707 = vadd.f32 %v2697, %v2702
  %v2708 = vld [vmem:[%s11] sm:$0xff]
  %v2709 = vld [vmem:[%s11 + $0x8] sm:$0xff]
  %v2710 = vld [vmem:[%s11 + $0x10] sm:$0xff]
  %v2711 = vld [vmem:[%s11 + $0x18] sm:$0xff]
  %v2712 = vld [vmem:[%s12] sm:$0x1]
  %v2714 = vlaneseq
  %v2715 = vshrl.u32 %v2714, 7
  %v2716 = vsub.s32 0, %v2715
  %v2717 = vrot.slane %v2712, %v2716
  %v2720 = vsel %vm179, %v2704, 0
  %v2723 = vsel %vm179, %v2705, 0
  %v2726 = vsel %vm179, %v2706, 0
  %v2729 = vsel %vm179, %v2707, 0
  %2731 = vmatprep.subr.mxu0 0.0
  %2732 = vmatpush1.msra.mxu0 0.0
  %2733 = vmatprep.subr.mxu0 0.0
  %2734 = vmatpush1.msra.mxu0 0.0
  %2735 = vmatprep.subr.mxu0 0.0
  %2736 = vmatpush1.msra.mxu0 0.0
  %2737 = vmatprep.subr.mxu0 0.0
  %2738 = vmatpush1.msra.mxu0 0.0
  %2739 = vmatprep.subr.mxu0 0.0
  %2740 = vmatpush1.msra.mxu0 0.0
  %2741 = vmatprep.subr.mxu0 0.0
  %2742 = vmatpush1.msra.mxu0 0.0
  %2743 = vmatprep.subr.mxu0 0.0
  %2744 = vmatpush1.msra.mxu0 0.0
  %2745 = vmatprep.subr.mxu0 0.0
  %2746 = vmatpush1.msra.mxu0 0.0
  %2747 = vmatprep.subr.mxu0 0.0
  %2748 = vmatpush1.msra.mxu0 0.0
  %2749 = vmatprep.subr.mxu0 0.0
  %2750 = vmatpush1.msra.mxu0 0.0
  %2751 = vmatprep.subr.mxu0 0.0
  %2752 = vmatpush1.msra.mxu0 0.0
  %2753 = vmatprep.subr.mxu0 0.0
  %2754 = vmatpush1.msra.mxu0 0.0
  %2755 = vmatprep.subr.mxu0 0.0
  %2756 = vmatpush1.msra.mxu0 %v2711
  %2757 = vmatprep.subr.mxu0 0.0
  %2758 = vmatpush1.msra.mxu0 %v2710
  %2759 = vmatprep.subr.mxu0 0.0
  %2760 = vmatpush1.msra.mxu0 %v2709
  %2761 = vmatprep.subr.mxu0 0.0
  %2762 = vmatpush1.msra.mxu0 %v2708
  %2763 = vmatprep.subr.mxu0 0.0
  %2764 = vmatpush2.msra.mxu0 0.0
  %2765 = vmatprep.subr.mxu0 0.0
  %2766 = vmatpush2.msra.mxu0 0.0
  %2767 = vmatprep.subr.mxu0 0.0
  %2768 = vmatpush2.msra.mxu0 0.0
  %2769 = vmatprep.subr.mxu0 0.0
  %2770 = vmatpush2.msra.mxu0 0.0
  %2771 = vmatprep.subr.mxu0 0.0
  %2772 = vmatpush2.msra.mxu0 0.0
  %2773 = vmatprep.subr.mxu0 0.0
  %2774 = vmatpush2.msra.mxu0 0.0
  %2775 = vmatprep.subr.mxu0 0.0
  %2776 = vmatpush2.msra.mxu0 0.0
  %2777 = vmatprep.subr.mxu0 0.0
  %2778 = vmatpush2.msra.mxu0 0.0
  %2779 = vmatprep.subr.mxu0 0.0
  %2780 = vmatpush2.msra.mxu0 0.0
  %2781 = vmatprep.subr.mxu0 0.0
  %2782 = vmatpush2.msra.mxu0 0.0
  %2783 = vmatprep.subr.mxu0 0.0
  %2784 = vmatpush2.msra.mxu0 0.0
  %2785 = vmatprep.subr.mxu0 0.0
  %2786 = vmatpush2.msra.mxu0 0.0
  %2787 = vmatprep.subr.mxu0 0.0
  %2788 = vmatpush2.msra.mxu0 0.0
  %2789 = vmatprep.subr.mxu0 0.0
  %2790 = vmatpush2.msra.mxu0 0.0
  %2791 = vmatprep.subr.mxu0 0.0
  %2792 = vmatpush2.msra.mxu0 0.0
  %2793 = vmatprep.subr.mxu0 0.0
  %2794 = vmatpush2.msra.mxu0 0.0
  %2795 = vmatprep.mubr.f32.mxu0 0.0
  %2796 = vmatmul.mubr.f32.gmra.mxu0 %v2720
  %v2797 = vpop.f32.mrf.mxu0
  %v2798 = vadd.f32 %v2717, %v2797
  %v2799 = vpop.f32.mrf.mxu0
  %2800 = vmatprep.mubr.f32.mxu0 0.0
  %2801 = vmatmul.mubr.f32.gmra.mxu0 %v2723
  %v2802 = vpop.f32.mrf.mxu0
  %v2803 = vadd.f32 %v2717, %v2802
  %v2804 = vpop.f32.mrf.mxu0
  %2805 = vmatprep.mubr.f32.mxu0 0.0
  %2806 = vmatmul.mubr.f32.gmra.mxu0 %v2726
  %v2807 = vpop.f32.mrf.mxu0
  %v2808 = vadd.f32 %v2717, %v2807
  %v2809 = vpop.f32.mrf.mxu0
  %2810 = vmatprep.mubr.f32.mxu0 0.0
  %2811 = vmatmul.mubr.f32.gmra.mxu0 %v2729
  %v2812 = vpop.f32.mrf.mxu0
  %v2813 = vadd.f32 %v2717, %v2812
  %v2814 = vpop.f32.mrf.mxu0
  %2815 = vdwg.mxu0
  %v2816 = vmul.f32 %v2798, 0.5
  %v2817 = vmul.f32 %v2803, 0.5
  %v2818 = vmul.f32 %v2808, 0.5
  %v2819 = vmul.f32 %v2813, 0.5
  %v2820 = vmul.f32 %v2798, 0.044715
  %v2821 = vmul.f32 %v2803, 0.044715
  %v2822 = vmul.f32 %v2808, 0.044715
  %v2823 = vmul.f32 %v2813, 0.044715
  %v2824 = vmul.f32 %v2820, %v2798
  %v2825 = vmul.f32 %v2821, %v2803
  %v2826 = vmul.f32 %v2822, %v2808
  %v2827 = vmul.f32 %v2823, %v2813
  %v2828 = vmul.f32 %v2824, %v2798
  %v2829 = vmul.f32 %v2825, %v2803
  %v2830 = vmul.f32 %v2826, %v2808
  %v2831 = vmul.f32 %v2827, %v2813
  %v2832 = vadd.f32 %v2798, %v2828
  %v2833 = vadd.f32 %v2803, %v2829
  %v2834 = vadd.f32 %v2808, %v2830
  %v2835 = vadd.f32 %v2813, %v2831
  %v2836 = vmul.f32 %v2832, 0.7978846
  %v2837 = vmul.f32 %v2833, 0.7978846
  %v2838 = vmul.f32 %v2834, 0.7978846
  %v2839 = vmul.f32 %v2835, 0.7978846
  %v2840 = vtanh.pop %v2836
  %v2841 = vtanh.pop %v2837
  %v2842 = vtanh.pop %v2838
  %v2843 = vtanh.pop %v2839
  %v2844 = vadd.f32 %v2840, 1.0
  %v2845 = vadd.f32 %v2841, 1.0
  %v2846 = vadd.f32 %v2842, 1.0
  %v2847 = vadd.f32 %v2843, 1.0
  %v2848 = vmul.f32 %v2816, %v2844
  %v2849 = vmul.f32 %v2817, %v2845
  %v2850 = vmul.f32 %v2818, %v2846
  %v2851 = vmul.f32 %v2819, %v2847
  %v2852 = vld [vmem:[%s13] sm:$0xff]
  %v2853 = vld [vmem:[%s13 + $0x8] sm:$0xff]
  %v2854 = vld [vmem:[%s13 + $0x10] sm:$0xff]
  %v2855 = vld [vmem:[%s13 + $0x18] sm:$0xff]
  %v2856 = vld [vmem:[%s13 + $0x20] sm:$0xff]
  %v2857 = vld [vmem:[%s13 + $0x28] sm:$0xff]
  %v2858 = vld [vmem:[%s13 + $0x30] sm:$0xff]
  %v2859 = vld [vmem:[%s13 + $0x38] sm:$0xff]
  %v2860 = vld [vmem:[%s14] sm:$0x1]
  %v2862 = vlaneseq
  %v2863 = vshrl.u32 %v2862, 7
  %v2864 = vsub.s32 0, %v2863
  %v2865 = vrot.slane %v2860, %v2864
  %vm2867 = vcmask 523264
  %v2869 = vsel %vm2867, %v2848, 0
  %v2872 = vsel %vm2867, %v2849, 0
  %v2875 = vsel %vm2867, %v2850, 0
  %v2878 = vsel %vm2867, %v2851, 0
  %2880 = vmatprep.subr.mxu0 0.0
  %2881 = vmatpush1.msra.mxu0 0.0
  %2882 = vmatprep.subr.mxu0 0.0
  %2883 = vmatpush1.msra.mxu0 0.0
  %2884 = vmatprep.subr.mxu0 0.0
  %2885 = vmatpush1.msra.mxu0 0.0
  %2886 = vmatprep.subr.mxu0 0.0
  %2887 = vmatpush1.msra.mxu0 0.0
  %2888 = vmatprep.subr.mxu0 0.0
  %2889 = vmatpush1.msra.mxu0 0.0
  %2890 = vmatprep.subr.mxu0 0.0
  %2891 = vmatpush1.msra.mxu0 0.0
  %2892 = vmatprep.subr.mxu0 0.0
  %2893 = vmatpush1.msra.mxu0 0.0
  %2894 = vmatprep.subr.mxu0 0.0
  %2895 = vmatpush1.msra.mxu0 0.0
  %2896 = vmatprep.subr.mxu0 0.0
  %2897 = vmatpush1.msra.mxu0 %v2859
  %2898 = vmatprep.subr.mxu0 0.0
  %2899 = vmatpush1.msra.mxu0 %v2858
  %2900 = vmatprep.subr.mxu0 0.0
  %2901 = vmatpush1.msra.mxu0 %v2857
  %2902 = vmatprep.subr.mxu0 0.0
  %2903 = vmatpush1.msra.mxu0 %v2856
  %2904 = vmatprep.subr.mxu0 0.0
  %2905 = vmatpush1.msra.mxu0 %v2855
  %2906 = vmatprep.subr.mxu0 0.0
  %2907 = vmatpush1.msra.mxu0 %v2854
  %2908 = vmatprep.subr.mxu0 0.0
  %2909 = vmatpush1.msra.mxu0 %v2853
  %2910 = vmatprep.subr.mxu0 0.0
  %2911 = vmatpush1.msra.mxu0 %v2852
  %2912 = vmatprep.subr.mxu0 0.0
  %2913 = vmatpush2.msra.mxu0 0.0
  %2914 = vmatprep.subr.mxu0 0.0
  %2915 = vmatpush2.msra.mxu0 0.0
  %2916 = vmatprep.subr.mxu0 0.0
  %2917 = vmatpush2.msra.mxu0 0.0
  %2918 = vmatprep.subr.mxu0 0.0
  %2919 = vmatpush2.msra.mxu0 0.0
  %2920 = vmatprep.subr.mxu0 0.0
  %2921 = vmatpush2.msra.mxu0 0.0
  %2922 = vmatprep.subr.mxu0 0.0
  %2923 = vmatpush2.msra.mxu0 0.0
  %2924 = vmatprep.subr.mxu0 0.0
  %2925 = vmatpush2.msra.mxu0 0.0
  %2926 = vmatprep.subr.mxu0 0.0
  %2927 = vmatpush2.msra.mxu0 0.0
  %2928 = vmatprep.subr.mxu0 0.0
  %2929 = vmatpush2.msra.mxu0 0.0
  %2930 = vmatprep.subr.mxu0 0.0
  %2931 = vmatpush2.msra.mxu0 0.0
  %2932 = vmatprep.subr.mxu0 0.0
  %2933 = vmatpush2.msra.mxu0 0.0
  %2934 = vmatprep.subr.mxu0 0.0
  %2935 = vmatpush2.msra.mxu0 0.0
  %2936 = vmatprep.subr.mxu0 0.0
  %2937 = vmatpush2.msra.mxu0 0.0
  %2938 = vmatprep.subr.mxu0 0.0
  %2939 = vmatpush2.msra.mxu0 0.0
  %2940 = vmatprep.subr.mxu0 0.0
  %2941 = vmatpush2.msra.mxu0 0.0
  %2942 = vmatprep.subr.mxu0 0.0
  %2943 = vmatpush2.msra.mxu0 0.0
  %2944 = vmatprep.mubr.f32.mxu0 0.0
  %2945 = vmatmul.mubr.f32.gmra.mxu0 %v2869
  %v2946 = vpop.f32.mrf.mxu0
  %v2947 = vadd.f32 %v2865, %v2946
  %v2948 = vpop.f32.mrf.mxu0
  %2949 = vmatprep.mubr.f32.mxu0 0.0
  %2950 = vmatmul.mubr.f32.gmra.mxu0 %v2872
  %v2951 = vpop.f32.mrf.mxu0
  %v2952 = vadd.f32 %v2865, %v2951
  %v2953 = vpop.f32.mrf.mxu0
  %2954 = vmatprep.mubr.f32.mxu0 0.0
  %2955 = vmatmul.mubr.f32.gmra.mxu0 %v2875
  %v2956 = vpop.f32.mrf.mxu0
  %v2957 = vadd.f32 %v2865, %v2956
  %v2958 = vpop.f32.mrf.mxu0
  %2959 = vmatprep.mubr.f32.mxu0 0.0
  %2960 = vmatmul.mubr.f32.gmra.mxu0 %v2878
  %v2961 = vpop.f32.mrf.mxu0
  %v2962 = vadd.f32 %v2865, %v2961
  %v2963 = vpop.f32.mrf.mxu0
  %2964 = vdwg.mxu0
  %v2965 = vadd.f32 %v2630, %v2947
  %v2966 = vadd.f32 %v2631, %v2952
  %v2967 = vadd.f32 %v2632, %v2957
  %v2968 = vadd.f32 %v2633, %v2962
  %s2969 = scalar_lea.vmem %s3, 1
  %v2970 = vld [vmem:[%s2969] sm:$0x1]
  %s2971 = scalar_lea.vmem %s4, 1
  %v2972 = vld [vmem:[%s2971] sm:$0x1]
  %v2973 = vsel %vm179, %v2965, 0.0
  %2974 = vadd.xlane.f32.xlu0 %v2973
  %v2975 = vpop.xlane.xlu0 %2974
  %v2976 = vsel %vm179, %v2966, 0.0
  %2977 = vadd.xlane.f32.xlu0 %v2976
  %v2978 = vpop.xlane.xlu0 %2977
  %v2979 = vsel %vm179, %v2967, 0.0
  %2980 = vadd.xlane.f32.xlu0 %v2979
  %v2981 = vpop.xlane.xlu0 %2980
  %v2982 = vsel %vm179, %v2968, 0.0
  %2983 = vadd.xlane.f32.xlu0 %v2982
  %v2984 = vpop.xlane.xlu0 %2983
  %v2985 = vmul.f32 %v2975, %v192
  %v2986 = vmul.f32 %v2978, %v192
  %v2987 = vmul.f32 %v2981, %v192
  %v2988 = vmul.f32 %v2984, %v192
  %v2989 = vsub.f32 %v2965, %v2985
  %v2990 = vsub.f32 %v2966, %v2986
  %v2991 = vsub.f32 %v2967, %v2987
  %v2992 = vsub.f32 %v2968, %v2988
  %v2993 = vmul.f32 %v2989, %v2989
  %v2994 = vmul.f32 %v2990, %v2990
  %v2995 = vmul.f32 %v2991, %v2991
  %v2996 = vmul.f32 %v2992, %v2992
  %v2997 = vsel %vm179, %v2993, 0.0
  %2998 = vadd.xlane.f32.xlu0 %v2997
  %v2999 = vpop.xlane.xlu0 %2998
  %v3000 = vsel %vm179, %v2994, 0.0
  %3001 = vadd.xlane.f32.xlu0 %v3000
  %v3002 = vpop.xlane.xlu0 %3001
  %v3003 = vsel %vm179, %v2995, 0.0
  %3004 = vadd.xlane.f32.xlu0 %v3003
  %v3005 = vpop.xlane.xlu0 %3004
  %v3006 = vsel %vm179, %v2996, 0.0
  %3007 = vadd.xlane.f32.xlu0 %v3006
  %v3008 = vpop.xlane.xlu0 %3007
  %v3009 = vmul.f32 %v2999, %v192
  %v3010 = vmul.f32 %v3002, %v192
  %v3011 = vmul.f32 %v3005, %v192
  %v3012 = vmul.f32 %v3008, %v192
  %v3013 = vadd.f32 %v3009, 1e-06
  %v3014 = vadd.f32 %v3010, 1e-06
  %v3015 = vadd.f32 %v3011, 1e-06
  %v3016 = vadd.f32 %v3012, 1e-06
  %v3017 = vrsqrt.pop %v3013
  %v3018 = vrsqrt.pop %v3014
  %v3019 = vrsqrt.pop %v3015
  %v3020 = vrsqrt.pop %v3016
  %v3021 = vmul.f32 %v2989, %v3017
  %v3022 = vmul.f32 %v2990, %v3018
  %v3023 = vmul.f32 %v2991, %v3019
  %v3024 = vmul.f32 %v2992, %v3020
  %v3026 = vlaneseq
  %v3027 = vshrl.u32 %v3026, 7
  %v3028 = vsub.s32 0, %v3027
  %v3029 = vrot.slane %v2970, %v3028
  %v3031 = vmul.f32 %v3021, %v3029
  %v3032 = vmul.f32 %v3022, %v3029
  %v3033 = vmul.f32 %v3023, %v3029
  %v3034 = vmul.f32 %v3024, %v3029
  %v3036 = vlaneseq
  %v3037 = vshrl.u32 %v3036, 7
  %v3038 = vsub.s32 0, %v3037
  %v3039 = vrot.slane %v2972, %v3038
  %v3041 = vadd.f32 %v3031, %v3039
  %v3042 = vadd.f32 %v3032, %v3039
  %v3043 = vadd.f32 %v3033, %v3039
  %v3044 = vadd.f32 %v3034, %v3039
  %s3045 = scalar_lea.vmem %s5, 96
  %v3046 = vld [vmem:[%s3045] sm:$0xff]
  %v3047 = vld [vmem:[%s3045 + $0x8] sm:$0xff]
  %v3048 = vld [vmem:[%s3045 + $0x10] sm:$0xff]
  %v3049 = vld [vmem:[%s3045 + $0x18] sm:$0xff]
  %v3050 = vld [vmem:[%s3045 + $0x20] sm:$0xff]
  %v3051 = vld [vmem:[%s3045 + $0x28] sm:$0xff]
  %v3052 = vld [vmem:[%s3045 + $0x30] sm:$0xff]
  %v3053 = vld [vmem:[%s3045 + $0x38] sm:$0xff]
  %v3054 = vld [vmem:[%s3045 + $0x40] sm:$0xff]
  %v3055 = vld [vmem:[%s3045 + $0x48] sm:$0xff]
  %v3056 = vld [vmem:[%s3045 + $0x50] sm:$0xff]
  %v3057 = vld [vmem:[%s3045 + $0x58] sm:$0xff]
  %s3058 = scalar_lea.vmem %s6, 96
  %v3059 = vld [vmem:[%s3058] sm:$0xff]
  %v3060 = vld [vmem:[%s3058 + $0x8] sm:$0xff]
  %v3061 = vld [vmem:[%s3058 + $0x10] sm:$0xff]
  %v3062 = vld [vmem:[%s3058 + $0x18] sm:$0xff]
  %v3063 = vld [vmem:[%s3058 + $0x20] sm:$0xff]
  %v3064 = vld [vmem:[%s3058 + $0x28] sm:$0xff]
  %v3065 = vld [vmem:[%s3058 + $0x30] sm:$0xff]
  %v3066 = vld [vmem:[%s3058 + $0x38] sm:$0xff]
  %v3067 = vld [vmem:[%s3058 + $0x40] sm:$0xff]
  %v3068 = vld [vmem:[%s3058 + $0x48] sm:$0xff]
  %v3069 = vld [vmem:[%s3058 + $0x50] sm:$0xff]
  %v3070 = vld [vmem:[%s3058 + $0x58] sm:$0xff]
  %s3071 = scalar_lea.vmem %s7, 32
  %v3072 = vld [vmem:[%s3071] sm:$0xff]
  %v3073 = vld [vmem:[%s3071 + $0x8] sm:$0xff]
  %v3074 = vld [vmem:[%s3071 + $0x10] sm:$0xff]
  %v3075 = vld [vmem:[%s3071 + $0x18] sm:$0xff]
  %3077 = vset.pattern.permute.xlu0 0
  %3078 = vperm.xlu0 %3077, %v3059
  %v3079 = vpop.permute.xlu0 %3078
  %3082 = vset.pattern.permute.xlu0 0
  %3083 = vperm.xlu0 %3082, %v3060
  %v3084 = vpop.permute.xlu0 %3083
  %3087 = vset.pattern.permute.xlu0 0
  %3088 = vperm.xlu0 %3087, %v3061
  %v3089 = vpop.permute.xlu0 %3088
  %3092 = vset.pattern.permute.xlu0 0
  %3093 = vperm.xlu0 %3092, %v3062
  %v3094 = vpop.permute.xlu0 %3093
  %3097 = vset.pattern.permute.xlu0 0
  %3098 = vperm.xlu0 %3097, %v3063
  %v3099 = vpop.permute.xlu0 %3098
  %3102 = vset.pattern.permute.xlu0 0
  %3103 = vperm.xlu0 %3102, %v3064
  %v3104 = vpop.permute.xlu0 %3103
  %3107 = vset.pattern.permute.xlu0 0
  %3108 = vperm.xlu0 %3107, %v3065
  %v3109 = vpop.permute.xlu0 %3108
  %3112 = vset.pattern.permute.xlu0 0
  %3113 = vperm.xlu0 %3112, %v3066
  %v3114 = vpop.permute.xlu0 %3113
  %3117 = vset.pattern.permute.xlu0 0
  %3118 = vperm.xlu0 %3117, %v3067
  %v3119 = vpop.permute.xlu0 %3118
  %3122 = vset.pattern.permute.xlu0 0
  %3123 = vperm.xlu0 %3122, %v3068
  %v3124 = vpop.permute.xlu0 %3123
  %3127 = vset.pattern.permute.xlu0 0
  %3128 = vperm.xlu0 %3127, %v3069
  %v3129 = vpop.permute.xlu0 %3128
  %3132 = vset.pattern.permute.xlu0 0
  %3133 = vperm.xlu0 %3132, %v3070
  %v3134 = vpop.permute.xlu0 %3133
  %v3137 = vsel %vm179, %v3046, 0
  %v3140 = vsel %vm179, %v3047, 0
  %v3143 = vsel %vm179, %v3048, 0
  %v3146 = vsel %vm179, %v3049, 0
  %v3149 = vsel %vm179, %v3050, 0
  %v3152 = vsel %vm179, %v3051, 0
  %v3155 = vsel %vm179, %v3052, 0
  %v3158 = vsel %vm179, %v3053, 0
  %v3161 = vsel %vm179, %v3054, 0
  %v3164 = vsel %vm179, %v3055, 0
  %v3167 = vsel %vm179, %v3056, 0
  %v3170 = vsel %vm179, %v3057, 0
  %v3173 = vsel %vm179, %v3041, 0
  %v3176 = vsel %vm179, %v3042, 0
  %3178 = vmatprep.subr.mxu0 0.0
  %3179 = vmatpush1.xpose.msra.mxu0 0.0
  %3180 = vmatprep.subr.mxu0 0.0
  %3181 = vmatpush1.xpose.msra.mxu0 0.0
  %3182 = vmatprep.subr.mxu0 0.0
  %3183 = vmatpush1.xpose.msra.mxu0 0.0
  %3184 = vmatprep.subr.mxu0 0.0
  %3185 = vmatpush1.xpose.msra.mxu0 0.0
  %3186 = vmatprep.subr.mxu0 0.0
  %3187 = vmatpush1.xpose.msra.mxu0 0.0
  %3188 = vmatprep.subr.mxu0 0.0
  %3189 = vmatpush1.xpose.msra.mxu0 0.0
  %3190 = vmatprep.subr.mxu0 0.0
  %3191 = vmatpush1.xpose.msra.mxu0 0.0
  %3192 = vmatprep.subr.mxu0 0.0
  %3193 = vmatpush1.xpose.msra.mxu0 0.0
  %3194 = vmatprep.subr.mxu0 0.0
  %3195 = vmatpush1.xpose.msra.mxu0 0.0
  %3196 = vmatprep.subr.mxu0 0.0
  %3197 = vmatpush1.xpose.msra.mxu0 0.0
  %3198 = vmatprep.subr.mxu0 0.0
  %3199 = vmatpush1.xpose.msra.mxu0 0.0
  %3200 = vmatprep.subr.mxu0 0.0
  %3201 = vmatpush1.xpose.msra.mxu0 0.0
  %3202 = vmatprep.subr.mxu0 0.0
  %3203 = vmatpush1.xpose.msra.mxu0 0.0
  %3204 = vmatprep.subr.mxu0 0.0
  %3205 = vmatpush1.xpose.msra.mxu0 0.0
  %3206 = vmatprep.subr.mxu0 0.0
  %3207 = vmatpush1.xpose.msra.mxu0 %v3176
  %3208 = vmatprep.subr.mxu0 0.0
  %3209 = vmatpush1.xpose.msra.mxu0 %v3173
  %3210 = vmatprep.subr.mxu0 0.0
  %3211 = vmatpush2.xpose.msra.mxu0 0.0
  %3212 = vmatprep.subr.mxu0 0.0
  %3213 = vmatpush2.xpose.msra.mxu0 0.0
  %3214 = vmatprep.subr.mxu0 0.0
  %3215 = vmatpush2.xpose.msra.mxu0 0.0
  %3216 = vmatprep.subr.mxu0 0.0
  %3217 = vmatpush2.xpose.msra.mxu0 0.0
  %3218 = vmatprep.subr.mxu0 0.0
  %3219 = vmatpush2.xpose.msra.mxu0 0.0
  %3220 = vmatprep.subr.mxu0 0.0
  %3221 = vmatpush2.xpose.msra.mxu0 0.0
  %3222 = vmatprep.subr.mxu0 0.0
  %3223 = vmatpush2.xpose.msra.mxu0 0.0
  %3224 = vmatprep.subr.mxu0 0.0
  %3225 = vmatpush2.xpose.msra.mxu0 0.0
  %3226 = vmatprep.subr.mxu0 0.0
  %3227 = vmatpush2.xpose.msra.mxu0 0.0
  %3228 = vmatprep.subr.mxu0 0.0
  %3229 = vmatpush2.xpose.msra.mxu0 0.0
  %3230 = vmatprep.subr.mxu0 0.0
  %3231 = vmatpush2.xpose.msra.mxu0 0.0
  %3232 = vmatprep.subr.mxu0 0.0
  %3233 = vmatpush2.xpose.msra.mxu0 0.0
  %3234 = vmatprep.subr.mxu0 0.0
  %3235 = vmatpush2.xpose.msra.mxu0 0.0
  %3236 = vmatprep.subr.mxu0 0.0
  %3237 = vmatpush2.xpose.msra.mxu0 0.0
  %3238 = vmatprep.subr.mxu0 0.0
  %3239 = vmatpush2.xpose.msra.mxu0 0.0
  %3240 = vmatprep.subr.mxu0 0.0
  %3241 = vmatpush2.xpose.msra.mxu0 0.0
  %3242 = vmatprep.mubr.f32.mxu0 0.0
  %3243 = vmatmul.mubr.f32.gmra.mxu0 %v3137
  %v3244 = vpop.f32.mrf.mxu0
  %v3245 = vadd.f32 %v3079, %v3244
  %v3246 = vpop.f32.mrf.mxu0
  %3247 = vmatprep.mubr.f32.mxu0 0.0
  %3248 = vmatmul.mubr.f32.gmra.mxu0 %v3140
  %v3249 = vpop.f32.mrf.mxu0
  %v3250 = vadd.f32 %v3084, %v3249
  %v3251 = vpop.f32.mrf.mxu0
  %3252 = vmatprep.mubr.f32.mxu0 0.0
  %3253 = vmatmul.mubr.f32.gmra.mxu0 %v3143
  %v3254 = vpop.f32.mrf.mxu0
  %v3255 = vadd.f32 %v3089, %v3254
  %v3256 = vpop.f32.mrf.mxu0
  %3257 = vmatprep.mubr.f32.mxu0 0.0
  %3258 = vmatmul.mubr.f32.gmra.mxu0 %v3146
  %v3259 = vpop.f32.mrf.mxu0
  %v3260 = vadd.f32 %v3094, %v3259
  %v3261 = vpop.f32.mrf.mxu0
  %3262 = vmatprep.mubr.f32.mxu0 0.0
  %3263 = vmatmul.mubr.f32.gmra.mxu0 %v3149
  %v3264 = vpop.f32.mrf.mxu0
  %v3265 = vadd.f32 %v3099, %v3264
  %v3266 = vpop.f32.mrf.mxu0
  %3267 = vmatprep.mubr.f32.mxu0 0.0
  %3268 = vmatmul.mubr.f32.gmra.mxu0 %v3152
  %v3269 = vpop.f32.mrf.mxu0
  %v3270 = vadd.f32 %v3104, %v3269
  %v3271 = vpop.f32.mrf.mxu0
  %3272 = vmatprep.mubr.f32.mxu0 0.0
  %3273 = vmatmul.mubr.f32.gmra.mxu0 %v3155
  %v3274 = vpop.f32.mrf.mxu0
  %v3275 = vadd.f32 %v3109, %v3274
  %v3276 = vpop.f32.mrf.mxu0
  %3277 = vmatprep.mubr.f32.mxu0 0.0
  %3278 = vmatmul.mubr.f32.gmra.mxu0 %v3158
  %v3279 = vpop.f32.mrf.mxu0
  %v3280 = vadd.f32 %v3114, %v3279
  %v3281 = vpop.f32.mrf.mxu0
  %3282 = vmatprep.mubr.f32.mxu0 0.0
  %3283 = vmatmul.mubr.f32.gmra.mxu0 %v3161
  %v3284 = vpop.f32.mrf.mxu0
  %v3285 = vadd.f32 %v3119, %v3284
  %v3286 = vpop.f32.mrf.mxu0
  %3287 = vmatprep.mubr.f32.mxu0 0.0
  %3288 = vmatmul.mubr.f32.gmra.mxu0 %v3164
  %v3289 = vpop.f32.mrf.mxu0
  %v3290 = vadd.f32 %v3124, %v3289
  %v3291 = vpop.f32.mrf.mxu0
  %3292 = vmatprep.mubr.f32.mxu0 0.0
  %3293 = vmatmul.mubr.f32.gmra.mxu0 %v3167
  %v3294 = vpop.f32.mrf.mxu0
  %v3295 = vadd.f32 %v3129, %v3294
  %v3296 = vpop.f32.mrf.mxu0
  %3297 = vmatprep.mubr.f32.mxu0 0.0
  %3298 = vmatmul.mubr.f32.gmra.mxu0 %v3170
  %v3299 = vpop.f32.mrf.mxu0
  %v3300 = vadd.f32 %v3134, %v3299
  %v3301 = vpop.f32.mrf.mxu0
  %3302 = vdwg.mxu0
  %3303 = vxpose.xlu0.b32.start [1/16] %v3245, 128
  %3304 = vxpose.xlu0.b32.cont [2/16] 0.0, 128
  %3305 = vxpose.xlu0.b32.cont [3/16] 0.0, 128
  %3306 = vxpose.xlu0.b32.cont [4/16] 0.0, 128
  %3307 = vxpose.xlu0.b32.cont [5/16] 0.0, 128
  %3308 = vxpose.xlu0.b32.cont [6/16] 0.0, 128
  %3309 = vxpose.xlu0.b32.cont [7/16] 0.0, 128
  %3310 = vxpose.xlu0.b32.cont [8/16] 0.0, 128
  %3311 = vxpose.xlu0.b32.cont [9/16] 0.0, 128
  %3312 = vxpose.xlu0.b32.cont [10/16] 0.0, 128
  %3313 = vxpose.xlu0.b32.cont [11/16] 0.0, 128
  %3314 = vxpose.xlu0.b32.cont [12/16] 0.0, 128
  %3315 = vxpose.xlu0.b32.cont [13/16] 0.0, 128
  %3316 = vxpose.xlu0.b32.cont [14/16] 0.0, 128
  %3317 = vxpose.xlu0.b32.cont [15/16] 0.0, 128
  %3318 = vxpose.xlu0.b32.end [16/16] 0.0, 128
  %v3319 = vpop.trf.xlu0
  %v3320 = vpop.trf.xlu0
  %v3321 = vpop.trf.xlu0
  %v3322 = vpop.trf.xlu0
  %v3323 = vpop.trf.xlu0
  %v3324 = vpop.trf.xlu0
  %v3325 = vpop.trf.xlu0
  %v3326 = vpop.trf.xlu0
  %v3327 = vpop.trf.xlu0
  %v3328 = vpop.trf.xlu0
  %v3329 = vpop.trf.xlu0
  %v3330 = vpop.trf.xlu0
  %v3331 = vpop.trf.xlu0
  %v3332 = vpop.trf.xlu0
  %v3333 = vpop.trf.xlu0
  %v3334 = vpop.trf.xlu0
  %v3336 = vsel %vm540, %v3319, 0
  %v3339 = vsel %vm540, %v3320, 0
  %3341 = vmatprep.subr.mxu0 0.0
  %3342 = vmatpush1.msra.mxu0 0.0
  %3343 = vmatprep.subr.mxu0 0.0
  %3344 = vmatpush1.msra.mxu0 0.0
  %3345 = vmatprep.subr.mxu0 0.0
  %3346 = vmatpush1.msra.mxu0 0.0
  %3347 = vmatprep.subr.mxu0 0.0
  %3348 = vmatpush1.msra.mxu0 0.0
  %3349 = vmatprep.subr.mxu0 0.0
  %3350 = vmatpush1.msra.mxu0 0.0
  %3351 = vmatprep.subr.mxu0 0.0
  %3352 = vmatpush1.msra.mxu0 0.0
  %3353 = vmatprep.subr.mxu0 0.0
  %3354 = vmatpush1.msra.mxu0 0.0
  %3355 = vmatprep.subr.mxu0 0.0
  %3356 = vmatpush1.msra.mxu0 0.0
  %3357 = vmatprep.subr.mxu0 0.0
  %3358 = vmatpush1.msra.mxu0 0.0
  %3359 = vmatprep.subr.mxu0 0.0
  %3360 = vmatpush1.msra.mxu0 0.0
  %3361 = vmatprep.subr.mxu0 0.0
  %3362 = vmatpush1.msra.mxu0 0.0
  %3363 = vmatprep.subr.mxu0 0.0
  %3364 = vmatpush1.msra.mxu0 0.0
  %3365 = vmatprep.subr.mxu0 0.0
  %3366 = vmatpush1.msra.mxu0 0.0
  %3367 = vmatprep.subr.mxu0 0.0
  %3368 = vmatpush1.msra.mxu0 0.0
  %3369 = vmatprep.subr.mxu0 0.0
  %3370 = vmatpush1.msra.mxu0 0.0
  %3371 = vmatprep.subr.mxu0 0.0
  %3372 = vmatpush1.msra.mxu0 %v3265
  %3373 = vmatprep.subr.mxu0 0.0
  %3374 = vmatpush2.msra.mxu0 0.0
  %3375 = vmatprep.subr.mxu0 0.0
  %3376 = vmatpush2.msra.mxu0 0.0
  %3377 = vmatprep.subr.mxu0 0.0
  %3378 = vmatpush2.msra.mxu0 0.0
  %3379 = vmatprep.subr.mxu0 0.0
  %3380 = vmatpush2.msra.mxu0 0.0
  %3381 = vmatprep.subr.mxu0 0.0
  %3382 = vmatpush2.msra.mxu0 0.0
  %3383 = vmatprep.subr.mxu0 0.0
  %3384 = vmatpush2.msra.mxu0 0.0
  %3385 = vmatprep.subr.mxu0 0.0
  %3386 = vmatpush2.msra.mxu0 0.0
  %3387 = vmatprep.subr.mxu0 0.0
  %3388 = vmatpush2.msra.mxu0 0.0
  %3389 = vmatprep.subr.mxu0 0.0
  %3390 = vmatpush2.msra.mxu0 0.0
  %3391 = vmatprep.subr.mxu0 0.0
  %3392 = vmatpush2.msra.mxu0 0.0
  %3393 = vmatprep.subr.mxu0 0.0
  %3394 = vmatpush2.msra.mxu0 0.0
  %3395 = vmatprep.subr.mxu0 0.0
  %3396 = vmatpush2.msra.mxu0 0.0
  %3397 = vmatprep.subr.mxu0 0.0
  %3398 = vmatpush2.msra.mxu0 0.0
  %3399 = vmatprep.subr.mxu0 0.0
  %3400 = vmatpush2.msra.mxu0 0.0
  %3401 = vmatprep.subr.mxu0 0.0
  %3402 = vmatpush2.msra.mxu0 0.0
  %3403 = vmatprep.subr.mxu0 0.0
  %3404 = vmatpush2.msra.mxu0 0.0
  %3405 = vmatprep.mubr.f32.mxu0 0.0
  %3406 = vmatmul.mubr.f32.gmra.mxu0 %v3336
  %v3407 = vpop.f32.mrf.mxu0
  %v3408 = vadd.f32 0.0, %v3407
  %v3409 = vpop.f32.mrf.mxu0
  %3410 = vmatprep.mubr.f32.mxu0 0.0
  %3411 = vmatmul.mubr.f32.gmra.mxu0 %v3339
  %v3412 = vpop.f32.mrf.mxu0
  %v3413 = vadd.f32 0.0, %v3412
  %v3414 = vpop.f32.mrf.mxu0
  %3415 = vdwg.mxu0
  %v3416 = vmul.f32 %v3408, 0.35355338
  %v3417 = vmul.f32 %v3413, 0.35355338
  %v3418 = vsel %vm624, %v3416, -inf
  %3419 = vmax.xlane.f32.xlu0 %v3418
  %v3420 = vpop.xlane.xlu0 %3419
  %v3421 = vsel %vm624, %v3417, -inf
  %3422 = vmax.xlane.f32.xlu0 %v3421
  %v3423 = vpop.xlane.xlu0 %3422
  %v3424 = vsub.f32 %v3416, %v3420
  %v3425 = vsub.f32 %v3417, %v3423
  %v3426 = vmul.f32 %v3424, 1.442695
  %v3427 = vpow.pop %v3426
  %v3428 = vmul.f32 %v3425, 1.442695
  %v3429 = vpow.pop %v3428
  %v3430 = vsel %vm624, %v3427, 0.0
  %3431 = vadd.xlane.f32.xlu0 %v3430
  %v3432 = vpop.xlane.xlu0 %3431
  %v3433 = vsel %vm624, %v3429, 0.0
  %3434 = vadd.xlane.f32.xlu0 %v3433
  %v3435 = vpop.xlane.xlu0 %3434
  %v3436 = vrcp.pop %v3432
  %v3437 = vrcp.pop %v3435
  %v3438 = vmul.f32 %v3427, %v3436
  %v3439 = vmul.f32 %v3429, %v3437
  %v3441 = vsel %vm624, %v3285, 0
  %v3444 = vsel %vm624, %v3438, 0
  %v3447 = vsel %vm624, %v3439, 0
  %3449 = vmatprep.subr.mxu0 0.0
  %3450 = vmatpush1.xpose.msra.mxu0 0.0
  %3451 = vmatprep.subr.mxu0 0.0
  %3452 = vmatpush1.xpose.msra.mxu0 0.0
  %3453 = vmatprep.subr.mxu0 0.0
  %3454 = vmatpush1.xpose.msra.mxu0 0.0
  %3455 = vmatprep.subr.mxu0 0.0
  %3456 = vmatpush1.xpose.msra.mxu0 0.0
  %3457 = vmatprep.subr.mxu0 0.0
  %3458 = vmatpush1.xpose.msra.mxu0 0.0
  %3459 = vmatprep.subr.mxu0 0.0
  %3460 = vmatpush1.xpose.msra.mxu0 0.0
  %3461 = vmatprep.subr.mxu0 0.0
  %3462 = vmatpush1.xpose.msra.mxu0 0.0
  %3463 = vmatprep.subr.mxu0 0.0
  %3464 = vmatpush1.xpose.msra.mxu0 0.0
  %3465 = vmatprep.subr.mxu0 0.0
  %3466 = vmatpush1.xpose.msra.mxu0 0.0
  %3467 = vmatprep.subr.mxu0 0.0
  %3468 = vmatpush1.xpose.msra.mxu0 0.0
  %3469 = vmatprep.subr.mxu0 0.0
  %3470 = vmatpush1.xpose.msra.mxu0 0.0
  %3471 = vmatprep.subr.mxu0 0.0
  %3472 = vmatpush1.xpose.msra.mxu0 0.0
  %3473 = vmatprep.subr.mxu0 0.0
  %3474 = vmatpush1.xpose.msra.mxu0 0.0
  %3475 = vmatprep.subr.mxu0 0.0
  %3476 = vmatpush1.xpose.msra.mxu0 0.0
  %3477 = vmatprep.subr.mxu0 0.0
  %3478 = vmatpush1.xpose.msra.mxu0 %v3447
  %3479 = vmatprep.subr.mxu0 0.0
  %3480 = vmatpush1.xpose.msra.mxu0 %v3444
  %3481 = vmatprep.subr.mxu0 0.0
  %3482 = vmatpush2.xpose.msra.mxu0 0.0
  %3483 = vmatprep.subr.mxu0 0.0
  %3484 = vmatpush2.xpose.msra.mxu0 0.0
  %3485 = vmatprep.subr.mxu0 0.0
  %3486 = vmatpush2.xpose.msra.mxu0 0.0
  %3487 = vmatprep.subr.mxu0 0.0
  %3488 = vmatpush2.xpose.msra.mxu0 0.0
  %3489 = vmatprep.subr.mxu0 0.0
  %3490 = vmatpush2.xpose.msra.mxu0 0.0
  %3491 = vmatprep.subr.mxu0 0.0
  %3492 = vmatpush2.xpose.msra.mxu0 0.0
  %3493 = vmatprep.subr.mxu0 0.0
  %3494 = vmatpush2.xpose.msra.mxu0 0.0
  %3495 = vmatprep.subr.mxu0 0.0
  %3496 = vmatpush2.xpose.msra.mxu0 0.0
  %3497 = vmatprep.subr.mxu0 0.0
  %3498 = vmatpush2.xpose.msra.mxu0 0.0
  %3499 = vmatprep.subr.mxu0 0.0
  %3500 = vmatpush2.xpose.msra.mxu0 0.0
  %3501 = vmatprep.subr.mxu0 0.0
  %3502 = vmatpush2.xpose.msra.mxu0 0.0
  %3503 = vmatprep.subr.mxu0 0.0
  %3504 = vmatpush2.xpose.msra.mxu0 0.0
  %3505 = vmatprep.subr.mxu0 0.0
  %3506 = vmatpush2.xpose.msra.mxu0 0.0
  %3507 = vmatprep.subr.mxu0 0.0
  %3508 = vmatpush2.xpose.msra.mxu0 0.0
  %3509 = vmatprep.subr.mxu0 0.0
  %3510 = vmatpush2.xpose.msra.mxu0 0.0
  %3511 = vmatprep.subr.mxu0 0.0
  %3512 = vmatpush2.xpose.msra.mxu0 0.0
  %3513 = vmatprep.mubr.f32.mxu0 0.0
  %3514 = vmatmul.mubr.f32.gmra.mxu0 %v3441
  %v3515 = vpop.f32.mrf.mxu0
  %v3516 = vadd.f32 0.0, %v3515
  %v3517 = vpop.f32.mrf.mxu0
  %3518 = vdwg.mxu0
  %3519 = vst.msk [vmem:[#allocation2] sm:$0xff] %vm624, %v3516
  %3520 = vxpose.xlu0.b32.start [1/16] %v3250, 128
  %3521 = vxpose.xlu0.b32.cont [2/16] 0.0, 128
  %3522 = vxpose.xlu0.b32.cont [3/16] 0.0, 128
  %3523 = vxpose.xlu0.b32.cont [4/16] 0.0, 128
  %3524 = vxpose.xlu0.b32.cont [5/16] 0.0, 128
  %3525 = vxpose.xlu0.b32.cont [6/16] 0.0, 128
  %3526 = vxpose.xlu0.b32.cont [7/16] 0.0, 128
  %3527 = vxpose.xlu0.b32.cont [8/16] 0.0, 128
  %3528 = vxpose.xlu0.b32.cont [9/16] 0.0, 128
  %3529 = vxpose.xlu0.b32.cont [10/16] 0.0, 128
  %3530 = vxpose.xlu0.b32.cont [11/16] 0.0, 128
  %3531 = vxpose.xlu0.b32.cont [12/16] 0.0, 128
  %3532 = vxpose.xlu0.b32.cont [13/16] 0.0, 128
  %3533 = vxpose.xlu0.b32.cont [14/16] 0.0, 128
  %3534 = vxpose.xlu0.b32.cont [15/16] 0.0, 128
  %3535 = vxpose.xlu0.b32.end [16/16] 0.0, 128
  %v3536 = vpop.trf.xlu0
  %v3537 = vpop.trf.xlu0
  %v3538 = vpop.trf.xlu0
  %v3539 = vpop.trf.xlu0
  %v3540 = vpop.trf.xlu0
  %v3541 = vpop.trf.xlu0
  %v3542 = vpop.trf.xlu0
  %v3543 = vpop.trf.xlu0
  %v3544 = vpop.trf.xlu0
  %v3545 = vpop.trf.xlu0
  %v3546 = vpop.trf.xlu0
  %v3547 = vpop.trf.xlu0
  %v3548 = vpop.trf.xlu0
  %v3549 = vpop.trf.xlu0
  %v3550 = vpop.trf.xlu0
  %v3551 = vpop.trf.xlu0
  %v3553 = vsel %vm540, %v3536, 0
  %v3556 = vsel %vm540, %v3537, 0
  %3558 = vmatprep.subr.mxu0 0.0
  %3559 = vmatpush1.msra.mxu0 0.0
  %3560 = vmatprep.subr.mxu0 0.0
  %3561 = vmatpush1.msra.mxu0 0.0
  %3562 = vmatprep.subr.mxu0 0.0
  %3563 = vmatpush1.msra.mxu0 0.0
  %3564 = vmatprep.subr.mxu0 0.0
  %3565 = vmatpush1.msra.mxu0 0.0
  %3566 = vmatprep.subr.mxu0 0.0
  %3567 = vmatpush1.msra.mxu0 0.0
  %3568 = vmatprep.subr.mxu0 0.0
  %3569 = vmatpush1.msra.mxu0 0.0
  %3570 = vmatprep.subr.mxu0 0.0
  %3571 = vmatpush1.msra.mxu0 0.0
  %3572 = vmatprep.subr.mxu0 0.0
  %3573 = vmatpush1.msra.mxu0 0.0
  %3574 = vmatprep.subr.mxu0 0.0
  %3575 = vmatpush1.msra.mxu0 0.0
  %3576 = vmatprep.subr.mxu0 0.0
  %3577 = vmatpush1.msra.mxu0 0.0
  %3578 = vmatprep.subr.mxu0 0.0
  %3579 = vmatpush1.msra.mxu0 0.0
  %3580 = vmatprep.subr.mxu0 0.0
  %3581 = vmatpush1.msra.mxu0 0.0
  %3582 = vmatprep.subr.mxu0 0.0
  %3583 = vmatpush1.msra.mxu0 0.0
  %3584 = vmatprep.subr.mxu0 0.0
  %3585 = vmatpush1.msra.mxu0 0.0
  %3586 = vmatprep.subr.mxu0 0.0
  %3587 = vmatpush1.msra.mxu0 0.0
  %3588 = vmatprep.subr.mxu0 0.0
  %3589 = vmatpush1.msra.mxu0 %v3270
  %3590 = vmatprep.subr.mxu0 0.0
  %3591 = vmatpush2.msra.mxu0 0.0
  %3592 = vmatprep.subr.mxu0 0.0
  %3593 = vmatpush2.msra.mxu0 0.0
  %3594 = vmatprep.subr.mxu0 0.0
  %3595 = vmatpush2.msra.mxu0 0.0
  %3596 = vmatprep.subr.mxu0 0.0
  %3597 = vmatpush2.msra.mxu0 0.0
  %3598 = vmatprep.subr.mxu0 0.0
  %3599 = vmatpush2.msra.mxu0 0.0
  %3600 = vmatprep.subr.mxu0 0.0
  %3601 = vmatpush2.msra.mxu0 0.0
  %3602 = vmatprep.subr.mxu0 0.0
  %3603 = vmatpush2.msra.mxu0 0.0
  %3604 = vmatprep.subr.mxu0 0.0
  %3605 = vmatpush2.msra.mxu0 0.0
  %3606 = vmatprep.subr.mxu0 0.0
  %3607 = vmatpush2.msra.mxu0 0.0
  %3608 = vmatprep.subr.mxu0 0.0
  %3609 = vmatpush2.msra.mxu0 0.0
  %3610 = vmatprep.subr.mxu0 0.0
  %3611 = vmatpush2.msra.mxu0 0.0
  %3612 = vmatprep.subr.mxu0 0.0
  %3613 = vmatpush2.msra.mxu0 0.0
  %3614 = vmatprep.subr.mxu0 0.0
  %3615 = vmatpush2.msra.mxu0 0.0
  %3616 = vmatprep.subr.mxu0 0.0
  %3617 = vmatpush2.msra.mxu0 0.0
  %3618 = vmatprep.subr.mxu0 0.0
  %3619 = vmatpush2.msra.mxu0 0.0
  %3620 = vmatprep.subr.mxu0 0.0
  %3621 = vmatpush2.msra.mxu0 0.0
  %3622 = vmatprep.mubr.f32.mxu0 0.0
  %3623 = vmatmul.mubr.f32.gmra.mxu0 %v3553
  %v3624 = vpop.f32.mrf.mxu0
  %v3625 = vadd.f32 0.0, %v3624
  %v3626 = vpop.f32.mrf.mxu0
  %3627 = vmatprep.mubr.f32.mxu0 0.0
  %3628 = vmatmul.mubr.f32.gmra.mxu0 %v3556
  %v3629 = vpop.f32.mrf.mxu0
  %v3630 = vadd.f32 0.0, %v3629
  %v3631 = vpop.f32.mrf.mxu0
  %3632 = vdwg.mxu0
  %v3633 = vmul.f32 %v3625, 0.35355338
  %v3634 = vmul.f32 %v3630, 0.35355338
  %v3635 = vsel %vm624, %v3633, -inf
  %3636 = vmax.xlane.f32.xlu0 %v3635
  %v3637 = vpop.xlane.xlu0 %3636
  %v3638 = vsel %vm624, %v3634, -inf
  %3639 = vmax.xlane.f32.xlu0 %v3638
  %v3640 = vpop.xlane.xlu0 %3639
  %v3641 = vsub.f32 %v3633, %v3637
  %v3642 = vsub.f32 %v3634, %v3640
  %v3643 = vmul.f32 %v3641, 1.442695
  %v3644 = vpow.pop %v3643
  %v3645 = vmul.f32 %v3642, 1.442695
  %v3646 = vpow.pop %v3645
  %v3647 = vsel %vm624, %v3644, 0.0
  %3648 = vadd.xlane.f32.xlu0 %v3647
  %v3649 = vpop.xlane.xlu0 %3648
  %v3650 = vsel %vm624, %v3646, 0.0
  %3651 = vadd.xlane.f32.xlu0 %v3650
  %v3652 = vpop.xlane.xlu0 %3651
  %v3653 = vrcp.pop %v3649
  %v3654 = vrcp.pop %v3652
  %v3655 = vmul.f32 %v3644, %v3653
  %v3656 = vmul.f32 %v3646, %v3654
  %v3658 = vsel %vm624, %v3290, 0
  %v3661 = vsel %vm624, %v3655, 0
  %v3664 = vsel %vm624, %v3656, 0
  %3666 = vmatprep.subr.mxu0 0.0
  %3667 = vmatpush1.xpose.msra.mxu0 0.0
  %3668 = vmatprep.subr.mxu0 0.0
  %3669 = vmatpush1.xpose.msra.mxu0 0.0
  %3670 = vmatprep.subr.mxu0 0.0
  %3671 = vmatpush1.xpose.msra.mxu0 0.0
  %3672 = vmatprep.subr.mxu0 0.0
  %3673 = vmatpush1.xpose.msra.mxu0 0.0
  %3674 = vmatprep.subr.mxu0 0.0
  %3675 = vmatpush1.xpose.msra.mxu0 0.0
  %3676 = vmatprep.subr.mxu0 0.0
  %3677 = vmatpush1.xpose.msra.mxu0 0.0
  %3678 = vmatprep.subr.mxu0 0.0
  %3679 = vmatpush1.xpose.msra.mxu0 0.0
  %3680 = vmatprep.subr.mxu0 0.0
  %3681 = vmatpush1.xpose.msra.mxu0 0.0
  %3682 = vmatprep.subr.mxu0 0.0
  %3683 = vmatpush1.xpose.msra.mxu0 0.0
  %3684 = vmatprep.subr.mxu0 0.0
  %3685 = vmatpush1.xpose.msra.mxu0 0.0
  %3686 = vmatprep.subr.mxu0 0.0
  %3687 = vmatpush1.xpose.msra.mxu0 0.0
  %3688 = vmatprep.subr.mxu0 0.0
  %3689 = vmatpush1.xpose.msra.mxu0 0.0
  %3690 = vmatprep.subr.mxu0 0.0
  %3691 = vmatpush1.xpose.msra.mxu0 0.0
  %3692 = vmatprep.subr.mxu0 0.0
  %3693 = vmatpush1.xpose.msra.mxu0 0.0
  %3694 = vmatprep.subr.mxu0 0.0
  %3695 = vmatpush1.xpose.msra.mxu0 %v3664
  %3696 = vmatprep.subr.mxu0 0.0
  %3697 = vmatpush1.xpose.msra.mxu0 %v3661
  %3698 = vmatprep.subr.mxu0 0.0
  %3699 = vmatpush2.xpose.msra.mxu0 0.0
  %3700 = vmatprep.subr.mxu0 0.0
  %3701 = vmatpush2.xpose.msra.mxu0 0.0
  %3702 = vmatprep.subr.mxu0 0.0
  %3703 = vmatpush2.xpose.msra.mxu0 0.0
  %3704 = vmatprep.subr.mxu0 0.0
  %3705 = vmatpush2.xpose.msra.mxu0 0.0
  %3706 = vmatprep.subr.mxu0 0.0
  %3707 = vmatpush2.xpose.msra.mxu0 0.0
  %3708 = vmatprep.subr.mxu0 0.0
  %3709 = vmatpush2.xpose.msra.mxu0 0.0
  %3710 = vmatprep.subr.mxu0 0.0
  %3711 = vmatpush2.xpose.msra.mxu0 0.0
  %3712 = vmatprep.subr.mxu0 0.0
  %3713 = vmatpush2.xpose.msra.mxu0 0.0
  %3714 = vmatprep.subr.mxu0 0.0
  %3715 = vmatpush2.xpose.msra.mxu0 0.0
  %3716 = vmatprep.subr.mxu0 0.0
  %3717 = vmatpush2.xpose.msra.mxu0 0.0
  %3718 = vmatprep.subr.mxu0 0.0
  %3719 = vmatpush2.xpose.msra.mxu0 0.0
  %3720 = vmatprep.subr.mxu0 0.0
  %3721 = vmatpush2.xpose.msra.mxu0 0.0
  %3722 = vmatprep.subr.mxu0 0.0
  %3723 = vmatpush2.xpose.msra.mxu0 0.0
  %3724 = vmatprep.subr.mxu0 0.0
  %3725 = vmatpush2.xpose.msra.mxu0 0.0
  %3726 = vmatprep.subr.mxu0 0.0
  %3727 = vmatpush2.xpose.msra.mxu0 0.0
  %3728 = vmatprep.subr.mxu0 0.0
  %3729 = vmatpush2.xpose.msra.mxu0 0.0
  %3730 = vmatprep.mubr.f32.mxu0 0.0
  %3731 = vmatmul.mubr.f32.gmra.mxu0 %v3658
  %v3732 = vpop.f32.mrf.mxu0
  %v3733 = vadd.f32 0.0, %v3732
  %v3734 = vpop.f32.mrf.mxu0
  %3735 = vdwg.mxu0
  %3736 = vst.msk [vmem:[#allocation2 + $0x8] sm:$0xff] %vm624, %v3733
  %3737 = vxpose.xlu0.b32.start [1/16] %v3255, 128
  %3738 = vxpose.xlu0.b32.cont [2/16] 0.0, 128
  %3739 = vxpose.xlu0.b32.cont [3/16] 0.0, 128
  %3740 = vxpose.xlu0.b32.cont [4/16] 0.0, 128
  %3741 = vxpose.xlu0.b32.cont [5/16] 0.0, 128
  %3742 = vxpose.xlu0.b32.cont [6/16] 0.0, 128
  %3743 = vxpose.xlu0.b32.cont [7/16] 0.0, 128
  %3744 = vxpose.xlu0.b32.cont [8/16] 0.0, 128
  %3745 = vxpose.xlu0.b32.cont [9/16] 0.0, 128
  %3746 = vxpose.xlu0.b32.cont [10/16] 0.0, 128
  %3747 = vxpose.xlu0.b32.cont [11/16] 0.0, 128
  %3748 = vxpose.xlu0.b32.cont [12/16] 0.0, 128
  %3749 = vxpose.xlu0.b32.cont [13/16] 0.0, 128
  %3750 = vxpose.xlu0.b32.cont [14/16] 0.0, 128
  %3751 = vxpose.xlu0.b32.cont [15/16] 0.0, 128
  %3752 = vxpose.xlu0.b32.end [16/16] 0.0, 128
  %v3753 = vpop.trf.xlu0
  %v3754 = vpop.trf.xlu0
  %v3755 = vpop.trf.xlu0
  %v3756 = vpop.trf.xlu0
  %v3757 = vpop.trf.xlu0
  %v3758 = vpop.trf.xlu0
  %v3759 = vpop.trf.xlu0
  %v3760 = vpop.trf.xlu0
  %v3761 = vpop.trf.xlu0
  %v3762 = vpop.trf.xlu0
  %v3763 = vpop.trf.xlu0
  %v3764 = vpop.trf.xlu0
  %v3765 = vpop.trf.xlu0
  %v3766 = vpop.trf.xlu0
  %v3767 = vpop.trf.xlu0
  %v3768 = vpop.trf.xlu0
  %v3770 = vsel %vm540, %v3753, 0
  %v3773 = vsel %vm540, %v3754, 0
  %3775 = vmatprep.subr.mxu0 0.0
  %3776 = vmatpush1.msra.mxu0 0.0
  %3777 = vmatprep.subr.mxu0 0.0
  %3778 = vmatpush1.msra.mxu0 0.0
  %3779 = vmatprep.subr.mxu0 0.0
  %3780 = vmatpush1.msra.mxu0 0.0
  %3781 = vmatprep.subr.mxu0 0.0
  %3782 = vmatpush1.msra.mxu0 0.0
  %3783 = vmatprep.subr.mxu0 0.0
  %3784 = vmatpush1.msra.mxu0 0.0
  %3785 = vmatprep.subr.mxu0 0.0
  %3786 = vmatpush1.msra.mxu0 0.0
  %3787 = vmatprep.subr.mxu0 0.0
  %3788 = vmatpush1.msra.mxu0 0.0
  %3789 = vmatprep.subr.mxu0 0.0
  %3790 = vmatpush1.msra.mxu0 0.0
  %3791 = vmatprep.subr.mxu0 0.0
  %3792 = vmatpush1.msra.mxu0 0.0
  %3793 = vmatprep.subr.mxu0 0.0
  %3794 = vmatpush1.msra.mxu0 0.0
  %3795 = vmatprep.subr.mxu0 0.0
  %3796 = vmatpush1.msra.mxu0 0.0
  %3797 = vmatprep.subr.mxu0 0.0
  %3798 = vmatpush1.msra.mxu0 0.0
  %3799 = vmatprep.subr.mxu0 0.0
  %3800 = vmatpush1.msra.mxu0 0.0
  %3801 = vmatprep.subr.mxu0 0.0
  %3802 = vmatpush1.msra.mxu0 0.0
  %3803 = vmatprep.subr.mxu0 0.0
  %3804 = vmatpush1.msra.mxu0 0.0
  %3805 = vmatprep.subr.mxu0 0.0
  %3806 = vmatpush1.msra.mxu0 %v3275
  %3807 = vmatprep.subr.mxu0 0.0
  %3808 = vmatpush2.msra.mxu0 0.0
  %3809 = vmatprep.subr.mxu0 0.0
  %3810 = vmatpush2.msra.mxu0 0.0
  %3811 = vmatprep.subr.mxu0 0.0
  %3812 = vmatpush2.msra.mxu0 0.0
  %3813 = vmatprep.subr.mxu0 0.0
  %3814 = vmatpush2.msra.mxu0 0.0
  %3815 = vmatprep.subr.mxu0 0.0
  %3816 = vmatpush2.msra.mxu0 0.0
  %3817 = vmatprep.subr.mxu0 0.0
  %3818 = vmatpush2.msra.mxu0 0.0
  %3819 = vmatprep.subr.mxu0 0.0
  %3820 = vmatpush2.msra.mxu0 0.0
  %3821 = vmatprep.subr.mxu0 0.0
  %3822 = vmatpush2.msra.mxu0 0.0
  %3823 = vmatprep.subr.mxu0 0.0
  %3824 = vmatpush2.msra.mxu0 0.0
  %3825 = vmatprep.subr.mxu0 0.0
  %3826 = vmatpush2.msra.mxu0 0.0
  %3827 = vmatprep.subr.mxu0 0.0
  %3828 = vmatpush2.msra.mxu0 0.0
  %3829 = vmatprep.subr.mxu0 0.0
  %3830 = vmatpush2.msra.mxu0 0.0
  %3831 = vmatprep.subr.mxu0 0.0
  %3832 = vmatpush2.msra.mxu0 0.0
  %3833 = vmatprep.subr.mxu0 0.0
  %3834 = vmatpush2.msra.mxu0 0.0
  %3835 = vmatprep.subr.mxu0 0.0
  %3836 = vmatpush2.msra.mxu0 0.0
  %3837 = vmatprep.subr.mxu0 0.0
  %3838 = vmatpush2.msra.mxu0 0.0
  %3839 = vmatprep.mubr.f32.mxu0 0.0
  %3840 = vmatmul.mubr.f32.gmra.mxu0 %v3770
  %v3841 = vpop.f32.mrf.mxu0
  %v3842 = vadd.f32 0.0, %v3841
  %v3843 = vpop.f32.mrf.mxu0
  %3844 = vmatprep.mubr.f32.mxu0 0.0
  %3845 = vmatmul.mubr.f32.gmra.mxu0 %v3773
  %v3846 = vpop.f32.mrf.mxu0
  %v3847 = vadd.f32 0.0, %v3846
  %v3848 = vpop.f32.mrf.mxu0
  %3849 = vdwg.mxu0
  %v3850 = vmul.f32 %v3842, 0.35355338
  %v3851 = vmul.f32 %v3847, 0.35355338
  %v3852 = vsel %vm624, %v3850, -inf
  %3853 = vmax.xlane.f32.xlu0 %v3852
  %v3854 = vpop.xlane.xlu0 %3853
  %v3855 = vsel %vm624, %v3851, -inf
  %3856 = vmax.xlane.f32.xlu0 %v3855
  %v3857 = vpop.xlane.xlu0 %3856
  %v3858 = vsub.f32 %v3850, %v3854
  %v3859 = vsub.f32 %v3851, %v3857
  %v3860 = vmul.f32 %v3858, 1.442695
  %v3861 = vpow.pop %v3860
  %v3862 = vmul.f32 %v3859, 1.442695
  %v3863 = vpow.pop %v3862
  %v3864 = vsel %vm624, %v3861, 0.0
  %3865 = vadd.xlane.f32.xlu0 %v3864
  %v3866 = vpop.xlane.xlu0 %3865
  %v3867 = vsel %vm624, %v3863, 0.0
  %3868 = vadd.xlane.f32.xlu0 %v3867
  %v3869 = vpop.xlane.xlu0 %3868
  %v3870 = vrcp.pop %v3866
  %v3871 = vrcp.pop %v3869
  %v3872 = vmul.f32 %v3861, %v3870
  %v3873 = vmul.f32 %v3863, %v3871
  %v3875 = vsel %vm624, %v3295, 0
  %v3878 = vsel %vm624, %v3872, 0
  %v3881 = vsel %vm624, %v3873, 0
  %3883 = vmatprep.subr.mxu0 0.0
  %3884 = vmatpush1.xpose.msra.mxu0 0.0
  %3885 = vmatprep.subr.mxu0 0.0
  %3886 = vmatpush1.xpose.msra.mxu0 0.0
  %3887 = vmatprep.subr.mxu0 0.0
  %3888 = vmatpush1.xpose.msra.mxu0 0.0
  %3889 = vmatprep.subr.mxu0 0.0
  %3890 = vmatpush1.xpose.msra.mxu0 0.0
  %3891 = vmatprep.subr.mxu0 0.0
  %3892 = vmatpush1.xpose.msra.mxu0 0.0
  %3893 = vmatprep.subr.mxu0 0.0
  %3894 = vmatpush1.xpose.msra.mxu0 0.0
  %3895 = vmatprep.subr.mxu0 0.0
  %3896 = vmatpush1.xpose.msra.mxu0 0.0
  %3897 = vmatprep.subr.mxu0 0.0
  %3898 = vmatpush1.xpose.msra.mxu0 0.0
  %3899 = vmatprep.subr.mxu0 0.0
  %3900 = vmatpush1.xpose.msra.mxu0 0.0
  %3901 = vmatprep.subr.mxu0 0.0
  %3902 = vmatpush1.xpose.msra.mxu0 0.0
  %3903 = vmatprep.subr.mxu0 0.0
  %3904 = vmatpush1.xpose.msra.mxu0 0.0
  %3905 = vmatprep.subr.mxu0 0.0
  %3906 = vmatpush1.xpose.msra.mxu0 0.0
  %3907 = vmatprep.subr.mxu0 0.0
  %3908 = vmatpush1.xpose.msra.mxu0 0.0
  %3909 = vmatprep.subr.mxu0 0.0
  %3910 = vmatpush1.xpose.msra.mxu0 0.0
  %3911 = vmatprep.subr.mxu0 0.0
  %3912 = vmatpush1.xpose.msra.mxu0 %v3881
  %3913 = vmatprep.subr.mxu0 0.0
  %3914 = vmatpush1.xpose.msra.mxu0 %v3878
  %3915 = vmatprep.subr.mxu0 0.0
  %3916 = vmatpush2.xpose.msra.mxu0 0.0
  %3917 = vmatprep.subr.mxu0 0.0
  %3918 = vmatpush2.xpose.msra.mxu0 0.0
  %3919 = vmatprep.subr.mxu0 0.0
  %3920 = vmatpush2.xpose.msra.mxu0 0.0
  %3921 = vmatprep.subr.mxu0 0.0
  %3922 = vmatpush2.xpose.msra.mxu0 0.0
  %3923 = vmatprep.subr.mxu0 0.0
  %3924 = vmatpush2.xpose.msra.mxu0 0.0
  %3925 = vmatprep.subr.mxu0 0.0
  %3926 = vmatpush2.xpose.msra.mxu0 0.0
  %3927 = vmatprep.subr.mxu0 0.0
  %3928 = vmatpush2.xpose.msra.mxu0 0.0
  %3929 = vmatprep.subr.mxu0 0.0
  %3930 = vmatpush2.xpose.msra.mxu0 0.0
  %3931 = vmatprep.subr.mxu0 0.0
  %3932 = vmatpush2.xpose.msra.mxu0 0.0
  %3933 = vmatprep.subr.mxu0 0.0
  %3934 = vmatpush2.xpose.msra.mxu0 0.0
  %3935 = vmatprep.subr.mxu0 0.0
  %3936 = vmatpush2.xpose.msra.mxu0 0.0
  %3937 = vmatprep.subr.mxu0 0.0
  %3938 = vmatpush2.xpose.msra.mxu0 0.0
  %3939 = vmatprep.subr.mxu0 0.0
  %3940 = vmatpush2.xpose.msra.mxu0 0.0
  %3941 = vmatprep.subr.mxu0 0.0
  %3942 = vmatpush2.xpose.msra.mxu0 0.0
  %3943 = vmatprep.subr.mxu0 0.0
  %3944 = vmatpush2.xpose.msra.mxu0 0.0
  %3945 = vmatprep.subr.mxu0 0.0
  %3946 = vmatpush2.xpose.msra.mxu0 0.0
  %3947 = vmatprep.mubr.f32.mxu0 0.0
  %3948 = vmatmul.mubr.f32.gmra.mxu0 %v3875
  %v3949 = vpop.f32.mrf.mxu0
  %v3950 = vadd.f32 0.0, %v3949
  %v3951 = vpop.f32.mrf.mxu0
  %3952 = vdwg.mxu0
  %3953 = vst.msk [vmem:[#allocation2 + $0x10] sm:$0xff] %vm624, %v3950
  %3954 = vxpose.xlu0.b32.start [1/16] %v3260, 128
  %3955 = vxpose.xlu0.b32.cont [2/16] 0.0, 128
  %3956 = vxpose.xlu0.b32.cont [3/16] 0.0, 128
  %3957 = vxpose.xlu0.b32.cont [4/16] 0.0, 128
  %3958 = vxpose.xlu0.b32.cont [5/16] 0.0, 128
  %3959 = vxpose.xlu0.b32.cont [6/16] 0.0, 128
  %3960 = vxpose.xlu0.b32.cont [7/16] 0.0, 128
  %3961 = vxpose.xlu0.b32.cont [8/16] 0.0, 128
  %3962 = vxpose.xlu0.b32.cont [9/16] 0.0, 128
  %3963 = vxpose.xlu0.b32.cont [10/16] 0.0, 128
  %3964 = vxpose.xlu0.b32.cont [11/16] 0.0, 128
  %3965 = vxpose.xlu0.b32.cont [12/16] 0.0, 128
  %3966 = vxpose.xlu0.b32.cont [13/16] 0.0, 128
  %3967 = vxpose.xlu0.b32.cont [14/16] 0.0, 128
  %3968 = vxpose.xlu0.b32.cont [15/16] 0.0, 128
  %3969 = vxpose.xlu0.b32.end [16/16] 0.0, 128
  %v3970 = vpop.trf.xlu0
  %v3971 = vpop.trf.xlu0
  %v3972 = vpop.trf.xlu0
  %v3973 = vpop.trf.xlu0
  %v3974 = vpop.trf.xlu0
  %v3975 = vpop.trf.xlu0
  %v3976 = vpop.trf.xlu0
  %v3977 = vpop.trf.xlu0
  %v3978 = vpop.trf.xlu0
  %v3979 = vpop.trf.xlu0
  %v3980 = vpop.trf.xlu0
  %v3981 = vpop.trf.xlu0
  %v3982 = vpop.trf.xlu0
  %v3983 = vpop.trf.xlu0
  %v3984 = vpop.trf.xlu0
  %v3985 = vpop.trf.xlu0
  %v3987 = vsel %vm540, %v3970, 0
  %v3990 = vsel %vm540, %v3971, 0
  %3992 = vmatprep.subr.mxu0 0.0
  %3993 = vmatpush1.msra.mxu0 0.0
  %3994 = vmatprep.subr.mxu0 0.0
  %3995 = vmatpush1.msra.mxu0 0.0
  %3996 = vmatprep.subr.mxu0 0.0
  %3997 = vmatpush1.msra.mxu0 0.0
  %3998 = vmatprep.subr.mxu0 0.0
  %3999 = vmatpush1.msra.mxu0 0.0
  %4000 = vmatprep.subr.mxu0 0.0
  %4001 = vmatpush1.msra.mxu0 0.0
  %4002 = vmatprep.subr.mxu0 0.0
  %4003 = vmatpush1.msra.mxu0 0.0
  %4004 = vmatprep.subr.mxu0 0.0
  %4005 = vmatpush1.msra.mxu0 0.0
  %4006 = vmatprep.subr.mxu0 0.0
  %4007 = vmatpush1.msra.mxu0 0.0
  %4008 = vmatprep.subr.mxu0 0.0
  %4009 = vmatpush1.msra.mxu0 0.0
  %4010 = vmatprep.subr.mxu0 0.0
  %4011 = vmatpush1.msra.mxu0 0.0
  %4012 = vmatprep.subr.mxu0 0.0
  %4013 = vmatpush1.msra.mxu0 0.0
  %4014 = vmatprep.subr.mxu0 0.0
  %4015 = vmatpush1.msra.mxu0 0.0
  %4016 = vmatprep.subr.mxu0 0.0
  %4017 = vmatpush1.msra.mxu0 0.0
  %4018 = vmatprep.subr.mxu0 0.0
  %4019 = vmatpush1.msra.mxu0 0.0
  %4020 = vmatprep.subr.mxu0 0.0
  %4021 = vmatpush1.msra.mxu0 0.0
  %4022 = vmatprep.subr.mxu0 0.0
  %4023 = vmatpush1.msra.mxu0 %v3280
  %4024 = vmatprep.subr.mxu0 0.0
  %4025 = vmatpush2.msra.mxu0 0.0
  %4026 = vmatprep.subr.mxu0 0.0
  %4027 = vmatpush2.msra.mxu0 0.0
  %4028 = vmatprep.subr.mxu0 0.0
  %4029 = vmatpush2.msra.mxu0 0.0
  %4030 = vmatprep.subr.mxu0 0.0
  %4031 = vmatpush2.msra.mxu0 0.0
  %4032 = vmatprep.subr.mxu0 0.0
  %4033 = vmatpush2.msra.mxu0 0.0
  %4034 = vmatprep.subr.mxu0 0.0
  %4035 = vmatpush2.msra.mxu0 0.0
  %4036 = vmatprep.subr.mxu0 0.0
  %4037 = vmatpush2.msra.mxu0 0.0
  %4038 = vmatprep.subr.mxu0 0.0
  %4039 = vmatpush2.msra.mxu0 0.0
  %4040 = vmatprep.subr.mxu0 0.0
  %4041 = vmatpush2.msra.mxu0 0.0
  %4042 = vmatprep.subr.mxu0 0.0
  %4043 = vmatpush2.msra.mxu0 0.0
  %4044 = vmatprep.subr.mxu0 0.0
  %4045 = vmatpush2.msra.mxu0 0.0
  %4046 = vmatprep.subr.mxu0 0.0
  %4047 = vmatpush2.msra.mxu0 0.0
  %4048 = vmatprep.subr.mxu0 0.0
  %4049 = vmatpush2.msra.mxu0 0.0
  %4050 = vmatprep.subr.mxu0 0.0
  %4051 = vmatpush2.msra.mxu0 0.0
  %4052 = vmatprep.subr.mxu0 0.0
  %4053 = vmatpush2.msra.mxu0 0.0
  %4054 = vmatprep.subr.mxu0 0.0
  %4055 = vmatpush2.msra.mxu0 0.0
  %4056 = vmatprep.mubr.f32.mxu0 0.0
  %4057 = vmatmul.mubr.f32.gmra.mxu0 %v3987
  %v4058 = vpop.f32.mrf.mxu0
  %v4059 = vadd.f32 0.0, %v4058
  %v4060 = vpop.f32.mrf.mxu0
  %4061 = vmatprep.mubr.f32.mxu0 0.0
  %4062 = vmatmul.mubr.f32.gmra.mxu0 %v3990
  %v4063 = vpop.f32.mrf.mxu0
  %v4064 = vadd.f32 0.0, %v4063
  %v4065 = vpop.f32.mrf.mxu0
  %4066 = vdwg.mxu0
  %v4067 = vmul.f32 %v4059, 0.35355338
  %v4068 = vmul.f32 %v4064, 0.35355338
  %v4069 = vsel %vm624, %v4067, -inf
  %4070 = vmax.xlane.f32.xlu0 %v4069
  %v4071 = vpop.xlane.xlu0 %4070
  %v4072 = vsel %vm624, %v4068, -inf
  %4073 = vmax.xlane.f32.xlu0 %v4072
  %v4074 = vpop.xlane.xlu0 %4073
  %v4075 = vsub.f32 %v4067, %v4071
  %v4076 = vsub.f32 %v4068, %v4074
  %v4077 = vmul.f32 %v4075, 1.442695
  %v4078 = vpow.pop %v4077
  %v4079 = vmul.f32 %v4076, 1.442695
  %v4080 = vpow.pop %v4079
  %v4081 = vsel %vm624, %v4078, 0.0
  %4082 = vadd.xlane.f32.xlu0 %v4081
  %v4083 = vpop.xlane.xlu0 %4082
  %v4084 = vsel %vm624, %v4080, 0.0
  %4085 = vadd.xlane.f32.xlu0 %v4084
  %v4086 = vpop.xlane.xlu0 %4085
  %v4087 = vrcp.pop %v4083
  %v4088 = vrcp.pop %v4086
  %v4089 = vmul.f32 %v4078, %v4087
  %v4090 = vmul.f32 %v4080, %v4088
  %v4092 = vsel %vm624, %v3300, 0
  %v4095 = vsel %vm624, %v4089, 0
  %v4098 = vsel %vm624, %v4090, 0
  %4100 = vmatprep.subr.mxu0 0.0
  %4101 = vmatpush1.xpose.msra.mxu0 0.0
  %4102 = vmatprep.subr.mxu0 0.0
  %4103 = vmatpush1.xpose.msra.mxu0 0.0
  %4104 = vmatprep.subr.mxu0 0.0
  %4105 = vmatpush1.xpose.msra.mxu0 0.0
  %4106 = vmatprep.subr.mxu0 0.0
  %4107 = vmatpush1.xpose.msra.mxu0 0.0
  %4108 = vmatprep.subr.mxu0 0.0
  %4109 = vmatpush1.xpose.msra.mxu0 0.0
  %4110 = vmatprep.subr.mxu0 0.0
  %4111 = vmatpush1.xpose.msra.mxu0 0.0
  %4112 = vmatprep.subr.mxu0 0.0
  %4113 = vmatpush1.xpose.msra.mxu0 0.0
  %4114 = vmatprep.subr.mxu0 0.0
  %4115 = vmatpush1.xpose.msra.mxu0 0.0
  %4116 = vmatprep.subr.mxu0 0.0
  %4117 = vmatpush1.xpose.msra.mxu0 0.0
  %4118 = vmatprep.subr.mxu0 0.0
  %4119 = vmatpush1.xpose.msra.mxu0 0.0
  %4120 = vmatprep.subr.mxu0 0.0
  %4121 = vmatpush1.xpose.msra.mxu0 0.0
  %4122 = vmatprep.subr.mxu0 0.0
  %4123 = vmatpush1.xpose.msra.mxu0 0.0
  %4124 = vmatprep.subr.mxu0 0.0
  %4125 = vmatpush1.xpose.msra.mxu0 0.0
  %4126 = vmatprep.subr.mxu0 0.0
  %4127 = vmatpush1.xpose.msra.mxu0 0.0
  %4128 = vmatprep.subr.mxu0 0.0
  %4129 = vmatpush1.xpose.msra.mxu0 %v4098
  %4130 = vmatprep.subr.mxu0 0.0
  %4131 = vmatpush1.xpose.msra.mxu0 %v4095
  %4132 = vmatprep.subr.mxu0 0.0
  %4133 = vmatpush2.xpose.msra.mxu0 0.0
  %4134 = vmatprep.subr.mxu0 0.0
  %4135 = vmatpush2.xpose.msra.mxu0 0.0
  %4136 = vmatprep.subr.mxu0 0.0
  %4137 = vmatpush2.xpose.msra.mxu0 0.0
  %4138 = vmatprep.subr.mxu0 0.0
  %4139 = vmatpush2.xpose.msra.mxu0 0.0
  %4140 = vmatprep.subr.mxu0 0.0
  %4141 = vmatpush2.xpose.msra.mxu0 0.0
  %4142 = vmatprep.subr.mxu0 0.0
  %4143 = vmatpush2.xpose.msra.mxu0 0.0
  %4144 = vmatprep.subr.mxu0 0.0
  %4145 = vmatpush2.xpose.msra.mxu0 0.0
  %4146 = vmatprep.subr.mxu0 0.0
  %4147 = vmatpush2.xpose.msra.mxu0 0.0
  %4148 = vmatprep.subr.mxu0 0.0
  %4149 = vmatpush2.xpose.msra.mxu0 0.0
  %4150 = vmatprep.subr.mxu0 0.0
  %4151 = vmatpush2.xpose.msra.mxu0 0.0
  %4152 = vmatprep.subr.mxu0 0.0
  %4153 = vmatpush2.xpose.msra.mxu0 0.0
  %4154 = vmatprep.subr.mxu0 0.0
  %4155 = vmatpush2.xpose.msra.mxu0 0.0
  %4156 = vmatprep.subr.mxu0 0.0
  %4157 = vmatpush2.xpose.msra.mxu0 0.0
  %4158 = vmatprep.subr.mxu0 0.0
  %4159 = vmatpush2.xpose.msra.mxu0 0.0
  %4160 = vmatprep.subr.mxu0 0.0
  %4161 = vmatpush2.xpose.msra.mxu0 0.0
  %4162 = vmatprep.subr.mxu0 0.0
  %4163 = vmatpush2.xpose.msra.mxu0 0.0
  %4164 = vmatprep.mubr.f32.mxu0 0.0
  %4165 = vmatmul.mubr.f32.gmra.mxu0 %v4092
  %v4166 = vpop.f32.mrf.mxu0
  %v4167 = vadd.f32 0.0, %v4166
  %v4168 = vpop.f32.mrf.mxu0
  %4169 = vdwg.mxu0
  %4170 = vst.msk [vmem:[#allocation2 + $0x18] sm:$0xff] %vm624, %v4167
  %v4171 = vld [vmem:[#allocation2] sm:$0xff]
  %v4172 = vld [vmem:[#allocation2 + $0x8] sm:$0xff]
  %v4173 = vld [vmem:[#allocation2 + $0x10] sm:$0xff]
  %v4174 = vld [vmem:[#allocation2 + $0x18] sm:$0xff]
  %4175 = vxpose.xlu0.b32.start [1/16] %v4171, 128
  %4176 = vxpose.xlu0.b32.cont [2/16] %v4172, 128
  %4177 = vxpose.xlu0.b32.cont [3/16] %v4173, 128
  %4178 = vxpose.xlu0.b32.cont [4/16] %v4174, 128
  %4179 = vxpose.xlu0.b32.cont [5/16] 0.0, 128
  %4180 = vxpose.xlu0.b32.cont [6/16] 0.0, 128
  %4181 = vxpose.xlu0.b32.cont [7/16] 0.0, 128
  %4182 = vxpose.xlu0.b32.cont [8/16] 0.0, 128
  %4183 = vxpose.xlu0.b32.cont [9/16] 0.0, 128
  %4184 = vxpose.xlu0.b32.cont [10/16] 0.0, 128
  %4185 = vxpose.xlu0.b32.cont [11/16] 0.0, 128
  %4186 = vxpose.xlu0.b32.cont [12/16] 0.0, 128
  %4187 = vxpose.xlu0.b32.cont [13/16] 0.0, 128
  %4188 = vxpose.xlu0.b32.cont [14/16] 0.0, 128
  %4189 = vxpose.xlu0.b32.cont [15/16] 0.0, 128
  %4190 = vxpose.xlu0.b32.end [16/16] 0.0, 128
  %v4191 = vpop.trf.xlu0
  %v4192 = vpop.trf.xlu0
  %v4193 = vpop.trf.xlu0
  %v4194 = vpop.trf.xlu0
  %v4195 = vpop.trf.xlu0
  %v4196 = vpop.trf.xlu0
  %v4197 = vpop.trf.xlu0
  %v4198 = vpop.trf.xlu0
  %v4199 = vpop.trf.xlu0
  %v4200 = vpop.trf.xlu0
  %v4201 = vpop.trf.xlu0
  %v4202 = vpop.trf.xlu0
  %v4203 = vpop.trf.xlu0
  %v4204 = vpop.trf.xlu0
  %v4205 = vpop.trf.xlu0
  %v4206 = vpop.trf.xlu0
  %v4208 = vsel %vm179, %v4191, 0
  %v4211 = vsel %vm179, %v4192, 0
  %4213 = vmatprep.subr.mxu0 0.0
  %4214 = vmatpush1.msra.mxu0 0.0
  %4215 = vmatprep.subr.mxu0 0.0
  %4216 = vmatpush1.msra.mxu0 0.0
  %4217 = vmatprep.subr.mxu0 0.0
  %4218 = vmatpush1.msra.mxu0 0.0
  %4219 = vmatprep.subr.mxu0 0.0
  %4220 = vmatpush1.msra.mxu0 0.0
  %4221 = vmatprep.subr.mxu0 0.0
  %4222 = vmatpush1.msra.mxu0 0.0
  %4223 = vmatprep.subr.mxu0 0.0
  %4224 = vmatpush1.msra.mxu0 0.0
  %4225 = vmatprep.subr.mxu0 0.0
  %4226 = vmatpush1.msra.mxu0 0.0
  %4227 = vmatprep.subr.mxu0 0.0
  %4228 = vmatpush1.msra.mxu0 0.0
  %4229 = vmatprep.subr.mxu0 0.0
  %4230 = vmatpush1.msra.mxu0 0.0
  %4231 = vmatprep.subr.mxu0 0.0
  %4232 = vmatpush1.msra.mxu0 0.0
  %4233 = vmatprep.subr.mxu0 0.0
  %4234 = vmatpush1.msra.mxu0 0.0
  %4235 = vmatprep.subr.mxu0 0.0
  %4236 = vmatpush1.msra.mxu0 0.0
  %4237 = vmatprep.subr.mxu0 0.0
  %4238 = vmatpush1.msra.mxu0 %v3075
  %4239 = vmatprep.subr.mxu0 0.0
  %4240 = vmatpush1.msra.mxu0 %v3074
  %4241 = vmatprep.subr.mxu0 0.0
  %4242 = vmatpush1.msra.mxu0 %v3073
  %4243 = vmatprep.subr.mxu0 0.0
  %4244 = vmatpush1.msra.mxu0 %v3072
  %4245 = vmatprep.subr.mxu0 0.0
  %4246 = vmatpush2.msra.mxu0 0.0
  %4247 = vmatprep.subr.mxu0 0.0
  %4248 = vmatpush2.msra.mxu0 0.0
  %4249 = vmatprep.subr.mxu0 0.0
  %4250 = vmatpush2.msra.mxu0 0.0
  %4251 = vmatprep.subr.mxu0 0.0
  %4252 = vmatpush2.msra.mxu0 0.0
  %4253 = vmatprep.subr.mxu0 0.0
  %4254 = vmatpush2.msra.mxu0 0.0
  %4255 = vmatprep.subr.mxu0 0.0
  %4256 = vmatpush2.msra.mxu0 0.0
  %4257 = vmatprep.subr.mxu0 0.0
  %4258 = vmatpush2.msra.mxu0 0.0
  %4259 = vmatprep.subr.mxu0 0.0
  %4260 = vmatpush2.msra.mxu0 0.0
  %4261 = vmatprep.subr.mxu0 0.0
  %4262 = vmatpush2.msra.mxu0 0.0
  %4263 = vmatprep.subr.mxu0 0.0
  %4264 = vmatpush2.msra.mxu0 0.0
  %4265 = vmatprep.subr.mxu0 0.0
  %4266 = vmatpush2.msra.mxu0 0.0
  %4267 = vmatprep.subr.mxu0 0.0
  %4268 = vmatpush2.msra.mxu0 0.0
  %4269 = vmatprep.subr.mxu0 0.0
  %4270 = vmatpush2.msra.mxu0 0.0
  %4271 = vmatprep.subr.mxu0 0.0
  %4272 = vmatpush2.msra.mxu0 0.0
  %4273 = vmatprep.subr.mxu0 0.0
  %4274 = vmatpush2.msra.mxu0 0.0
  %4275 = vmatprep.subr.mxu0 0.0
  %4276 = vmatpush2.msra.mxu0 0.0
  %4277 = vmatprep.mubr.f32.mxu0 0.0
  %4278 = vmatmul.mubr.f32.gmra.mxu0 %v4208
  %v4279 = vpop.f32.mrf.mxu0
  %v4280 = vadd.f32 0.0, %v4279
  %v4281 = vpop.f32.mrf.mxu0
  %4282 = vmatprep.mubr.f32.mxu0 0.0
  %4283 = vmatmul.mubr.f32.gmra.mxu0 %v4211
  %v4284 = vpop.f32.mrf.mxu0
  %v4285 = vadd.f32 0.0, %v4284
  %v4286 = vpop.f32.mrf.mxu0
  %4287 = vdwg.mxu0
  %4288 = vst.msk [vmem:[#allocation3] sm:$0xff] %vm179, %v4280
  %4289 = vst.msk [vmem:[#allocation3 + $0x8] sm:$0xff] %vm179, %v4285
  %v4291 = vsel %vm179, %v3043, 0
  %v4294 = vsel %vm179, %v3044, 0
  %4296 = vmatprep.subr.mxu0 0.0
  %4297 = vmatpush1.xpose.msra.mxu0 0.0
  %4298 = vmatprep.subr.mxu0 0.0
  %4299 = vmatpush1.xpose.msra.mxu0 0.0
  %4300 = vmatprep.subr.mxu0 0.0
  %4301 = vmatpush1.xpose.msra.mxu0 0.0
  %4302 = vmatprep.subr.mxu0 0.0
  %4303 = vmatpush1.xpose.msra.mxu0 0.0
  %4304 = vmatprep.subr.mxu0 0.0
  %4305 = vmatpush1.xpose.msra.mxu0 0.0
  %4306 = vmatprep.subr.mxu0 0.0
  %4307 = vmatpush1.xpose.msra.mxu0 0.0
  %4308 = vmatprep.subr.mxu0 0.0
  %4309 = vmatpush1.xpose.msra.mxu0 0.0
  %4310 = vmatprep.subr.mxu0 0.0
  %4311 = vmatpush1.xpose.msra.mxu0 0.0
  %4312 = vmatprep.subr.mxu0 0.0
  %4313 = vmatpush1.xpose.msra.mxu0 0.0
  %4314 = vmatprep.subr.mxu0 0.0
  %4315 = vmatpush1.xpose.msra.mxu0 0.0
  %4316 = vmatprep.subr.mxu0 0.0
  %4317 = vmatpush1.xpose.msra.mxu0 0.0
  %4318 = vmatprep.subr.mxu0 0.0
  %4319 = vmatpush1.xpose.msra.mxu0 0.0
  %4320 = vmatprep.subr.mxu0 0.0
  %4321 = vmatpush1.xpose.msra.mxu0 0.0
  %4322 = vmatprep.subr.mxu0 0.0
  %4323 = vmatpush1.xpose.msra.mxu0 0.0
  %4324 = vmatprep.subr.mxu0 0.0
  %4325 = vmatpush1.xpose.msra.mxu0 %v4294
  %4326 = vmatprep.subr.mxu0 0.0
  %4327 = vmatpush1.xpose.msra.mxu0 %v4291
  %4328 = vmatprep.subr.mxu0 0.0
  %4329 = vmatpush2.xpose.msra.mxu0 0.0
  %4330 = vmatprep.subr.mxu0 0.0
  %4331 = vmatpush2.xpose.msra.mxu0 0.0
  %4332 = vmatprep.subr.mxu0 0.0
  %4333 = vmatpush2.xpose.msra.mxu0 0.0
  %4334 = vmatprep.subr.mxu0 0.0
  %4335 = vmatpush2.xpose.msra.mxu0 0.0
  %4336 = vmatprep.subr.mxu0 0.0
  %4337 = vmatpush2.xpose.msra.mxu0 0.0
  %4338 = vmatprep.subr.mxu0 0.0
  %4339 = vmatpush2.xpose.msra.mxu0 0.0
  %4340 = vmatprep.subr.mxu0 0.0
  %4341 = vmatpush2.xpose.msra.mxu0 0.0
  %4342 = vmatprep.subr.mxu0 0.0
  %4343 = vmatpush2.xpose.msra.mxu0 0.0
  %4344 = vmatprep.subr.mxu0 0.0
  %4345 = vmatpush2.xpose.msra.mxu0 0.0
  %4346 = vmatprep.subr.mxu0 0.0
  %4347 = vmatpush2.xpose.msra.mxu0 0.0
  %4348 = vmatprep.subr.mxu0 0.0
  %4349 = vmatpush2.xpose.msra.mxu0 0.0
  %4350 = vmatprep.subr.mxu0 0.0
  %4351 = vmatpush2.xpose.msra.mxu0 0.0
  %4352 = vmatprep.subr.mxu0 0.0
  %4353 = vmatpush2.xpose.msra.mxu0 0.0
  %4354 = vmatprep.subr.mxu0 0.0
  %4355 = vmatpush2.xpose.msra.mxu0 0.0
  %4356 = vmatprep.subr.mxu0 0.0
  %4357 = vmatpush2.xpose.msra.mxu0 0.0
  %4358 = vmatprep.subr.mxu0 0.0
  %4359 = vmatpush2.xpose.msra.mxu0 0.0
  %4360 = vmatprep.mubr.f32.mxu0 0.0
  %4361 = vmatmul.mubr.f32.gmra.mxu0 %v3137
  %v4362 = vpop.f32.mrf.mxu0
  %v4363 = vadd.f32 %v3079, %v4362
  %v4364 = vpop.f32.mrf.mxu0
  %4365 = vmatprep.mubr.f32.mxu0 0.0
  %4366 = vmatmul.mubr.f32.gmra.mxu0 %v3140
  %v4367 = vpop.f32.mrf.mxu0
  %v4368 = vadd.f32 %v3084, %v4367
  %v4369 = vpop.f32.mrf.mxu0
  %4370 = vmatprep.mubr.f32.mxu0 0.0
  %4371 = vmatmul.mubr.f32.gmra.mxu0 %v3143
  %v4372 = vpop.f32.mrf.mxu0
  %v4373 = vadd.f32 %v3089, %v4372
  %v4374 = vpop.f32.mrf.mxu0
  %4375 = vmatprep.mubr.f32.mxu0 0.0
  %4376 = vmatmul.mubr.f32.gmra.mxu0 %v3146
  %v4377 = vpop.f32.mrf.mxu0
  %v4378 = vadd.f32 %v3094, %v4377
  %v4379 = vpop.f32.mrf.mxu0
  %4380 = vmatprep.mubr.f32.mxu0 0.0
  %4381 = vmatmul.mubr.f32.gmra.mxu0 %v3149
  %v4382 = vpop.f32.mrf.mxu0
  %v4383 = vadd.f32 %v3099, %v4382
  %v4384 = vpop.f32.mrf.mxu0
  %4385 = vmatprep.mubr.f32.mxu0 0.0
  %4386 = vmatmul.mubr.f32.gmra.mxu0 %v3152
  %v4387 = vpop.f32.mrf.mxu0
  %v4388 = vadd.f32 %v3104, %v4387
  %v4389 = vpop.f32.mrf.mxu0
  %4390 = vmatprep.mubr.f32.mxu0 0.0
  %4391 = vmatmul.mubr.f32.gmra.mxu0 %v3155
  %v4392 = vpop.f32.mrf.mxu0
  %v4393 = vadd.f32 %v3109, %v4392
  %v4394 = vpop.f32.mrf.mxu0
  %4395 = vmatprep.mubr.f32.mxu0 0.0
  %4396 = vmatmul.mubr.f32.gmra.mxu0 %v3158
  %v4397 = vpop.f32.mrf.mxu0
  %v4398 = vadd.f32 %v3114, %v4397
  %v4399 = vpop.f32.mrf.mxu0
  %4400 = vmatprep.mubr.f32.mxu0 0.0
  %4401 = vmatmul.mubr.f32.gmra.mxu0 %v3161
  %v4402 = vpop.f32.mrf.mxu0
  %v4403 = vadd.f32 %v3119, %v4402
  %v4404 = vpop.f32.mrf.mxu0
  %4405 = vmatprep.mubr.f32.mxu0 0.0
  %4406 = vmatmul.mubr.f32.gmra.mxu0 %v3164
  %v4407 = vpop.f32.mrf.mxu0
  %v4408 = vadd.f32 %v3124, %v4407
  %v4409 = vpop.f32.mrf.mxu0
  %4410 = vmatprep.mubr.f32.mxu0 0.0
  %4411 = vmatmul.mubr.f32.gmra.mxu0 %v3167
  %v4412 = vpop.f32.mrf.mxu0
  %v4413 = vadd.f32 %v3129, %v4412
  %v4414 = vpop.f32.mrf.mxu0
  %4415 = vmatprep.mubr.f32.mxu0 0.0
  %4416 = vmatmul.mubr.f32.gmra.mxu0 %v3170
  %v4417 = vpop.f32.mrf.mxu0
  %v4418 = vadd.f32 %v3134, %v4417
  %v4419 = vpop.f32.mrf.mxu0
  %4420 = vdwg.mxu0
  %4421 = vxpose.xlu0.b32.start [1/16] %v4363, 128
  %4422 = vxpose.xlu0.b32.cont [2/16] 0.0, 128
  %4423 = vxpose.xlu0.b32.cont [3/16] 0.0, 128
  %4424 = vxpose.xlu0.b32.cont [4/16] 0.0, 128
  %4425 = vxpose.xlu0.b32.cont [5/16] 0.0, 128
  %4426 = vxpose.xlu0.b32.cont [6/16] 0.0, 128
  %4427 = vxpose.xlu0.b32.cont [7/16] 0.0, 128
  %4428 = vxpose.xlu0.b32.cont [8/16] 0.0, 128
  %4429 = vxpose.xlu0.b32.cont [9/16] 0.0, 128
  %4430 = vxpose.xlu0.b32.cont [10/16] 0.0, 128
  %4431 = vxpose.xlu0.b32.cont [11/16] 0.0, 128
  %4432 = vxpose.xlu0.b32.cont [12/16] 0.0, 128
  %4433 = vxpose.xlu0.b32.cont [13/16] 0.0, 128
  %4434 = vxpose.xlu0.b32.cont [14/16] 0.0, 128
  %4435 = vxpose.xlu0.b32.cont [15/16] 0.0, 128
  %4436 = vxpose.xlu0.b32.end [16/16] 0.0, 128
  %v4437 = vpop.trf.xlu0
  %v4438 = vpop.trf.xlu0
  %v4439 = vpop.trf.xlu0
  %v4440 = vpop.trf.xlu0
  %v4441 = vpop.trf.xlu0
  %v4442 = vpop.trf.xlu0
  %v4443 = vpop.trf.xlu0
  %v4444 = vpop.trf.xlu0
  %v4445 = vpop.trf.xlu0
  %v4446 = vpop.trf.xlu0
  %v4447 = vpop.trf.xlu0
  %v4448 = vpop.trf.xlu0
  %v4449 = vpop.trf.xlu0
  %v4450 = vpop.trf.xlu0
  %v4451 = vpop.trf.xlu0
  %v4452 = vpop.trf.xlu0
  %v4454 = vsel %vm540, %v4437, 0
  %v4457 = vsel %vm540, %v4438, 0
  %4459 = vmatprep.subr.mxu0 0.0
  %4460 = vmatpush1.msra.mxu0 0.0
  %4461 = vmatprep.subr.mxu0 0.0
  %4462 = vmatpush1.msra.mxu0 0.0
  %4463 = vmatprep.subr.mxu0 0.0
  %4464 = vmatpush1.msra.mxu0 0.0
  %4465 = vmatprep.subr.mxu0 0.0
  %4466 = vmatpush1.msra.mxu0 0.0
  %4467 = vmatprep.subr.mxu0 0.0
  %4468 = vmatpush1.msra.mxu0 0.0
  %4469 = vmatprep.subr.mxu0 0.0
  %4470 = vmatpush1.msra.mxu0 0.0
  %4471 = vmatprep.subr.mxu0 0.0
  %4472 = vmatpush1.msra.mxu0 0.0
  %4473 = vmatprep.subr.mxu0 0.0
  %4474 = vmatpush1.msra.mxu0 0.0
  %4475 = vmatprep.subr.mxu0 0.0
  %4476 = vmatpush1.msra.mxu0 0.0
  %4477 = vmatprep.subr.mxu0 0.0
  %4478 = vmatpush1.msra.mxu0 0.0
  %4479 = vmatprep.subr.mxu0 0.0
  %4480 = vmatpush1.msra.mxu0 0.0
  %4481 = vmatprep.subr.mxu0 0.0
  %4482 = vmatpush1.msra.mxu0 0.0
  %4483 = vmatprep.subr.mxu0 0.0
  %4484 = vmatpush1.msra.mxu0 0.0
  %4485 = vmatprep.subr.mxu0 0.0
  %4486 = vmatpush1.msra.mxu0 0.0
  %4487 = vmatprep.subr.mxu0 0.0
  %4488 = vmatpush1.msra.mxu0 0.0
  %4489 = vmatprep.subr.mxu0 0.0
  %4490 = vmatpush1.msra.mxu0 %v4383
  %4491 = vmatprep.subr.mxu0 0.0
  %4492 = vmatpush2.msra.mxu0 0.0
  %4493 = vmatprep.subr.mxu0 0.0
  %4494 = vmatpush2.msra.mxu0 0.0
  %4495 = vmatprep.subr.mxu0 0.0
  %4496 = vmatpush2.msra.mxu0 0.0
  %4497 = vmatprep.subr.mxu0 0.0
  %4498 = vmatpush2.msra.mxu0 0.0
  %4499 = vmatprep.subr.mxu0 0.0
  %4500 = vmatpush2.msra.mxu0 0.0
  %4501 = vmatprep.subr.mxu0 0.0
  %4502 = vmatpush2.msra.mxu0 0.0
  %4503 = vmatprep.subr.mxu0 0.0
  %4504 = vmatpush2.msra.mxu0 0.0
  %4505 = vmatprep.subr.mxu0 0.0
  %4506 = vmatpush2.msra.mxu0 0.0
  %4507 = vmatprep.subr.mxu0 0.0
  %4508 = vmatpush2.msra.mxu0 0.0
  %4509 = vmatprep.subr.mxu0 0.0
  %4510 = vmatpush2.msra.mxu0 0.0
  %4511 = vmatprep.subr.mxu0 0.0
  %4512 = vmatpush2.msra.mxu0 0.0
  %4513 = vmatprep.subr.mxu0 0.0
  %4514 = vmatpush2.msra.mxu0 0.0
  %4515 = vmatprep.subr.mxu0 0.0
  %4516 = vmatpush2.msra.mxu0 0.0
  %4517 = vmatprep.subr.mxu0 0.0
  %4518 = vmatpush2.msra.mxu0 0.0
  %4519 = vmatprep.subr.mxu0 0.0
  %4520 = vmatpush2.msra.mxu0 0.0
  %4521 = vmatprep.subr.mxu0 0.0
  %4522 = vmatpush2.msra.mxu0 0.0
  %4523 = vmatprep.mubr.f32.mxu0 0.0
  %4524 = vmatmul.mubr.f32.gmra.mxu0 %v4454
  %v4525 = vpop.f32.mrf.mxu0
  %v4526 = vadd.f32 0.0, %v4525
  %v4527 = vpop.f32.mrf.mxu0
  %4528 = vmatprep.mubr.f32.mxu0 0.0
  %4529 = vmatmul.mubr.f32.gmra.mxu0 %v4457
  %v4530 = vpop.f32.mrf.mxu0
  %v4531 = vadd.f32 0.0, %v4530
  %v4532 = vpop.f32.mrf.mxu0
  %4533 = vdwg.mxu0
  %v4534 = vmul.f32 %v4526, 0.35355338
  %v4535 = vmul.f32 %v4531, 0.35355338
  %v4536 = vsel %vm624, %v4534, -inf
  %4537 = vmax.xlane.f32.xlu0 %v4536
  %v4538 = vpop.xlane.xlu0 %4537
  %v4539 = vsel %vm624, %v4535, -inf
  %4540 = vmax.xlane.f32.xlu0 %v4539
  %v4541 = vpop.xlane.xlu0 %4540
  %v4542 = vsub.f32 %v4534, %v4538
  %v4543 = vsub.f32 %v4535, %v4541
  %v4544 = vmul.f32 %v4542, 1.442695
  %v4545 = vpow.pop %v4544
  %v4546 = vmul.f32 %v4543, 1.442695
  %v4547 = vpow.pop %v4546
  %v4548 = vsel %vm624, %v4545, 0.0
  %4549 = vadd.xlane.f32.xlu0 %v4548
  %v4550 = vpop.xlane.xlu0 %4549
  %v4551 = vsel %vm624, %v4547, 0.0
  %4552 = vadd.xlane.f32.xlu0 %v4551
  %v4553 = vpop.xlane.xlu0 %4552
  %v4554 = vrcp.pop %v4550
  %v4555 = vrcp.pop %v4553
  %v4556 = vmul.f32 %v4545, %v4554
  %v4557 = vmul.f32 %v4547, %v4555
  %v4559 = vsel %vm624, %v4403, 0
  %v4562 = vsel %vm624, %v4556, 0
  %v4565 = vsel %vm624, %v4557, 0
  %4567 = vmatprep.subr.mxu0 0.0
  %4568 = vmatpush1.xpose.msra.mxu0 0.0
  %4569 = vmatprep.subr.mxu0 0.0
  %4570 = vmatpush1.xpose.msra.mxu0 0.0
  %4571 = vmatprep.subr.mxu0 0.0
  %4572 = vmatpush1.xpose.msra.mxu0 0.0
  %4573 = vmatprep.subr.mxu0 0.0
  %4574 = vmatpush1.xpose.msra.mxu0 0.0
  %4575 = vmatprep.subr.mxu0 0.0
  %4576 = vmatpush1.xpose.msra.mxu0 0.0
  %4577 = vmatprep.subr.mxu0 0.0
  %4578 = vmatpush1.xpose.msra.mxu0 0.0
  %4579 = vmatprep.subr.mxu0 0.0
  %4580 = vmatpush1.xpose.msra.mxu0 0.0
  %4581 = vmatprep.subr.mxu0 0.0
  %4582 = vmatpush1.xpose.msra.mxu0 0.0
  %4583 = vmatprep.subr.mxu0 0.0
  %4584 = vmatpush1.xpose.msra.mxu0 0.0
  %4585 = vmatprep.subr.mxu0 0.0
  %4586 = vmatpush1.xpose.msra.mxu0 0.0
  %4587 = vmatprep.subr.mxu0 0.0
  %4588 = vmatpush1.xpose.msra.mxu0 0.0
  %4589 = vmatprep.subr.mxu0 0.0
  %4590 = vmatpush1.xpose.msra.mxu0 0.0
  %4591 = vmatprep.subr.mxu0 0.0
  %4592 = vmatpush1.xpose.msra.mxu0 0.0
  %4593 = vmatprep.subr.mxu0 0.0
  %4594 = vmatpush1.xpose.msra.mxu0 0.0
  %4595 = vmatprep.subr.mxu0 0.0
  %4596 = vmatpush1.xpose.msra.mxu0 %v4565
  %4597 = vmatprep.subr.mxu0 0.0
  %4598 = vmatpush1.xpose.msra.mxu0 %v4562
  %4599 = vmatprep.subr.mxu0 0.0
  %4600 = vmatpush2.xpose.msra.mxu0 0.0
  %4601 = vmatprep.subr.mxu0 0.0
  %4602 = vmatpush2.xpose.msra.mxu0 0.0
  %4603 = vmatprep.subr.mxu0 0.0
  %4604 = vmatpush2.xpose.msra.mxu0 0.0
  %4605 = vmatprep.subr.mxu0 0.0
  %4606 = vmatpush2.xpose.msra.mxu0 0.0
  %4607 = vmatprep.subr.mxu0 0.0
  %4608 = vmatpush2.xpose.msra.mxu0 0.0
  %4609 = vmatprep.subr.mxu0 0.0
  %4610 = vmatpush2.xpose.msra.mxu0 0.0
  %4611 = vmatprep.subr.mxu0 0.0
  %4612 = vmatpush2.xpose.msra.mxu0 0.0
  %4613 = vmatprep.subr.mxu0 0.0
  %4614 = vmatpush2.xpose.msra.mxu0 0.0
  %4615 = vmatprep.subr.mxu0 0.0
  %4616 = vmatpush2.xpose.msra.mxu0 0.0
  %4617 = vmatprep.subr.mxu0 0.0
  %4618 = vmatpush2.xpose.msra.mxu0 0.0
  %4619 = vmatprep.subr.mxu0 0.0
  %4620 = vmatpush2.xpose.msra.mxu0 0.0
  %4621 = vmatprep.subr.mxu0 0.0
  %4622 = vmatpush2.xpose.msra.mxu0 0.0
  %4623 = vmatprep.subr.mxu0 0.0
  %4624 = vmatpush2.xpose.msra.mxu0 0.0
  %4625 = vmatprep.subr.mxu0 0.0
  %4626 = vmatpush2.xpose.msra.mxu0 0.0
  %4627 = vmatprep.subr.mxu0 0.0
  %4628 = vmatpush2.xpose.msra.mxu0 0.0
  %4629 = vmatprep.subr.mxu0 0.0
  %4630 = vmatpush2.xpose.msra.mxu0 0.0
  %4631 = vmatprep.mubr.f32.mxu0 0.0
  %4632 = vmatmul.mubr.f32.gmra.mxu0 %v4559
  %v4633 = vpop.f32.mrf.mxu0
  %v4634 = vadd.f32 0.0, %v4633
  %v4635 = vpop.f32.mrf.mxu0
  %4636 = vdwg.mxu0
  %4637 = vst.msk [vmem:[#allocation2] sm:$0xff] %vm624, %v4634
  %4638 = vxpose.xlu0.b32.start [1/16] %v4368, 128
  %4639 = vxpose.xlu0.b32.cont [2/16] 0.0, 128
  %4640 = vxpose.xlu0.b32.cont [3/16] 0.0, 128
  %4641 = vxpose.xlu0.b32.cont [4/16] 0.0, 128
  %4642 = vxpose.xlu0.b32.cont [5/16] 0.0, 128
  %4643 = vxpose.xlu0.b32.cont [6/16] 0.0, 128
  %4644 = vxpose.xlu0.b32.cont [7/16] 0.0, 128
  %4645 = vxpose.xlu0.b32.cont [8/16] 0.0, 128
  %4646 = vxpose.xlu0.b32.cont [9/16] 0.0, 128
  %4647 = vxpose.xlu0.b32.cont [10/16] 0.0, 128
  %4648 = vxpose.xlu0.b32.cont [11/16] 0.0, 128
  %4649 = vxpose.xlu0.b32.cont [12/16] 0.0, 128
  %4650 = vxpose.xlu0.b32.cont [13/16] 0.0, 128
  %4651 = vxpose.xlu0.b32.cont [14/16] 0.0, 128
  %4652 = vxpose.xlu0.b32.cont [15/16] 0.0, 128
  %4653 = vxpose.xlu0.b32.end [16/16] 0.0, 128
  %v4654 = vpop.trf.xlu0
  %v4655 = vpop.trf.xlu0
  %v4656 = vpop.trf.xlu0
  %v4657 = vpop.trf.xlu0
  %v4658 = vpop.trf.xlu0
  %v4659 = vpop.trf.xlu0
  %v4660 = vpop.trf.xlu0
  %v4661 = vpop.trf.xlu0
  %v4662 = vpop.trf.xlu0
  %v4663 = vpop.trf.xlu0
  %v4664 = vpop.trf.xlu0
  %v4665 = vpop.trf.xlu0
  %v4666 = vpop.trf.xlu0
  %v4667 = vpop.trf.xlu0
  %v4668 = vpop.trf.xlu0
  %v4669 = vpop.trf.xlu0
  %v4671 = vsel %vm540, %v4654, 0
  %v4674 = vsel %vm540, %v4655, 0
  %4676 = vmatprep.subr.mxu0 0.0
  %4677 = vmatpush1.msra.mxu0 0.0
  %4678 = vmatprep.subr.mxu0 0.0
  %4679 = vmatpush1.msra.mxu0 0.0
  %4680 = vmatprep.subr.mxu0 0.0
  %4681 = vmatpush1.msra.mxu0 0.0
  %4682 = vmatprep.subr.mxu0 0.0
  %4683 = vmatpush1.msra.mxu0 0.0
  %4684 = vmatprep.subr.mxu0 0.0
  %4685 = vmatpush1.msra.mxu0 0.0
  %4686 = vmatprep.subr.mxu0 0.0
  %4687 = vmatpush1.msra.mxu0 0.0
  %4688 = vmatprep.subr.mxu0 0.0
  %4689 = vmatpush1.msra.mxu0 0.0
  %4690 = vmatprep.subr.mxu0 0.0
  %4691 = vmatpush1.msra.mxu0 0.0
  %4692 = vmatprep.subr.mxu0 0.0
  %4693 = vmatpush1.msra.mxu0 0.0
  %4694 = vmatprep.subr.mxu0 0.0
  %4695 = vmatpush1.msra.mxu0 0.0
  %4696 = vmatprep.subr.mxu0 0.0
  %4697 = vmatpush1.msra.mxu0 0.0
  %4698 = vmatprep.subr.mxu0 0.0
  %4699 = vmatpush1.msra.mxu0 0.0
  %4700 = vmatprep.subr.mxu0 0.0
  %4701 = vmatpush1.msra.mxu0 0.0
  %4702 = vmatprep.subr.mxu0 0.0
  %4703 = vmatpush1.msra.mxu0 0.0
  %4704 = vmatprep.subr.mxu0 0.0
  %4705 = vmatpush1.msra.mxu0 0.0
  %4706 = vmatprep.subr.mxu0 0.0
  %4707 = vmatpush1.msra.mxu0 %v4388
  %4708 = vmatprep.subr.mxu0 0.0
  %4709 = vmatpush2.msra.mxu0 0.0
  %4710 = vmatprep.subr.mxu0 0.0
  %4711 = vmatpush2.msra.mxu0 0.0
  %4712 = vmatprep.subr.mxu0 0.0
  %4713 = vmatpush2.msra.mxu0 0.0
  %4714 = vmatprep.subr.mxu0 0.0
  %4715 = vmatpush2.msra.mxu0 0.0
  %4716 = vmatprep.subr.mxu0 0.0
  %4717 = vmatpush2.msra.mxu0 0.0
  %4718 = vmatprep.subr.mxu0 0.0
  %4719 = vmatpush2.msra.mxu0 0.0
  %4720 = vmatprep.subr.mxu0 0.0
  %4721 = vmatpush2.msra.mxu0 0.0
  %4722 = vmatprep.subr.mxu0 0.0
  %4723 = vmatpush2.msra.mxu0 0.0
  %4724 = vmatprep.subr.mxu0 0.0
  %4725 = vmatpush2.msra.mxu0 0.0
  %4726 = vmatprep.subr.mxu0 0.0
  %4727 = vmatpush2.msra.mxu0 0.0
  %4728 = vmatprep.subr.mxu0 0.0
  %4729 = vmatpush2.msra.mxu0 0.0
  %4730 = vmatprep.subr.mxu0 0.0
  %4731 = vmatpush2.msra.mxu0 0.0
  %4732 = vmatprep.subr.mxu0 0.0
  %4733 = vmatpush2.msra.mxu0 0.0
  %4734 = vmatprep.subr.mxu0 0.0
  %4735 = vmatpush2.msra.mxu0 0.0
  %4736 = vmatprep.subr.mxu0 0.0
  %4737 = vmatpush2.msra.mxu0 0.0
  %4738 = vmatprep.subr.mxu0 0.0
  %4739 = vmatpush2.msra.mxu0 0.0
  %4740 = vmatprep.mubr.f32.mxu0 0.0
  %4741 = vmatmul.mubr.f32.gmra.mxu0 %v4671
  %v4742 = vpop.f32.mrf.mxu0
  %v4743 = vadd.f32 0.0, %v4742
  %v4744 = vpop.f32.mrf.mxu0
  %4745 = vmatprep.mubr.f32.mxu0 0.0
  %4746 = vmatmul.mubr.f32.gmra.mxu0 %v4674
  %v4747 = vpop.f32.mrf.mxu0
  %v4748 = vadd.f32 0.0, %v4747
  %v4749 = vpop.f32.mrf.mxu0
  %4750 = vdwg.mxu0
  %v4751 = vmul.f32 %v4743, 0.35355338
  %v4752 = vmul.f32 %v4748, 0.35355338
  %v4753 = vsel %vm624, %v4751, -inf
  %4754 = vmax.xlane.f32.xlu0 %v4753
  %v4755 = vpop.xlane.xlu0 %4754
  %v4756 = vsel %vm624, %v4752, -inf
  %4757 = vmax.xlane.f32.xlu0 %v4756
  %v4758 = vpop.xlane.xlu0 %4757
  %v4759 = vsub.f32 %v4751, %v4755
  %v4760 = vsub.f32 %v4752, %v4758
  %v4761 = vmul.f32 %v4759, 1.442695
  %v4762 = vpow.pop %v4761
  %v4763 = vmul.f32 %v4760, 1.442695
  %v4764 = vpow.pop %v4763
  %v4765 = vsel %vm624, %v4762, 0.0
  %4766 = vadd.xlane.f32.xlu0 %v4765
  %v4767 = vpop.xlane.xlu0 %4766
  %v4768 = vsel %vm624, %v4764, 0.0
  %4769 = vadd.xlane.f32.xlu0 %v4768
  %v4770 = vpop.xlane.xlu0 %4769
  %v4771 = vrcp.pop %v4767
  %v4772 = vrcp.pop %v4770
  %v4773 = vmul.f32 %v4762, %v4771
  %v4774 = vmul.f32 %v4764, %v4772
  %v4776 = vsel %vm624, %v4408, 0
  %v4779 = vsel %vm624, %v4773, 0
  %v4782 = vsel %vm624, %v4774, 0
  %4784 = vmatprep.subr.mxu0 0.0
  %4785 = vmatpush1.xpose.msra.mxu0 0.0
  %4786 = vmatprep.subr.mxu0 0.0
  %4787 = vmatpush1.xpose.msra.mxu0 0.0
  %4788 = vmatprep.subr.mxu0 0.0
  %4789 = vmatpush1.xpose.msra.mxu0 0.0
  %4790 = vmatprep.subr.mxu0 0.0
  %4791 = vmatpush1.xpose.msra.mxu0 0.0
  %4792 = vmatprep.subr.mxu0 0.0
  %4793 = vmatpush1.xpose.msra.mxu0 0.0
  %4794 = vmatprep.subr.mxu0 0.0
  %4795 = vmatpush1.xpose.msra.mxu0 0.0
  %4796 = vmatprep.subr.mxu0 0.0
  %4797 = vmatpush1.xpose.msra.mxu0 0.0
  %4798 = vmatprep.subr.mxu0 0.0
  %4799 = vmatpush1.xpose.msra.mxu0 0.0
  %4800 = vmatprep.subr.mxu0 0.0
  %4801 = vmatpush1.xpose.msra.mxu0 0.0
  %4802 = vmatprep.subr.mxu0 0.0
  %4803 = vmatpush1.xpose.msra.mxu0 0.0
  %4804 = vmatprep.subr.mxu0 0.0
  %4805 = vmatpush1.xpose.msra.mxu0 0.0
  %4806 = vmatprep.subr.mxu0 0.0
  %4807 = vmatpush1.xpose.msra.mxu0 0.0
  %4808 = vmatprep.subr.mxu0 0.0
  %4809 = vmatpush1.xpose.msra.mxu0 0.0
  %4810 = vmatprep.subr.mxu0 0.0
  %4811 = vmatpush1.xpose.msra.mxu0 0.0
  %4812 = vmatprep.subr.mxu0 0.0
  %4813 = vmatpush1.xpose.msra.mxu0 %v4782
  %4814 = vmatprep.subr.mxu0 0.0
  %4815 = vmatpush1.xpose.msra.mxu0 %v4779
  %4816 = vmatprep.subr.mxu0 0.0
  %4817 = vmatpush2.xpose.msra.mxu0 0.0
  %4818 = vmatprep.subr.mxu0 0.0
  %4819 = vmatpush2.xpose.msra.mxu0 0.0
  %4820 = vmatprep.subr.mxu0 0.0
  %4821 = vmatpush2.xpose.msra.mxu0 0.0
  %4822 = vmatprep.subr.mxu0 0.0
  %4823 = vmatpush2.xpose.msra.mxu0 0.0
  %4824 = vmatprep.subr.mxu0 0.0
  %4825 = vmatpush2.xpose.msra.mxu0 0.0
  %4826 = vmatprep.subr.mxu0 0.0
  %4827 = vmatpush2.xpose.msra.mxu0 0.0
  %4828 = vmatprep.subr.mxu0 0.0
  %4829 = vmatpush2.xpose.msra.mxu0 0.0
  %4830 = vmatprep.subr.mxu0 0.0
  %4831 = vmatpush2.xpose.msra.mxu0 0.0
  %4832 = vmatprep.subr.mxu0 0.0
  %4833 = vmatpush2.xpose.msra.mxu0 0.0
  %4834 = vmatprep.subr.mxu0 0.0
  %4835 = vmatpush2.xpose.msra.mxu0 0.0
  %4836 = vmatprep.subr.mxu0 0.0
  %4837 = vmatpush2.xpose.msra.mxu0 0.0
  %4838 = vmatprep.subr.mxu0 0.0
  %4839 = vmatpush2.xpose.msra.mxu0 0.0
  %4840 = vmatprep.subr.mxu0 0.0
  %4841 = vmatpush2.xpose.msra.mxu0 0.0
  %4842 = vmatprep.subr.mxu0 0.0
  %4843 = vmatpush2.xpose.msra.mxu0 0.0
  %4844 = vmatprep.subr.mxu0 0.0
  %4845 = vmatpush2.xpose.msra.mxu0 0.0
  %4846 = vmatprep.subr.mxu0 0.0
  %4847 = vmatpush2.xpose.msra.mxu0 0.0
  %4848 = vmatprep.mubr.f32.mxu0 0.0
  %4849 = vmatmul.mubr.f32.gmra.mxu0 %v4776
  %v4850 = vpop.f32.mrf.mxu0
  %v4851 = vadd.f32 0.0, %v4850
  %v4852 = vpop.f32.mrf.mxu0
  %4853 = vdwg.mxu0
  %4854 = vst.msk [vmem:[#allocation2 + $0x8] sm:$0xff] %vm624, %v4851
  %4855 = vxpose.xlu0.b32.start [1/16] %v4373, 128
  %4856 = vxpose.xlu0.b32.cont [2/16] 0.0, 128
  %4857 = vxpose.xlu0.b32.cont [3/16] 0.0, 128
  %4858 = vxpose.xlu0.b32.cont [4/16] 0.0, 128
  %4859 = vxpose.xlu0.b32.cont [5/16] 0.0, 128
  %4860 = vxpose.xlu0.b32.cont [6/16] 0.0, 128
  %4861 = vxpose.xlu0.b32.cont [7/16] 0.0, 128
  %4862 = vxpose.xlu0.b32.cont [8/16] 0.0, 128
  %4863 = vxpose.xlu0.b32.cont [9/16] 0.0, 128
  %4864 = vxpose.xlu0.b32.cont [10/16] 0.0, 128
  %4865 = vxpose.xlu0.b32.cont [11/16] 0.0, 128
  %4866 = vxpose.xlu0.b32.cont [12/16] 0.0, 128
  %4867 = vxpose.xlu0.b32.cont [13/16] 0.0, 128
  %4868 = vxpose.xlu0.b32.cont [14/16] 0.0, 128
  %4869 = vxpose.xlu0.b32.cont [15/16] 0.0, 128
  %4870 = vxpose.xlu0.b32.end [16/16] 0.0, 128
  %v4871 = vpop.trf.xlu0
  %v4872 = vpop.trf.xlu0
  %v4873 = vpop.trf.xlu0
  %v4874 = vpop.trf.xlu0
  %v4875 = vpop.trf.xlu0
  %v4876 = vpop.trf.xlu0
  %v4877 = vpop.trf.xlu0
  %v4878 = vpop.trf.xlu0
  %v4879 = vpop.trf.xlu0
  %v4880 = vpop.trf.xlu0
  %v4881 = vpop.trf.xlu0
  %v4882 = vpop.trf.xlu0
  %v4883 = vpop.trf.xlu0
  %v4884 = vpop.trf.xlu0
  %v4885 = vpop.trf.xlu0
  %v4886 = vpop.trf.xlu0
  %v4888 = vsel %vm540, %v4871, 0
  %v4891 = vsel %vm540, %v4872, 0
  %4893 = vmatprep.subr.mxu0 0.0
  %4894 = vmatpush1.msra.mxu0 0.0
  %4895 = vmatprep.subr.mxu0 0.0
  %4896 = vmatpush1.msra.mxu0 0.0
  %4897 = vmatprep.subr.mxu0 0.0
  %4898 = vmatpush1.msra.mxu0 0.0
  %4899 = vmatprep.subr.mxu0 0.0
  %4900 = vmatpush1.msra.mxu0 0.0
  %4901 = vmatprep.subr.mxu0 0.0
  %4902 = vmatpush1.msra.mxu0 0.0
  %4903 = vmatprep.subr.mxu0 0.0
  %4904 = vmatpush1.msra.mxu0 0.0
  %4905 = vmatprep.subr.mxu0 0.0
  %4906 = vmatpush1.msra.mxu0 0.0
  %4907 = vmatprep.subr.mxu0 0.0
  %4908 = vmatpush1.msra.mxu0 0.0
  %4909 = vmatprep.subr.mxu0 0.0
  %4910 = vmatpush1.msra.mxu0 0.0
  %4911 = vmatprep.subr.mxu0 0.0
  %4912 = vmatpush1.msra.mxu0 0.0
  %4913 = vmatprep.subr.mxu0 0.0
  %4914 = vmatpush1.msra.mxu0 0.0
  %4915 = vmatprep.subr.mxu0 0.0
  %4916 = vmatpush1.msra.mxu0 0.0
  %4917 = vmatprep.subr.mxu0 0.0
  %4918 = vmatpush1.msra.mxu0 0.0
  %4919 = vmatprep.subr.mxu0 0.0
  %4920 = vmatpush1.msra.mxu0 0.0
  %4921 = vmatprep.subr.mxu0 0.0
  %4922 = vmatpush1.msra.mxu0 0.0
  %4923 = vmatprep.subr.mxu0 0.0
  %4924 = vmatpush1.msra.mxu0 %v4393
  %4925 = vmatprep.subr.mxu0 0.0
  %4926 = vmatpush2.msra.mxu0 0.0
  %4927 = vmatprep.subr.mxu0 0.0
  %4928 = vmatpush2.msra.mxu0 0.0
  %4929 = vmatprep.subr.mxu0 0.0
  %4930 = vmatpush2.msra.mxu0 0.0
  %4931 = vmatprep.subr.mxu0 0.0
  %4932 = vmatpush2.msra.mxu0 0.0
  %4933 = vmatprep.subr.mxu0 0.0
  %4934 = vmatpush2.msra.mxu0 0.0
  %4935 = vmatprep.subr.mxu0 0.0
  %4936 = vmatpush2.msra.mxu0 0.0
  %4937 = vmatprep.subr.mxu0 0.0
  %4938 = vmatpush2.msra.mxu0 0.0
  %4939 = vmatprep.subr.mxu0 0.0
  %4940 = vmatpush2.msra.mxu0 0.0
  %4941 = vmatprep.subr.mxu0 0.0
  %4942 = vmatpush2.msra.mxu0 0.0
  %4943 = vmatprep.subr.mxu0 0.0
  %4944 = vmatpush2.msra.mxu0 0.0
  %4945 = vmatprep.subr.mxu0 0.0
  %4946 = vmatpush2.msra.mxu0 0.0
  %4947 = vmatprep.subr.mxu0 0.0
  %4948 = vmatpush2.msra.mxu0 0.0
  %4949 = vmatprep.subr.mxu0 0.0
  %4950 = vmatpush2.msra.mxu0 0.0
  %4951 = vmatprep.subr.mxu0 0.0
  %4952 = vmatpush2.msra.mxu0 0.0
  %4953 = vmatprep.subr.mxu0 0.0
  %4954 = vmatpush2.msra.mxu0 0.0
  %4955 = vmatprep.subr.mxu0 0.0
  %4956 = vmatpush2.msra.mxu0 0.0
  %4957 = vmatprep.mubr.f32.mxu0 0.0
  %4958 = vmatmul.mubr.f32.gmra.mxu0 %v4888
  %v4959 = vpop.f32.mrf.mxu0
  %v4960 = vadd.f32 0.0, %v4959
  %v4961 = vpop.f32.mrf.mxu0
  %4962 = vmatprep.mubr.f32.mxu0 0.0
  %4963 = vmatmul.mubr.f32.gmra.mxu0 %v4891
  %v4964 = vpop.f32.mrf.mxu0
  %v4965 = vadd.f32 0.0, %v4964
  %v4966 = vpop.f32.mrf.mxu0
  %4967 = vdwg.mxu0
  %v4968 = vmul.f32 %v4960, 0.35355338
  %v4969 = vmul.f32 %v4965, 0.35355338
  %v4970 = vsel %vm624, %v4968, -inf
  %4971 = vmax.xlane.f32.xlu0 %v4970
  %v4972 = vpop.xlane.xlu0 %4971
  %v4973 = vsel %vm624, %v4969, -inf
  %4974 = vmax.xlane.f32.xlu0 %v4973
  %v4975 = vpop.xlane.xlu0 %4974
  %v4976 = vsub.f32 %v4968, %v4972
  %v4977 = vsub.f32 %v4969, %v4975
  %v4978 = vmul.f32 %v4976, 1.442695
  %v4979 = vpow.pop %v4978
  %v4980 = vmul.f32 %v4977, 1.442695
  %v4981 = vpow.pop %v4980
  %v4982 = vsel %vm624, %v4979, 0.0
  %4983 = vadd.xlane.f32.xlu0 %v4982
  %v4984 = vpop.xlane.xlu0 %4983
  %v4985 = vsel %vm624, %v4981, 0.0
  %4986 = vadd.xlane.f32.xlu0 %v4985
  %v4987 = vpop.xlane.xlu0 %4986
  %v4988 = vrcp.pop %v4984
  %v4989 = vrcp.pop %v4987
  %v4990 = vmul.f32 %v4979, %v4988
  %v4991 = vmul.f32 %v4981, %v4989
  %v4993 = vsel %vm624, %v4413, 0
  %v4996 = vsel %vm624, %v4990, 0
  %v4999 = vsel %vm624, %v4991, 0
  %5001 = vmatprep.subr.mxu0 0.0
  %5002 = vmatpush1.xpose.msra.mxu0 0.0
  %5003 = vmatprep.subr.mxu0 0.0
  %5004 = vmatpush1.xpose.msra.mxu0 0.0
  %5005 = vmatprep.subr.mxu0 0.0
  %5006 = vmatpush1.xpose.msra.mxu0 0.0
  %5007 = vmatprep.subr.mxu0 0.0
  %5008 = vmatpush1.xpose.msra.mxu0 0.0
  %5009 = vmatprep.subr.mxu0 0.0
  %5010 = vmatpush1.xpose.msra.mxu0 0.0
  %5011 = vmatprep.subr.mxu0 0.0
  %5012 = vmatpush1.xpose.msra.mxu0 0.0
  %5013 = vmatprep.subr.mxu0 0.0
  %5014 = vmatpush1.xpose.msra.mxu0 0.0
  %5015 = vmatprep.subr.mxu0 0.0
  %5016 = vmatpush1.xpose.msra.mxu0 0.0
  %5017 = vmatprep.subr.mxu0 0.0
  %5018 = vmatpush1.xpose.msra.mxu0 0.0
  %5019 = vmatprep.subr.mxu0 0.0
  %5020 = vmatpush1.xpose.msra.mxu0 0.0
  %5021 = vmatprep.subr.mxu0 0.0
  %5022 = vmatpush1.xpose.msra.mxu0 0.0
  %5023 = vmatprep.subr.mxu0 0.0
  %5024 = vmatpush1.xpose.msra.mxu0 0.0
  %5025 = vmatprep.subr.mxu0 0.0
  %5026 = vmatpush1.xpose.msra.mxu0 0.0
  %5027 = vmatprep.subr.mxu0 0.0
  %5028 = vmatpush1.xpose.msra.mxu0 0.0
  %5029 = vmatprep.subr.mxu0 0.0
  %5030 = vmatpush1.xpose.msra.mxu0 %v4999
  %5031 = vmatprep.subr.mxu0 0.0
  %5032 = vmatpush1.xpose.msra.mxu0 %v4996
  %5033 = vmatprep.subr.mxu0 0.0
  %5034 = vmatpush2.xpose.msra.mxu0 0.0
  %5035 = vmatprep.subr.mxu0 0.0
  %5036 = vmatpush2.xpose.msra.mxu0 0.0
  %5037 = vmatprep.subr.mxu0 0.0
  %5038 = vmatpush2.xpose.msra.mxu0 0.0
  %5039 = vmatprep.subr.mxu0 0.0
  %5040 = vmatpush2.xpose.msra.mxu0 0.0
  %5041 = vmatprep.subr.mxu0 0.0
  %5042 = vmatpush2.xpose.msra.mxu0 0.0
  %5043 = vmatprep.subr.mxu0 0.0
  %5044 = vmatpush2.xpose.msra.mxu0 0.0
  %5045 = vmatprep.subr.mxu0 0.0
  %5046 = vmatpush2.xpose.msra.mxu0 0.0
  %5047 = vmatprep.subr.mxu0 0.0
  %5048 = vmatpush2.xpose.msra.mxu0 0.0
  %5049 = vmatprep.subr.mxu0 0.0
  %5050 = vmatpush2.xpose.msra.mxu0 0.0
  %5051 = vmatprep.subr.mxu0 0.0
  %5052 = vmatpush2.xpose.msra.mxu0 0.0
  %5053 = vmatprep.subr.mxu0 0.0
  %5054 = vmatpush2.xpose.msra.mxu0 0.0
  %5055 = vmatprep.subr.mxu0 0.0
  %5056 = vmatpush2.xpose.msra.mxu0 0.0
  %5057 = vmatprep.subr.mxu0 0.0
  %5058 = vmatpush2.xpose.msra.mxu0 0.0
  %5059 = vmatprep.subr.mxu0 0.0
  %5060 = vmatpush2.xpose.msra.mxu0 0.0
  %5061 = vmatprep.subr.mxu0 0.0
  %5062 = vmatpush2.xpose.msra.mxu0 0.0
  %5063 = vmatprep.subr.mxu0 0.0
  %5064 = vmatpush2.xpose.msra.mxu0 0.0
  %5065 = vmatprep.mubr.f32.mxu0 0.0
  %5066 = vmatmul.mubr.f32.gmra.mxu0 %v4993
  %v5067 = vpop.f32.mrf.mxu0
  %v5068 = vadd.f32 0.0, %v5067
  %v5069 = vpop.f32.mrf.mxu0
  %5070 = vdwg.mxu0
  %5071 = vst.msk [vmem:[#allocation2 + $0x10] sm:$0xff] %vm624, %v5068
  %5072 = vxpose.xlu0.b32.start [1/16] %v4378, 128
  %5073 = vxpose.xlu0.b32.cont [2/16] 0.0, 128
  %5074 = vxpose.xlu0.b32.cont [3/16] 0.0, 128
  %5075 = vxpose.xlu0.b32.cont [4/16] 0.0, 128
  %5076 = vxpose.xlu0.b32.cont [5/16] 0.0, 128
  %5077 = vxpose.xlu0.b32.cont [6/16] 0.0, 128
  %5078 = vxpose.xlu0.b32.cont [7/16] 0.0, 128
  %5079 = vxpose.xlu0.b32.cont [8/16] 0.0, 128
  %5080 = vxpose.xlu0.b32.cont [9/16] 0.0, 128
  %5081 = vxpose.xlu0.b32.cont [10/16] 0.0, 128
  %5082 = vxpose.xlu0.b32.cont [11/16] 0.0, 128
  %5083 = vxpose.xlu0.b32.cont [12/16] 0.0, 128
  %5084 = vxpose.xlu0.b32.cont [13/16] 0.0, 128
  %5085 = vxpose.xlu0.b32.cont [14/16] 0.0, 128
  %5086 = vxpose.xlu0.b32.cont [15/16] 0.0, 128
  %5087 = vxpose.xlu0.b32.end [16/16] 0.0, 128
  %v5088 = vpop.trf.xlu0
  %v5089 = vpop.trf.xlu0
  %v5090 = vpop.trf.xlu0
  %v5091 = vpop.trf.xlu0
  %v5092 = vpop.trf.xlu0
  %v5093 = vpop.trf.xlu0
  %v5094 = vpop.trf.xlu0
  %v5095 = vpop.trf.xlu0
  %v5096 = vpop.trf.xlu0
  %v5097 = vpop.trf.xlu0
  %v5098 = vpop.trf.xlu0
  %v5099 = vpop.trf.xlu0
  %v5100 = vpop.trf.xlu0
  %v5101 = vpop.trf.xlu0
  %v5102 = vpop.trf.xlu0
  %v5103 = vpop.trf.xlu0
  %v5105 = vsel %vm540, %v5088, 0
  %v5108 = vsel %vm540, %v5089, 0
  %5110 = vmatprep.subr.mxu0 0.0
  %5111 = vmatpush1.msra.mxu0 0.0
  %5112 = vmatprep.subr.mxu0 0.0
  %5113 = vmatpush1.msra.mxu0 0.0
  %5114 = vmatprep.subr.mxu0 0.0
  %5115 = vmatpush1.msra.mxu0 0.0
  %5116 = vmatprep.subr.mxu0 0.0
  %5117 = vmatpush1.msra.mxu0 0.0
  %5118 = vmatprep.subr.mxu0 0.0
  %5119 = vmatpush1.msra.mxu0 0.0
  %5120 = vmatprep.subr.mxu0 0.0
  %5121 = vmatpush1.msra.mxu0 0.0
  %5122 = vmatprep.subr.mxu0 0.0
  %5123 = vmatpush1.msra.mxu0 0.0
  %5124 = vmatprep.subr.mxu0 0.0
  %5125 = vmatpush1.msra.mxu0 0.0
  %5126 = vmatprep.subr.mxu0 0.0
  %5127 = vmatpush1.msra.mxu0 0.0
  %5128 = vmatprep.subr.mxu0 0.0
  %5129 = vmatpush1.msra.mxu0 0.0
  %5130 = vmatprep.subr.mxu0 0.0
  %5131 = vmatpush1.msra.mxu0 0.0
  %5132 = vmatprep.subr.mxu0 0.0
  %5133 = vmatpush1.msra.mxu0 0.0
  %5134 = vmatprep.subr.mxu0 0.0
  %5135 = vmatpush1.msra.mxu0 0.0
  %5136 = vmatprep.subr.mxu0 0.0
  %5137 = vmatpush1.msra.mxu0 0.0
  %5138 = vmatprep.subr.mxu0 0.0
  %5139 = vmatpush1.msra.mxu0 0.0
  %5140 = vmatprep.subr.mxu0 0.0
  %5141 = vmatpush1.msra.mxu0 %v4398
  %5142 = vmatprep.subr.mxu0 0.0
  %5143 = vmatpush2.msra.mxu0 0.0
  %5144 = vmatprep.subr.mxu0 0.0
  %5145 = vmatpush2.msra.mxu0 0.0
  %5146 = vmatprep.subr.mxu0 0.0
  %5147 = vmatpush2.msra.mxu0 0.0
  %5148 = vmatprep.subr.mxu0 0.0
  %5149 = vmatpush2.msra.mxu0 0.0
  %5150 = vmatprep.subr.mxu0 0.0
  %5151 = vmatpush2.msra.mxu0 0.0
  %5152 = vmatprep.subr.mxu0 0.0
  %5153 = vmatpush2.msra.mxu0 0.0
  %5154 = vmatprep.subr.mxu0 0.0
  %5155 = vmatpush2.msra.mxu0 0.0
  %5156 = vmatprep.subr.mxu0 0.0
  %5157 = vmatpush2.msra.mxu0 0.0
  %5158 = vmatprep.subr.mxu0 0.0
  %5159 = vmatpush2.msra.mxu0 0.0
  %5160 = vmatprep.subr.mxu0 0.0
  %5161 = vmatpush2.msra.mxu0 0.0
  %5162 = vmatprep.subr.mxu0 0.0
  %5163 = vmatpush2.msra.mxu0 0.0
  %5164 = vmatprep.subr.mxu0 0.0
  %5165 = vmatpush2.msra.mxu0 0.0
  %5166 = vmatprep.subr.mxu0 0.0
  %5167 = vmatpush2.msra.mxu0 0.0
  %5168 = vmatprep.subr.mxu0 0.0
  %5169 = vmatpush2.msra.mxu0 0.0
  %5170 = vmatprep.subr.mxu0 0.0
  %5171 = vmatpush2.msra.mxu0 0.0
  %5172 = vmatprep.subr.mxu0 0.0
  %5173 = vmatpush2.msra.mxu0 0.0
  %5174 = vmatprep.mubr.f32.mxu0 0.0
  %5175 = vmatmul.mubr.f32.gmra.mxu0 %v5105
  %v5176 = vpop.f32.mrf.mxu0
  %v5177 = vadd.f32 0.0, %v5176
  %v5178 = vpop.f32.mrf.mxu0
  %5179 = vmatprep.mubr.f32.mxu0 0.0
  %5180 = vmatmul.mubr.f32.gmra.mxu0 %v5108
  %v5181 = vpop.f32.mrf.mxu0
  %v5182 = vadd.f32 0.0, %v5181
  %v5183 = vpop.f32.mrf.mxu0
  %5184 = vdwg.mxu0
  %v5185 = vmul.f32 %v5177, 0.35355338
  %v5186 = vmul.f32 %v5182, 0.35355338
  %v5187 = vsel %vm624, %v5185, -inf
  %5188 = vmax.xlane.f32.xlu0 %v5187
  %v5189 = vpop.xlane.xlu0 %5188
  %v5190 = vsel %vm624, %v5186, -inf
  %5191 = vmax.xlane.f32.xlu0 %v5190
  %v5192 = vpop.xlane.xlu0 %5191
  %v5193 = vsub.f32 %v5185, %v5189
  %v5194 = vsub.f32 %v5186, %v5192
  %v5195 = vmul.f32 %v5193, 1.442695
  %v5196 = vpow.pop %v5195
  %v5197 = vmul.f32 %v5194, 1.442695
  %v5198 = vpow.pop %v5197
  %v5199 = vsel %vm624, %v5196, 0.0
  %5200 = vadd.xlane.f32.xlu0 %v5199
  %v5201 = vpop.xlane.xlu0 %5200
  %v5202 = vsel %vm624, %v5198, 0.0
  %5203 = vadd.xlane.f32.xlu0 %v5202
  %v5204 = vpop.xlane.xlu0 %5203
  %v5205 = vrcp.pop %v5201
  %v5206 = vrcp.pop %v5204
  %v5207 = vmul.f32 %v5196, %v5205
  %v5208 = vmul.f32 %v5198, %v5206
  %v5210 = vsel %vm624, %v4418, 0
  %v5213 = vsel %vm624, %v5207, 0
  %v5216 = vsel %vm624, %v5208, 0
  %5218 = vmatprep.subr.mxu0 0.0
  %5219 = vmatpush1.xpose.msra.mxu0 0.0
  %5220 = vmatprep.subr.mxu0 0.0
  %5221 = vmatpush1.xpose.msra.mxu0 0.0
  %5222 = vmatprep.subr.mxu0 0.0
  %5223 = vmatpush1.xpose.msra.mxu0 0.0
  %5224 = vmatprep.subr.mxu0 0.0
  %5225 = vmatpush1.xpose.msra.mxu0 0.0
  %5226 = vmatprep.subr.mxu0 0.0
  %5227 = vmatpush1.xpose.msra.mxu0 0.0
  %5228 = vmatprep.subr.mxu0 0.0
  %5229 = vmatpush1.xpose.msra.mxu0 0.0
  %5230 = vmatprep.subr.mxu0 0.0
  %5231 = vmatpush1.xpose.msra.mxu0 0.0
  %5232 = vmatprep.subr.mxu0 0.0
  %5233 = vmatpush1.xpose.msra.mxu0 0.0
  %5234 = vmatprep.subr.mxu0 0.0
  %5235 = vmatpush1.xpose.msra.mxu0 0.0
  %5236 = vmatprep.subr.mxu0 0.0
  %5237 = vmatpush1.xpose.msra.mxu0 0.0
  %5238 = vmatprep.subr.mxu0 0.0
  %5239 = vmatpush1.xpose.msra.mxu0 0.0
  %5240 = vmatprep.subr.mxu0 0.0
  %5241 = vmatpush1.xpose.msra.mxu0 0.0
  %5242 = vmatprep.subr.mxu0 0.0
  %5243 = vmatpush1.xpose.msra.mxu0 0.0
  %5244 = vmatprep.subr.mxu0 0.0
  %5245 = vmatpush1.xpose.msra.mxu0 0.0
  %5246 = vmatprep.subr.mxu0 0.0
  %5247 = vmatpush1.xpose.msra.mxu0 %v5216
  %5248 = vmatprep.subr.mxu0 0.0
  %5249 = vmatpush1.xpose.msra.mxu0 %v5213
  %5250 = vmatprep.subr.mxu0 0.0
  %5251 = vmatpush2.xpose.msra.mxu0 0.0
  %5252 = vmatprep.subr.mxu0 0.0
  %5253 = vmatpush2.xpose.msra.mxu0 0.0
  %5254 = vmatprep.subr.mxu0 0.0
  %5255 = vmatpush2.xpose.msra.mxu0 0.0
  %5256 = vmatprep.subr.mxu0 0.0
  %5257 = vmatpush2.xpose.msra.mxu0 0.0
  %5258 = vmatprep.subr.mxu0 0.0
  %5259 = vmatpush2.xpose.msra.mxu0 0.0
  %5260 = vmatprep.subr.mxu0 0.0
  %5261 = vmatpush2.xpose.msra.mxu0 0.0
  %5262 = vmatprep.subr.mxu0 0.0
  %5263 = vmatpush2.xpose.msra.mxu0 0.0
  %5264 = vmatprep.subr.mxu0 0.0
  %5265 = vmatpush2.xpose.msra.mxu0 0.0
  %5266 = vmatprep.subr.mxu0 0.0
  %5267 = vmatpush2.xpose.msra.mxu0 0.0
  %5268 = vmatprep.subr.mxu0 0.0
  %5269 = vmatpush2.xpose.msra.mxu0 0.0
  %5270 = vmatprep.subr.mxu0 0.0
  %5271 = vmatpush2.xpose.msra.mxu0 0.0
  %5272 = vmatprep.subr.mxu0 0.0
  %5273 = vmatpush2.xpose.msra.mxu0 0.0
  %5274 = vmatprep.subr.mxu0 0.0
  %5275 = vmatpush2.xpose.msra.mxu0 0.0
  %5276 = vmatprep.subr.mxu0 0.0
  %5277 = vmatpush2.xpose.msra.mxu0 0.0
  %5278 = vmatprep.subr.mxu0 0.0
  %5279 = vmatpush2.xpose.msra.mxu0 0.0
  %5280 = vmatprep.subr.mxu0 0.0
  %5281 = vmatpush2.xpose.msra.mxu0 0.0
  %5282 = vmatprep.mubr.f32.mxu0 0.0
  %5283 = vmatmul.mubr.f32.gmra.mxu0 %v5210
  %v5284 = vpop.f32.mrf.mxu0
  %v5285 = vadd.f32 0.0, %v5284
  %v5286 = vpop.f32.mrf.mxu0
  %5287 = vdwg.mxu0
  %5288 = vst.msk [vmem:[#allocation2 + $0x18] sm:$0xff] %vm624, %v5285
  %v5289 = vld [vmem:[#allocation2] sm:$0xff]
  %v5290 = vld [vmem:[#allocation2 + $0x8] sm:$0xff]
  %v5291 = vld [vmem:[#allocation2 + $0x10] sm:$0xff]
  %v5292 = vld [vmem:[#allocation2 + $0x18] sm:$0xff]
  %5293 = vxpose.xlu0.b32.start [1/16] %v5289, 128
  %5294 = vxpose.xlu0.b32.cont [2/16] %v5290, 128
  %5295 = vxpose.xlu0.b32.cont [3/16] %v5291, 128
  %5296 = vxpose.xlu0.b32.cont [4/16] %v5292, 128
  %5297 = vxpose.xlu0.b32.cont [5/16] 0.0, 128
  %5298 = vxpose.xlu0.b32.cont [6/16] 0.0, 128
  %5299 = vxpose.xlu0.b32.cont [7/16] 0.0, 128
  %5300 = vxpose.xlu0.b32.cont [8/16] 0.0, 128
  %5301 = vxpose.xlu0.b32.cont [9/16] 0.0, 128
  %5302 = vxpose.xlu0.b32.cont [10/16] 0.0, 128
  %5303 = vxpose.xlu0.b32.cont [11/16] 0.0, 128
  %5304 = vxpose.xlu0.b32.cont [12/16] 0.0, 128
  %5305 = vxpose.xlu0.b32.cont [13/16] 0.0, 128
  %5306 = vxpose.xlu0.b32.cont [14/16] 0.0, 128
  %5307 = vxpose.xlu0.b32.cont [15/16] 0.0, 128
  %5308 = vxpose.xlu0.b32.end [16/16] 0.0, 128
  %v5309 = vpop.trf.xlu0
  %v5310 = vpop.trf.xlu0
  %v5311 = vpop.trf.xlu0
  %v5312 = vpop.trf.xlu0
  %v5313 = vpop.trf.xlu0
  %v5314 = vpop.trf.xlu0
  %v5315 = vpop.trf.xlu0
  %v5316 = vpop.trf.xlu0
  %v5317 = vpop.trf.xlu0
  %v5318 = vpop.trf.xlu0
  %v5319 = vpop.trf.xlu0
  %v5320 = vpop.trf.xlu0
  %v5321 = vpop.trf.xlu0
  %v5322 = vpop.trf.xlu0
  %v5323 = vpop.trf.xlu0
  %v5324 = vpop.trf.xlu0
  %v5326 = vsel %vm179, %v5309, 0
  %v5329 = vsel %vm179, %v5310, 0
  %5331 = vmatprep.subr.mxu0 0.0
  %5332 = vmatpush1.msra.mxu0 0.0
  %5333 = vmatprep.subr.mxu0 0.0
  %5334 = vmatpush1.msra.mxu0 0.0
  %5335 = vmatprep.subr.mxu0 0.0
  %5336 = vmatpush1.msra.mxu0 0.0
  %5337 = vmatprep.subr.mxu0 0.0
  %5338 = vmatpush1.msra.mxu0 0.0
  %5339 = vmatprep.subr.mxu0 0.0
  %5340 = vmatpush1.msra.mxu0 0.0
  %5341 = vmatprep.subr.mxu0 0.0
  %5342 = vmatpush1.msra.mxu0 0.0
  %5343 = vmatprep.subr.mxu0 0.0
  %5344 = vmatpush1.msra.mxu0 0.0
  %5345 = vmatprep.subr.mxu0 0.0
  %5346 = vmatpush1.msra.mxu0 0.0
  %5347 = vmatprep.subr.mxu0 0.0
  %5348 = vmatpush1.msra.mxu0 0.0
  %5349 = vmatprep.subr.mxu0 0.0
  %5350 = vmatpush1.msra.mxu0 0.0
  %5351 = vmatprep.subr.mxu0 0.0
  %5352 = vmatpush1.msra.mxu0 0.0
  %5353 = vmatprep.subr.mxu0 0.0
  %5354 = vmatpush1.msra.mxu0 0.0
  %5355 = vmatprep.subr.mxu0 0.0
  %5356 = vmatpush1.msra.mxu0 %v3075
  %5357 = vmatprep.subr.mxu0 0.0
  %5358 = vmatpush1.msra.mxu0 %v3074
  %5359 = vmatprep.subr.mxu0 0.0
  %5360 = vmatpush1.msra.mxu0 %v3073
  %5361 = vmatprep.subr.mxu0 0.0
  %5362 = vmatpush1.msra.mxu0 %v3072
  %5363 = vmatprep.subr.mxu0 0.0
  %5364 = vmatpush2.msra.mxu0 0.0
  %5365 = vmatprep.subr.mxu0 0.0
  %5366 = vmatpush2.msra.mxu0 0.0
  %5367 = vmatprep.subr.mxu0 0.0
  %5368 = vmatpush2.msra.mxu0 0.0
  %5369 = vmatprep.subr.mxu0 0.0
  %5370 = vmatpush2.msra.mxu0 0.0
  %5371 = vmatprep.subr.mxu0 0.0
  %5372 = vmatpush2.msra.mxu0 0.0
  %5373 = vmatprep.subr.mxu0 0.0
  %5374 = vmatpush2.msra.mxu0 0.0
  %5375 = vmatprep.subr.mxu0 0.0
  %5376 = vmatpush2.msra.mxu0 0.0
  %5377 = vmatprep.subr.mxu0 0.0
  %5378 = vmatpush2.msra.mxu0 0.0
  %5379 = vmatprep.subr.mxu0 0.0
  %5380 = vmatpush2.msra.mxu0 0.0
  %5381 = vmatprep.subr.mxu0 0.0
  %5382 = vmatpush2.msra.mxu0 0.0
  %5383 = vmatprep.subr.mxu0 0.0
  %5384 = vmatpush2.msra.mxu0 0.0
  %5385 = vmatprep.subr.mxu0 0.0
  %5386 = vmatpush2.msra.mxu0 0.0
  %5387 = vmatprep.subr.mxu0 0.0
  %5388 = vmatpush2.msra.mxu0 0.0
  %5389 = vmatprep.subr.mxu0 0.0
  %5390 = vmatpush2.msra.mxu0 0.0
  %5391 = vmatprep.subr.mxu0 0.0
  %5392 = vmatpush2.msra.mxu0 0.0
  %5393 = vmatprep.subr.mxu0 0.0
  %5394 = vmatpush2.msra.mxu0 0.0
  %5395 = vmatprep.mubr.f32.mxu0 0.0
  %5396 = vmatmul.mubr.f32.gmra.mxu0 %v5326
  %v5397 = vpop.f32.mrf.mxu0
  %v5398 = vadd.f32 0.0, %v5397
  %v5399 = vpop.f32.mrf.mxu0
  %5400 = vmatprep.mubr.f32.mxu0 0.0
  %5401 = vmatmul.mubr.f32.gmra.mxu0 %v5329
  %v5402 = vpop.f32.mrf.mxu0
  %v5403 = vadd.f32 0.0, %v5402
  %v5404 = vpop.f32.mrf.mxu0
  %5405 = vdwg.mxu0
  %5406 = vst.msk [vmem:[#allocation3 + $0x10] sm:$0xff] %vm179, %v5398
  %5407 = vst.msk [vmem:[#allocation3 + $0x18] sm:$0xff] %vm179, %v5403
  %v5408 = vld [vmem:[#allocation3] sm:$0xff]
  %v5409 = vld [vmem:[#allocation3 + $0x8] sm:$0xff]
  %v5410 = vld [vmem:[#allocation3 + $0x10] sm:$0xff]
  %v5411 = vld [vmem:[#allocation3 + $0x18] sm:$0xff]
  %v5412 = vadd.f32 %v2965, %v5408
  %v5413 = vadd.f32 %v2966, %v5409
  %v5414 = vadd.f32 %v2967, %v5410
  %v5415 = vadd.f32 %v2968, %v5411
  %s5416 = scalar_lea.vmem %s8, 1
  %v5417 = vld [vmem:[%s5416] sm:$0x1]
  %v5419 = vlaneseq
  %v5420 = vshrl.u32 %v5419, 7
  %v5421 = vsub.s32 0, %v5420
  %v5422 = vrot.slane %v5417, %v5421
  %v5424 = vadd.f32 %v5412, %v5422
  %v5425 = vadd.f32 %v5413, %v5422
  %v5426 = vadd.f32 %v5414, %v5422
  %v5427 = vadd.f32 %v5415, %v5422
  %s5428 = scalar_lea.vmem %s9, 1
  %v5429 = vld [vmem:[%s5428] sm:$0x1]
  %s5430 = scalar_lea.vmem %s10, 1
  %v5431 = vld [vmem:[%s5430] sm:$0x1]
  %v5432 = vsel %vm179, %v5424, 0.0
  %5433 = vadd.xlane.f32.xlu0 %v5432
  %v5434 = vpop.xlane.xlu0 %5433
  %v5435 = vsel %vm179, %v5425, 0.0
  %5436 = vadd.xlane.f32.xlu0 %v5435
  %v5437 = vpop.xlane.xlu0 %5436
  %v5438 = vsel %vm179, %v5426, 0.0
  %5439 = vadd.xlane.f32.xlu0 %v5438
  %v5440 = vpop.xlane.xlu0 %5439
  %v5441 = vsel %vm179, %v5427, 0.0
  %5442 = vadd.xlane.f32.xlu0 %v5441
  %v5443 = vpop.xlane.xlu0 %5442
  %v5444 = vmul.f32 %v5434, %v192
  %v5445 = vmul.f32 %v5437, %v192
  %v5446 = vmul.f32 %v5440, %v192
  %v5447 = vmul.f32 %v5443, %v192
  %v5448 = vsub.f32 %v5424, %v5444
  %v5449 = vsub.f32 %v5425, %v5445
  %v5450 = vsub.f32 %v5426, %v5446
  %v5451 = vsub.f32 %v5427, %v5447
  %v5452 = vmul.f32 %v5448, %v5448
  %v5453 = vmul.f32 %v5449, %v5449
  %v5454 = vmul.f32 %v5450, %v5450
  %v5455 = vmul.f32 %v5451, %v5451
  %v5456 = vsel %vm179, %v5452, 0.0
  %5457 = vadd.xlane.f32.xlu0 %v5456
  %v5458 = vpop.xlane.xlu0 %5457
  %v5459 = vsel %vm179, %v5453, 0.0
  %5460 = vadd.xlane.f32.xlu0 %v5459
  %v5461 = vpop.xlane.xlu0 %5460
  %v5462 = vsel %vm179, %v5454, 0.0
  %5463 = vadd.xlane.f32.xlu0 %v5462
  %v5464 = vpop.xlane.xlu0 %5463
  %v5465 = vsel %vm179, %v5455, 0.0
  %5466 = vadd.xlane.f32.xlu0 %v5465
  %v5467 = vpop.xlane.xlu0 %5466
  %v5468 = vmul.f32 %v5458, %v192
  %v5469 = vmul.f32 %v5461, %v192
  %v5470 = vmul.f32 %v5464, %v192
  %v5471 = vmul.f32 %v5467, %v192
  %v5472 = vadd.f32 %v5468, 1e-06
  %v5473 = vadd.f32 %v5469, 1e-06
  %v5474 = vadd.f32 %v5470, 1e-06
  %v5475 = vadd.f32 %v5471, 1e-06
  %v5476 = vrsqrt.pop %v5472
  %v5477 = vrsqrt.pop %v5473
  %v5478 = vrsqrt.pop %v5474
  %v5479 = vrsqrt.pop %v5475
  %v5480 = vmul.f32 %v5448, %v5476
  %v5481 = vmul.f32 %v5449, %v5477
  %v5482 = vmul.f32 %v5450, %v5478
  %v5483 = vmul.f32 %v5451, %v5479
  %v5485 = vlaneseq
  %v5486 = vshrl.u32 %v5485, 7
  %v5487 = vsub.s32 0, %v5486
  %v5488 = vrot.slane %v5429, %v5487
  %v5490 = vmul.f32 %v5480, %v5488
  %v5491 = vmul.f32 %v5481, %v5488
  %v5492 = vmul.f32 %v5482, %v5488
  %v5493 = vmul.f32 %v5483, %v5488
  %v5495 = vlaneseq
  %v5496 = vshrl.u32 %v5495, 7
  %v5497 = vsub.s32 0, %v5496
  %v5498 = vrot.slane %v5431, %v5497
  %v5500 = vadd.f32 %v5490, %v5498
  %v5501 = vadd.f32 %v5491, %v5498
  %v5502 = vadd.f32 %v5492, %v5498
  %v5503 = vadd.f32 %v5493, %v5498
  %s5504 = scalar_lea.vmem %s11, 32
  %v5505 = vld [vmem:[%s5504] sm:$0xff]
  %v5506 = vld [vmem:[%s5504 + $0x8] sm:$0xff]
  %v5507 = vld [vmem:[%s5504 + $0x10] sm:$0xff]
  %v5508 = vld [vmem:[%s5504 + $0x18] sm:$0xff]
  %s5509 = scalar_lea.vmem %s12, 1
  %v5510 = vld [vmem:[%s5509] sm:$0x1]
  %v5512 = vlaneseq
  %v5513 = vshrl.u32 %v5512, 7
  %v5514 = vsub.s32 0, %v5513
  %v5515 = vrot.slane %v5510, %v5514
  %v5518 = vsel %vm179, %v5500, 0
  %v5521 = vsel %vm179, %v5501, 0
  %v5524 = vsel %vm179, %v5502, 0
  %v5527 = vsel %vm179, %v5503, 0
  %5529 = vmatprep.subr.mxu0 0.0
  %5530 = vmatpush1.msra.mxu0 0.0
  %5531 = vmatprep.subr.mxu0 0.0
  %5532 = vmatpush1.msra.mxu0 0.0
  %5533 = vmatprep.subr.mxu0 0.0
  %5534 = vmatpush1.msra.mxu0 0.0
  %5535 = vmatprep.subr.mxu0 0.0
  %5536 = vmatpush1.msra.mxu0 0.0
  %5537 = vmatprep.subr.mxu0 0.0
  %5538 = vmatpush1.msra.mxu0 0.0
  %5539 = vmatprep.subr.mxu0 0.0
  %5540 = vmatpush1.msra.mxu0 0.0
  %5541 = vmatprep.subr.mxu0 0.0
  %5542 = vmatpush1.msra.mxu0 0.0
  %5543 = vmatprep.subr.mxu0 0.0
  %5544 = vmatpush1.msra.mxu0 0.0
  %5545 = vmatprep.subr.mxu0 0.0
  %5546 = vmatpush1.msra.mxu0 0.0
  %5547 = vmatprep.subr.mxu0 0.0
  %5548 = vmatpush1.msra.mxu0 0.0
  %5549 = vmatprep.subr.mxu0 0.0
  %5550 = vmatpush1.msra.mxu0 0.0
  %5551 = vmatprep.subr.mxu0 0.0
  %5552 = vmatpush1.msra.mxu0 0.0
  %5553 = vmatprep.subr.mxu0 0.0
  %5554 = vmatpush1.msra.mxu0 %v5508
  %5555 = vmatprep.subr.mxu0 0.0
  %5556 = vmatpush1.msra.mxu0 %v5507
  %5557 = vmatprep.subr.mxu0 0.0
  %5558 = vmatpush1.msra.mxu0 %v5506
  %5559 = vmatprep.subr.mxu0 0.0
  %5560 = vmatpush1.msra.mxu0 %v5505
  %5561 = vmatprep.subr.mxu0 0.0
  %5562 = vmatpush2.msra.mxu0 0.0
  %5563 = vmatprep.subr.mxu0 0.0
  %5564 = vmatpush2.msra.mxu0 0.0
  %5565 = vmatprep.subr.mxu0 0.0
  %5566 = vmatpush2.msra.mxu0 0.0
  %5567 = vmatprep.subr.mxu0 0.0
  %5568 = vmatpush2.msra.mxu0 0.0
  %5569 = vmatprep.subr.mxu0 0.0
  %5570 = vmatpush2.msra.mxu0 0.0
  %5571 = vmatprep.subr.mxu0 0.0
  %5572 = vmatpush2.msra.mxu0 0.0
  %5573 = vmatprep.subr.mxu0 0.0
  %5574 = vmatpush2.msra.mxu0 0.0
  %5575 = vmatprep.subr.mxu0 0.0
  %5576 = vmatpush2.msra.mxu0 0.0
  %5577 = vmatprep.subr.mxu0 0.0
  %5578 = vmatpush2.msra.mxu0 0.0
  %5579 = vmatprep.subr.mxu0 0.0
  %5580 = vmatpush2.msra.mxu0 0.0
  %5581 = vmatprep.subr.mxu0 0.0
  %5582 = vmatpush2.msra.mxu0 0.0
  %5583 = vmatprep.subr.mxu0 0.0
  %5584 = vmatpush2.msra.mxu0 0.0
  %5585 = vmatprep.subr.mxu0 0.0
  %5586 = vmatpush2.msra.mxu0 0.0
  %5587 = vmatprep.subr.mxu0 0.0
  %5588 = vmatpush2.msra.mxu0 0.0
  %5589 = vmatprep.subr.mxu0 0.0
  %5590 = vmatpush2.msra.mxu0 0.0
  %5591 = vmatprep.subr.mxu0 0.0
  %5592 = vmatpush2.msra.mxu0 0.0
  %5593 = vmatprep.mubr.f32.mxu0 0.0
  %5594 = vmatmul.mubr.f32.gmra.mxu0 %v5518
  %v5595 = vpop.f32.mrf.mxu0
  %v5596 = vadd.f32 %v5515, %v5595
  %v5597 = vpop.f32.mrf.mxu0
  %5598 = vmatprep.mubr.f32.mxu0 0.0
  %5599 = vmatmul.mubr.f32.gmra.mxu0 %v5521
  %v5600 = vpop.f32.mrf.mxu0
  %v5601 = vadd.f32 %v5515, %v5600
  %v5602 = vpop.f32.mrf.mxu0
  %5603 = vmatprep.mubr.f32.mxu0 0.0
  %5604 = vmatmul.mubr.f32.gmra.mxu0 %v5524
  %v5605 = vpop.f32.mrf.mxu0
  %v5606 = vadd.f32 %v5515, %v5605
  %v5607 = vpop.f32.mrf.mxu0
  %5608 = vmatprep.mubr.f32.mxu0 0.0
  %5609 = vmatmul.mubr.f32.gmra.mxu0 %v5527
  %v5610 = vpop.f32.mrf.mxu0
  %v5611 = vadd.f32 %v5515, %v5610
  %v5612 = vpop.f32.mrf.mxu0
  %5613 = vdwg.mxu0
  %v5614 = vmul.f32 %v5596, 0.5
  %v5615 = vmul.f32 %v5601, 0.5
  %v5616 = vmul.f32 %v5606, 0.5
  %v5617 = vmul.f32 %v5611, 0.5
  %v5618 = vmul.f32 %v5596, 0.044715
  %v5619 = vmul.f32 %v5601, 0.044715
  %v5620 = vmul.f32 %v5606, 0.044715
  %v5621 = vmul.f32 %v5611, 0.044715
  %v5622 = vmul.f32 %v5618, %v5596
  %v5623 = vmul.f32 %v5619, %v5601
  %v5624 = vmul.f32 %v5620, %v5606
  %v5625 = vmul.f32 %v5621, %v5611
  %v5626 = vmul.f32 %v5622, %v5596
  %v5627 = vmul.f32 %v5623, %v5601
  %v5628 = vmul.f32 %v5624, %v5606
  %v5629 = vmul.f32 %v5625, %v5611
  %v5630 = vadd.f32 %v5596, %v5626
  %v5631 = vadd.f32 %v5601, %v5627
  %v5632 = vadd.f32 %v5606, %v5628
  %v5633 = vadd.f32 %v5611, %v5629
  %v5634 = vmul.f32 %v5630, 0.7978846
  %v5635 = vmul.f32 %v5631, 0.7978846
  %v5636 = vmul.f32 %v5632, 0.7978846
  %v5637 = vmul.f32 %v5633, 0.7978846
  %v5638 = vtanh.pop %v5634
  %v5639 = vtanh.pop %v5635
  %v5640 = vtanh.pop %v5636
  %v5641 = vtanh.pop %v5637
  %v5642 = vadd.f32 %v5638, 1.0
  %v5643 = vadd.f32 %v5639, 1.0
  %v5644 = vadd.f32 %v5640, 1.0
  %v5645 = vadd.f32 %v5641, 1.0
  %v5646 = vmul.f32 %v5614, %v5642
  %v5647 = vmul.f32 %v5615, %v5643
  %v5648 = vmul.f32 %v5616, %v5644
  %v5649 = vmul.f32 %v5617, %v5645
  %s5650 = scalar_lea.vmem %s13, 64
  %v5651 = vld [vmem:[%s5650] sm:$0xff]
  %v5652 = vld [vmem:[%s5650 + $0x8] sm:$0xff]
  %v5653 = vld [vmem:[%s5650 + $0x10] sm:$0xff]
  %v5654 = vld [vmem:[%s5650 + $0x18] sm:$0xff]
  %v5655 = vld [vmem:[%s5650 + $0x20] sm:$0xff]
  %v5656 = vld [vmem:[%s5650 + $0x28] sm:$0xff]
  %v5657 = vld [vmem:[%s5650 + $0x30] sm:$0xff]
  %v5658 = vld [vmem:[%s5650 + $0x38] sm:$0xff]
  %s5659 = scalar_lea.vmem %s14, 1
  %v5660 = vld [vmem:[%s5659] sm:$0x1]
  %v5662 = vlaneseq
  %v5663 = vshrl.u32 %v5662, 7
  %v5664 = vsub.s32 0, %v5663
  %v5665 = vrot.slane %v5660, %v5664
  %v5668 = vsel %vm2867, %v5646, 0
  %v5671 = vsel %vm2867, %v5647, 0
  %v5674 = vsel %vm2867, %v5648, 0
  %v5677 = vsel %vm2867, %v5649, 0
  %5679 = vmatprep.subr.mxu0 0.0
  %5680 = vmatpush1.msra.mxu0 0.0
  %5681 = vmatprep.subr.mxu0 0.0
  %5682 = vmatpush1.msra.mxu0 0.0
  %5683 = vmatprep.subr.mxu0 0.0
  %5684 = vmatpush1.msra.mxu0 0.0
  %5685 = vmatprep.subr.mxu0 0.0
  %5686 = vmatpush1.msra.mxu0 0.0
  %5687 = vmatprep.subr.mxu0 0.0
  %5688 = vmatpush1.msra.mxu0 0.0
  %5689 = vmatprep.subr.mxu0 0.0
  %5690 = vmatpush1.msra.mxu0 0.0
  %5691 = vmatprep.subr.mxu0 0.0
  %5692 = vmatpush1.msra.mxu0 0.0
  %5693 = vmatprep.subr.mxu0 0.0
  %5694 = vmatpush1.msra.mxu0 0.0
  %5695 = vmatprep.subr.mxu0 0.0
  %5696 = vmatpush1.msra.mxu0 %v5658
  %5697 = vmatprep.subr.mxu0 0.0
  %5698 = vmatpush1.msra.mxu0 %v5657
  %5699 = vmatprep.subr.mxu0 0.0
  %5700 = vmatpush1.msra.mxu0 %v5656
  %5701 = vmatprep.subr.mxu0 0.0
  %5702 = vmatpush1.msra.mxu0 %v5655
  %5703 = vmatprep.subr.mxu0 0.0
  %5704 = vmatpush1.msra.mxu0 %v5654
  %5705 = vmatprep.subr.mxu0 0.0
  %5706 = vmatpush1.msra.mxu0 %v5653
  %5707 = vmatprep.subr.mxu0 0.0
  %5708 = vmatpush1.msra.mxu0 %v5652
  %5709 = vmatprep.subr.mxu0 0.0
  %5710 = vmatpush1.msra.mxu0 %v5651
  %5711 = vmatprep.subr.mxu0 0.0
  %5712 = vmatpush2.msra.mxu0 0.0
  %5713 = vmatprep.subr.mxu0 0.0
  %5714 = vmatpush2.msra.mxu0 0.0
  %5715 = vmatprep.subr.mxu0 0.0
  %5716 = vmatpush2.msra.mxu0 0.0
  %5717 = vmatprep.subr.mxu0 0.0
  %5718 = vmatpush2.msra.mxu0 0.0
  %5719 = vmatprep.subr.mxu0 0.0
  %5720 = vmatpush2.msra.mxu0 0.0
  %5721 = vmatprep.subr.mxu0 0.0
  %5722 = vmatpush2.msra.mxu0 0.0
  %5723 = vmatprep.subr.mxu0 0.0
  %5724 = vmatpush2.msra.mxu0 0.0
  %5725 = vmatprep.subr.mxu0 0.0
  %5726 = vmatpush2.msra.mxu0 0.0
  %5727 = vmatprep.subr.mxu0 0.0
  %5728 = vmatpush2.msra.mxu0 0.0
  %5729 = vmatprep.subr.mxu0 0.0
  %5730 = vmatpush2.msra.mxu0 0.0
  %5731 = vmatprep.subr.mxu0 0.0
  %5732 = vmatpush2.msra.mxu0 0.0
  %5733 = vmatprep.subr.mxu0 0.0
  %5734 = vmatpush2.msra.mxu0 0.0
  %5735 = vmatprep.subr.mxu0 0.0
  %5736 = vmatpush2.msra.mxu0 0.0
  %5737 = vmatprep.subr.mxu0 0.0
  %5738 = vmatpush2.msra.mxu0 0.0
  %5739 = vmatprep.subr.mxu0 0.0
  %5740 = vmatpush2.msra.mxu0 0.0
  %5741 = vmatprep.subr.mxu0 0.0
  %5742 = vmatpush2.msra.mxu0 0.0
  %5743 = vmatprep.mubr.f32.mxu0 0.0
  %5744 = vmatmul.mubr.f32.gmra.mxu0 %v5668
  %v5745 = vpop.f32.mrf.mxu0
  %v5746 = vadd.f32 %v5665, %v5745
  %v5747 = vpop.f32.mrf.mxu0
  %5748 = vmatprep.mubr.f32.mxu0 0.0
  %5749 = vmatmul.mubr.f32.gmra.mxu0 %v5671
  %v5750 = vpop.f32.mrf.mxu0
  %v5751 = vadd.f32 %v5665, %v5750
  %v5752 = vpop.f32.mrf.mxu0
  %5753 = vmatprep.mubr.f32.mxu0 0.0
  %5754 = vmatmul.mubr.f32.gmra.mxu0 %v5674
  %v5755 = vpop.f32.mrf.mxu0
  %v5756 = vadd.f32 %v5665, %v5755
  %v5757 = vpop.f32.mrf.mxu0
  %5758 = vmatprep.mubr.f32.mxu0 0.0
  %5759 = vmatmul.mubr.f32.gmra.mxu0 %v5677
  %v5760 = vpop.f32.mrf.mxu0
  %v5761 = vadd.f32 %v5665, %v5760
  %v5762 = vpop.f32.mrf.mxu0
  %5763 = vdwg.mxu0
  %v5764 = vadd.f32 %v5424, %v5746
  %v5765 = vadd.f32 %v5425, %v5751
  %v5766 = vadd.f32 %v5426, %v5756
  %v5767 = vadd.f32 %v5427, %v5761
  %v5768 = vld [vmem:[%s15] sm:$0x1]
  %v5769 = vld [vmem:[%s16] sm:$0x1]
  %v5770 = vsel %vm179, %v5764, 0.0
  %5771 = vadd.xlane.f32.xlu0 %v5770
  %v5772 = vpop.xlane.xlu0 %5771
  %v5773 = vsel %vm179, %v5765, 0.0
  %5774 = vadd.xlane.f32.xlu0 %v5773
  %v5775 = vpop.xlane.xlu0 %5774
  %v5776 = vsel %vm179, %v5766, 0.0
  %5777 = vadd.xlane.f32.xlu0 %v5776
  %v5778 = vpop.xlane.xlu0 %5777
  %v5779 = vsel %vm179, %v5767, 0.0
  %5780 = vadd.xlane.f32.xlu0 %v5779
  %v5781 = vpop.xlane.xlu0 %5780
  %v5782 = vmul.f32 %v5772, %v192
  %v5783 = vmul.f32 %v5775, %v192
  %v5784 = vmul.f32 %v5778, %v192
  %v5785 = vmul.f32 %v5781, %v192
  %v5786 = vsub.f32 %v5764, %v5782
  %v5787 = vsub.f32 %v5765, %v5783
  %v5788 = vsub.f32 %v5766, %v5784
  %v5789 = vsub.f32 %v5767, %v5785
  %v5790 = vmul.f32 %v5786, %v5786
  %v5791 = vmul.f32 %v5787, %v5787
  %v5792 = vmul.f32 %v5788, %v5788
  %v5793 = vmul.f32 %v5789, %v5789
  %v5794 = vsel %vm179, %v5790, 0.0
  %5795 = vadd.xlane.f32.xlu0 %v5794
  %v5796 = vpop.xlane.xlu0 %5795
  %v5797 = vsel %vm179, %v5791, 0.0
  %5798 = vadd.xlane.f32.xlu0 %v5797
  %v5799 = vpop.xlane.xlu0 %5798
  %v5800 = vsel %vm179, %v5792, 0.0
  %5801 = vadd.xlane.f32.xlu0 %v5800
  %v5802 = vpop.xlane.xlu0 %5801
  %v5803 = vsel %vm179, %v5793, 0.0
  %5804 = vadd.xlane.f32.xlu0 %v5803
  %v5805 = vpop.xlane.xlu0 %5804
  %v5806 = vmul.f32 %v5796, %v192
  %v5807 = vmul.f32 %v5799, %v192
  %v5808 = vmul.f32 %v5802, %v192
  %v5809 = vmul.f32 %v5805, %v192
  %v5810 = vadd.f32 %v5806, 1e-06
  %v5811 = vadd.f32 %v5807, 1e-06
  %v5812 = vadd.f32 %v5808, 1e-06
  %v5813 = vadd.f32 %v5809, 1e-06
  %v5814 = vrsqrt.pop %v5810
  %v5815 = vrsqrt.pop %v5811
  %v5816 = vrsqrt.pop %v5812
  %v5817 = vrsqrt.pop %v5813
  %v5818 = vmul.f32 %v5786, %v5814
  %v5819 = vmul.f32 %v5787, %v5815
  %v5820 = vmul.f32 %v5788, %v5816
  %v5821 = vmul.f32 %v5789, %v5817
  %v5823 = vlaneseq
  %v5824 = vshrl.u32 %v5823, 7
  %v5825 = vsub.s32 0, %v5824
  %v5826 = vrot.slane %v5768, %v5825
  %v5828 = vmul.f32 %v5818, %v5826
  %v5829 = vmul.f32 %v5819, %v5826
  %v5830 = vmul.f32 %v5820, %v5826
  %v5831 = vmul.f32 %v5821, %v5826
  %v5833 = vlaneseq
  %v5834 = vshrl.u32 %v5833, 7
  %v5835 = vsub.s32 0, %v5834
  %v5836 = vrot.slane %v5769, %v5835
  %v5838 = vadd.f32 %v5828, %v5836
  %v5839 = vadd.f32 %v5829, %v5836
  %v5840 = vadd.f32 %v5830, %v5836
  %v5841 = vadd.f32 %v5831, %v5836
  %v5842 = vld [vmem:[%s17] sm:$0xff]
  %v5843 = vld [vmem:[%s18] sm:$0xff]
  %5845 = vset.pattern.permute.xlu0 0
  %5846 = vperm.xlu0 %5845, %v5843
  %v5847 = vpop.permute.xlu0 %5846
  %v5850 = vsel %vm179, %v5842, 0
  %v5853 = vsel %vm179, %v5838, 0
  %v5856 = vsel %vm179, %v5839, 0
  %5858 = vmatprep.subr.mxu0 0.0
  %5859 = vmatpush1.xpose.msra.mxu0 0.0
  %5860 = vmatprep.subr.mxu0 0.0
  %5861 = vmatpush1.xpose.msra.mxu0 0.0
  %5862 = vmatprep.subr.mxu0 0.0
  %5863 = vmatpush1.xpose.msra.mxu0 0.0
  %5864 = vmatprep.subr.mxu0 0.0
  %5865 = vmatpush1.xpose.msra.mxu0 0.0
  %5866 = vmatprep.subr.mxu0 0.0
  %5867 = vmatpush1.xpose.msra.mxu0 0.0
  %5868 = vmatprep.subr.mxu0 0.0
  %5869 = vmatpush1.xpose.msra.mxu0 0.0
  %5870 = vmatprep.subr.mxu0 0.0
  %5871 = vmatpush1.xpose.msra.mxu0 0.0
  %5872 = vmatprep.subr.mxu0 0.0
  %5873 = vmatpush1.xpose.msra.mxu0 0.0
  %5874 = vmatprep.subr.mxu0 0.0
  %5875 = vmatpush1.xpose.msra.mxu0 0.0
  %5876 = vmatprep.subr.mxu0 0.0
  %5877 = vmatpush1.xpose.msra.mxu0 0.0
  %5878 = vmatprep.subr.mxu0 0.0
  %5879 = vmatpush1.xpose.msra.mxu0 0.0
  %5880 = vmatprep.subr.mxu0 0.0
  %5881 = vmatpush1.xpose.msra.mxu0 0.0
  %5882 = vmatprep.subr.mxu0 0.0
  %5883 = vmatpush1.xpose.msra.mxu0 0.0
  %5884 = vmatprep.subr.mxu0 0.0
  %5885 = vmatpush1.xpose.msra.mxu0 0.0
  %5886 = vmatprep.subr.mxu0 0.0
  %5887 = vmatpush1.xpose.msra.mxu0 %v5856
  %5888 = vmatprep.subr.mxu0 0.0
  %5889 = vmatpush1.xpose.msra.mxu0 %v5853
  %5890 = vmatprep.subr.mxu0 0.0
  %5891 = vmatpush2.xpose.msra.mxu0 0.0
  %5892 = vmatprep.subr.mxu0 0.0
  %5893 = vmatpush2.xpose.msra.mxu0 0.0
  %5894 = vmatprep.subr.mxu0 0.0
  %5895 = vmatpush2.xpose.msra.mxu0 0.0
  %5896 = vmatprep.subr.mxu0 0.0
  %5897 = vmatpush2.xpose.msra.mxu0 0.0
  %5898 = vmatprep.subr.mxu0 0.0
  %5899 = vmatpush2.xpose.msra.mxu0 0.0
  %5900 = vmatprep.subr.mxu0 0.0
  %5901 = vmatpush2.xpose.msra.mxu0 0.0
  %5902 = vmatprep.subr.mxu0 0.0
  %5903 = vmatpush2.xpose.msra.mxu0 0.0
  %5904 = vmatprep.subr.mxu0 0.0
  %5905 = vmatpush2.xpose.msra.mxu0 0.0
  %5906 = vmatprep.subr.mxu0 0.0
  %5907 = vmatpush2.xpose.msra.mxu0 0.0
  %5908 = vmatprep.subr.mxu0 0.0
  %5909 = vmatpush2.xpose.msra.mxu0 0.0
  %5910 = vmatprep.subr.mxu0 0.0
  %5911 = vmatpush2.xpose.msra.mxu0 0.0
  %5912 = vmatprep.subr.mxu0 0.0
  %5913 = vmatpush2.xpose.msra.mxu0 0.0
  %5914 = vmatprep.subr.mxu0 0.0
  %5915 = vmatpush2.xpose.msra.mxu0 0.0
  %5916 = vmatprep.subr.mxu0 0.0
  %5917 = vmatpush2.xpose.msra.mxu0 0.0
  %5918 = vmatprep.subr.mxu0 0.0
  %5919 = vmatpush2.xpose.msra.mxu0 0.0
  %5920 = vmatprep.subr.mxu0 0.0
  %5921 = vmatpush2.xpose.msra.mxu0 0.0
  %5922 = vmatprep.mubr.f32.mxu0 0.0
  %5923 = vmatmul.mubr.f32.gmra.mxu0 %v5850
  %v5924 = vpop.f32.mrf.mxu0
  %v5925 = vadd.f32 %v5847, %v5924
  %v5926 = vpop.f32.mrf.mxu0
  %5927 = vdwg.mxu0
  %v5928 = vld [vmem:[%s19] sm:$0xff]
  %v5929 = vld [vmem:[%s19 + $0x8] sm:$0xff]
  %v5930 = vld [vmem:[%s19 + $0x10] sm:$0xff]
  %v5931 = vld [vmem:[%s19 + $0x18] sm:$0xff]
  %v5933 = vsel %vm624, %v5925, 0
  %5935 = vmatprep.subr.mxu0 0.0
  %5936 = vmatpush1.msra.mxu0 0.0
  %5937 = vmatprep.subr.mxu0 0.0
  %5938 = vmatpush1.msra.mxu0 0.0
  %5939 = vmatprep.subr.mxu0 0.0
  %5940 = vmatpush1.msra.mxu0 0.0
  %5941 = vmatprep.subr.mxu0 0.0
  %5942 = vmatpush1.msra.mxu0 0.0
  %5943 = vmatprep.subr.mxu0 0.0
  %5944 = vmatpush1.msra.mxu0 0.0
  %5945 = vmatprep.subr.mxu0 0.0
  %5946 = vmatpush1.msra.mxu0 0.0
  %5947 = vmatprep.subr.mxu0 0.0
  %5948 = vmatpush1.msra.mxu0 0.0
  %5949 = vmatprep.subr.mxu0 0.0
  %5950 = vmatpush1.msra.mxu0 0.0
  %5951 = vmatprep.subr.mxu0 0.0
  %5952 = vmatpush1.msra.mxu0 0.0
  %5953 = vmatprep.subr.mxu0 0.0
  %5954 = vmatpush1.msra.mxu0 0.0
  %5955 = vmatprep.subr.mxu0 0.0
  %5956 = vmatpush1.msra.mxu0 0.0
  %5957 = vmatprep.subr.mxu0 0.0
  %5958 = vmatpush1.msra.mxu0 0.0
  %5959 = vmatprep.subr.mxu0 0.0
  %5960 = vmatpush1.msra.mxu0 0.0
  %5961 = vmatprep.subr.mxu0 0.0
  %5962 = vmatpush1.msra.mxu0 0.0
  %5963 = vmatprep.subr.mxu0 %v5931
  %5964 = vmatpush1.msra.mxu0 %v5930
  %5965 = vmatprep.subr.mxu0 %v5929
  %5966 = vmatpush1.msra.mxu0 %v5928
  %5967 = vmatprep.subr.mxu0 0.0
  %5968 = vmatpush2.msra.mxu0 0.0
  %5969 = vmatprep.subr.mxu0 0.0
  %5970 = vmatpush2.msra.mxu0 0.0
  %5971 = vmatprep.subr.mxu0 0.0
  %5972 = vmatpush2.msra.mxu0 0.0
  %5973 = vmatprep.subr.mxu0 0.0
  %5974 = vmatpush2.msra.mxu0 0.0
  %5975 = vmatprep.subr.mxu0 0.0
  %5976 = vmatpush2.msra.mxu0 0.0
  %5977 = vmatprep.subr.mxu0 0.0
  %5978 = vmatpush2.msra.mxu0 0.0
  %5979 = vmatprep.subr.mxu0 0.0
  %5980 = vmatpush2.msra.mxu0 0.0
  %5981 = vmatprep.subr.mxu0 0.0
  %5982 = vmatpush2.msra.mxu0 0.0
  %5983 = vmatprep.subr.mxu0 0.0
  %5984 = vmatpush2.msra.mxu0 0.0
  %5985 = vmatprep.subr.mxu0 0.0
  %5986 = vmatpush2.msra.mxu0 0.0
  %5987 = vmatprep.subr.mxu0 0.0
  %5988 = vmatpush2.msra.mxu0 0.0
  %5989 = vmatprep.subr.mxu0 0.0
  %5990 = vmatpush2.msra.mxu0 0.0
  %5991 = vmatprep.subr.mxu0 0.0
  %5992 = vmatpush2.msra.mxu0 0.0
  %5993 = vmatprep.subr.mxu0 0.0
  %5994 = vmatpush2.msra.mxu0 0.0
  %5995 = vmatprep.subr.mxu0 0.0
  %5996 = vmatpush2.msra.mxu0 0.0
  %5997 = vmatprep.subr.mxu0 0.0
  %5998 = vmatpush2.msra.mxu0 0.0
  %5999 = vmatprep.mubr.f32.mxu0 0.0
  %6000 = vmatmul.mubr.f32.gmra.mxu0 %v5933
  %v6001 = vpop.f32.mrf.mxu0
  %v6002 = vadd.f32 0.0, %v6001
  %v6003 = vpop.f32.mrf.mxu0
  %v6004 = vadd.f32 0.0, %v6003
  %6005 = vdwg.mxu0
  %6006 = vst [vmem:[%s20] sm:$0xff] %v6002
  %6007 = vst [vmem:[%s20 + $0x8] sm:$0xff] %v6004
  %v6008 = vld [vmem:[%s17] sm:$0xff]
  %v6009 = vld [vmem:[%s18] sm:$0xff]
  %6011 = vset.pattern.permute.xlu0 0
  %6012 = vperm.xlu0 %6011, %v6009
  %v6013 = vpop.permute.xlu0 %6012
  %v6016 = vsel %vm179, %v6008, 0
  %v6019 = vsel %vm179, %v5840, 0
  %v6022 = vsel %vm179, %v5841, 0
  %6024 = vmatprep.subr.mxu0 0.0
  %6025 = vmatpush1.xpose.msra.mxu0 0.0
  %6026 = vmatprep.subr.mxu0 0.0
  %6027 = vmatpush1.xpose.msra.mxu0 0.0
  %6028 = vmatprep.subr.mxu0 0.0
  %6029 = vmatpush1.xpose.msra.mxu0 0.0
  %6030 = vmatprep.subr.mxu0 0.0
  %6031 = vmatpush1.xpose.msra.mxu0 0.0
  %6032 = vmatprep.subr.mxu0 0.0
  %6033 = vmatpush1.xpose.msra.mxu0 0.0
  %6034 = vmatprep.subr.mxu0 0.0
  %6035 = vmatpush1.xpose.msra.mxu0 0.0
  %6036 = vmatprep.subr.mxu0 0.0
  %6037 = vmatpush1.xpose.msra.mxu0 0.0
  %6038 = vmatprep.subr.mxu0 0.0
  %6039 = vmatpush1.xpose.msra.mxu0 0.0
  %6040 = vmatprep.subr.mxu0 0.0
  %6041 = vmatpush1.xpose.msra.mxu0 0.0
  %6042 = vmatprep.subr.mxu0 0.0
  %6043 = vmatpush1.xpose.msra.mxu0 0.0
  %6044 = vmatprep.subr.mxu0 0.0
  %6045 = vmatpush1.xpose.msra.mxu0 0.0
  %6046 = vmatprep.subr.mxu0 0.0
  %6047 = vmatpush1.xpose.msra.mxu0 0.0
  %6048 = vmatprep.subr.mxu0 0.0
  %6049 = vmatpush1.xpose.msra.mxu0 0.0
  %6050 = vmatprep.subr.mxu0 0.0
  %6051 = vmatpush1.xpose.msra.mxu0 0.0
  %6052 = vmatprep.subr.mxu0 0.0
  %6053 = vmatpush1.xpose.msra.mxu0 %v6022
  %6054 = vmatprep.subr.mxu0 0.0
  %6055 = vmatpush1.xpose.msra.mxu0 %v6019
  %6056 = vmatprep.subr.mxu0 0.0
  %6057 = vmatpush2.xpose.msra.mxu0 0.0
  %6058 = vmatprep.subr.mxu0 0.0
  %6059 = vmatpush2.xpose.msra.mxu0 0.0
  %6060 = vmatprep.subr.mxu0 0.0
  %6061 = vmatpush2.xpose.msra.mxu0 0.0
  %6062 = vmatprep.subr.mxu0 0.0
  %6063 = vmatpush2.xpose.msra.mxu0 0.0
  %6064 = vmatprep.subr.mxu0 0.0
  %6065 = vmatpush2.xpose.msra.mxu0 0.0
  %6066 = vmatprep.subr.mxu0 0.0
  %6067 = vmatpush2.xpose.msra.mxu0 0.0
  %6068 = vmatprep.subr.mxu0 0.0
  %6069 = vmatpush2.xpose.msra.mxu0 0.0
  %6070 = vmatprep.subr.mxu0 0.0
  %6071 = vmatpush2.xpose.msra.mxu0 0.0
  %6072 = vmatprep.subr.mxu0 0.0
  %6073 = vmatpush2.xpose.msra.mxu0 0.0
  %6074 = vmatprep.subr.mxu0 0.0
  %6075 = vmatpush2.xpose.msra.mxu0 0.0
  %6076 = vmatprep.subr.mxu0 0.0
  %6077 = vmatpush2.xpose.msra.mxu0 0.0
  %6078 = vmatprep.subr.mxu0 0.0
  %6079 = vmatpush2.xpose.msra.mxu0 0.0
  %6080 = vmatprep.subr.mxu0 0.0
  %6081 = vmatpush2.xpose.msra.mxu0 0.0
  %6082 = vmatprep.subr.mxu0 0.0
  %6083 = vmatpush2.xpose.msra.mxu0 0.0
  %6084 = vmatprep.subr.mxu0 0.0
  %6085 = vmatpush2.xpose.msra.mxu0 0.0
  %6086 = vmatprep.subr.mxu0 0.0
  %6087 = vmatpush2.xpose.msra.mxu0 0.0
  %6088 = vmatprep.mubr.f32.mxu0 0.0
  %6089 = vmatmul.mubr.f32.gmra.mxu0 %v6016
  %v6090 = vpop.f32.mrf.mxu0
  %v6091 = vadd.f32 %v6013, %v6090
  %v6092 = vpop.f32.mrf.mxu0
  %6093 = vdwg.mxu0
  %v6094 = vld [vmem:[%s19] sm:$0xff]
  %v6095 = vld [vmem:[%s19 + $0x8] sm:$0xff]
  %v6096 = vld [vmem:[%s19 + $0x10] sm:$0xff]
  %v6097 = vld [vmem:[%s19 + $0x18] sm:$0xff]
  %v6099 = vsel %vm624, %v6091, 0
  %6101 = vmatprep.subr.mxu0 0.0
  %6102 = vmatpush1.msra.mxu0 0.0
  %6103 = vmatprep.subr.mxu0 0.0
  %6104 = vmatpush1.msra.mxu0 0.0
  %6105 = vmatprep.subr.mxu0 0.0
  %6106 = vmatpush1.msra.mxu0 0.0
  %6107 = vmatprep.subr.mxu0 0.0
  %6108 = vmatpush1.msra.mxu0 0.0
  %6109 = vmatprep.subr.mxu0 0.0
  %6110 = vmatpush1.msra.mxu0 0.0
  %6111 = vmatprep.subr.mxu0 0.0
  %6112 = vmatpush1.msra.mxu0 0.0
  %6113 = vmatprep.subr.mxu0 0.0
  %6114 = vmatpush1.msra.mxu0 0.0
  %6115 = vmatprep.subr.mxu0 0.0
  %6116 = vmatpush1.msra.mxu0 0.0
  %6117 = vmatprep.subr.mxu0 0.0
  %6118 = vmatpush1.msra.mxu0 0.0
  %6119 = vmatprep.subr.mxu0 0.0
  %6120 = vmatpush1.msra.mxu0 0.0
  %6121 = vmatprep.subr.mxu0 0.0
  %6122 = vmatpush1.msra.mxu0 0.0
  %6123 = vmatprep.subr.mxu0 0.0
  %6124 = vmatpush1.msra.mxu0 0.0
  %6125 = vmatprep.subr.mxu0 0.0
  %6126 = vmatpush1.msra.mxu0 0.0
  %6127 = vmatprep.subr.mxu0 0.0
  %6128 = vmatpush1.msra.mxu0 0.0
  %6129 = vmatprep.subr.mxu0 %v6097
  %6130 = vmatpush1.msra.mxu0 %v6096
  %6131 = vmatprep.subr.mxu0 %v6095
  %6132 = vmatpush1.msra.mxu0 %v6094
  %6133 = vmatprep.subr.mxu0 0.0
  %6134 = vmatpush2.msra.mxu0 0.0
  %6135 = vmatprep.subr.mxu0 0.0
  %6136 = vmatpush2.msra.mxu0 0.0
  %6137 = vmatprep.subr.mxu0 0.0
  %6138 = vmatpush2.msra.mxu0 0.0
  %6139 = vmatprep.subr.mxu0 0.0
  %6140 = vmatpush2.msra.mxu0 0.0
  %6141 = vmatprep.subr.mxu0 0.0
  %6142 = vmatpush2.msra.mxu0 0.0
  %6143 = vmatprep.subr.mxu0 0.0
  %6144 = vmatpush2.msra.mxu0 0.0
  %6145 = vmatprep.subr.mxu0 0.0
  %6146 = vmatpush2.msra.mxu0 0.0
  %6147 = vmatprep.subr.mxu0 0.0
  %6148 = vmatpush2.msra.mxu0 0.0
  %6149 = vmatprep.subr.mxu0 0.0
  %6150 = vmatpush2.msra.mxu0 0.0
  %6151 = vmatprep.subr.mxu0 0.0
  %6152 = vmatpush2.msra.mxu0 0.0
  %6153 = vmatprep.subr.mxu0 0.0
  %6154 = vmatpush2.msra.mxu0 0.0
  %6155 = vmatprep.subr.mxu0 0.0
  %6156 = vmatpush2.msra.mxu0 0.0
  %6157 = vmatprep.subr.mxu0 0.0
  %6158 = vmatpush2.msra.mxu0 0.0
  %6159 = vmatprep.subr.mxu0 0.0
  %6160 = vmatpush2.msra.mxu0 0.0
  %6161 = vmatprep.subr.mxu0 0.0
  %6162 = vmatpush2.msra.mxu0 0.0
  %6163 = vmatprep.subr.mxu0 0.0
  %6164 = vmatpush2.msra.mxu0 0.0
  %6165 = vmatprep.mubr.f32.mxu0 0.0
  %6166 = vmatmul.mubr.f32.gmra.mxu0 %v6099
  %v6167 = vpop.f32.mrf.mxu0
  %v6168 = vadd.f32 0.0, %v6167
  %v6169 = vpop.f32.mrf.mxu0
  %v6170 = vadd.f32 0.0, %v6169
  %6171 = vdwg.mxu0
  %s6172 = scalar_lea.vmem %s20, 16
  %6173 = vst [vmem:[%s6172] sm:$0xff] %v6168
  %6174 = vst [vmem:[%s6172 + $0x8] sm:$0xff] %v6170
  // Predicated region
  $region82: #{just_vit_forward.1} parent=0 // pred_check
    _
  $region83: #{just_vit_forward.1} parent=0 // pred_check_branch
    %6176 = sbr.rel (0) target = $region85
  $region84: #{just_vit_forward.1} parent=0 // pred_region
    _
  $region85: #{just_vit_forward.1} parent=0 // pred_fallthru
    _
  // Predicated region
  $region86: #{just_vit_forward.1} parent=0 // pred_check
    _
  $region87: #{just_vit_forward.1} parent=0 // pred_check_branch
    %6178 = sbr.rel (0) target = $region89
  $region88: #{just_vit_forward.1} parent=0 // pred_region
    _
  $region89: #{just_vit_forward.1} parent=0 // pred_fallthru
    _

</llo_original>
